<compile_context>
chip_gen: v6e
topology: v6e:2x2x1
jax: 0.10.0
libtpu: 0.0.40
codegen_flags: <defaults>
</compile_context>

<pallas_src>
from functools import partial

import jax
import jax.numpy as jnp
from jax import lax
from jax.experimental import pallas as pl
from jax.experimental.pallas import tpu as pltpu

EPS = 1e-12  # F.normalize default eps


# --------------------------------------------------------------------------
# Kernel
# --------------------------------------------------------------------------
def transd_kernel(h_ref, ht_ref, r_ref, rt_ref, t_ref, tt_ref, out_ref, *,
                  margin, p_norm, norm_flag):
    h = h_ref[...]      # (tb, D)
    ht = ht_ref[...]
    r = r_ref[...]
    rt = rt_ref[...]
    t = t_ref[...]
    tt = tt_ref[...]

    def l2_normalize(x):
        # x / max(||x||, eps)  ==  x * rsqrt(max(||x||^2, eps^2))
        ss = jnp.sum(x * x, axis=-1, keepdims=True)
        return x * lax.rsqrt(jnp.maximum(ss, EPS * EPS))

    def transfer(e, e_tr, r_tr):
        # _transfer: normalize(e + <e, e_transfer> * r_transfer); dim_e == dim_r
        # so _resize is the identity.
        proj = e + jnp.sum(e * e_tr, axis=-1, keepdims=True) * r_tr
        return l2_normalize(proj)

    h_p = transfer(h, ht, rt)
    t_p = transfer(t, tt, rt)

    if norm_flag:
        # h_p / t_p are already unit-norm from transfer(); re-normalizing them
        # (as the PyTorch _calc does) is a mathematical no-op, so only r needs
        # the extra normalize.
        r = l2_normalize(r)

    s = h_p + r - t_p
    if p_norm == 1:
        score = jnp.sum(jnp.abs(s), axis=-1)                       # (tb,)
    elif p_norm == 2:
        score = jnp.sqrt(jnp.sum(s * s, axis=-1))                  # (tb,)
    else:
        score = jnp.sum(jnp.abs(s) ** p_norm, axis=-1) ** (1.0 / p_norm)

    # Lane-dense store: one full-width row per grid step.
    if margin is None:
        out_ref[...] = score[None, :]
    else:
        out_ref[...] = (margin - score)[None, :]


# --------------------------------------------------------------------------
# Hardware probes + tile selection
# --------------------------------------------------------------------------
def _vmem_capacity_bytes():
    try:
        return int(pltpu.get_tpu_info().vmem_capacity_bytes)
    except Exception:
        return 64 * 1024 * 1024  # conservative (v7x-sized) fallback


def _num_tensorcores():
    # Best-effort probe; default to 1 (v5e/v6e) so single-TC chips never pay
    # an extra grid step just for a hypothetical megacore split.
    try:
        info = pltpu.get_tpu_info()
        for attr in ("num_cores", "core_count", "num_tensorcores",
                     "tensorcores_per_chip"):
            v = getattr(info, attr, None)
            if v:
                return int(v)
    except Exception:
        pass
    return 1


def _pick_tb(batch, dim, vmem_cap, num_cores):
    # 6 separate (tb, D) f32 input streams, double-buffered by the pipeline.
    bytes_per_row = 6 * 2 * dim * 4
    budget = vmem_cap // 2                       # headroom for output/scratch
    target_rows = (4 * 1024 * 1024) // (dim * 4)  # ~4 MiB per input block
    tb = min(target_rows, budget // bytes_per_row, 32768)
    tb = max(128, (tb // 128) * 128)             # multiple of 128
    b128 = pl.cdiv(batch, 128) * 128
    if tb >= b128:
        # Whole batch fits in one tile.  Only split it in two when there are
        # >= 2 TensorCores (v7x megacore) so the parallel grid can be sharded.
        if num_cores >= 2 and b128 >= 256:
            tb = max(128, ((b128 // 2) // 128) * 128)
        else:
            tb = b128
    return tb


# --------------------------------------------------------------------------
# Wrapper (mode='normal'): sample is int32 [B, 3] = (h_id, r_id, t_id)
# --------------------------------------------------------------------------
@partial(jax.jit, static_argnames=("margin", "p_norm", "norm_flag"))
def kge_forward_pallas(ent_emb, rel_emb, ent_tr, rel_tr, sample,
                       *, margin=1.0, p_norm=1, norm_flag=True):
    B = sample.shape[0]
    D = ent_emb.shape[1]
    # TODO(synk): dim_e != dim_r would need the _resize (truncate/pad) path.
    assert rel_emb.shape[1] == D, "kernel assumes dim_e == dim_r"

    vmem_cap = _vmem_capacity_bytes()
    num_cores = _num_tensorcores()
    tb = _pick_tb(B, D, vmem_cap, num_cores)
    B_pad = pl.cdiv(B, tb) * tb

    # Pad the batch to a tile multiple with valid (index 0) dummy triples.
    if B_pad != B:
        pad = jnp.zeros((B_pad - B, 3), sample.dtype)
        sample_p = jnp.concatenate([sample, pad], axis=0)
    else:
        sample_p = sample

    h_ids, r_ids, t_ids = sample_p[:, 0], sample_p[:, 1], sample_p[:, 2]

    # Six gathers from the ORIGINAL tables -- no per-call table concat.
    h = jnp.take(ent_emb, h_ids, axis=0)     # (B_pad, D)
    ht = jnp.take(ent_tr, h_ids, axis=0)
    r = jnp.take(rel_emb, r_ids, axis=0)
    rt = jnp.take(rel_tr, r_ids, axis=0)
    t = jnp.take(ent_emb, t_ids, axis=0)
    tt = jnp.take(ent_tr, t_ids, axis=0)

    kernel = partial(transd_kernel,
                     margin=None if margin is None else float(margin),
                     p_norm=p_norm, norm_flag=norm_flag)
    in_spec = pl.BlockSpec((tb, D), lambda i: (i, 0))

    out = pl.pallas_call(
        kernel,
        out_shape=jax.ShapeDtypeStruct((1, B_pad), jnp.float32),
        grid=(B_pad // tb,),
        in_specs=[in_spec] * 6,
        out_specs=pl.BlockSpec((1, tb), lambda i: (0, i)),
        compiler_params=pltpu.CompilerParams(
            dimension_semantics=("parallel",),
            # ~96 MiB on v5e/v6e (128 MiB VMEM), ~48 MiB on v7x (64 MiB VMEM).
            vmem_limit_bytes=int(vmem_cap * 3 // 4),
            allow_input_fusion=[True] * 6,
        ),
    )(h, ht, r, rt, t, tt)

    # (1, B_pad) -> (B,): matches `margin - torch.norm(...).flatten()`.
    return out[0, :B]


# --------------------------------------------------------------------------
# Pure-JAX reference faithful to the PyTorch forward (mode='normal')
# --------------------------------------------------------------------------
def kge_forward_ref(ent_emb, rel_emb, ent_tr, rel_tr, sample,
                    *, margin=1.0, p_norm=1, norm_flag=True):
    h = ent_emb[sample[:, 0]]
    r = rel_emb[sample[:, 1]]
    t = ent_emb[sample[:, 2]]
    ht = ent_tr[sample[:, 0]]
    rt = rel_tr[sample[:, 1]]
    tt = ent_tr[sample[:, 2]]

    def l2n(x):
        n = jnp.sqrt(jnp.sum(x * x, axis=-1, keepdims=True))
        return x / jnp.maximum(n, EPS)

    def transfer(e, e_tr, r_tr):
        return l2n(e + jnp.sum(e * e_tr, axis=-1, keepdims=True) * r_tr)

    h_p = transfer(h, ht, rt)
    t_p = transfer(t, tt, rt)
    if norm_flag:
        h_p = l2n(h_p)
        r = l2n(r)
        t_p = l2n(t_p)
    s = h_p + r - t_p
    score = jnp.sum(jnp.abs(s) ** p_norm, axis=-1) ** (1.0 / p_norm)
    if margin is None:
        return score
    return margin - score


# --------------------------------------------------------------------------
if __name__ == "__main__":
    # Small deterministic setup mirroring KGEModel.__init__ (mode='normal').
    ent_tot, rel_tot = 64, 16
    dim_e = dim_r = 32
    margin, epsilon = 1.0, 2.0
    B = 300  # non-multiple of 128 to exercise the padded tail tile

    ent_range = (margin + epsilon) / dim_e
    rel_range = (margin + epsilon) / dim_r

    key = jax.random.PRNGKey(0)
    k1, k2, k3, k4, k5 = jax.random.split(key, 5)
    ent_emb = jax.random.uniform(k1, (ent_tot, dim_e), jnp.float32,
                                 -ent_range, ent_range)
    rel_emb = jax.random.uniform(k2, (rel_tot, dim_r), jnp.float32,
                                 -rel_range, rel_range)
    ent_tr = jax.random.uniform(k3, (ent_tot, dim_e), jnp.float32,
                                -ent_range, ent_range)
    rel_tr = jax.random.uniform(k4, (rel_tot, dim_r), jnp.float32,
                                -rel_range, rel_range)

    kh, kr, kt = jax.random.split(k5, 3)
    sample = jnp.stack([
        jax.random.randint(kh, (B,), 0, ent_tot),
        jax.random.randint(kr, (B,), 0, rel_tot),
        jax.random.randint(kt, (B,), 0, ent_tot),
    ], axis=1).astype(jnp.int32)  # (B, 3)

    out = kge_forward_pallas(ent_emb, rel_emb, ent_tr, rel_tr, sample,
                             margin=margin, p_norm=1, norm_flag=True)
    out = jax.block_until_ready(out)

    ref = kge_forward_ref(ent_emb, rel_emb, ent_tr, rel_tr, sample,
                          margin=margin, p_norm=1, norm_flag=True)

    assert out.shape == (B,), out.shape
    assert jnp.allclose(out, ref, atol=5e-5, rtol=5e-5), (
        float(jnp.max(jnp.abs(out - ref))))

    print("KERNEL_OK")
</pallas_src>

<mosaic_0001>
module attributes {stable_mosaic.version = 11 : i64} {
  func.func @transd_kernel(%arg0: i32, %arg1: memref<384x32xf32, #tpu.memory_space<vmem>>, %arg2: memref<384x32xf32, #tpu.memory_space<vmem>>, %arg3: memref<384x32xf32, #tpu.memory_space<vmem>>, %arg4: memref<384x32xf32, #tpu.memory_space<vmem>>, %arg5: memref<384x32xf32, #tpu.memory_space<vmem>>, %arg6: memref<384x32xf32, #tpu.memory_space<vmem>>, %arg7: memref<1x384xf32, #tpu.memory_space<vmem>>) attributes {dimension_semantics = [#tpu.dimension_semantics<parallel>], iteration_bounds = array<i64: 1>, scalar_prefetch = 0 : i64, scratch_operands = 0 : i64, tpu.core_type = #tpu.core_type<tc>, window_params = [{transform_indices = @transform_0, window_bounds = array<i64: 384, 32>}, {transform_indices = @transform_1, window_bounds = array<i64: 384, 32>}, {transform_indices = @transform_2, window_bounds = array<i64: 384, 32>}, {transform_indices = @transform_3, window_bounds = array<i64: 384, 32>}, {transform_indices = @transform_4, window_bounds = array<i64: 384, 32>}, {transform_indices = @transform_5, window_bounds = array<i64: 384, 32>}, {transform_indices = @transform_6, window_bounds = array<i64: 1, 384>}]} {
    %c0 = arith.constant 0 : index
    %c0_0 = arith.constant 0 : index
    %0 = vector.load %arg1[%c0, %c0_0] : memref<384x32xf32, #tpu.memory_space<vmem>>, vector<384x32xf32>
    %c0_1 = arith.constant 0 : index
    %c0_2 = arith.constant 0 : index
    %1 = vector.load %arg2[%c0_1, %c0_2] : memref<384x32xf32, #tpu.memory_space<vmem>>, vector<384x32xf32>
    %c0_3 = arith.constant 0 : index
    %c0_4 = arith.constant 0 : index
    %2 = vector.load %arg3[%c0_3, %c0_4] : memref<384x32xf32, #tpu.memory_space<vmem>>, vector<384x32xf32>
    %c0_5 = arith.constant 0 : index
    %c0_6 = arith.constant 0 : index
    %3 = vector.load %arg4[%c0_5, %c0_6] : memref<384x32xf32, #tpu.memory_space<vmem>>, vector<384x32xf32>
    %c0_7 = arith.constant 0 : index
    %c0_8 = arith.constant 0 : index
    %4 = vector.load %arg5[%c0_7, %c0_8] : memref<384x32xf32, #tpu.memory_space<vmem>>, vector<384x32xf32>
    %c0_9 = arith.constant 0 : index
    %c0_10 = arith.constant 0 : index
    %5 = vector.load %arg6[%c0_9, %c0_10] : memref<384x32xf32, #tpu.memory_space<vmem>>, vector<384x32xf32>
    %6 = arith.mulf %0, %1 : vector<384x32xf32>
    %cst = arith.constant dense<0.000000e+00> : vector<384xf32>
    %7 = vector.multi_reduction <add>, %6, %cst [1] : vector<384x32xf32> to vector<384xf32>
    %8 = vector.shape_cast %7 : vector<384xf32> to vector<384x1xf32>
    %9 = vector.broadcast %8 : vector<384x1xf32> to vector<384x32xf32>
    %10 = arith.mulf %9, %3 : vector<384x32xf32>
    %11 = arith.addf %0, %10 : vector<384x32xf32>
    %12 = arith.mulf %11, %11 : vector<384x32xf32>
    %cst_11 = arith.constant dense<0.000000e+00> : vector<384xf32>
    %13 = vector.multi_reduction <add>, %12, %cst_11 [1] : vector<384x32xf32> to vector<384xf32>
    %14 = vector.shape_cast %13 : vector<384xf32> to vector<384x1xf32>
    %cst_12 = arith.constant 1.000000e-24 : f32
    %15 = vector.broadcast %cst_12 : f32 to vector<384x1xf32>
    %16 = arith.maximumf %14, %15 : vector<384x1xf32>
    %17 = math.rsqrt %16 : vector<384x1xf32>
    %18 = vector.broadcast %17 : vector<384x1xf32> to vector<384x32xf32>
    %19 = arith.mulf %11, %18 : vector<384x32xf32>
    %20 = arith.mulf %4, %5 : vector<384x32xf32>
    %cst_13 = arith.constant dense<0.000000e+00> : vector<384xf32>
    %21 = vector.multi_reduction <add>, %20, %cst_13 [1] : vector<384x32xf32> to vector<384xf32>
    %22 = vector.shape_cast %21 : vector<384xf32> to vector<384x1xf32>
    %23 = vector.broadcast %22 : vector<384x1xf32> to vector<384x32xf32>
    %24 = arith.mulf %23, %3 : vector<384x32xf32>
    %25 = arith.addf %4, %24 : vector<384x32xf32>
    %26 = arith.mulf %25, %25 : vector<384x32xf32>
    %cst_14 = arith.constant dense<0.000000e+00> : vector<384xf32>
    %27 = vector.multi_reduction <add>, %26, %cst_14 [1] : vector<384x32xf32> to vector<384xf32>
    %28 = vector.shape_cast %27 : vector<384xf32> to vector<384x1xf32>
    %cst_15 = arith.constant 1.000000e-24 : f32
    %29 = vector.broadcast %cst_15 : f32 to vector<384x1xf32>
    %30 = arith.maximumf %28, %29 : vector<384x1xf32>
    %31 = math.rsqrt %30 : vector<384x1xf32>
    %32 = vector.broadcast %31 : vector<384x1xf32> to vector<384x32xf32>
    %33 = arith.mulf %25, %32 : vector<384x32xf32>
    %34 = arith.mulf %2, %2 : vector<384x32xf32>
    %cst_16 = arith.constant dense<0.000000e+00> : vector<384xf32>
    %35 = vector.multi_reduction <add>, %34, %cst_16 [1] : vector<384x32xf32> to vector<384xf32>
    %36 = vector.shape_cast %35 : vector<384xf32> to vector<384x1xf32>
    %cst_17 = arith.constant 1.000000e-24 : f32
    %37 = vector.broadcast %cst_17 : f32 to vector<384x1xf32>
    %38 = arith.maximumf %36, %37 : vector<384x1xf32>
    %39 = math.rsqrt %38 : vector<384x1xf32>
    %40 = vector.broadcast %39 : vector<384x1xf32> to vector<384x32xf32>
    %41 = arith.mulf %2, %40 : vector<384x32xf32>
    %42 = arith.addf %19, %41 : vector<384x32xf32>
    %43 = arith.subf %42, %33 : vector<384x32xf32>
    %44 = math.absf %43 : vector<384x32xf32>
    %cst_18 = arith.constant dense<0.000000e+00> : vector<384xf32>
    %45 = vector.multi_reduction <add>, %44, %cst_18 [1] : vector<384x32xf32> to vector<384xf32>
    %cst_19 = arith.constant 1.000000e+00 : f32
    %46 = vector.broadcast %cst_19 : f32 to vector<384xf32>
    %47 = arith.subf %46, %45 : vector<384xf32>
    %48 = vector.shape_cast %47 : vector<384xf32> to vector<1x384xf32>
    %c0_20 = arith.constant 0 : index
    %c0_21 = arith.constant 0 : index
    %49 = vector.load %arg7[%c0_20, %c0_21] : memref<1x384xf32, #tpu.memory_space<vmem>>, vector<1x384xf32>
    tpu.vector_store %arg7[%c0_20, %c0_21], %48 {strides = array<i32>} : memref<1x384xf32, #tpu.memory_space<vmem>>, vector<1x384xf32>,
    return
  }
  func.func @transform_0(%arg0: i32) -> (i32, i32) {
    %c0_i32 = arith.constant 0 : i32
    %c0_i32_0 = arith.constant 0 : i32
    return %arg0, %c0_i32 : i32, i32
  }
  func.func @transform_1(%arg0: i32) -> (i32, i32) {
    %c0_i32 = arith.constant 0 : i32
    %c0_i32_0 = arith.constant 0 : i32
    return %arg0, %c0_i32 : i32, i32
  }
  func.func @transform_2(%arg0: i32) -> (i32, i32) {
    %c0_i32 = arith.constant 0 : i32
    %c0_i32_0 = arith.constant 0 : i32
    return %arg0, %c0_i32 : i32, i32
  }
  func.func @transform_3(%arg0: i32) -> (i32, i32) {
    %c0_i32 = arith.constant 0 : i32
    %c0_i32_0 = arith.constant 0 : i32
    return %arg0, %c0_i32 : i32, i32
  }
  func.func @transform_4(%arg0: i32) -> (i32, i32) {
    %c0_i32 = arith.constant 0 : i32
    %c0_i32_0 = arith.constant 0 : i32
    return %arg0, %c0_i32 : i32, i32
  }
  func.func @transform_5(%arg0: i32) -> (i32, i32) {
    %c0_i32 = arith.constant 0 : i32
    %c0_i32_0 = arith.constant 0 : i32
    return %arg0, %c0_i32 : i32, i32
  }
  func.func @transform_6(%arg0: i32) -> (i32, i32) {
    %c0_i32 = arith.constant 0 : i32
    %c0_i32_0 = arith.constant 0 : i32
    return %c0_i32, %arg0 : i32, i32
  }
}

</mosaic_0001>

<llo_original>
// kernel: kge_forward_pallas.2
$region0: #{kge_forward_pallas.2}
  #allocation0 [shape = 'u32[]', space=smem, size = 0x4, offset = 0x4, fixed_abs, tag = 'smem constant byte address 0x4 - core index']
  #allocation1 [shape = 'u32[144,128]{1,0:T(1,128)}', space=vmem, size = 0x12000, scoped, tag = 'internal scratch']
  %s0 = inlined_call_operand.vmem [shape: f32[384,32], index: 0, kind: input, shape index: {}]
  %s1 = inlined_call_operand.vmem [shape: f32[384,32], index: 1, kind: input, shape index: {}]
  %s2 = inlined_call_operand.vmem [shape: f32[384,32], index: 2, kind: input, shape index: {}]
  %s3 = inlined_call_operand.vmem [shape: f32[384,32], index: 3, kind: input, shape index: {}]
  %s4 = inlined_call_operand.vmem [shape: f32[384,32], index: 4, kind: input, shape index: {}]
  %s5 = inlined_call_operand.vmem [shape: f32[384,32], index: 5, kind: input, shape index: {}]
  %s6 = inlined_call_operand.<no memory space> [shape: f32[], index: 6, kind: input, shape index: {}]
  %s7 = inlined_call_operand.vmem [shape: pred[384], index: 7, kind: input, shape index: {}]
  %s8 = inlined_call_operand.vmem [shape: pred[384], index: 8, kind: input, shape index: {}]
  %s9 = inlined_call_operand.vmem [shape: pred[384], index: 9, kind: input, shape index: {}]
  %s10 = inlined_call_operand.vmem [shape: f32[1,384], index: 10, kind: output, shape index: {}]
  %s11 = sld [smem:[#allocation0]]
  $region58: #{kge_forward_pallas.2} parent=0
    _
  %s13 = ssub.s32 1, %s11
  %s14 = scalar_select 0, %s13, %s11
  %v15 = vstv %s6
  %v16 = vstv %s6
  %v17 = vstv %s6
  %v18 = vstv %s6
  %v19 = vstv %s6
  %v20 = vstv %s6
  $region1: #{kge_forward_pallas.2} parent=0
    #allocation2 [shape = 'u8[196608]{0}', space=vmem, size = 0x30000, dematerialized = true, scoped, tag = 'FusionAdapter Buffer %fusion.6 = f32[384,32]{1,0:T(8,128)} fusion(%param_5.10, %param_6.9, %param_9.5), kind=kLoop, calls=%fused_computation.12.clone, metadata={op_name="jit(kge_forward_pallas)/jit(_take)/select_n" stack_frame_id=12}']
    #allocation3 [shape = 'u8[196608]{0}', space=vmem, size = 0x30000, dematerialized = true, scoped, tag = 'FusionAdapter Buffer %fusion.5 = f32[384,32]{1,0:T(8,128)} fusion(%param_4.9, %param_6.9, %param_9.5), kind=kLoop, calls=%fused_computation.11.clone, metadata={op_name="jit(kge_forward_pallas)/jit(_take)/select_n" stack_frame_id=13}']
    #allocation4 [shape = 'u8[196608]{0}', space=vmem, size = 0x30000, dematerialized = true, scoped, tag = 'FusionAdapter Buffer %fusion.4 = f32[384,32]{1,0:T(8,128)} fusion(%param_3.7, %param_6.9, %param_8.7), kind=kLoop, calls=%fused_computation.10.clone, metadata={op_name="jit(kge_forward_pallas)/jit(_take)/select_n" stack_frame_id=14}']
    #allocation5 [shape = 'u8[196608]{0}', space=vmem, size = 0x30000, dematerialized = true, scoped, tag = 'FusionAdapter Buffer %fusion.3 = f32[384,32]{1,0:T(8,128)} fusion(%param_2.20, %param_6.9, %param_8.7), kind=kLoop, calls=%fused_computation.9.clone, metadata={op_name="jit(kge_forward_pallas)/jit(_take)/select_n" stack_frame_id=15}']
    #allocation6 [shape = 'u8[196608]{0}', space=vmem, size = 0x30000, dematerialized = true, scoped, tag = 'FusionAdapter Buffer %fusion.2 = f32[384,32]{1,0:T(8,128)} fusion(%param_1.45, %param_6.9, %param_7.9), kind=kLoop, calls=%fused_computation.8.clone, metadata={op_name="jit(kge_forward_pallas)/jit(_take)/select_n" stack_frame_id=16}']
    #allocation7 [shape = 'u8[196608]{0}', space=vmem, size = 0x30000, dematerialized = true, scoped, tag = 'FusionAdapter Buffer %fusion.1 = f32[384,32]{1,0:T(8,128)} fusion(%param_0.39, %param_6.9, %param_7.9), kind=kLoop, calls=%fused_computation.7.clone, metadata={op_name="jit(kge_forward_pallas)/jit(_take)/select_n" stack_frame_id=17}']
    // Predicated region
    $region2: #{kge_forward_pallas.2} parent=1 // pred_check
      _
    $region3: #{kge_forward_pallas.2} parent=1 // pred_check_branch
      %22 = sbr.rel (0) target = $region5
    $region4: #{kge_forward_pallas.2} parent=1 // pred_region
      _
    $region5: #{kge_forward_pallas.2} parent=1 // pred_fallthru
      _
    // Predicated region
    $region6: #{kge_forward_pallas.2} parent=1 // pred_check
      _
    $region7: #{kge_forward_pallas.2} parent=1 // pred_check_branch
      %24 = sbr.rel (0) target = $region9
    $region8: #{kge_forward_pallas.2} parent=1 // pred_region
      _
    $region9: #{kge_forward_pallas.2} parent=1 // pred_fallthru
      _
    // Predicated region
    $region10: #{kge_forward_pallas.2} parent=1 // pred_check
      _
    $region11: #{kge_forward_pallas.2} parent=1 // pred_check_branch
      %26 = sbr.rel (0) target = $region13
    $region12: #{kge_forward_pallas.2} parent=1 // pred_region
      _
    $region13: #{kge_forward_pallas.2} parent=1 // pred_fallthru
      _
    // Predicated region
    $region14: #{kge_forward_pallas.2} parent=1 // pred_check
      _
    $region15: #{kge_forward_pallas.2} parent=1 // pred_check_branch
      %28 = sbr.rel (0) target = $region17
    $region16: #{kge_forward_pallas.2} parent=1 // pred_region
      _
    $region17: #{kge_forward_pallas.2} parent=1 // pred_fallthru
      _
    // Predicated region
    $region18: #{kge_forward_pallas.2} parent=1 // pred_check
      _
    $region19: #{kge_forward_pallas.2} parent=1 // pred_check_branch
      %30 = sbr.rel (0) target = $region21
    $region20: #{kge_forward_pallas.2} parent=1 // pred_region
      _
    $region21: #{kge_forward_pallas.2} parent=1 // pred_fallthru
      _
    // Predicated region
    $region22: #{kge_forward_pallas.2} parent=1 // pred_check
      _
    $region23: #{kge_forward_pallas.2} parent=1 // pred_check_branch
      %32 = sbr.rel (0) target = $region25
    $region24: #{kge_forward_pallas.2} parent=1 // pred_region
      _
    $region25: #{kge_forward_pallas.2} parent=1 // pred_fallthru
      _
    // Predicated region
    $region26: #{kge_forward_pallas.2} parent=1 // pred_check
      _
    $region27: #{kge_forward_pallas.2} parent=1 // pred_check_branch
      %34 = sbr.rel (0) target = $region29
    $region28: #{kge_forward_pallas.2} parent=1 // pred_region
      _
    $region29: #{kge_forward_pallas.2} parent=1 // pred_fallthru
      _
    // Predicated region
    $region30: #{kge_forward_pallas.2} parent=1 // pred_check
      _
    $region31: #{kge_forward_pallas.2} parent=1 // pred_check_branch
      %36 = sbr.rel (0) target = $region33
    $region32: #{kge_forward_pallas.2} parent=1 // pred_region
      _
    $region33: #{kge_forward_pallas.2} parent=1 // pred_fallthru
      _
    // Predicated region
    $region34: #{kge_forward_pallas.2} parent=1 // pred_check
      _
    $region35: #{kge_forward_pallas.2} parent=1 // pred_check_branch
      %38 = sbr.rel (0) target = $region37
    $region36: #{kge_forward_pallas.2} parent=1 // pred_region
      _
    $region37: #{kge_forward_pallas.2} parent=1 // pred_fallthru
      _
    // Predicated region
    $region38: #{kge_forward_pallas.2} parent=1 // pred_check
      _
    $region39: #{kge_forward_pallas.2} parent=1 // pred_check_branch
      %40 = sbr.rel (0) target = $region41
    $region40: #{kge_forward_pallas.2} parent=1 // pred_region
      _
    $region41: #{kge_forward_pallas.2} parent=1 // pred_fallthru
      _
    // Predicated region
    $region42: #{kge_forward_pallas.2} parent=1 // pred_check
      _
    $region43: #{kge_forward_pallas.2} parent=1 // pred_check_branch
      %42 = sbr.rel (0) target = $region45
    $region44: #{kge_forward_pallas.2} parent=1 // pred_region
      _
    $region45: #{kge_forward_pallas.2} parent=1 // pred_fallthru
      _
    // Predicated region
    $region46: #{kge_forward_pallas.2} parent=1 // pred_check
      _
    $region47: #{kge_forward_pallas.2} parent=1 // pred_check_branch
      %44 = sbr.rel (0) target = $region49
    $region48: #{kge_forward_pallas.2} parent=1 // pred_region
      _
    $region49: #{kge_forward_pallas.2} parent=1 // pred_fallthru
      _
    %v45 = vld [vmem:[%s5] sm:$0xff]
    %v46 = vld [vmem:[%s9] ss:$0 sm:$0xff]
    %v48 = vshra.s32 %v46, 0
    %v49 = vand.u32 %v48, 255
    %51 = vbcast.lane.b32.xlu0 %v49, 256
    %v52 = vpop.permute.xlu0 %51
    %53 = xla_tuple %v52, %v45, %v15
    %54 = xla_tuple %53
    %vm55 = vcmp.ne.s32.totalorder %v52, 0
    %v56 = vsel %vm55, %v45, %v15
    %57 = xla_tuple %v56
    %s59 = ssub.s32 256, 1
    %60 = vst [vmem:[#allocation2] sm:%s59] %v56
    %s61 = scalar_lea.vmem %s5, 8
    %v62 = vld [vmem:[%s61] sm:$0xff]
    %v63 = vld [vmem:[%s9] ss:$0 sm:$0xff]
    %v65 = vshra.s32 %v63, 0
    %v66 = vand.u32 %v65, 255
    %s68 = sor.u32 256, 8
    %69 = vbcast.lane.b32.xlu0 %v66, %s68
    %v70 = vpop.permute.xlu0 %69
    %71 = xla_tuple %v70, %v62, %v15
    %72 = xla_tuple %71
    %vm73 = vcmp.ne.s32.totalorder %v70, 0
    %v74 = vsel %vm73, %v62, %v15
    %75 = xla_tuple %v74
    %s76 = scalar_lea.vmem [#allocation2], 8
    %s78 = ssub.s32 256, 1
    %79 = vst [vmem:[%s76] sm:%s78] %v74
    %s80 = scalar_lea.vmem %s5, 16
    %v81 = vld [vmem:[%s80] sm:$0xff]
    %v82 = vld [vmem:[%s9] ss:$0 sm:$0xff]
    %v84 = vshra.s32 %v82, 0
    %v85 = vand.u32 %v84, 255
    %s87 = sor.u32 256, 16
    %88 = vbcast.lane.b32.xlu0 %v85, %s87
    %v89 = vpop.permute.xlu0 %88
    %90 = xla_tuple %v89, %v81, %v15
    %91 = xla_tuple %90
    %vm92 = vcmp.ne.s32.totalorder %v89, 0
    %v93 = vsel %vm92, %v81, %v15
    %94 = xla_tuple %v93
    %s95 = scalar_lea.vmem [#allocation2], 16
    %s97 = ssub.s32 256, 1
    %98 = vst [vmem:[%s95] sm:%s97] %v93
    %s99 = scalar_lea.vmem %s5, 24
    %v100 = vld [vmem:[%s99] sm:$0xff]
    %v101 = vld [vmem:[%s9] ss:$0 sm:$0xff]
    %v103 = vshra.s32 %v101, 0
    %v104 = vand.u32 %v103, 255
    %s106 = sor.u32 256, 24
    %107 = vbcast.lane.b32.xlu0 %v104, %s106
    %v108 = vpop.permute.xlu0 %107
    %109 = xla_tuple %v108, %v100, %v15
    %110 = xla_tuple %109
    %vm111 = vcmp.ne.s32.totalorder %v108, 0
    %v112 = vsel %vm111, %v100, %v15
    %113 = xla_tuple %v112
    %s114 = scalar_lea.vmem [#allocation2], 24
    %s116 = ssub.s32 256, 1
    %117 = vst [vmem:[%s114] sm:%s116] %v112
    %s118 = scalar_lea.vmem %s5, 32
    %v119 = vld [vmem:[%s118] sm:$0xff]
    %v120 = vld [vmem:[%s9] ss:$0 sm:$0xff]
    %v122 = vshra.s32 %v120, 0
    %v123 = vand.u32 %v122, 255
    %s125 = sor.u32 256, 32
    %126 = vbcast.lane.b32.xlu0 %v123, %s125
    %v127 = vpop.permute.xlu0 %126
    %128 = xla_tuple %v127, %v119, %v15
    %129 = xla_tuple %128
    %vm130 = vcmp.ne.s32.totalorder %v127, 0
    %v131 = vsel %vm130, %v119, %v15
    %132 = xla_tuple %v131
    %s133 = scalar_lea.vmem [#allocation2], 32
    %s135 = ssub.s32 256, 1
    %136 = vst [vmem:[%s133] sm:%s135] %v131
    %s137 = scalar_lea.vmem %s5, 40
    %v138 = vld [vmem:[%s137] sm:$0xff]
    %v139 = vld [vmem:[%s9] ss:$0 sm:$0xff]
    %v141 = vshra.s32 %v139, 0
    %v142 = vand.u32 %v141, 255
    %s144 = sor.u32 256, 40
    %145 = vbcast.lane.b32.xlu0 %v142, %s144
    %v146 = vpop.permute.xlu0 %145
    %147 = xla_tuple %v146, %v138, %v15
    %148 = xla_tuple %147
    %vm149 = vcmp.ne.s32.totalorder %v146, 0
    %v150 = vsel %vm149, %v138, %v15
    %151 = xla_tuple %v150
    %s152 = scalar_lea.vmem [#allocation2], 40
    %s154 = ssub.s32 256, 1
    %155 = vst [vmem:[%s152] sm:%s154] %v150
    %s156 = scalar_lea.vmem %s5, 48
    %v157 = vld [vmem:[%s156] sm:$0xff]
    %v158 = vld [vmem:[%s9] ss:$0 sm:$0xff]
    %v160 = vshra.s32 %v158, 0
    %v161 = vand.u32 %v160, 255
    %s163 = sor.u32 256, 48
    %164 = vbcast.lane.b32.xlu0 %v161, %s163
    %v165 = vpop.permute.xlu0 %164
    %166 = xla_tuple %v165, %v157, %v15
    %167 = xla_tuple %166
    %vm168 = vcmp.ne.s32.totalorder %v165, 0
    %v169 = vsel %vm168, %v157, %v15
    %170 = xla_tuple %v169
    %s171 = scalar_lea.vmem [#allocation2], 48
    %s173 = ssub.s32 256, 1
    %174 = vst [vmem:[%s171] sm:%s173] %v169
    %s175 = scalar_lea.vmem %s5, 56
    %v176 = vld [vmem:[%s175] sm:$0xff]
    %v177 = vld [vmem:[%s9] ss:$0 sm:$0xff]
    %v179 = vshra.s32 %v177, 0
    %v180 = vand.u32 %v179, 255
    %s182 = sor.u32 256, 56
    %183 = vbcast.lane.b32.xlu0 %v180, %s182
    %v184 = vpop.permute.xlu0 %183
    %185 = xla_tuple %v184, %v176, %v15
    %186 = xla_tuple %185
    %vm187 = vcmp.ne.s32.totalorder %v184, 0
    %v188 = vsel %vm187, %v176, %v15
    %189 = xla_tuple %v188
    %s190 = scalar_lea.vmem [#allocation2], 56
    %s192 = ssub.s32 256, 1
    %193 = vst [vmem:[%s190] sm:%s192] %v188
    %s194 = scalar_lea.vmem %s5, 64
    %v195 = vld [vmem:[%s194] sm:$0xff]
    %v196 = vld [vmem:[%s9] ss:$0 sm:$0xff]
    %v198 = vshra.s32 %v196, 0
    %v199 = vand.u32 %v198, 255
    %s201 = sor.u32 256, 64
    %202 = vbcast.lane.b32.xlu0 %v199, %s201
    %v203 = vpop.permute.xlu0 %202
    %204 = xla_tuple %v203, %v195, %v15
    %205 = xla_tuple %204
    %vm206 = vcmp.ne.s32.totalorder %v203, 0
    %v207 = vsel %vm206, %v195, %v15
    %208 = xla_tuple %v207
    %s209 = scalar_lea.vmem [#allocation2], 64
    %s211 = ssub.s32 256, 1
    %212 = vst [vmem:[%s209] sm:%s211] %v207
    %s213 = scalar_lea.vmem %s5, 72
    %v214 = vld [vmem:[%s213] sm:$0xff]
    %v215 = vld [vmem:[%s9] ss:$0 sm:$0xff]
    %v217 = vshra.s32 %v215, 0
    %v218 = vand.u32 %v217, 255
    %s220 = sor.u32 256, 72
    %221 = vbcast.lane.b32.xlu0 %v218, %s220
    %v222 = vpop.permute.xlu0 %221
    %223 = xla_tuple %v222, %v214, %v15
    %224 = xla_tuple %223
    %vm225 = vcmp.ne.s32.totalorder %v222, 0
    %v226 = vsel %vm225, %v214, %v15
    %227 = xla_tuple %v226
    %s228 = scalar_lea.vmem [#allocation2], 72
    %s230 = ssub.s32 256, 1
    %231 = vst [vmem:[%s228] sm:%s230] %v226
    %s232 = scalar_lea.vmem %s5, 80
    %v233 = vld [vmem:[%s232] sm:$0xff]
    %v234 = vld [vmem:[%s9] ss:$0 sm:$0xff]
    %v236 = vshra.s32 %v234, 0
    %v237 = vand.u32 %v236, 255
    %s239 = sor.u32 256, 80
    %240 = vbcast.lane.b32.xlu0 %v237, %s239
    %v241 = vpop.permute.xlu0 %240
    %242 = xla_tuple %v241, %v233, %v15
    %243 = xla_tuple %242
    %vm244 = vcmp.ne.s32.totalorder %v241, 0
    %v245 = vsel %vm244, %v233, %v15
    %246 = xla_tuple %v245
    %s247 = scalar_lea.vmem [#allocation2], 80
    %s249 = ssub.s32 256, 1
    %250 = vst [vmem:[%s247] sm:%s249] %v245
    %s251 = scalar_lea.vmem %s5, 88
    %v252 = vld [vmem:[%s251] sm:$0xff]
    %v253 = vld [vmem:[%s9] ss:$0 sm:$0xff]
    %v255 = vshra.s32 %v253, 0
    %v256 = vand.u32 %v255, 255
    %s258 = sor.u32 256, 88
    %259 = vbcast.lane.b32.xlu0 %v256, %s258
    %v260 = vpop.permute.xlu0 %259
    %261 = xla_tuple %v260, %v252, %v15
    %262 = xla_tuple %261
    %vm263 = vcmp.ne.s32.totalorder %v260, 0
    %v264 = vsel %vm263, %v252, %v15
    %265 = xla_tuple %v264
    %s266 = scalar_lea.vmem [#allocation2], 88
    %s268 = ssub.s32 256, 1
    %269 = vst [vmem:[%s266] sm:%s268] %v264
    %s270 = scalar_lea.vmem %s5, 96
    %v271 = vld [vmem:[%s270] sm:$0xff]
    %v272 = vld [vmem:[%s9] ss:$0 sm:$0xff]
    %v274 = vshra.s32 %v272, 0
    %v275 = vand.u32 %v274, 255
    %s277 = sor.u32 256, 96
    %278 = vbcast.lane.b32.xlu0 %v275, %s277
    %v279 = vpop.permute.xlu0 %278
    %280 = xla_tuple %v279, %v271, %v15
    %281 = xla_tuple %280
    %vm282 = vcmp.ne.s32.totalorder %v279, 0
    %v283 = vsel %vm282, %v271, %v15
    %284 = xla_tuple %v283
    %s285 = scalar_lea.vmem [#allocation2], 96
    %s287 = ssub.s32 256, 1
    %288 = vst [vmem:[%s285] sm:%s287] %v283
    %s289 = scalar_lea.vmem %s5, 104
    %v290 = vld [vmem:[%s289] sm:$0xff]
    %v291 = vld [vmem:[%s9] ss:$0 sm:$0xff]
    %v293 = vshra.s32 %v291, 0
    %v294 = vand.u32 %v293, 255
    %s296 = sor.u32 256, 104
    %297 = vbcast.lane.b32.xlu0 %v294, %s296
    %v298 = vpop.permute.xlu0 %297
    %299 = xla_tuple %v298, %v290, %v15
    %300 = xla_tuple %299
    %vm301 = vcmp.ne.s32.totalorder %v298, 0
    %v302 = vsel %vm301, %v290, %v15
    %303 = xla_tuple %v302
    %s304 = scalar_lea.vmem [#allocation2], 104
    %s306 = ssub.s32 256, 1
    %307 = vst [vmem:[%s304] sm:%s306] %v302
    %s308 = scalar_lea.vmem %s5, 112
    %v309 = vld [vmem:[%s308] sm:$0xff]
    %v310 = vld [vmem:[%s9] ss:$0 sm:$0xff]
    %v312 = vshra.s32 %v310, 0
    %v313 = vand.u32 %v312, 255
    %s315 = sor.u32 256, 112
    %316 = vbcast.lane.b32.xlu0 %v313, %s315
    %v317 = vpop.permute.xlu0 %316
    %318 = xla_tuple %v317, %v309, %v15
    %319 = xla_tuple %318
    %vm320 = vcmp.ne.s32.totalorder %v317, 0
    %v321 = vsel %vm320, %v309, %v15
    %322 = xla_tuple %v321
    %s323 = scalar_lea.vmem [#allocation2], 112
    %s325 = ssub.s32 256, 1
    %326 = vst [vmem:[%s323] sm:%s325] %v321
    %s327 = scalar_lea.vmem %s5, 120
    %v328 = vld [vmem:[%s327] sm:$0xff]
    %v329 = vld [vmem:[%s9] ss:$0 sm:$0xff]
    %v331 = vshra.s32 %v329, 0
    %v332 = vand.u32 %v331, 255
    %s334 = sor.u32 256, 120
    %335 = vbcast.lane.b32.xlu0 %v332, %s334
    %v336 = vpop.permute.xlu0 %335
    %337 = xla_tuple %v336, %v328, %v15
    %338 = xla_tuple %337
    %vm339 = vcmp.ne.s32.totalorder %v336, 0
    %v340 = vsel %vm339, %v328, %v15
    %341 = xla_tuple %v340
    %s342 = scalar_lea.vmem [#allocation2], 120
    %s344 = ssub.s32 256, 1
    %345 = vst [vmem:[%s342] sm:%s344] %v340
    %s346 = scalar_lea.vmem %s5, 128
    %v347 = vld [vmem:[%s346] sm:$0xff]
    %v348 = vld [vmem:[%s9] ss:$0 sm:$0xff]
    %v350 = vshra.s32 %v348, 8
    %v351 = vand.u32 %v350, 255
    %353 = vbcast.lane.b32.xlu0 %v351, 256
    %v354 = vpop.permute.xlu0 %353
    %355 = xla_tuple %v354, %v347, %v15
    %356 = xla_tuple %355
    %vm357 = vcmp.ne.s32.totalorder %v354, 0
    %v358 = vsel %vm357, %v347, %v15
    %359 = xla_tuple %v358
    %s360 = scalar_lea.vmem [#allocation2], 128
    %s362 = ssub.s32 256, 1
    %363 = vst [vmem:[%s360] sm:%s362] %v358
    %s364 = scalar_lea.vmem %s5, 136
    %v365 = vld [vmem:[%s364] sm:$0xff]
    %v366 = vld [vmem:[%s9] ss:$0 sm:$0xff]
    %v368 = vshra.s32 %v366, 8
    %v369 = vand.u32 %v368, 255
    %s371 = sor.u32 256, 8
    %372 = vbcast.lane.b32.xlu0 %v369, %s371
    %v373 = vpop.permute.xlu0 %372
    %374 = xla_tuple %v373, %v365, %v15
    %375 = xla_tuple %374
    %vm376 = vcmp.ne.s32.totalorder %v373, 0
    %v377 = vsel %vm376, %v365, %v15
    %378 = xla_tuple %v377
    %s379 = scalar_lea.vmem [#allocation2], 136
    %s381 = ssub.s32 256, 1
    %382 = vst [vmem:[%s379] sm:%s381] %v377
    %s383 = scalar_lea.vmem %s5, 144
    %v384 = vld [vmem:[%s383] sm:$0xff]
    %v385 = vld [vmem:[%s9] ss:$0 sm:$0xff]
    %v387 = vshra.s32 %v385, 8
    %v388 = vand.u32 %v387, 255
    %s390 = sor.u32 256, 16
    %391 = vbcast.lane.b32.xlu0 %v388, %s390
    %v392 = vpop.permute.xlu0 %391
    %393 = xla_tuple %v392, %v384, %v15
    %394 = xla_tuple %393
    %vm395 = vcmp.ne.s32.totalorder %v392, 0
    %v396 = vsel %vm395, %v384, %v15
    %397 = xla_tuple %v396
    %s398 = scalar_lea.vmem [#allocation2], 144
    %s400 = ssub.s32 256, 1
    %401 = vst [vmem:[%s398] sm:%s400] %v396
    %s402 = scalar_lea.vmem %s5, 152
    %v403 = vld [vmem:[%s402] sm:$0xff]
    %v404 = vld [vmem:[%s9] ss:$0 sm:$0xff]
    %v406 = vshra.s32 %v404, 8
    %v407 = vand.u32 %v406, 255
    %s409 = sor.u32 256, 24
    %410 = vbcast.lane.b32.xlu0 %v407, %s409
    %v411 = vpop.permute.xlu0 %410
    %412 = xla_tuple %v411, %v403, %v15
    %413 = xla_tuple %412
    %vm414 = vcmp.ne.s32.totalorder %v411, 0
    %v415 = vsel %vm414, %v403, %v15
    %416 = xla_tuple %v415
    %s417 = scalar_lea.vmem [#allocation2], 152
    %s419 = ssub.s32 256, 1
    %420 = vst [vmem:[%s417] sm:%s419] %v415
    %s421 = scalar_lea.vmem %s5, 160
    %v422 = vld [vmem:[%s421] sm:$0xff]
    %v423 = vld [vmem:[%s9] ss:$0 sm:$0xff]
    %v425 = vshra.s32 %v423, 8
    %v426 = vand.u32 %v425, 255
    %s428 = sor.u32 256, 32
    %429 = vbcast.lane.b32.xlu0 %v426, %s428
    %v430 = vpop.permute.xlu0 %429
    %431 = xla_tuple %v430, %v422, %v15
    %432 = xla_tuple %431
    %vm433 = vcmp.ne.s32.totalorder %v430, 0
    %v434 = vsel %vm433, %v422, %v15
    %435 = xla_tuple %v434
    %s436 = scalar_lea.vmem [#allocation2], 160
    %s438 = ssub.s32 256, 1
    %439 = vst [vmem:[%s436] sm:%s438] %v434
    %s440 = scalar_lea.vmem %s5, 168
    %v441 = vld [vmem:[%s440] sm:$0xff]
    %v442 = vld [vmem:[%s9] ss:$0 sm:$0xff]
    %v444 = vshra.s32 %v442, 8
    %v445 = vand.u32 %v444, 255
    %s447 = sor.u32 256, 40
    %448 = vbcast.lane.b32.xlu0 %v445, %s447
    %v449 = vpop.permute.xlu0 %448
    %450 = xla_tuple %v449, %v441, %v15
    %451 = xla_tuple %450
    %vm452 = vcmp.ne.s32.totalorder %v449, 0
    %v453 = vsel %vm452, %v441, %v15
    %454 = xla_tuple %v453
    %s455 = scalar_lea.vmem [#allocation2], 168
    %s457 = ssub.s32 256, 1
    %458 = vst [vmem:[%s455] sm:%s457] %v453
    %s459 = scalar_lea.vmem %s5, 176
    %v460 = vld [vmem:[%s459] sm:$0xff]
    %v461 = vld [vmem:[%s9] ss:$0 sm:$0xff]
    %v463 = vshra.s32 %v461, 8
    %v464 = vand.u32 %v463, 255
    %s466 = sor.u32 256, 48
    %467 = vbcast.lane.b32.xlu0 %v464, %s466
    %v468 = vpop.permute.xlu0 %467
    %469 = xla_tuple %v468, %v460, %v15
    %470 = xla_tuple %469
    %vm471 = vcmp.ne.s32.totalorder %v468, 0
    %v472 = vsel %vm471, %v460, %v15
    %473 = xla_tuple %v472
    %s474 = scalar_lea.vmem [#allocation2], 176
    %s476 = ssub.s32 256, 1
    %477 = vst [vmem:[%s474] sm:%s476] %v472
    %s478 = scalar_lea.vmem %s5, 184
    %v479 = vld [vmem:[%s478] sm:$0xff]
    %v480 = vld [vmem:[%s9] ss:$0 sm:$0xff]
    %v482 = vshra.s32 %v480, 8
    %v483 = vand.u32 %v482, 255
    %s485 = sor.u32 256, 56
    %486 = vbcast.lane.b32.xlu0 %v483, %s485
    %v487 = vpop.permute.xlu0 %486
    %488 = xla_tuple %v487, %v479, %v15
    %489 = xla_tuple %488
    %vm490 = vcmp.ne.s32.totalorder %v487, 0
    %v491 = vsel %vm490, %v479, %v15
    %492 = xla_tuple %v491
    %s493 = scalar_lea.vmem [#allocation2], 184
    %s495 = ssub.s32 256, 1
    %496 = vst [vmem:[%s493] sm:%s495] %v491
    %s497 = scalar_lea.vmem %s5, 192
    %v498 = vld [vmem:[%s497] sm:$0xff]
    %v499 = vld [vmem:[%s9] ss:$0 sm:$0xff]
    %v501 = vshra.s32 %v499, 8
    %v502 = vand.u32 %v501, 255
    %s504 = sor.u32 256, 64
    %505 = vbcast.lane.b32.xlu0 %v502, %s504
    %v506 = vpop.permute.xlu0 %505
    %507 = xla_tuple %v506, %v498, %v15
    %508 = xla_tuple %507
    %vm509 = vcmp.ne.s32.totalorder %v506, 0
    %v510 = vsel %vm509, %v498, %v15
    %511 = xla_tuple %v510
    %s512 = scalar_lea.vmem [#allocation2], 192
    %s514 = ssub.s32 256, 1
    %515 = vst [vmem:[%s512] sm:%s514] %v510
    %s516 = scalar_lea.vmem %s5, 200
    %v517 = vld [vmem:[%s516] sm:$0xff]
    %v518 = vld [vmem:[%s9] ss:$0 sm:$0xff]
    %v520 = vshra.s32 %v518, 8
    %v521 = vand.u32 %v520, 255
    %s523 = sor.u32 256, 72
    %524 = vbcast.lane.b32.xlu0 %v521, %s523
    %v525 = vpop.permute.xlu0 %524
    %526 = xla_tuple %v525, %v517, %v15
    %527 = xla_tuple %526
    %vm528 = vcmp.ne.s32.totalorder %v525, 0
    %v529 = vsel %vm528, %v517, %v15
    %530 = xla_tuple %v529
    %s531 = scalar_lea.vmem [#allocation2], 200
    %s533 = ssub.s32 256, 1
    %534 = vst [vmem:[%s531] sm:%s533] %v529
    %s535 = scalar_lea.vmem %s5, 208
    %v536 = vld [vmem:[%s535] sm:$0xff]
    %v537 = vld [vmem:[%s9] ss:$0 sm:$0xff]
    %v539 = vshra.s32 %v537, 8
    %v540 = vand.u32 %v539, 255
    %s542 = sor.u32 256, 80
    %543 = vbcast.lane.b32.xlu0 %v540, %s542
    %v544 = vpop.permute.xlu0 %543
    %545 = xla_tuple %v544, %v536, %v15
    %546 = xla_tuple %545
    %vm547 = vcmp.ne.s32.totalorder %v544, 0
    %v548 = vsel %vm547, %v536, %v15
    %549 = xla_tuple %v548
    %s550 = scalar_lea.vmem [#allocation2], 208
    %s552 = ssub.s32 256, 1
    %553 = vst [vmem:[%s550] sm:%s552] %v548
    %s554 = scalar_lea.vmem %s5, 216
    %v555 = vld [vmem:[%s554] sm:$0xff]
    %v556 = vld [vmem:[%s9] ss:$0 sm:$0xff]
    %v558 = vshra.s32 %v556, 8
    %v559 = vand.u32 %v558, 255
    %s561 = sor.u32 256, 88
    %562 = vbcast.lane.b32.xlu0 %v559, %s561
    %v563 = vpop.permute.xlu0 %562
    %564 = xla_tuple %v563, %v555, %v15
    %565 = xla_tuple %564
    %vm566 = vcmp.ne.s32.totalorder %v563, 0
    %v567 = vsel %vm566, %v555, %v15
    %568 = xla_tuple %v567
    %s569 = scalar_lea.vmem [#allocation2], 216
    %s571 = ssub.s32 256, 1
    %572 = vst [vmem:[%s569] sm:%s571] %v567
    %s573 = scalar_lea.vmem %s5, 224
    %v574 = vld [vmem:[%s573] sm:$0xff]
    %v575 = vld [vmem:[%s9] ss:$0 sm:$0xff]
    %v577 = vshra.s32 %v575, 8
    %v578 = vand.u32 %v577, 255
    %s580 = sor.u32 256, 96
    %581 = vbcast.lane.b32.xlu0 %v578, %s580
    %v582 = vpop.permute.xlu0 %581
    %583 = xla_tuple %v582, %v574, %v15
    %584 = xla_tuple %583
    %vm585 = vcmp.ne.s32.totalorder %v582, 0
    %v586 = vsel %vm585, %v574, %v15
    %587 = xla_tuple %v586
    %s588 = scalar_lea.vmem [#allocation2], 224
    %s590 = ssub.s32 256, 1
    %591 = vst [vmem:[%s588] sm:%s590] %v586
    %s592 = scalar_lea.vmem %s5, 232
    %v593 = vld [vmem:[%s592] sm:$0xff]
    %v594 = vld [vmem:[%s9] ss:$0 sm:$0xff]
    %v596 = vshra.s32 %v594, 8
    %v597 = vand.u32 %v596, 255
    %s599 = sor.u32 256, 104
    %600 = vbcast.lane.b32.xlu0 %v597, %s599
    %v601 = vpop.permute.xlu0 %600
    %602 = xla_tuple %v601, %v593, %v15
    %603 = xla_tuple %602
    %vm604 = vcmp.ne.s32.totalorder %v601, 0
    %v605 = vsel %vm604, %v593, %v15
    %606 = xla_tuple %v605
    %s607 = scalar_lea.vmem [#allocation2], 232
    %s609 = ssub.s32 256, 1
    %610 = vst [vmem:[%s607] sm:%s609] %v605
    %s611 = scalar_lea.vmem %s5, 240
    %v612 = vld [vmem:[%s611] sm:$0xff]
    %v613 = vld [vmem:[%s9] ss:$0 sm:$0xff]
    %v615 = vshra.s32 %v613, 8
    %v616 = vand.u32 %v615, 255
    %s618 = sor.u32 256, 112
    %619 = vbcast.lane.b32.xlu0 %v616, %s618
    %v620 = vpop.permute.xlu0 %619
    %621 = xla_tuple %v620, %v612, %v15
    %622 = xla_tuple %621
    %vm623 = vcmp.ne.s32.totalorder %v620, 0
    %v624 = vsel %vm623, %v612, %v15
    %625 = xla_tuple %v624
    %s626 = scalar_lea.vmem [#allocation2], 240
    %s628 = ssub.s32 256, 1
    %629 = vst [vmem:[%s626] sm:%s628] %v624
    %s630 = scalar_lea.vmem %s5, 248
    %v631 = vld [vmem:[%s630] sm:$0xff]
    %v632 = vld [vmem:[%s9] ss:$0 sm:$0xff]
    %v634 = vshra.s32 %v632, 8
    %v635 = vand.u32 %v634, 255
    %s637 = sor.u32 256, 120
    %638 = vbcast.lane.b32.xlu0 %v635, %s637
    %v639 = vpop.permute.xlu0 %638
    %640 = xla_tuple %v639, %v631, %v15
    %641 = xla_tuple %640
    %vm642 = vcmp.ne.s32.totalorder %v639, 0
    %v643 = vsel %vm642, %v631, %v15
    %644 = xla_tuple %v643
    %s645 = scalar_lea.vmem [#allocation2], 248
    %s647 = ssub.s32 256, 1
    %648 = vst [vmem:[%s645] sm:%s647] %v643
    %s649 = scalar_lea.vmem %s5, 256
    %v650 = vld [vmem:[%s649] sm:$0xff]
    %v651 = vld [vmem:[%s9] ss:$0 sm:$0xff]
    %v653 = vshra.s32 %v651, 16
    %v654 = vand.u32 %v653, 255
    %656 = vbcast.lane.b32.xlu0 %v654, 256
    %v657 = vpop.permute.xlu0 %656
    %658 = xla_tuple %v657, %v650, %v15
    %659 = xla_tuple %658
    %vm660 = vcmp.ne.s32.totalorder %v657, 0
    %v661 = vsel %vm660, %v650, %v15
    %662 = xla_tuple %v661
    %s663 = scalar_lea.vmem [#allocation2], 256
    %s665 = ssub.s32 256, 1
    %666 = vst [vmem:[%s663] sm:%s665] %v661
    %s667 = scalar_lea.vmem %s5, 264
    %v668 = vld [vmem:[%s667] sm:$0xff]
    %v669 = vld [vmem:[%s9] ss:$0 sm:$0xff]
    %v671 = vshra.s32 %v669, 16
    %v672 = vand.u32 %v671, 255
    %s674 = sor.u32 256, 8
    %675 = vbcast.lane.b32.xlu0 %v672, %s674
    %v676 = vpop.permute.xlu0 %675
    %677 = xla_tuple %v676, %v668, %v15
    %678 = xla_tuple %677
    %vm679 = vcmp.ne.s32.totalorder %v676, 0
    %v680 = vsel %vm679, %v668, %v15
    %681 = xla_tuple %v680
    %s682 = scalar_lea.vmem [#allocation2], 264
    %s684 = ssub.s32 256, 1
    %685 = vst [vmem:[%s682] sm:%s684] %v680
    %s686 = scalar_lea.vmem %s5, 272
    %v687 = vld [vmem:[%s686] sm:$0xff]
    %v688 = vld [vmem:[%s9] ss:$0 sm:$0xff]
    %v690 = vshra.s32 %v688, 16
    %v691 = vand.u32 %v690, 255
    %s693 = sor.u32 256, 16
    %694 = vbcast.lane.b32.xlu0 %v691, %s693
    %v695 = vpop.permute.xlu0 %694
    %696 = xla_tuple %v695, %v687, %v15
    %697 = xla_tuple %696
    %vm698 = vcmp.ne.s32.totalorder %v695, 0
    %v699 = vsel %vm698, %v687, %v15
    %700 = xla_tuple %v699
    %s701 = scalar_lea.vmem [#allocation2], 272
    %s703 = ssub.s32 256, 1
    %704 = vst [vmem:[%s701] sm:%s703] %v699
    %s705 = scalar_lea.vmem %s5, 280
    %v706 = vld [vmem:[%s705] sm:$0xff]
    %v707 = vld [vmem:[%s9] ss:$0 sm:$0xff]
    %v709 = vshra.s32 %v707, 16
    %v710 = vand.u32 %v709, 255
    %s712 = sor.u32 256, 24
    %713 = vbcast.lane.b32.xlu0 %v710, %s712
    %v714 = vpop.permute.xlu0 %713
    %715 = xla_tuple %v714, %v706, %v15
    %716 = xla_tuple %715
    %vm717 = vcmp.ne.s32.totalorder %v714, 0
    %v718 = vsel %vm717, %v706, %v15
    %719 = xla_tuple %v718
    %s720 = scalar_lea.vmem [#allocation2], 280
    %s722 = ssub.s32 256, 1
    %723 = vst [vmem:[%s720] sm:%s722] %v718
    %s724 = scalar_lea.vmem %s5, 288
    %v725 = vld [vmem:[%s724] sm:$0xff]
    %v726 = vld [vmem:[%s9] ss:$0 sm:$0xff]
    %v728 = vshra.s32 %v726, 16
    %v729 = vand.u32 %v728, 255
    %s731 = sor.u32 256, 32
    %732 = vbcast.lane.b32.xlu0 %v729, %s731
    %v733 = vpop.permute.xlu0 %732
    %734 = xla_tuple %v733, %v725, %v15
    %735 = xla_tuple %734
    %vm736 = vcmp.ne.s32.totalorder %v733, 0
    %v737 = vsel %vm736, %v725, %v15
    %738 = xla_tuple %v737
    %s739 = scalar_lea.vmem [#allocation2], 288
    %s741 = ssub.s32 256, 1
    %742 = vst [vmem:[%s739] sm:%s741] %v737
    %s743 = scalar_lea.vmem %s5, 296
    %v744 = vld [vmem:[%s743] sm:$0xff]
    %v745 = vld [vmem:[%s9] ss:$0 sm:$0xff]
    %v747 = vshra.s32 %v745, 16
    %v748 = vand.u32 %v747, 255
    %s750 = sor.u32 256, 40
    %751 = vbcast.lane.b32.xlu0 %v748, %s750
    %v752 = vpop.permute.xlu0 %751
    %753 = xla_tuple %v752, %v744, %v15
    %754 = xla_tuple %753
    %vm755 = vcmp.ne.s32.totalorder %v752, 0
    %v756 = vsel %vm755, %v744, %v15
    %757 = xla_tuple %v756
    %s758 = scalar_lea.vmem [#allocation2], 296
    %s760 = ssub.s32 256, 1
    %761 = vst [vmem:[%s758] sm:%s760] %v756
    %s762 = scalar_lea.vmem %s5, 304
    %v763 = vld [vmem:[%s762] sm:$0xff]
    %v764 = vld [vmem:[%s9] ss:$0 sm:$0xff]
    %v766 = vshra.s32 %v764, 16
    %v767 = vand.u32 %v766, 255
    %s769 = sor.u32 256, 48
    %770 = vbcast.lane.b32.xlu0 %v767, %s769
    %v771 = vpop.permute.xlu0 %770
    %772 = xla_tuple %v771, %v763, %v15
    %773 = xla_tuple %772
    %vm774 = vcmp.ne.s32.totalorder %v771, 0
    %v775 = vsel %vm774, %v763, %v15
    %776 = xla_tuple %v775
    %s777 = scalar_lea.vmem [#allocation2], 304
    %s779 = ssub.s32 256, 1
    %780 = vst [vmem:[%s777] sm:%s779] %v775
    %s781 = scalar_lea.vmem %s5, 312
    %v782 = vld [vmem:[%s781] sm:$0xff]
    %v783 = vld [vmem:[%s9] ss:$0 sm:$0xff]
    %v785 = vshra.s32 %v783, 16
    %v786 = vand.u32 %v785, 255
    %s788 = sor.u32 256, 56
    %789 = vbcast.lane.b32.xlu0 %v786, %s788
    %v790 = vpop.permute.xlu0 %789
    %791 = xla_tuple %v790, %v782, %v15
    %792 = xla_tuple %791
    %vm793 = vcmp.ne.s32.totalorder %v790, 0
    %v794 = vsel %vm793, %v782, %v15
    %795 = xla_tuple %v794
    %s796 = scalar_lea.vmem [#allocation2], 312
    %s798 = ssub.s32 256, 1
    %799 = vst [vmem:[%s796] sm:%s798] %v794
    %s800 = scalar_lea.vmem %s5, 320
    %v801 = vld [vmem:[%s800] sm:$0xff]
    %v802 = vld [vmem:[%s9] ss:$0 sm:$0xff]
    %v804 = vshra.s32 %v802, 16
    %v805 = vand.u32 %v804, 255
    %s807 = sor.u32 256, 64
    %808 = vbcast.lane.b32.xlu0 %v805, %s807
    %v809 = vpop.permute.xlu0 %808
    %810 = xla_tuple %v809, %v801, %v15
    %811 = xla_tuple %810
    %vm812 = vcmp.ne.s32.totalorder %v809, 0
    %v813 = vsel %vm812, %v801, %v15
    %814 = xla_tuple %v813
    %s815 = scalar_lea.vmem [#allocation2], 320
    %s817 = ssub.s32 256, 1
    %818 = vst [vmem:[%s815] sm:%s817] %v813
    %s819 = scalar_lea.vmem %s5, 328
    %v820 = vld [vmem:[%s819] sm:$0xff]
    %v821 = vld [vmem:[%s9] ss:$0 sm:$0xff]
    %v823 = vshra.s32 %v821, 16
    %v824 = vand.u32 %v823, 255
    %s826 = sor.u32 256, 72
    %827 = vbcast.lane.b32.xlu0 %v824, %s826
    %v828 = vpop.permute.xlu0 %827
    %829 = xla_tuple %v828, %v820, %v15
    %830 = xla_tuple %829
    %vm831 = vcmp.ne.s32.totalorder %v828, 0
    %v832 = vsel %vm831, %v820, %v15
    %833 = xla_tuple %v832
    %s834 = scalar_lea.vmem [#allocation2], 328
    %s836 = ssub.s32 256, 1
    %837 = vst [vmem:[%s834] sm:%s836] %v832
    %s838 = scalar_lea.vmem %s5, 336
    %v839 = vld [vmem:[%s838] sm:$0xff]
    %v840 = vld [vmem:[%s9] ss:$0 sm:$0xff]
    %v842 = vshra.s32 %v840, 16
    %v843 = vand.u32 %v842, 255
    %s845 = sor.u32 256, 80
    %846 = vbcast.lane.b32.xlu0 %v843, %s845
    %v847 = vpop.permute.xlu0 %846
    %848 = xla_tuple %v847, %v839, %v15
    %849 = xla_tuple %848
    %vm850 = vcmp.ne.s32.totalorder %v847, 0
    %v851 = vsel %vm850, %v839, %v15
    %852 = xla_tuple %v851
    %s853 = scalar_lea.vmem [#allocation2], 336
    %s855 = ssub.s32 256, 1
    %856 = vst [vmem:[%s853] sm:%s855] %v851
    %s857 = scalar_lea.vmem %s5, 344
    %v858 = vld [vmem:[%s857] sm:$0xff]
    %v859 = vld [vmem:[%s9] ss:$0 sm:$0xff]
    %v861 = vshra.s32 %v859, 16
    %v862 = vand.u32 %v861, 255
    %s864 = sor.u32 256, 88
    %865 = vbcast.lane.b32.xlu0 %v862, %s864
    %v866 = vpop.permute.xlu0 %865
    %867 = xla_tuple %v866, %v858, %v15
    %868 = xla_tuple %867
    %vm869 = vcmp.ne.s32.totalorder %v866, 0
    %v870 = vsel %vm869, %v858, %v15
    %871 = xla_tuple %v870
    %s872 = scalar_lea.vmem [#allocation2], 344
    %s874 = ssub.s32 256, 1
    %875 = vst [vmem:[%s872] sm:%s874] %v870
    %s876 = scalar_lea.vmem %s5, 352
    %v877 = vld [vmem:[%s876] sm:$0xff]
    %v878 = vld [vmem:[%s9] ss:$0 sm:$0xff]
    %v880 = vshra.s32 %v878, 16
    %v881 = vand.u32 %v880, 255
    %s883 = sor.u32 256, 96
    %884 = vbcast.lane.b32.xlu0 %v881, %s883
    %v885 = vpop.permute.xlu0 %884
    %886 = xla_tuple %v885, %v877, %v15
    %887 = xla_tuple %886
    %vm888 = vcmp.ne.s32.totalorder %v885, 0
    %v889 = vsel %vm888, %v877, %v15
    %890 = xla_tuple %v889
    %s891 = scalar_lea.vmem [#allocation2], 352
    %s893 = ssub.s32 256, 1
    %894 = vst [vmem:[%s891] sm:%s893] %v889
    %s895 = scalar_lea.vmem %s5, 360
    %v896 = vld [vmem:[%s895] sm:$0xff]
    %v897 = vld [vmem:[%s9] ss:$0 sm:$0xff]
    %v899 = vshra.s32 %v897, 16
    %v900 = vand.u32 %v899, 255
    %s902 = sor.u32 256, 104
    %903 = vbcast.lane.b32.xlu0 %v900, %s902
    %v904 = vpop.permute.xlu0 %903
    %905 = xla_tuple %v904, %v896, %v15
    %906 = xla_tuple %905
    %vm907 = vcmp.ne.s32.totalorder %v904, 0
    %v908 = vsel %vm907, %v896, %v15
    %909 = xla_tuple %v908
    %s910 = scalar_lea.vmem [#allocation2], 360
    %s912 = ssub.s32 256, 1
    %913 = vst [vmem:[%s910] sm:%s912] %v908
    %s914 = scalar_lea.vmem %s5, 368
    %v915 = vld [vmem:[%s914] sm:$0xff]
    %v916 = vld [vmem:[%s9] ss:$0 sm:$0xff]
    %v918 = vshra.s32 %v916, 16
    %v919 = vand.u32 %v918, 255
    %s921 = sor.u32 256, 112
    %922 = vbcast.lane.b32.xlu0 %v919, %s921
    %v923 = vpop.permute.xlu0 %922
    %924 = xla_tuple %v923, %v915, %v15
    %925 = xla_tuple %924
    %vm926 = vcmp.ne.s32.totalorder %v923, 0
    %v927 = vsel %vm926, %v915, %v15
    %928 = xla_tuple %v927
    %s929 = scalar_lea.vmem [#allocation2], 368
    %s931 = ssub.s32 256, 1
    %932 = vst [vmem:[%s929] sm:%s931] %v927
    %s933 = scalar_lea.vmem %s5, 376
    %v934 = vld [vmem:[%s933] sm:$0xff]
    %v935 = vld [vmem:[%s9] ss:$0 sm:$0xff]
    %v937 = vshra.s32 %v935, 16
    %v938 = vand.u32 %v937, 255
    %s940 = sor.u32 256, 120
    %941 = vbcast.lane.b32.xlu0 %v938, %s940
    %v942 = vpop.permute.xlu0 %941
    %943 = xla_tuple %v942, %v934, %v15
    %944 = xla_tuple %943
    %vm945 = vcmp.ne.s32.totalorder %v942, 0
    %v946 = vsel %vm945, %v934, %v15
    %947 = xla_tuple %v946
    %s948 = scalar_lea.vmem [#allocation2], 376
    %s950 = ssub.s32 256, 1
    %951 = vst [vmem:[%s948] sm:%s950] %v946
    %v952 = vld [vmem:[%s4] sm:$0xff]
    %v953 = vld [vmem:[%s9] ss:$0 sm:$0xff]
    %v955 = vshra.s32 %v953, 0
    %v956 = vand.u32 %v955, 255
    %958 = vbcast.lane.b32.xlu0 %v956, 256
    %v959 = vpop.permute.xlu0 %958
    %960 = xla_tuple %v959, %v952, %v16
    %961 = xla_tuple %960
    %vm962 = vcmp.ne.s32.totalorder %v959, 0
    %v963 = vsel %vm962, %v952, %v16
    %964 = xla_tuple %v963
    %s966 = ssub.s32 256, 1
    %967 = vst [vmem:[#allocation3] sm:%s966] %v963
    %s968 = scalar_lea.vmem %s4, 8
    %v969 = vld [vmem:[%s968] sm:$0xff]
    %v970 = vld [vmem:[%s9] ss:$0 sm:$0xff]
    %v972 = vshra.s32 %v970, 0
    %v973 = vand.u32 %v972, 255
    %s975 = sor.u32 256, 8
    %976 = vbcast.lane.b32.xlu0 %v973, %s975
    %v977 = vpop.permute.xlu0 %976
    %978 = xla_tuple %v977, %v969, %v16
    %979 = xla_tuple %978
    %vm980 = vcmp.ne.s32.totalorder %v977, 0
    %v981 = vsel %vm980, %v969, %v16
    %982 = xla_tuple %v981
    %s983 = scalar_lea.vmem [#allocation3], 8
    %s985 = ssub.s32 256, 1
    %986 = vst [vmem:[%s983] sm:%s985] %v981
    %s987 = scalar_lea.vmem %s4, 16
    %v988 = vld [vmem:[%s987] sm:$0xff]
    %v989 = vld [vmem:[%s9] ss:$0 sm:$0xff]
    %v991 = vshra.s32 %v989, 0
    %v992 = vand.u32 %v991, 255
    %s994 = sor.u32 256, 16
    %995 = vbcast.lane.b32.xlu0 %v992, %s994
    %v996 = vpop.permute.xlu0 %995
    %997 = xla_tuple %v996, %v988, %v16
    %998 = xla_tuple %997
    %vm999 = vcmp.ne.s32.totalorder %v996, 0
    %v1000 = vsel %vm999, %v988, %v16
    %1001 = xla_tuple %v1000
    %s1002 = scalar_lea.vmem [#allocation3], 16
    %s1004 = ssub.s32 256, 1
    %1005 = vst [vmem:[%s1002] sm:%s1004] %v1000
    %s1006 = scalar_lea.vmem %s4, 24
    %v1007 = vld [vmem:[%s1006] sm:$0xff]
    %v1008 = vld [vmem:[%s9] ss:$0 sm:$0xff]
    %v1010 = vshra.s32 %v1008, 0
    %v1011 = vand.u32 %v1010, 255
    %s1013 = sor.u32 256, 24
    %1014 = vbcast.lane.b32.xlu0 %v1011, %s1013
    %v1015 = vpop.permute.xlu0 %1014
    %1016 = xla_tuple %v1015, %v1007, %v16
    %1017 = xla_tuple %1016
    %vm1018 = vcmp.ne.s32.totalorder %v1015, 0
    %v1019 = vsel %vm1018, %v1007, %v16
    %1020 = xla_tuple %v1019
    %s1021 = scalar_lea.vmem [#allocation3], 24
    %s1023 = ssub.s32 256, 1
    %1024 = vst [vmem:[%s1021] sm:%s1023] %v1019
    %s1025 = scalar_lea.vmem %s4, 32
    %v1026 = vld [vmem:[%s1025] sm:$0xff]
    %v1027 = vld [vmem:[%s9] ss:$0 sm:$0xff]
    %v1029 = vshra.s32 %v1027, 0
    %v1030 = vand.u32 %v1029, 255
    %s1032 = sor.u32 256, 32
    %1033 = vbcast.lane.b32.xlu0 %v1030, %s1032
    %v1034 = vpop.permute.xlu0 %1033
    %1035 = xla_tuple %v1034, %v1026, %v16
    %1036 = xla_tuple %1035
    %vm1037 = vcmp.ne.s32.totalorder %v1034, 0
    %v1038 = vsel %vm1037, %v1026, %v16
    %1039 = xla_tuple %v1038
    %s1040 = scalar_lea.vmem [#allocation3], 32
    %s1042 = ssub.s32 256, 1
    %1043 = vst [vmem:[%s1040] sm:%s1042] %v1038
    %s1044 = scalar_lea.vmem %s4, 40
    %v1045 = vld [vmem:[%s1044] sm:$0xff]
    %v1046 = vld [vmem:[%s9] ss:$0 sm:$0xff]
    %v1048 = vshra.s32 %v1046, 0
    %v1049 = vand.u32 %v1048, 255
    %s1051 = sor.u32 256, 40
    %1052 = vbcast.lane.b32.xlu0 %v1049, %s1051
    %v1053 = vpop.permute.xlu0 %1052
    %1054 = xla_tuple %v1053, %v1045, %v16
    %1055 = xla_tuple %1054
    %vm1056 = vcmp.ne.s32.totalorder %v1053, 0
    %v1057 = vsel %vm1056, %v1045, %v16
    %1058 = xla_tuple %v1057
    %s1059 = scalar_lea.vmem [#allocation3], 40
    %s1061 = ssub.s32 256, 1
    %1062 = vst [vmem:[%s1059] sm:%s1061] %v1057
    %s1063 = scalar_lea.vmem %s4, 48
    %v1064 = vld [vmem:[%s1063] sm:$0xff]
    %v1065 = vld [vmem:[%s9] ss:$0 sm:$0xff]
    %v1067 = vshra.s32 %v1065, 0
    %v1068 = vand.u32 %v1067, 255
    %s1070 = sor.u32 256, 48
    %1071 = vbcast.lane.b32.xlu0 %v1068, %s1070
    %v1072 = vpop.permute.xlu0 %1071
    %1073 = xla_tuple %v1072, %v1064, %v16
    %1074 = xla_tuple %1073
    %vm1075 = vcmp.ne.s32.totalorder %v1072, 0
    %v1076 = vsel %vm1075, %v1064, %v16
    %1077 = xla_tuple %v1076
    %s1078 = scalar_lea.vmem [#allocation3], 48
    %s1080 = ssub.s32 256, 1
    %1081 = vst [vmem:[%s1078] sm:%s1080] %v1076
    %s1082 = scalar_lea.vmem %s4, 56
    %v1083 = vld [vmem:[%s1082] sm:$0xff]
    %v1084 = vld [vmem:[%s9] ss:$0 sm:$0xff]
    %v1086 = vshra.s32 %v1084, 0
    %v1087 = vand.u32 %v1086, 255
    %s1089 = sor.u32 256, 56
    %1090 = vbcast.lane.b32.xlu0 %v1087, %s1089
    %v1091 = vpop.permute.xlu0 %1090
    %1092 = xla_tuple %v1091, %v1083, %v16
    %1093 = xla_tuple %1092
    %vm1094 = vcmp.ne.s32.totalorder %v1091, 0
    %v1095 = vsel %vm1094, %v1083, %v16
    %1096 = xla_tuple %v1095
    %s1097 = scalar_lea.vmem [#allocation3], 56
    %s1099 = ssub.s32 256, 1
    %1100 = vst [vmem:[%s1097] sm:%s1099] %v1095
    %s1101 = scalar_lea.vmem %s4, 64
    %v1102 = vld [vmem:[%s1101] sm:$0xff]
    %v1103 = vld [vmem:[%s9] ss:$0 sm:$0xff]
    %v1105 = vshra.s32 %v1103, 0
    %v1106 = vand.u32 %v1105, 255
    %s1108 = sor.u32 256, 64
    %1109 = vbcast.lane.b32.xlu0 %v1106, %s1108
    %v1110 = vpop.permute.xlu0 %1109
    %1111 = xla_tuple %v1110, %v1102, %v16
    %1112 = xla_tuple %1111
    %vm1113 = vcmp.ne.s32.totalorder %v1110, 0
    %v1114 = vsel %vm1113, %v1102, %v16
    %1115 = xla_tuple %v1114
    %s1116 = scalar_lea.vmem [#allocation3], 64
    %s1118 = ssub.s32 256, 1
    %1119 = vst [vmem:[%s1116] sm:%s1118] %v1114
    %s1120 = scalar_lea.vmem %s4, 72
    %v1121 = vld [vmem:[%s1120] sm:$0xff]
    %v1122 = vld [vmem:[%s9] ss:$0 sm:$0xff]
    %v1124 = vshra.s32 %v1122, 0
    %v1125 = vand.u32 %v1124, 255
    %s1127 = sor.u32 256, 72
    %1128 = vbcast.lane.b32.xlu0 %v1125, %s1127
    %v1129 = vpop.permute.xlu0 %1128
    %1130 = xla_tuple %v1129, %v1121, %v16
    %1131 = xla_tuple %1130
    %vm1132 = vcmp.ne.s32.totalorder %v1129, 0
    %v1133 = vsel %vm1132, %v1121, %v16
    %1134 = xla_tuple %v1133
    %s1135 = scalar_lea.vmem [#allocation3], 72
    %s1137 = ssub.s32 256, 1
    %1138 = vst [vmem:[%s1135] sm:%s1137] %v1133
    %s1139 = scalar_lea.vmem %s4, 80
    %v1140 = vld [vmem:[%s1139] sm:$0xff]
    %v1141 = vld [vmem:[%s9] ss:$0 sm:$0xff]
    %v1143 = vshra.s32 %v1141, 0
    %v1144 = vand.u32 %v1143, 255
    %s1146 = sor.u32 256, 80
    %1147 = vbcast.lane.b32.xlu0 %v1144, %s1146
    %v1148 = vpop.permute.xlu0 %1147
    %1149 = xla_tuple %v1148, %v1140, %v16
    %1150 = xla_tuple %1149
    %vm1151 = vcmp.ne.s32.totalorder %v1148, 0
    %v1152 = vsel %vm1151, %v1140, %v16
    %1153 = xla_tuple %v1152
    %s1154 = scalar_lea.vmem [#allocation3], 80
    %s1156 = ssub.s32 256, 1
    %1157 = vst [vmem:[%s1154] sm:%s1156] %v1152
    %s1158 = scalar_lea.vmem %s4, 88
    %v1159 = vld [vmem:[%s1158] sm:$0xff]
    %v1160 = vld [vmem:[%s9] ss:$0 sm:$0xff]
    %v1162 = vshra.s32 %v1160, 0
    %v1163 = vand.u32 %v1162, 255
    %s1165 = sor.u32 256, 88
    %1166 = vbcast.lane.b32.xlu0 %v1163, %s1165
    %v1167 = vpop.permute.xlu0 %1166
    %1168 = xla_tuple %v1167, %v1159, %v16
    %1169 = xla_tuple %1168
    %vm1170 = vcmp.ne.s32.totalorder %v1167, 0
    %v1171 = vsel %vm1170, %v1159, %v16
    %1172 = xla_tuple %v1171
    %s1173 = scalar_lea.vmem [#allocation3], 88
    %s1175 = ssub.s32 256, 1
    %1176 = vst [vmem:[%s1173] sm:%s1175] %v1171
    %s1177 = scalar_lea.vmem %s4, 96
    %v1178 = vld [vmem:[%s1177] sm:$0xff]
    %v1179 = vld [vmem:[%s9] ss:$0 sm:$0xff]
    %v1181 = vshra.s32 %v1179, 0
    %v1182 = vand.u32 %v1181, 255
    %s1184 = sor.u32 256, 96
    %1185 = vbcast.lane.b32.xlu0 %v1182, %s1184
    %v1186 = vpop.permute.xlu0 %1185
    %1187 = xla_tuple %v1186, %v1178, %v16
    %1188 = xla_tuple %1187
    %vm1189 = vcmp.ne.s32.totalorder %v1186, 0
    %v1190 = vsel %vm1189, %v1178, %v16
    %1191 = xla_tuple %v1190
    %s1192 = scalar_lea.vmem [#allocation3], 96
    %s1194 = ssub.s32 256, 1
    %1195 = vst [vmem:[%s1192] sm:%s1194] %v1190
    %s1196 = scalar_lea.vmem %s4, 104
    %v1197 = vld [vmem:[%s1196] sm:$0xff]
    %v1198 = vld [vmem:[%s9] ss:$0 sm:$0xff]
    %v1200 = vshra.s32 %v1198, 0
    %v1201 = vand.u32 %v1200, 255
    %s1203 = sor.u32 256, 104
    %1204 = vbcast.lane.b32.xlu0 %v1201, %s1203
    %v1205 = vpop.permute.xlu0 %1204
    %1206 = xla_tuple %v1205, %v1197, %v16
    %1207 = xla_tuple %1206
    %vm1208 = vcmp.ne.s32.totalorder %v1205, 0
    %v1209 = vsel %vm1208, %v1197, %v16
    %1210 = xla_tuple %v1209
    %s1211 = scalar_lea.vmem [#allocation3], 104
    %s1213 = ssub.s32 256, 1
    %1214 = vst [vmem:[%s1211] sm:%s1213] %v1209
    %s1215 = scalar_lea.vmem %s4, 112
    %v1216 = vld [vmem:[%s1215] sm:$0xff]
    %v1217 = vld [vmem:[%s9] ss:$0 sm:$0xff]
    %v1219 = vshra.s32 %v1217, 0
    %v1220 = vand.u32 %v1219, 255
    %s1222 = sor.u32 256, 112
    %1223 = vbcast.lane.b32.xlu0 %v1220, %s1222
    %v1224 = vpop.permute.xlu0 %1223
    %1225 = xla_tuple %v1224, %v1216, %v16
    %1226 = xla_tuple %1225
    %vm1227 = vcmp.ne.s32.totalorder %v1224, 0
    %v1228 = vsel %vm1227, %v1216, %v16
    %1229 = xla_tuple %v1228
    %s1230 = scalar_lea.vmem [#allocation3], 112
    %s1232 = ssub.s32 256, 1
    %1233 = vst [vmem:[%s1230] sm:%s1232] %v1228
    %s1234 = scalar_lea.vmem %s4, 120
    %v1235 = vld [vmem:[%s1234] sm:$0xff]
    %v1236 = vld [vmem:[%s9] ss:$0 sm:$0xff]
    %v1238 = vshra.s32 %v1236, 0
    %v1239 = vand.u32 %v1238, 255
    %s1241 = sor.u32 256, 120
    %1242 = vbcast.lane.b32.xlu0 %v1239, %s1241
    %v1243 = vpop.permute.xlu0 %1242
    %1244 = xla_tuple %v1243, %v1235, %v16
    %1245 = xla_tuple %1244
    %vm1246 = vcmp.ne.s32.totalorder %v1243, 0
    %v1247 = vsel %vm1246, %v1235, %v16
    %1248 = xla_tuple %v1247
    %s1249 = scalar_lea.vmem [#allocation3], 120
    %s1251 = ssub.s32 256, 1
    %1252 = vst [vmem:[%s1249] sm:%s1251] %v1247
    %s1253 = scalar_lea.vmem %s4, 128
    %v1254 = vld [vmem:[%s1253] sm:$0xff]
    %v1255 = vld [vmem:[%s9] ss:$0 sm:$0xff]
    %v1257 = vshra.s32 %v1255, 8
    %v1258 = vand.u32 %v1257, 255
    %1260 = vbcast.lane.b32.xlu0 %v1258, 256
    %v1261 = vpop.permute.xlu0 %1260
    %1262 = xla_tuple %v1261, %v1254, %v16
    %1263 = xla_tuple %1262
    %vm1264 = vcmp.ne.s32.totalorder %v1261, 0
    %v1265 = vsel %vm1264, %v1254, %v16
    %1266 = xla_tuple %v1265
    %s1267 = scalar_lea.vmem [#allocation3], 128
    %s1269 = ssub.s32 256, 1
    %1270 = vst [vmem:[%s1267] sm:%s1269] %v1265
    %s1271 = scalar_lea.vmem %s4, 136
    %v1272 = vld [vmem:[%s1271] sm:$0xff]
    %v1273 = vld [vmem:[%s9] ss:$0 sm:$0xff]
    %v1275 = vshra.s32 %v1273, 8
    %v1276 = vand.u32 %v1275, 255
    %s1278 = sor.u32 256, 8
    %1279 = vbcast.lane.b32.xlu0 %v1276, %s1278
    %v1280 = vpop.permute.xlu0 %1279
    %1281 = xla_tuple %v1280, %v1272, %v16
    %1282 = xla_tuple %1281
    %vm1283 = vcmp.ne.s32.totalorder %v1280, 0
    %v1284 = vsel %vm1283, %v1272, %v16
    %1285 = xla_tuple %v1284
    %s1286 = scalar_lea.vmem [#allocation3], 136
    %s1288 = ssub.s32 256, 1
    %1289 = vst [vmem:[%s1286] sm:%s1288] %v1284
    %s1290 = scalar_lea.vmem %s4, 144
    %v1291 = vld [vmem:[%s1290] sm:$0xff]
    %v1292 = vld [vmem:[%s9] ss:$0 sm:$0xff]
    %v1294 = vshra.s32 %v1292, 8
    %v1295 = vand.u32 %v1294, 255
    %s1297 = sor.u32 256, 16
    %1298 = vbcast.lane.b32.xlu0 %v1295, %s1297
    %v1299 = vpop.permute.xlu0 %1298
    %1300 = xla_tuple %v1299, %v1291, %v16
    %1301 = xla_tuple %1300
    %vm1302 = vcmp.ne.s32.totalorder %v1299, 0
    %v1303 = vsel %vm1302, %v1291, %v16
    %1304 = xla_tuple %v1303
    %s1305 = scalar_lea.vmem [#allocation3], 144
    %s1307 = ssub.s32 256, 1
    %1308 = vst [vmem:[%s1305] sm:%s1307] %v1303
    %s1309 = scalar_lea.vmem %s4, 152
    %v1310 = vld [vmem:[%s1309] sm:$0xff]
    %v1311 = vld [vmem:[%s9] ss:$0 sm:$0xff]
    %v1313 = vshra.s32 %v1311, 8
    %v1314 = vand.u32 %v1313, 255
    %s1316 = sor.u32 256, 24
    %1317 = vbcast.lane.b32.xlu0 %v1314, %s1316
    %v1318 = vpop.permute.xlu0 %1317
    %1319 = xla_tuple %v1318, %v1310, %v16
    %1320 = xla_tuple %1319
    %vm1321 = vcmp.ne.s32.totalorder %v1318, 0
    %v1322 = vsel %vm1321, %v1310, %v16
    %1323 = xla_tuple %v1322
    %s1324 = scalar_lea.vmem [#allocation3], 152
    %s1326 = ssub.s32 256, 1
    %1327 = vst [vmem:[%s1324] sm:%s1326] %v1322
    %s1328 = scalar_lea.vmem %s4, 160
    %v1329 = vld [vmem:[%s1328] sm:$0xff]
    %v1330 = vld [vmem:[%s9] ss:$0 sm:$0xff]
    %v1332 = vshra.s32 %v1330, 8
    %v1333 = vand.u32 %v1332, 255
    %s1335 = sor.u32 256, 32
    %1336 = vbcast.lane.b32.xlu0 %v1333, %s1335
    %v1337 = vpop.permute.xlu0 %1336
    %1338 = xla_tuple %v1337, %v1329, %v16
    %1339 = xla_tuple %1338
    %vm1340 = vcmp.ne.s32.totalorder %v1337, 0
    %v1341 = vsel %vm1340, %v1329, %v16
    %1342 = xla_tuple %v1341
    %s1343 = scalar_lea.vmem [#allocation3], 160
    %s1345 = ssub.s32 256, 1
    %1346 = vst [vmem:[%s1343] sm:%s1345] %v1341
    %s1347 = scalar_lea.vmem %s4, 168
    %v1348 = vld [vmem:[%s1347] sm:$0xff]
    %v1349 = vld [vmem:[%s9] ss:$0 sm:$0xff]
    %v1351 = vshra.s32 %v1349, 8
    %v1352 = vand.u32 %v1351, 255
    %s1354 = sor.u32 256, 40
    %1355 = vbcast.lane.b32.xlu0 %v1352, %s1354
    %v1356 = vpop.permute.xlu0 %1355
    %1357 = xla_tuple %v1356, %v1348, %v16
    %1358 = xla_tuple %1357
    %vm1359 = vcmp.ne.s32.totalorder %v1356, 0
    %v1360 = vsel %vm1359, %v1348, %v16
    %1361 = xla_tuple %v1360
    %s1362 = scalar_lea.vmem [#allocation3], 168
    %s1364 = ssub.s32 256, 1
    %1365 = vst [vmem:[%s1362] sm:%s1364] %v1360
    %s1366 = scalar_lea.vmem %s4, 176
    %v1367 = vld [vmem:[%s1366] sm:$0xff]
    %v1368 = vld [vmem:[%s9] ss:$0 sm:$0xff]
    %v1370 = vshra.s32 %v1368, 8
    %v1371 = vand.u32 %v1370, 255
    %s1373 = sor.u32 256, 48
    %1374 = vbcast.lane.b32.xlu0 %v1371, %s1373
    %v1375 = vpop.permute.xlu0 %1374
    %1376 = xla_tuple %v1375, %v1367, %v16
    %1377 = xla_tuple %1376
    %vm1378 = vcmp.ne.s32.totalorder %v1375, 0
    %v1379 = vsel %vm1378, %v1367, %v16
    %1380 = xla_tuple %v1379
    %s1381 = scalar_lea.vmem [#allocation3], 176
    %s1383 = ssub.s32 256, 1
    %1384 = vst [vmem:[%s1381] sm:%s1383] %v1379
    %s1385 = scalar_lea.vmem %s4, 184
    %v1386 = vld [vmem:[%s1385] sm:$0xff]
    %v1387 = vld [vmem:[%s9] ss:$0 sm:$0xff]
    %v1389 = vshra.s32 %v1387, 8
    %v1390 = vand.u32 %v1389, 255
    %s1392 = sor.u32 256, 56
    %1393 = vbcast.lane.b32.xlu0 %v1390, %s1392
    %v1394 = vpop.permute.xlu0 %1393
    %1395 = xla_tuple %v1394, %v1386, %v16
    %1396 = xla_tuple %1395
    %vm1397 = vcmp.ne.s32.totalorder %v1394, 0
    %v1398 = vsel %vm1397, %v1386, %v16
    %1399 = xla_tuple %v1398
    %s1400 = scalar_lea.vmem [#allocation3], 184
    %s1402 = ssub.s32 256, 1
    %1403 = vst [vmem:[%s1400] sm:%s1402] %v1398
    %s1404 = scalar_lea.vmem %s4, 192
    %v1405 = vld [vmem:[%s1404] sm:$0xff]
    %v1406 = vld [vmem:[%s9] ss:$0 sm:$0xff]
    %v1408 = vshra.s32 %v1406, 8
    %v1409 = vand.u32 %v1408, 255
    %s1411 = sor.u32 256, 64
    %1412 = vbcast.lane.b32.xlu0 %v1409, %s1411
    %v1413 = vpop.permute.xlu0 %1412
    %1414 = xla_tuple %v1413, %v1405, %v16
    %1415 = xla_tuple %1414
    %vm1416 = vcmp.ne.s32.totalorder %v1413, 0
    %v1417 = vsel %vm1416, %v1405, %v16
    %1418 = xla_tuple %v1417
    %s1419 = scalar_lea.vmem [#allocation3], 192
    %s1421 = ssub.s32 256, 1
    %1422 = vst [vmem:[%s1419] sm:%s1421] %v1417
    %s1423 = scalar_lea.vmem %s4, 200
    %v1424 = vld [vmem:[%s1423] sm:$0xff]
    %v1425 = vld [vmem:[%s9] ss:$0 sm:$0xff]
    %v1427 = vshra.s32 %v1425, 8
    %v1428 = vand.u32 %v1427, 255
    %s1430 = sor.u32 256, 72
    %1431 = vbcast.lane.b32.xlu0 %v1428, %s1430
    %v1432 = vpop.permute.xlu0 %1431
    %1433 = xla_tuple %v1432, %v1424, %v16
    %1434 = xla_tuple %1433
    %vm1435 = vcmp.ne.s32.totalorder %v1432, 0
    %v1436 = vsel %vm1435, %v1424, %v16
    %1437 = xla_tuple %v1436
    %s1438 = scalar_lea.vmem [#allocation3], 200
    %s1440 = ssub.s32 256, 1
    %1441 = vst [vmem:[%s1438] sm:%s1440] %v1436
    %s1442 = scalar_lea.vmem %s4, 208
    %v1443 = vld [vmem:[%s1442] sm:$0xff]
    %v1444 = vld [vmem:[%s9] ss:$0 sm:$0xff]
    %v1446 = vshra.s32 %v1444, 8
    %v1447 = vand.u32 %v1446, 255
    %s1449 = sor.u32 256, 80
    %1450 = vbcast.lane.b32.xlu0 %v1447, %s1449
    %v1451 = vpop.permute.xlu0 %1450
    %1452 = xla_tuple %v1451, %v1443, %v16
    %1453 = xla_tuple %1452
    %vm1454 = vcmp.ne.s32.totalorder %v1451, 0
    %v1455 = vsel %vm1454, %v1443, %v16
    %1456 = xla_tuple %v1455
    %s1457 = scalar_lea.vmem [#allocation3], 208
    %s1459 = ssub.s32 256, 1
    %1460 = vst [vmem:[%s1457] sm:%s1459] %v1455
    %s1461 = scalar_lea.vmem %s4, 216
    %v1462 = vld [vmem:[%s1461] sm:$0xff]
    %v1463 = vld [vmem:[%s9] ss:$0 sm:$0xff]
    %v1465 = vshra.s32 %v1463, 8
    %v1466 = vand.u32 %v1465, 255
    %s1468 = sor.u32 256, 88
    %1469 = vbcast.lane.b32.xlu0 %v1466, %s1468
    %v1470 = vpop.permute.xlu0 %1469
    %1471 = xla_tuple %v1470, %v1462, %v16
    %1472 = xla_tuple %1471
    %vm1473 = vcmp.ne.s32.totalorder %v1470, 0
    %v1474 = vsel %vm1473, %v1462, %v16
    %1475 = xla_tuple %v1474
    %s1476 = scalar_lea.vmem [#allocation3], 216
    %s1478 = ssub.s32 256, 1
    %1479 = vst [vmem:[%s1476] sm:%s1478] %v1474
    %s1480 = scalar_lea.vmem %s4, 224
    %v1481 = vld [vmem:[%s1480] sm:$0xff]
    %v1482 = vld [vmem:[%s9] ss:$0 sm:$0xff]
    %v1484 = vshra.s32 %v1482, 8
    %v1485 = vand.u32 %v1484, 255
    %s1487 = sor.u32 256, 96
    %1488 = vbcast.lane.b32.xlu0 %v1485, %s1487
    %v1489 = vpop.permute.xlu0 %1488
    %1490 = xla_tuple %v1489, %v1481, %v16
    %1491 = xla_tuple %1490
    %vm1492 = vcmp.ne.s32.totalorder %v1489, 0
    %v1493 = vsel %vm1492, %v1481, %v16
    %1494 = xla_tuple %v1493
    %s1495 = scalar_lea.vmem [#allocation3], 224
    %s1497 = ssub.s32 256, 1
    %1498 = vst [vmem:[%s1495] sm:%s1497] %v1493
    %s1499 = scalar_lea.vmem %s4, 232
    %v1500 = vld [vmem:[%s1499] sm:$0xff]
    %v1501 = vld [vmem:[%s9] ss:$0 sm:$0xff]
    %v1503 = vshra.s32 %v1501, 8
    %v1504 = vand.u32 %v1503, 255
    %s1506 = sor.u32 256, 104
    %1507 = vbcast.lane.b32.xlu0 %v1504, %s1506
    %v1508 = vpop.permute.xlu0 %1507
    %1509 = xla_tuple %v1508, %v1500, %v16
    %1510 = xla_tuple %1509
    %vm1511 = vcmp.ne.s32.totalorder %v1508, 0
    %v1512 = vsel %vm1511, %v1500, %v16
    %1513 = xla_tuple %v1512
    %s1514 = scalar_lea.vmem [#allocation3], 232
    %s1516 = ssub.s32 256, 1
    %1517 = vst [vmem:[%s1514] sm:%s1516] %v1512
    %s1518 = scalar_lea.vmem %s4, 240
    %v1519 = vld [vmem:[%s1518] sm:$0xff]
    %v1520 = vld [vmem:[%s9] ss:$0 sm:$0xff]
    %v1522 = vshra.s32 %v1520, 8
    %v1523 = vand.u32 %v1522, 255
    %s1525 = sor.u32 256, 112
    %1526 = vbcast.lane.b32.xlu0 %v1523, %s1525
    %v1527 = vpop.permute.xlu0 %1526
    %1528 = xla_tuple %v1527, %v1519, %v16
    %1529 = xla_tuple %1528
    %vm1530 = vcmp.ne.s32.totalorder %v1527, 0
    %v1531 = vsel %vm1530, %v1519, %v16
    %1532 = xla_tuple %v1531
    %s1533 = scalar_lea.vmem [#allocation3], 240
    %s1535 = ssub.s32 256, 1
    %1536 = vst [vmem:[%s1533] sm:%s1535] %v1531
    %s1537 = scalar_lea.vmem %s4, 248
    %v1538 = vld [vmem:[%s1537] sm:$0xff]
    %v1539 = vld [vmem:[%s9] ss:$0 sm:$0xff]
    %v1541 = vshra.s32 %v1539, 8
    %v1542 = vand.u32 %v1541, 255
    %s1544 = sor.u32 256, 120
    %1545 = vbcast.lane.b32.xlu0 %v1542, %s1544
    %v1546 = vpop.permute.xlu0 %1545
    %1547 = xla_tuple %v1546, %v1538, %v16
    %1548 = xla_tuple %1547
    %vm1549 = vcmp.ne.s32.totalorder %v1546, 0
    %v1550 = vsel %vm1549, %v1538, %v16
    %1551 = xla_tuple %v1550
    %s1552 = scalar_lea.vmem [#allocation3], 248
    %s1554 = ssub.s32 256, 1
    %1555 = vst [vmem:[%s1552] sm:%s1554] %v1550
    %s1556 = scalar_lea.vmem %s4, 256
    %v1557 = vld [vmem:[%s1556] sm:$0xff]
    %v1558 = vld [vmem:[%s9] ss:$0 sm:$0xff]
    %v1560 = vshra.s32 %v1558, 16
    %v1561 = vand.u32 %v1560, 255
    %1563 = vbcast.lane.b32.xlu0 %v1561, 256
    %v1564 = vpop.permute.xlu0 %1563
    %1565 = xla_tuple %v1564, %v1557, %v16
    %1566 = xla_tuple %1565
    %vm1567 = vcmp.ne.s32.totalorder %v1564, 0
    %v1568 = vsel %vm1567, %v1557, %v16
    %1569 = xla_tuple %v1568
    %s1570 = scalar_lea.vmem [#allocation3], 256
    %s1572 = ssub.s32 256, 1
    %1573 = vst [vmem:[%s1570] sm:%s1572] %v1568
    %s1574 = scalar_lea.vmem %s4, 264
    %v1575 = vld [vmem:[%s1574] sm:$0xff]
    %v1576 = vld [vmem:[%s9] ss:$0 sm:$0xff]
    %v1578 = vshra.s32 %v1576, 16
    %v1579 = vand.u32 %v1578, 255
    %s1581 = sor.u32 256, 8
    %1582 = vbcast.lane.b32.xlu0 %v1579, %s1581
    %v1583 = vpop.permute.xlu0 %1582
    %1584 = xla_tuple %v1583, %v1575, %v16
    %1585 = xla_tuple %1584
    %vm1586 = vcmp.ne.s32.totalorder %v1583, 0
    %v1587 = vsel %vm1586, %v1575, %v16
    %1588 = xla_tuple %v1587
    %s1589 = scalar_lea.vmem [#allocation3], 264
    %s1591 = ssub.s32 256, 1
    %1592 = vst [vmem:[%s1589] sm:%s1591] %v1587
    %s1593 = scalar_lea.vmem %s4, 272
    %v1594 = vld [vmem:[%s1593] sm:$0xff]
    %v1595 = vld [vmem:[%s9] ss:$0 sm:$0xff]
    %v1597 = vshra.s32 %v1595, 16
    %v1598 = vand.u32 %v1597, 255
    %s1600 = sor.u32 256, 16
    %1601 = vbcast.lane.b32.xlu0 %v1598, %s1600
    %v1602 = vpop.permute.xlu0 %1601
    %1603 = xla_tuple %v1602, %v1594, %v16
    %1604 = xla_tuple %1603
    %vm1605 = vcmp.ne.s32.totalorder %v1602, 0
    %v1606 = vsel %vm1605, %v1594, %v16
    %1607 = xla_tuple %v1606
    %s1608 = scalar_lea.vmem [#allocation3], 272
    %s1610 = ssub.s32 256, 1
    %1611 = vst [vmem:[%s1608] sm:%s1610] %v1606
    %s1612 = scalar_lea.vmem %s4, 280
    %v1613 = vld [vmem:[%s1612] sm:$0xff]
    %v1614 = vld [vmem:[%s9] ss:$0 sm:$0xff]
    %v1616 = vshra.s32 %v1614, 16
    %v1617 = vand.u32 %v1616, 255
    %s1619 = sor.u32 256, 24
    %1620 = vbcast.lane.b32.xlu0 %v1617, %s1619
    %v1621 = vpop.permute.xlu0 %1620
    %1622 = xla_tuple %v1621, %v1613, %v16
    %1623 = xla_tuple %1622
    %vm1624 = vcmp.ne.s32.totalorder %v1621, 0
    %v1625 = vsel %vm1624, %v1613, %v16
    %1626 = xla_tuple %v1625
    %s1627 = scalar_lea.vmem [#allocation3], 280
    %s1629 = ssub.s32 256, 1
    %1630 = vst [vmem:[%s1627] sm:%s1629] %v1625
    %s1631 = scalar_lea.vmem %s4, 288
    %v1632 = vld [vmem:[%s1631] sm:$0xff]
    %v1633 = vld [vmem:[%s9] ss:$0 sm:$0xff]
    %v1635 = vshra.s32 %v1633, 16
    %v1636 = vand.u32 %v1635, 255
    %s1638 = sor.u32 256, 32
    %1639 = vbcast.lane.b32.xlu0 %v1636, %s1638
    %v1640 = vpop.permute.xlu0 %1639
    %1641 = xla_tuple %v1640, %v1632, %v16
    %1642 = xla_tuple %1641
    %vm1643 = vcmp.ne.s32.totalorder %v1640, 0
    %v1644 = vsel %vm1643, %v1632, %v16
    %1645 = xla_tuple %v1644
    %s1646 = scalar_lea.vmem [#allocation3], 288
    %s1648 = ssub.s32 256, 1
    %1649 = vst [vmem:[%s1646] sm:%s1648] %v1644
    %s1650 = scalar_lea.vmem %s4, 296
    %v1651 = vld [vmem:[%s1650] sm:$0xff]
    %v1652 = vld [vmem:[%s9] ss:$0 sm:$0xff]
    %v1654 = vshra.s32 %v1652, 16
    %v1655 = vand.u32 %v1654, 255
    %s1657 = sor.u32 256, 40
    %1658 = vbcast.lane.b32.xlu0 %v1655, %s1657
    %v1659 = vpop.permute.xlu0 %1658
    %1660 = xla_tuple %v1659, %v1651, %v16
    %1661 = xla_tuple %1660
    %vm1662 = vcmp.ne.s32.totalorder %v1659, 0
    %v1663 = vsel %vm1662, %v1651, %v16
    %1664 = xla_tuple %v1663
    %s1665 = scalar_lea.vmem [#allocation3], 296
    %s1667 = ssub.s32 256, 1
    %1668 = vst [vmem:[%s1665] sm:%s1667] %v1663
    %s1669 = scalar_lea.vmem %s4, 304
    %v1670 = vld [vmem:[%s1669] sm:$0xff]
    %v1671 = vld [vmem:[%s9] ss:$0 sm:$0xff]
    %v1673 = vshra.s32 %v1671, 16
    %v1674 = vand.u32 %v1673, 255
    %s1676 = sor.u32 256, 48
    %1677 = vbcast.lane.b32.xlu0 %v1674, %s1676
    %v1678 = vpop.permute.xlu0 %1677
    %1679 = xla_tuple %v1678, %v1670, %v16
    %1680 = xla_tuple %1679
    %vm1681 = vcmp.ne.s32.totalorder %v1678, 0
    %v1682 = vsel %vm1681, %v1670, %v16
    %1683 = xla_tuple %v1682
    %s1684 = scalar_lea.vmem [#allocation3], 304
    %s1686 = ssub.s32 256, 1
    %1687 = vst [vmem:[%s1684] sm:%s1686] %v1682
    %s1688 = scalar_lea.vmem %s4, 312
    %v1689 = vld [vmem:[%s1688] sm:$0xff]
    %v1690 = vld [vmem:[%s9] ss:$0 sm:$0xff]
    %v1692 = vshra.s32 %v1690, 16
    %v1693 = vand.u32 %v1692, 255
    %s1695 = sor.u32 256, 56
    %1696 = vbcast.lane.b32.xlu0 %v1693, %s1695
    %v1697 = vpop.permute.xlu0 %1696
    %1698 = xla_tuple %v1697, %v1689, %v16
    %1699 = xla_tuple %1698
    %vm1700 = vcmp.ne.s32.totalorder %v1697, 0
    %v1701 = vsel %vm1700, %v1689, %v16
    %1702 = xla_tuple %v1701
    %s1703 = scalar_lea.vmem [#allocation3], 312
    %s1705 = ssub.s32 256, 1
    %1706 = vst [vmem:[%s1703] sm:%s1705] %v1701
    %s1707 = scalar_lea.vmem %s4, 320
    %v1708 = vld [vmem:[%s1707] sm:$0xff]
    %v1709 = vld [vmem:[%s9] ss:$0 sm:$0xff]
    %v1711 = vshra.s32 %v1709, 16
    %v1712 = vand.u32 %v1711, 255
    %s1714 = sor.u32 256, 64
    %1715 = vbcast.lane.b32.xlu0 %v1712, %s1714
    %v1716 = vpop.permute.xlu0 %1715
    %1717 = xla_tuple %v1716, %v1708, %v16
    %1718 = xla_tuple %1717
    %vm1719 = vcmp.ne.s32.totalorder %v1716, 0
    %v1720 = vsel %vm1719, %v1708, %v16
    %1721 = xla_tuple %v1720
    %s1722 = scalar_lea.vmem [#allocation3], 320
    %s1724 = ssub.s32 256, 1
    %1725 = vst [vmem:[%s1722] sm:%s1724] %v1720
    %s1726 = scalar_lea.vmem %s4, 328
    %v1727 = vld [vmem:[%s1726] sm:$0xff]
    %v1728 = vld [vmem:[%s9] ss:$0 sm:$0xff]
    %v1730 = vshra.s32 %v1728, 16
    %v1731 = vand.u32 %v1730, 255
    %s1733 = sor.u32 256, 72
    %1734 = vbcast.lane.b32.xlu0 %v1731, %s1733
    %v1735 = vpop.permute.xlu0 %1734
    %1736 = xla_tuple %v1735, %v1727, %v16
    %1737 = xla_tuple %1736
    %vm1738 = vcmp.ne.s32.totalorder %v1735, 0
    %v1739 = vsel %vm1738, %v1727, %v16
    %1740 = xla_tuple %v1739
    %s1741 = scalar_lea.vmem [#allocation3], 328
    %s1743 = ssub.s32 256, 1
    %1744 = vst [vmem:[%s1741] sm:%s1743] %v1739
    %s1745 = scalar_lea.vmem %s4, 336
    %v1746 = vld [vmem:[%s1745] sm:$0xff]
    %v1747 = vld [vmem:[%s9] ss:$0 sm:$0xff]
    %v1749 = vshra.s32 %v1747, 16
    %v1750 = vand.u32 %v1749, 255
    %s1752 = sor.u32 256, 80
    %1753 = vbcast.lane.b32.xlu0 %v1750, %s1752
    %v1754 = vpop.permute.xlu0 %1753
    %1755 = xla_tuple %v1754, %v1746, %v16
    %1756 = xla_tuple %1755
    %vm1757 = vcmp.ne.s32.totalorder %v1754, 0
    %v1758 = vsel %vm1757, %v1746, %v16
    %1759 = xla_tuple %v1758
    %s1760 = scalar_lea.vmem [#allocation3], 336
    %s1762 = ssub.s32 256, 1
    %1763 = vst [vmem:[%s1760] sm:%s1762] %v1758
    %s1764 = scalar_lea.vmem %s4, 344
    %v1765 = vld [vmem:[%s1764] sm:$0xff]
    %v1766 = vld [vmem:[%s9] ss:$0 sm:$0xff]
    %v1768 = vshra.s32 %v1766, 16
    %v1769 = vand.u32 %v1768, 255
    %s1771 = sor.u32 256, 88
    %1772 = vbcast.lane.b32.xlu0 %v1769, %s1771
    %v1773 = vpop.permute.xlu0 %1772
    %1774 = xla_tuple %v1773, %v1765, %v16
    %1775 = xla_tuple %1774
    %vm1776 = vcmp.ne.s32.totalorder %v1773, 0
    %v1777 = vsel %vm1776, %v1765, %v16
    %1778 = xla_tuple %v1777
    %s1779 = scalar_lea.vmem [#allocation3], 344
    %s1781 = ssub.s32 256, 1
    %1782 = vst [vmem:[%s1779] sm:%s1781] %v1777
    %s1783 = scalar_lea.vmem %s4, 352
    %v1784 = vld [vmem:[%s1783] sm:$0xff]
    %v1785 = vld [vmem:[%s9] ss:$0 sm:$0xff]
    %v1787 = vshra.s32 %v1785, 16
    %v1788 = vand.u32 %v1787, 255
    %s1790 = sor.u32 256, 96
    %1791 = vbcast.lane.b32.xlu0 %v1788, %s1790
    %v1792 = vpop.permute.xlu0 %1791
    %1793 = xla_tuple %v1792, %v1784, %v16
    %1794 = xla_tuple %1793
    %vm1795 = vcmp.ne.s32.totalorder %v1792, 0
    %v1796 = vsel %vm1795, %v1784, %v16
    %1797 = xla_tuple %v1796
    %s1798 = scalar_lea.vmem [#allocation3], 352
    %s1800 = ssub.s32 256, 1
    %1801 = vst [vmem:[%s1798] sm:%s1800] %v1796
    %s1802 = scalar_lea.vmem %s4, 360
    %v1803 = vld [vmem:[%s1802] sm:$0xff]
    %v1804 = vld [vmem:[%s9] ss:$0 sm:$0xff]
    %v1806 = vshra.s32 %v1804, 16
    %v1807 = vand.u32 %v1806, 255
    %s1809 = sor.u32 256, 104
    %1810 = vbcast.lane.b32.xlu0 %v1807, %s1809
    %v1811 = vpop.permute.xlu0 %1810
    %1812 = xla_tuple %v1811, %v1803, %v16
    %1813 = xla_tuple %1812
    %vm1814 = vcmp.ne.s32.totalorder %v1811, 0
    %v1815 = vsel %vm1814, %v1803, %v16
    %1816 = xla_tuple %v1815
    %s1817 = scalar_lea.vmem [#allocation3], 360
    %s1819 = ssub.s32 256, 1
    %1820 = vst [vmem:[%s1817] sm:%s1819] %v1815
    %s1821 = scalar_lea.vmem %s4, 368
    %v1822 = vld [vmem:[%s1821] sm:$0xff]
    %v1823 = vld [vmem:[%s9] ss:$0 sm:$0xff]
    %v1825 = vshra.s32 %v1823, 16
    %v1826 = vand.u32 %v1825, 255
    %s1828 = sor.u32 256, 112
    %1829 = vbcast.lane.b32.xlu0 %v1826, %s1828
    %v1830 = vpop.permute.xlu0 %1829
    %1831 = xla_tuple %v1830, %v1822, %v16
    %1832 = xla_tuple %1831
    %vm1833 = vcmp.ne.s32.totalorder %v1830, 0
    %v1834 = vsel %vm1833, %v1822, %v16
    %1835 = xla_tuple %v1834
    %s1836 = scalar_lea.vmem [#allocation3], 368
    %s1838 = ssub.s32 256, 1
    %1839 = vst [vmem:[%s1836] sm:%s1838] %v1834
    %s1840 = scalar_lea.vmem %s4, 376
    %v1841 = vld [vmem:[%s1840] sm:$0xff]
    %v1842 = vld [vmem:[%s9] ss:$0 sm:$0xff]
    %v1844 = vshra.s32 %v1842, 16
    %v1845 = vand.u32 %v1844, 255
    %s1847 = sor.u32 256, 120
    %1848 = vbcast.lane.b32.xlu0 %v1845, %s1847
    %v1849 = vpop.permute.xlu0 %1848
    %1850 = xla_tuple %v1849, %v1841, %v16
    %1851 = xla_tuple %1850
    %vm1852 = vcmp.ne.s32.totalorder %v1849, 0
    %v1853 = vsel %vm1852, %v1841, %v16
    %1854 = xla_tuple %v1853
    %s1855 = scalar_lea.vmem [#allocation3], 376
    %s1857 = ssub.s32 256, 1
    %1858 = vst [vmem:[%s1855] sm:%s1857] %v1853
    %v1859 = vld [vmem:[%s3] sm:$0xff]
    %v1860 = vld [vmem:[%s8] ss:$0 sm:$0xff]
    %v1862 = vshra.s32 %v1860, 0
    %v1863 = vand.u32 %v1862, 255
    %1865 = vbcast.lane.b32.xlu0 %v1863, 256
    %v1866 = vpop.permute.xlu0 %1865
    %1867 = xla_tuple %v1866, %v1859, %v17
    %1868 = xla_tuple %1867
    %vm1869 = vcmp.ne.s32.totalorder %v1866, 0
    %v1870 = vsel %vm1869, %v1859, %v17
    %1871 = xla_tuple %v1870
    %s1873 = ssub.s32 256, 1
    %1874 = vst [vmem:[#allocation4] sm:%s1873] %v1870
    %s1875 = scalar_lea.vmem %s3, 8
    %v1876 = vld [vmem:[%s1875] sm:$0xff]
    %v1877 = vld [vmem:[%s8] ss:$0 sm:$0xff]
    %v1879 = vshra.s32 %v1877, 0
    %v1880 = vand.u32 %v1879, 255
    %s1882 = sor.u32 256, 8
    %1883 = vbcast.lane.b32.xlu0 %v1880, %s1882
    %v1884 = vpop.permute.xlu0 %1883
    %1885 = xla_tuple %v1884, %v1876, %v17
    %1886 = xla_tuple %1885
    %vm1887 = vcmp.ne.s32.totalorder %v1884, 0
    %v1888 = vsel %vm1887, %v1876, %v17
    %1889 = xla_tuple %v1888
    %s1890 = scalar_lea.vmem [#allocation4], 8
    %s1892 = ssub.s32 256, 1
    %1893 = vst [vmem:[%s1890] sm:%s1892] %v1888
    %s1894 = scalar_lea.vmem %s3, 16
    %v1895 = vld [vmem:[%s1894] sm:$0xff]
    %v1896 = vld [vmem:[%s8] ss:$0 sm:$0xff]
    %v1898 = vshra.s32 %v1896, 0
    %v1899 = vand.u32 %v1898, 255
    %s1901 = sor.u32 256, 16
    %1902 = vbcast.lane.b32.xlu0 %v1899, %s1901
    %v1903 = vpop.permute.xlu0 %1902
    %1904 = xla_tuple %v1903, %v1895, %v17
    %1905 = xla_tuple %1904
    %vm1906 = vcmp.ne.s32.totalorder %v1903, 0
    %v1907 = vsel %vm1906, %v1895, %v17
    %1908 = xla_tuple %v1907
    %s1909 = scalar_lea.vmem [#allocation4], 16
    %s1911 = ssub.s32 256, 1
    %1912 = vst [vmem:[%s1909] sm:%s1911] %v1907
    %s1913 = scalar_lea.vmem %s3, 24
    %v1914 = vld [vmem:[%s1913] sm:$0xff]
    %v1915 = vld [vmem:[%s8] ss:$0 sm:$0xff]
    %v1917 = vshra.s32 %v1915, 0
    %v1918 = vand.u32 %v1917, 255
    %s1920 = sor.u32 256, 24
    %1921 = vbcast.lane.b32.xlu0 %v1918, %s1920
    %v1922 = vpop.permute.xlu0 %1921
    %1923 = xla_tuple %v1922, %v1914, %v17
    %1924 = xla_tuple %1923
    %vm1925 = vcmp.ne.s32.totalorder %v1922, 0
    %v1926 = vsel %vm1925, %v1914, %v17
    %1927 = xla_tuple %v1926
    %s1928 = scalar_lea.vmem [#allocation4], 24
    %s1930 = ssub.s32 256, 1
    %1931 = vst [vmem:[%s1928] sm:%s1930] %v1926
    %s1932 = scalar_lea.vmem %s3, 32
    %v1933 = vld [vmem:[%s1932] sm:$0xff]
    %v1934 = vld [vmem:[%s8] ss:$0 sm:$0xff]
    %v1936 = vshra.s32 %v1934, 0
    %v1937 = vand.u32 %v1936, 255
    %s1939 = sor.u32 256, 32
    %1940 = vbcast.lane.b32.xlu0 %v1937, %s1939
    %v1941 = vpop.permute.xlu0 %1940
    %1942 = xla_tuple %v1941, %v1933, %v17
    %1943 = xla_tuple %1942
    %vm1944 = vcmp.ne.s32.totalorder %v1941, 0
    %v1945 = vsel %vm1944, %v1933, %v17
    %1946 = xla_tuple %v1945
    %s1947 = scalar_lea.vmem [#allocation4], 32
    %s1949 = ssub.s32 256, 1
    %1950 = vst [vmem:[%s1947] sm:%s1949] %v1945
    %s1951 = scalar_lea.vmem %s3, 40
    %v1952 = vld [vmem:[%s1951] sm:$0xff]
    %v1953 = vld [vmem:[%s8] ss:$0 sm:$0xff]
    %v1955 = vshra.s32 %v1953, 0
    %v1956 = vand.u32 %v1955, 255
    %s1958 = sor.u32 256, 40
    %1959 = vbcast.lane.b32.xlu0 %v1956, %s1958
    %v1960 = vpop.permute.xlu0 %1959
    %1961 = xla_tuple %v1960, %v1952, %v17
    %1962 = xla_tuple %1961
    %vm1963 = vcmp.ne.s32.totalorder %v1960, 0
    %v1964 = vsel %vm1963, %v1952, %v17
    %1965 = xla_tuple %v1964
    %s1966 = scalar_lea.vmem [#allocation4], 40
    %s1968 = ssub.s32 256, 1
    %1969 = vst [vmem:[%s1966] sm:%s1968] %v1964
    %s1970 = scalar_lea.vmem %s3, 48
    %v1971 = vld [vmem:[%s1970] sm:$0xff]
    %v1972 = vld [vmem:[%s8] ss:$0 sm:$0xff]
    %v1974 = vshra.s32 %v1972, 0
    %v1975 = vand.u32 %v1974, 255
    %s1977 = sor.u32 256, 48
    %1978 = vbcast.lane.b32.xlu0 %v1975, %s1977
    %v1979 = vpop.permute.xlu0 %1978
    %1980 = xla_tuple %v1979, %v1971, %v17
    %1981 = xla_tuple %1980
    %vm1982 = vcmp.ne.s32.totalorder %v1979, 0
    %v1983 = vsel %vm1982, %v1971, %v17
    %1984 = xla_tuple %v1983
    %s1985 = scalar_lea.vmem [#allocation4], 48
    %s1987 = ssub.s32 256, 1
    %1988 = vst [vmem:[%s1985] sm:%s1987] %v1983
    %s1989 = scalar_lea.vmem %s3, 56
    %v1990 = vld [vmem:[%s1989] sm:$0xff]
    %v1991 = vld [vmem:[%s8] ss:$0 sm:$0xff]
    %v1993 = vshra.s32 %v1991, 0
    %v1994 = vand.u32 %v1993, 255
    %s1996 = sor.u32 256, 56
    %1997 = vbcast.lane.b32.xlu0 %v1994, %s1996
    %v1998 = vpop.permute.xlu0 %1997
    %1999 = xla_tuple %v1998, %v1990, %v17
    %2000 = xla_tuple %1999
    %vm2001 = vcmp.ne.s32.totalorder %v1998, 0
    %v2002 = vsel %vm2001, %v1990, %v17
    %2003 = xla_tuple %v2002
    %s2004 = scalar_lea.vmem [#allocation4], 56
    %s2006 = ssub.s32 256, 1
    %2007 = vst [vmem:[%s2004] sm:%s2006] %v2002
    %s2008 = scalar_lea.vmem %s3, 64
    %v2009 = vld [vmem:[%s2008] sm:$0xff]
    %v2010 = vld [vmem:[%s8] ss:$0 sm:$0xff]
    %v2012 = vshra.s32 %v2010, 0
    %v2013 = vand.u32 %v2012, 255
    %s2015 = sor.u32 256, 64
    %2016 = vbcast.lane.b32.xlu0 %v2013, %s2015
    %v2017 = vpop.permute.xlu0 %2016
    %2018 = xla_tuple %v2017, %v2009, %v17
    %2019 = xla_tuple %2018
    %vm2020 = vcmp.ne.s32.totalorder %v2017, 0
    %v2021 = vsel %vm2020, %v2009, %v17
    %2022 = xla_tuple %v2021
    %s2023 = scalar_lea.vmem [#allocation4], 64
    %s2025 = ssub.s32 256, 1
    %2026 = vst [vmem:[%s2023] sm:%s2025] %v2021
    %s2027 = scalar_lea.vmem %s3, 72
    %v2028 = vld [vmem:[%s2027] sm:$0xff]
    %v2029 = vld [vmem:[%s8] ss:$0 sm:$0xff]
    %v2031 = vshra.s32 %v2029, 0
    %v2032 = vand.u32 %v2031, 255
    %s2034 = sor.u32 256, 72
    %2035 = vbcast.lane.b32.xlu0 %v2032, %s2034
    %v2036 = vpop.permute.xlu0 %2035
    %2037 = xla_tuple %v2036, %v2028, %v17
    %2038 = xla_tuple %2037
    %vm2039 = vcmp.ne.s32.totalorder %v2036, 0
    %v2040 = vsel %vm2039, %v2028, %v17
    %2041 = xla_tuple %v2040
    %s2042 = scalar_lea.vmem [#allocation4], 72
    %s2044 = ssub.s32 256, 1
    %2045 = vst [vmem:[%s2042] sm:%s2044] %v2040
    %s2046 = scalar_lea.vmem %s3, 80
    %v2047 = vld [vmem:[%s2046] sm:$0xff]
    %v2048 = vld [vmem:[%s8] ss:$0 sm:$0xff]
    %v2050 = vshra.s32 %v2048, 0
    %v2051 = vand.u32 %v2050, 255
    %s2053 = sor.u32 256, 80
    %2054 = vbcast.lane.b32.xlu0 %v2051, %s2053
    %v2055 = vpop.permute.xlu0 %2054
    %2056 = xla_tuple %v2055, %v2047, %v17
    %2057 = xla_tuple %2056
    %vm2058 = vcmp.ne.s32.totalorder %v2055, 0
    %v2059 = vsel %vm2058, %v2047, %v17
    %2060 = xla_tuple %v2059
    %s2061 = scalar_lea.vmem [#allocation4], 80
    %s2063 = ssub.s32 256, 1
    %2064 = vst [vmem:[%s2061] sm:%s2063] %v2059
    %s2065 = scalar_lea.vmem %s3, 88
    %v2066 = vld [vmem:[%s2065] sm:$0xff]
    %v2067 = vld [vmem:[%s8] ss:$0 sm:$0xff]
    %v2069 = vshra.s32 %v2067, 0
    %v2070 = vand.u32 %v2069, 255
    %s2072 = sor.u32 256, 88
    %2073 = vbcast.lane.b32.xlu0 %v2070, %s2072
    %v2074 = vpop.permute.xlu0 %2073
    %2075 = xla_tuple %v2074, %v2066, %v17
    %2076 = xla_tuple %2075
    %vm2077 = vcmp.ne.s32.totalorder %v2074, 0
    %v2078 = vsel %vm2077, %v2066, %v17
    %2079 = xla_tuple %v2078
    %s2080 = scalar_lea.vmem [#allocation4], 88
    %s2082 = ssub.s32 256, 1
    %2083 = vst [vmem:[%s2080] sm:%s2082] %v2078
    %s2084 = scalar_lea.vmem %s3, 96
    %v2085 = vld [vmem:[%s2084] sm:$0xff]
    %v2086 = vld [vmem:[%s8] ss:$0 sm:$0xff]
    %v2088 = vshra.s32 %v2086, 0
    %v2089 = vand.u32 %v2088, 255
    %s2091 = sor.u32 256, 96
    %2092 = vbcast.lane.b32.xlu0 %v2089, %s2091
    %v2093 = vpop.permute.xlu0 %2092
    %2094 = xla_tuple %v2093, %v2085, %v17
    %2095 = xla_tuple %2094
    %vm2096 = vcmp.ne.s32.totalorder %v2093, 0
    %v2097 = vsel %vm2096, %v2085, %v17
    %2098 = xla_tuple %v2097
    %s2099 = scalar_lea.vmem [#allocation4], 96
    %s2101 = ssub.s32 256, 1
    %2102 = vst [vmem:[%s2099] sm:%s2101] %v2097
    %s2103 = scalar_lea.vmem %s3, 104
    %v2104 = vld [vmem:[%s2103] sm:$0xff]
    %v2105 = vld [vmem:[%s8] ss:$0 sm:$0xff]
    %v2107 = vshra.s32 %v2105, 0
    %v2108 = vand.u32 %v2107, 255
    %s2110 = sor.u32 256, 104
    %2111 = vbcast.lane.b32.xlu0 %v2108, %s2110
    %v2112 = vpop.permute.xlu0 %2111
    %2113 = xla_tuple %v2112, %v2104, %v17
    %2114 = xla_tuple %2113
    %vm2115 = vcmp.ne.s32.totalorder %v2112, 0
    %v2116 = vsel %vm2115, %v2104, %v17
    %2117 = xla_tuple %v2116
    %s2118 = scalar_lea.vmem [#allocation4], 104
    %s2120 = ssub.s32 256, 1
    %2121 = vst [vmem:[%s2118] sm:%s2120] %v2116
    %s2122 = scalar_lea.vmem %s3, 112
    %v2123 = vld [vmem:[%s2122] sm:$0xff]
    %v2124 = vld [vmem:[%s8] ss:$0 sm:$0xff]
    %v2126 = vshra.s32 %v2124, 0
    %v2127 = vand.u32 %v2126, 255
    %s2129 = sor.u32 256, 112
    %2130 = vbcast.lane.b32.xlu0 %v2127, %s2129
    %v2131 = vpop.permute.xlu0 %2130
    %2132 = xla_tuple %v2131, %v2123, %v17
    %2133 = xla_tuple %2132
    %vm2134 = vcmp.ne.s32.totalorder %v2131, 0
    %v2135 = vsel %vm2134, %v2123, %v17
    %2136 = xla_tuple %v2135
    %s2137 = scalar_lea.vmem [#allocation4], 112
    %s2139 = ssub.s32 256, 1
    %2140 = vst [vmem:[%s2137] sm:%s2139] %v2135
    %s2141 = scalar_lea.vmem %s3, 120
    %v2142 = vld [vmem:[%s2141] sm:$0xff]
    %v2143 = vld [vmem:[%s8] ss:$0 sm:$0xff]
    %v2145 = vshra.s32 %v2143, 0
    %v2146 = vand.u32 %v2145, 255
    %s2148 = sor.u32 256, 120
    %2149 = vbcast.lane.b32.xlu0 %v2146, %s2148
    %v2150 = vpop.permute.xlu0 %2149
    %2151 = xla_tuple %v2150, %v2142, %v17
    %2152 = xla_tuple %2151
    %vm2153 = vcmp.ne.s32.totalorder %v2150, 0
    %v2154 = vsel %vm2153, %v2142, %v17
    %2155 = xla_tuple %v2154
    %s2156 = scalar_lea.vmem [#allocation4], 120
    %s2158 = ssub.s32 256, 1
    %2159 = vst [vmem:[%s2156] sm:%s2158] %v2154
    %s2160 = scalar_lea.vmem %s3, 128
    %v2161 = vld [vmem:[%s2160] sm:$0xff]
    %v2162 = vld [vmem:[%s8] ss:$0 sm:$0xff]
    %v2164 = vshra.s32 %v2162, 8
    %v2165 = vand.u32 %v2164, 255
    %2167 = vbcast.lane.b32.xlu0 %v2165, 256
    %v2168 = vpop.permute.xlu0 %2167
    %2169 = xla_tuple %v2168, %v2161, %v17
    %2170 = xla_tuple %2169
    %vm2171 = vcmp.ne.s32.totalorder %v2168, 0
    %v2172 = vsel %vm2171, %v2161, %v17
    %2173 = xla_tuple %v2172
    %s2174 = scalar_lea.vmem [#allocation4], 128
    %s2176 = ssub.s32 256, 1
    %2177 = vst [vmem:[%s2174] sm:%s2176] %v2172
    %s2178 = scalar_lea.vmem %s3, 136
    %v2179 = vld [vmem:[%s2178] sm:$0xff]
    %v2180 = vld [vmem:[%s8] ss:$0 sm:$0xff]
    %v2182 = vshra.s32 %v2180, 8
    %v2183 = vand.u32 %v2182, 255
    %s2185 = sor.u32 256, 8
    %2186 = vbcast.lane.b32.xlu0 %v2183, %s2185
    %v2187 = vpop.permute.xlu0 %2186
    %2188 = xla_tuple %v2187, %v2179, %v17
    %2189 = xla_tuple %2188
    %vm2190 = vcmp.ne.s32.totalorder %v2187, 0
    %v2191 = vsel %vm2190, %v2179, %v17
    %2192 = xla_tuple %v2191
    %s2193 = scalar_lea.vmem [#allocation4], 136
    %s2195 = ssub.s32 256, 1
    %2196 = vst [vmem:[%s2193] sm:%s2195] %v2191
    %s2197 = scalar_lea.vmem %s3, 144
    %v2198 = vld [vmem:[%s2197] sm:$0xff]
    %v2199 = vld [vmem:[%s8] ss:$0 sm:$0xff]
    %v2201 = vshra.s32 %v2199, 8
    %v2202 = vand.u32 %v2201, 255
    %s2204 = sor.u32 256, 16
    %2205 = vbcast.lane.b32.xlu0 %v2202, %s2204
    %v2206 = vpop.permute.xlu0 %2205
    %2207 = xla_tuple %v2206, %v2198, %v17
    %2208 = xla_tuple %2207
    %vm2209 = vcmp.ne.s32.totalorder %v2206, 0
    %v2210 = vsel %vm2209, %v2198, %v17
    %2211 = xla_tuple %v2210
    %s2212 = scalar_lea.vmem [#allocation4], 144
    %s2214 = ssub.s32 256, 1
    %2215 = vst [vmem:[%s2212] sm:%s2214] %v2210
    %s2216 = scalar_lea.vmem %s3, 152
    %v2217 = vld [vmem:[%s2216] sm:$0xff]
    %v2218 = vld [vmem:[%s8] ss:$0 sm:$0xff]
    %v2220 = vshra.s32 %v2218, 8
    %v2221 = vand.u32 %v2220, 255
    %s2223 = sor.u32 256, 24
    %2224 = vbcast.lane.b32.xlu0 %v2221, %s2223
    %v2225 = vpop.permute.xlu0 %2224
    %2226 = xla_tuple %v2225, %v2217, %v17
    %2227 = xla_tuple %2226
    %vm2228 = vcmp.ne.s32.totalorder %v2225, 0
    %v2229 = vsel %vm2228, %v2217, %v17
    %2230 = xla_tuple %v2229
    %s2231 = scalar_lea.vmem [#allocation4], 152
    %s2233 = ssub.s32 256, 1
    %2234 = vst [vmem:[%s2231] sm:%s2233] %v2229
    %s2235 = scalar_lea.vmem %s3, 160
    %v2236 = vld [vmem:[%s2235] sm:$0xff]
    %v2237 = vld [vmem:[%s8] ss:$0 sm:$0xff]
    %v2239 = vshra.s32 %v2237, 8
    %v2240 = vand.u32 %v2239, 255
    %s2242 = sor.u32 256, 32
    %2243 = vbcast.lane.b32.xlu0 %v2240, %s2242
    %v2244 = vpop.permute.xlu0 %2243
    %2245 = xla_tuple %v2244, %v2236, %v17
    %2246 = xla_tuple %2245
    %vm2247 = vcmp.ne.s32.totalorder %v2244, 0
    %v2248 = vsel %vm2247, %v2236, %v17
    %2249 = xla_tuple %v2248
    %s2250 = scalar_lea.vmem [#allocation4], 160
    %s2252 = ssub.s32 256, 1
    %2253 = vst [vmem:[%s2250] sm:%s2252] %v2248
    %s2254 = scalar_lea.vmem %s3, 168
    %v2255 = vld [vmem:[%s2254] sm:$0xff]
    %v2256 = vld [vmem:[%s8] ss:$0 sm:$0xff]
    %v2258 = vshra.s32 %v2256, 8
    %v2259 = vand.u32 %v2258, 255
    %s2261 = sor.u32 256, 40
    %2262 = vbcast.lane.b32.xlu0 %v2259, %s2261
    %v2263 = vpop.permute.xlu0 %2262
    %2264 = xla_tuple %v2263, %v2255, %v17
    %2265 = xla_tuple %2264
    %vm2266 = vcmp.ne.s32.totalorder %v2263, 0
    %v2267 = vsel %vm2266, %v2255, %v17
    %2268 = xla_tuple %v2267
    %s2269 = scalar_lea.vmem [#allocation4], 168
    %s2271 = ssub.s32 256, 1
    %2272 = vst [vmem:[%s2269] sm:%s2271] %v2267
    %s2273 = scalar_lea.vmem %s3, 176
    %v2274 = vld [vmem:[%s2273] sm:$0xff]
    %v2275 = vld [vmem:[%s8] ss:$0 sm:$0xff]
    %v2277 = vshra.s32 %v2275, 8
    %v2278 = vand.u32 %v2277, 255
    %s2280 = sor.u32 256, 48
    %2281 = vbcast.lane.b32.xlu0 %v2278, %s2280
    %v2282 = vpop.permute.xlu0 %2281
    %2283 = xla_tuple %v2282, %v2274, %v17
    %2284 = xla_tuple %2283
    %vm2285 = vcmp.ne.s32.totalorder %v2282, 0
    %v2286 = vsel %vm2285, %v2274, %v17
    %2287 = xla_tuple %v2286
    %s2288 = scalar_lea.vmem [#allocation4], 176
    %s2290 = ssub.s32 256, 1
    %2291 = vst [vmem:[%s2288] sm:%s2290] %v2286
    %s2292 = scalar_lea.vmem %s3, 184
    %v2293 = vld [vmem:[%s2292] sm:$0xff]
    %v2294 = vld [vmem:[%s8] ss:$0 sm:$0xff]
    %v2296 = vshra.s32 %v2294, 8
    %v2297 = vand.u32 %v2296, 255
    %s2299 = sor.u32 256, 56
    %2300 = vbcast.lane.b32.xlu0 %v2297, %s2299
    %v2301 = vpop.permute.xlu0 %2300
    %2302 = xla_tuple %v2301, %v2293, %v17
    %2303 = xla_tuple %2302
    %vm2304 = vcmp.ne.s32.totalorder %v2301, 0
    %v2305 = vsel %vm2304, %v2293, %v17
    %2306 = xla_tuple %v2305
    %s2307 = scalar_lea.vmem [#allocation4], 184
    %s2309 = ssub.s32 256, 1
    %2310 = vst [vmem:[%s2307] sm:%s2309] %v2305
    %s2311 = scalar_lea.vmem %s3, 192
    %v2312 = vld [vmem:[%s2311] sm:$0xff]
    %v2313 = vld [vmem:[%s8] ss:$0 sm:$0xff]
    %v2315 = vshra.s32 %v2313, 8
    %v2316 = vand.u32 %v2315, 255
    %s2318 = sor.u32 256, 64
    %2319 = vbcast.lane.b32.xlu0 %v2316, %s2318
    %v2320 = vpop.permute.xlu0 %2319
    %2321 = xla_tuple %v2320, %v2312, %v17
    %2322 = xla_tuple %2321
    %vm2323 = vcmp.ne.s32.totalorder %v2320, 0
    %v2324 = vsel %vm2323, %v2312, %v17
    %2325 = xla_tuple %v2324
    %s2326 = scalar_lea.vmem [#allocation4], 192
    %s2328 = ssub.s32 256, 1
    %2329 = vst [vmem:[%s2326] sm:%s2328] %v2324
    %s2330 = scalar_lea.vmem %s3, 200
    %v2331 = vld [vmem:[%s2330] sm:$0xff]
    %v2332 = vld [vmem:[%s8] ss:$0 sm:$0xff]
    %v2334 = vshra.s32 %v2332, 8
    %v2335 = vand.u32 %v2334, 255
    %s2337 = sor.u32 256, 72
    %2338 = vbcast.lane.b32.xlu0 %v2335, %s2337
    %v2339 = vpop.permute.xlu0 %2338
    %2340 = xla_tuple %v2339, %v2331, %v17
    %2341 = xla_tuple %2340
    %vm2342 = vcmp.ne.s32.totalorder %v2339, 0
    %v2343 = vsel %vm2342, %v2331, %v17
    %2344 = xla_tuple %v2343
    %s2345 = scalar_lea.vmem [#allocation4], 200
    %s2347 = ssub.s32 256, 1
    %2348 = vst [vmem:[%s2345] sm:%s2347] %v2343
    %s2349 = scalar_lea.vmem %s3, 208
    %v2350 = vld [vmem:[%s2349] sm:$0xff]
    %v2351 = vld [vmem:[%s8] ss:$0 sm:$0xff]
    %v2353 = vshra.s32 %v2351, 8
    %v2354 = vand.u32 %v2353, 255
    %s2356 = sor.u32 256, 80
    %2357 = vbcast.lane.b32.xlu0 %v2354, %s2356
    %v2358 = vpop.permute.xlu0 %2357
    %2359 = xla_tuple %v2358, %v2350, %v17
    %2360 = xla_tuple %2359
    %vm2361 = vcmp.ne.s32.totalorder %v2358, 0
    %v2362 = vsel %vm2361, %v2350, %v17
    %2363 = xla_tuple %v2362
    %s2364 = scalar_lea.vmem [#allocation4], 208
    %s2366 = ssub.s32 256, 1
    %2367 = vst [vmem:[%s2364] sm:%s2366] %v2362
    %s2368 = scalar_lea.vmem %s3, 216
    %v2369 = vld [vmem:[%s2368] sm:$0xff]
    %v2370 = vld [vmem:[%s8] ss:$0 sm:$0xff]
    %v2372 = vshra.s32 %v2370, 8
    %v2373 = vand.u32 %v2372, 255
    %s2375 = sor.u32 256, 88
    %2376 = vbcast.lane.b32.xlu0 %v2373, %s2375
    %v2377 = vpop.permute.xlu0 %2376
    %2378 = xla_tuple %v2377, %v2369, %v17
    %2379 = xla_tuple %2378
    %vm2380 = vcmp.ne.s32.totalorder %v2377, 0
    %v2381 = vsel %vm2380, %v2369, %v17
    %2382 = xla_tuple %v2381
    %s2383 = scalar_lea.vmem [#allocation4], 216
    %s2385 = ssub.s32 256, 1
    %2386 = vst [vmem:[%s2383] sm:%s2385] %v2381
    %s2387 = scalar_lea.vmem %s3, 224
    %v2388 = vld [vmem:[%s2387] sm:$0xff]
    %v2389 = vld [vmem:[%s8] ss:$0 sm:$0xff]
    %v2391 = vshra.s32 %v2389, 8
    %v2392 = vand.u32 %v2391, 255
    %s2394 = sor.u32 256, 96
    %2395 = vbcast.lane.b32.xlu0 %v2392, %s2394
    %v2396 = vpop.permute.xlu0 %2395
    %2397 = xla_tuple %v2396, %v2388, %v17
    %2398 = xla_tuple %2397
    %vm2399 = vcmp.ne.s32.totalorder %v2396, 0
    %v2400 = vsel %vm2399, %v2388, %v17
    %2401 = xla_tuple %v2400
    %s2402 = scalar_lea.vmem [#allocation4], 224
    %s2404 = ssub.s32 256, 1
    %2405 = vst [vmem:[%s2402] sm:%s2404] %v2400
    %s2406 = scalar_lea.vmem %s3, 232
    %v2407 = vld [vmem:[%s2406] sm:$0xff]
    %v2408 = vld [vmem:[%s8] ss:$0 sm:$0xff]
    %v2410 = vshra.s32 %v2408, 8
    %v2411 = vand.u32 %v2410, 255
    %s2413 = sor.u32 256, 104
    %2414 = vbcast.lane.b32.xlu0 %v2411, %s2413
    %v2415 = vpop.permute.xlu0 %2414
    %2416 = xla_tuple %v2415, %v2407, %v17
    %2417 = xla_tuple %2416
    %vm2418 = vcmp.ne.s32.totalorder %v2415, 0
    %v2419 = vsel %vm2418, %v2407, %v17
    %2420 = xla_tuple %v2419
    %s2421 = scalar_lea.vmem [#allocation4], 232
    %s2423 = ssub.s32 256, 1
    %2424 = vst [vmem:[%s2421] sm:%s2423] %v2419
    %s2425 = scalar_lea.vmem %s3, 240
    %v2426 = vld [vmem:[%s2425] sm:$0xff]
    %v2427 = vld [vmem:[%s8] ss:$0 sm:$0xff]
    %v2429 = vshra.s32 %v2427, 8
    %v2430 = vand.u32 %v2429, 255
    %s2432 = sor.u32 256, 112
    %2433 = vbcast.lane.b32.xlu0 %v2430, %s2432
    %v2434 = vpop.permute.xlu0 %2433
    %2435 = xla_tuple %v2434, %v2426, %v17
    %2436 = xla_tuple %2435
    %vm2437 = vcmp.ne.s32.totalorder %v2434, 0
    %v2438 = vsel %vm2437, %v2426, %v17
    %2439 = xla_tuple %v2438
    %s2440 = scalar_lea.vmem [#allocation4], 240
    %s2442 = ssub.s32 256, 1
    %2443 = vst [vmem:[%s2440] sm:%s2442] %v2438
    %s2444 = scalar_lea.vmem %s3, 248
    %v2445 = vld [vmem:[%s2444] sm:$0xff]
    %v2446 = vld [vmem:[%s8] ss:$0 sm:$0xff]
    %v2448 = vshra.s32 %v2446, 8
    %v2449 = vand.u32 %v2448, 255
    %s2451 = sor.u32 256, 120
    %2452 = vbcast.lane.b32.xlu0 %v2449, %s2451
    %v2453 = vpop.permute.xlu0 %2452
    %2454 = xla_tuple %v2453, %v2445, %v17
    %2455 = xla_tuple %2454
    %vm2456 = vcmp.ne.s32.totalorder %v2453, 0
    %v2457 = vsel %vm2456, %v2445, %v17
    %2458 = xla_tuple %v2457
    %s2459 = scalar_lea.vmem [#allocation4], 248
    %s2461 = ssub.s32 256, 1
    %2462 = vst [vmem:[%s2459] sm:%s2461] %v2457
    %s2463 = scalar_lea.vmem %s3, 256
    %v2464 = vld [vmem:[%s2463] sm:$0xff]
    %v2465 = vld [vmem:[%s8] ss:$0 sm:$0xff]
    %v2467 = vshra.s32 %v2465, 16
    %v2468 = vand.u32 %v2467, 255
    %2470 = vbcast.lane.b32.xlu0 %v2468, 256
    %v2471 = vpop.permute.xlu0 %2470
    %2472 = xla_tuple %v2471, %v2464, %v17
    %2473 = xla_tuple %2472
    %vm2474 = vcmp.ne.s32.totalorder %v2471, 0
    %v2475 = vsel %vm2474, %v2464, %v17
    %2476 = xla_tuple %v2475
    %s2477 = scalar_lea.vmem [#allocation4], 256
    %s2479 = ssub.s32 256, 1
    %2480 = vst [vmem:[%s2477] sm:%s2479] %v2475
    %s2481 = scalar_lea.vmem %s3, 264
    %v2482 = vld [vmem:[%s2481] sm:$0xff]
    %v2483 = vld [vmem:[%s8] ss:$0 sm:$0xff]
    %v2485 = vshra.s32 %v2483, 16
    %v2486 = vand.u32 %v2485, 255
    %s2488 = sor.u32 256, 8
    %2489 = vbcast.lane.b32.xlu0 %v2486, %s2488
    %v2490 = vpop.permute.xlu0 %2489
    %2491 = xla_tuple %v2490, %v2482, %v17
    %2492 = xla_tuple %2491
    %vm2493 = vcmp.ne.s32.totalorder %v2490, 0
    %v2494 = vsel %vm2493, %v2482, %v17
    %2495 = xla_tuple %v2494
    %s2496 = scalar_lea.vmem [#allocation4], 264
    %s2498 = ssub.s32 256, 1
    %2499 = vst [vmem:[%s2496] sm:%s2498] %v2494
    %s2500 = scalar_lea.vmem %s3, 272
    %v2501 = vld [vmem:[%s2500] sm:$0xff]
    %v2502 = vld [vmem:[%s8] ss:$0 sm:$0xff]
    %v2504 = vshra.s32 %v2502, 16
    %v2505 = vand.u32 %v2504, 255
    %s2507 = sor.u32 256, 16
    %2508 = vbcast.lane.b32.xlu0 %v2505, %s2507
    %v2509 = vpop.permute.xlu0 %2508
    %2510 = xla_tuple %v2509, %v2501, %v17
    %2511 = xla_tuple %2510
    %vm2512 = vcmp.ne.s32.totalorder %v2509, 0
    %v2513 = vsel %vm2512, %v2501, %v17
    %2514 = xla_tuple %v2513
    %s2515 = scalar_lea.vmem [#allocation4], 272
    %s2517 = ssub.s32 256, 1
    %2518 = vst [vmem:[%s2515] sm:%s2517] %v2513
    %s2519 = scalar_lea.vmem %s3, 280
    %v2520 = vld [vmem:[%s2519] sm:$0xff]
    %v2521 = vld [vmem:[%s8] ss:$0 sm:$0xff]
    %v2523 = vshra.s32 %v2521, 16
    %v2524 = vand.u32 %v2523, 255
    %s2526 = sor.u32 256, 24
    %2527 = vbcast.lane.b32.xlu0 %v2524, %s2526
    %v2528 = vpop.permute.xlu0 %2527
    %2529 = xla_tuple %v2528, %v2520, %v17
    %2530 = xla_tuple %2529
    %vm2531 = vcmp.ne.s32.totalorder %v2528, 0
    %v2532 = vsel %vm2531, %v2520, %v17
    %2533 = xla_tuple %v2532
    %s2534 = scalar_lea.vmem [#allocation4], 280
    %s2536 = ssub.s32 256, 1
    %2537 = vst [vmem:[%s2534] sm:%s2536] %v2532
    %s2538 = scalar_lea.vmem %s3, 288
    %v2539 = vld [vmem:[%s2538] sm:$0xff]
    %v2540 = vld [vmem:[%s8] ss:$0 sm:$0xff]
    %v2542 = vshra.s32 %v2540, 16
    %v2543 = vand.u32 %v2542, 255
    %s2545 = sor.u32 256, 32
    %2546 = vbcast.lane.b32.xlu0 %v2543, %s2545
    %v2547 = vpop.permute.xlu0 %2546
    %2548 = xla_tuple %v2547, %v2539, %v17
    %2549 = xla_tuple %2548
    %vm2550 = vcmp.ne.s32.totalorder %v2547, 0
    %v2551 = vsel %vm2550, %v2539, %v17
    %2552 = xla_tuple %v2551
    %s2553 = scalar_lea.vmem [#allocation4], 288
    %s2555 = ssub.s32 256, 1
    %2556 = vst [vmem:[%s2553] sm:%s2555] %v2551
    %s2557 = scalar_lea.vmem %s3, 296
    %v2558 = vld [vmem:[%s2557] sm:$0xff]
    %v2559 = vld [vmem:[%s8] ss:$0 sm:$0xff]
    %v2561 = vshra.s32 %v2559, 16
    %v2562 = vand.u32 %v2561, 255
    %s2564 = sor.u32 256, 40
    %2565 = vbcast.lane.b32.xlu0 %v2562, %s2564
    %v2566 = vpop.permute.xlu0 %2565
    %2567 = xla_tuple %v2566, %v2558, %v17
    %2568 = xla_tuple %2567
    %vm2569 = vcmp.ne.s32.totalorder %v2566, 0
    %v2570 = vsel %vm2569, %v2558, %v17
    %2571 = xla_tuple %v2570
    %s2572 = scalar_lea.vmem [#allocation4], 296
    %s2574 = ssub.s32 256, 1
    %2575 = vst [vmem:[%s2572] sm:%s2574] %v2570
    %s2576 = scalar_lea.vmem %s3, 304
    %v2577 = vld [vmem:[%s2576] sm:$0xff]
    %v2578 = vld [vmem:[%s8] ss:$0 sm:$0xff]
    %v2580 = vshra.s32 %v2578, 16
    %v2581 = vand.u32 %v2580, 255
    %s2583 = sor.u32 256, 48
    %2584 = vbcast.lane.b32.xlu0 %v2581, %s2583
    %v2585 = vpop.permute.xlu0 %2584
    %2586 = xla_tuple %v2585, %v2577, %v17
    %2587 = xla_tuple %2586
    %vm2588 = vcmp.ne.s32.totalorder %v2585, 0
    %v2589 = vsel %vm2588, %v2577, %v17
    %2590 = xla_tuple %v2589
    %s2591 = scalar_lea.vmem [#allocation4], 304
    %s2593 = ssub.s32 256, 1
    %2594 = vst [vmem:[%s2591] sm:%s2593] %v2589
    %s2595 = scalar_lea.vmem %s3, 312
    %v2596 = vld [vmem:[%s2595] sm:$0xff]
    %v2597 = vld [vmem:[%s8] ss:$0 sm:$0xff]
    %v2599 = vshra.s32 %v2597, 16
    %v2600 = vand.u32 %v2599, 255
    %s2602 = sor.u32 256, 56
    %2603 = vbcast.lane.b32.xlu0 %v2600, %s2602
    %v2604 = vpop.permute.xlu0 %2603
    %2605 = xla_tuple %v2604, %v2596, %v17
    %2606 = xla_tuple %2605
    %vm2607 = vcmp.ne.s32.totalorder %v2604, 0
    %v2608 = vsel %vm2607, %v2596, %v17
    %2609 = xla_tuple %v2608
    %s2610 = scalar_lea.vmem [#allocation4], 312
    %s2612 = ssub.s32 256, 1
    %2613 = vst [vmem:[%s2610] sm:%s2612] %v2608
    %s2614 = scalar_lea.vmem %s3, 320
    %v2615 = vld [vmem:[%s2614] sm:$0xff]
    %v2616 = vld [vmem:[%s8] ss:$0 sm:$0xff]
    %v2618 = vshra.s32 %v2616, 16
    %v2619 = vand.u32 %v2618, 255
    %s2621 = sor.u32 256, 64
    %2622 = vbcast.lane.b32.xlu0 %v2619, %s2621
    %v2623 = vpop.permute.xlu0 %2622
    %2624 = xla_tuple %v2623, %v2615, %v17
    %2625 = xla_tuple %2624
    %vm2626 = vcmp.ne.s32.totalorder %v2623, 0
    %v2627 = vsel %vm2626, %v2615, %v17
    %2628 = xla_tuple %v2627
    %s2629 = scalar_lea.vmem [#allocation4], 320
    %s2631 = ssub.s32 256, 1
    %2632 = vst [vmem:[%s2629] sm:%s2631] %v2627
    %s2633 = scalar_lea.vmem %s3, 328
    %v2634 = vld [vmem:[%s2633] sm:$0xff]
    %v2635 = vld [vmem:[%s8] ss:$0 sm:$0xff]
    %v2637 = vshra.s32 %v2635, 16
    %v2638 = vand.u32 %v2637, 255
    %s2640 = sor.u32 256, 72
    %2641 = vbcast.lane.b32.xlu0 %v2638, %s2640
    %v2642 = vpop.permute.xlu0 %2641
    %2643 = xla_tuple %v2642, %v2634, %v17
    %2644 = xla_tuple %2643
    %vm2645 = vcmp.ne.s32.totalorder %v2642, 0
    %v2646 = vsel %vm2645, %v2634, %v17
    %2647 = xla_tuple %v2646
    %s2648 = scalar_lea.vmem [#allocation4], 328
    %s2650 = ssub.s32 256, 1
    %2651 = vst [vmem:[%s2648] sm:%s2650] %v2646
    %s2652 = scalar_lea.vmem %s3, 336
    %v2653 = vld [vmem:[%s2652] sm:$0xff]
    %v2654 = vld [vmem:[%s8] ss:$0 sm:$0xff]
    %v2656 = vshra.s32 %v2654, 16
    %v2657 = vand.u32 %v2656, 255
    %s2659 = sor.u32 256, 80
    %2660 = vbcast.lane.b32.xlu0 %v2657, %s2659
    %v2661 = vpop.permute.xlu0 %2660
    %2662 = xla_tuple %v2661, %v2653, %v17
    %2663 = xla_tuple %2662
    %vm2664 = vcmp.ne.s32.totalorder %v2661, 0
    %v2665 = vsel %vm2664, %v2653, %v17
    %2666 = xla_tuple %v2665
    %s2667 = scalar_lea.vmem [#allocation4], 336
    %s2669 = ssub.s32 256, 1
    %2670 = vst [vmem:[%s2667] sm:%s2669] %v2665
    %s2671 = scalar_lea.vmem %s3, 344
    %v2672 = vld [vmem:[%s2671] sm:$0xff]
    %v2673 = vld [vmem:[%s8] ss:$0 sm:$0xff]
    %v2675 = vshra.s32 %v2673, 16
    %v2676 = vand.u32 %v2675, 255
    %s2678 = sor.u32 256, 88
    %2679 = vbcast.lane.b32.xlu0 %v2676, %s2678
    %v2680 = vpop.permute.xlu0 %2679
    %2681 = xla_tuple %v2680, %v2672, %v17
    %2682 = xla_tuple %2681
    %vm2683 = vcmp.ne.s32.totalorder %v2680, 0
    %v2684 = vsel %vm2683, %v2672, %v17
    %2685 = xla_tuple %v2684
    %s2686 = scalar_lea.vmem [#allocation4], 344
    %s2688 = ssub.s32 256, 1
    %2689 = vst [vmem:[%s2686] sm:%s2688] %v2684
    %s2690 = scalar_lea.vmem %s3, 352
    %v2691 = vld [vmem:[%s2690] sm:$0xff]
    %v2692 = vld [vmem:[%s8] ss:$0 sm:$0xff]
    %v2694 = vshra.s32 %v2692, 16
    %v2695 = vand.u32 %v2694, 255
    %s2697 = sor.u32 256, 96
    %2698 = vbcast.lane.b32.xlu0 %v2695, %s2697
    %v2699 = vpop.permute.xlu0 %2698
    %2700 = xla_tuple %v2699, %v2691, %v17
    %2701 = xla_tuple %2700
    %vm2702 = vcmp.ne.s32.totalorder %v2699, 0
    %v2703 = vsel %vm2702, %v2691, %v17
    %2704 = xla_tuple %v2703
    %s2705 = scalar_lea.vmem [#allocation4], 352
    %s2707 = ssub.s32 256, 1
    %2708 = vst [vmem:[%s2705] sm:%s2707] %v2703
    %s2709 = scalar_lea.vmem %s3, 360
    %v2710 = vld [vmem:[%s2709] sm:$0xff]
    %v2711 = vld [vmem:[%s8] ss:$0 sm:$0xff]
    %v2713 = vshra.s32 %v2711, 16
    %v2714 = vand.u32 %v2713, 255
    %s2716 = sor.u32 256, 104
    %2717 = vbcast.lane.b32.xlu0 %v2714, %s2716
    %v2718 = vpop.permute.xlu0 %2717
    %2719 = xla_tuple %v2718, %v2710, %v17
    %2720 = xla_tuple %2719
    %vm2721 = vcmp.ne.s32.totalorder %v2718, 0
    %v2722 = vsel %vm2721, %v2710, %v17
    %2723 = xla_tuple %v2722
    %s2724 = scalar_lea.vmem [#allocation4], 360
    %s2726 = ssub.s32 256, 1
    %2727 = vst [vmem:[%s2724] sm:%s2726] %v2722
    %s2728 = scalar_lea.vmem %s3, 368
    %v2729 = vld [vmem:[%s2728] sm:$0xff]
    %v2730 = vld [vmem:[%s8] ss:$0 sm:$0xff]
    %v2732 = vshra.s32 %v2730, 16
    %v2733 = vand.u32 %v2732, 255
    %s2735 = sor.u32 256, 112
    %2736 = vbcast.lane.b32.xlu0 %v2733, %s2735
    %v2737 = vpop.permute.xlu0 %2736
    %2738 = xla_tuple %v2737, %v2729, %v17
    %2739 = xla_tuple %2738
    %vm2740 = vcmp.ne.s32.totalorder %v2737, 0
    %v2741 = vsel %vm2740, %v2729, %v17
    %2742 = xla_tuple %v2741
    %s2743 = scalar_lea.vmem [#allocation4], 368
    %s2745 = ssub.s32 256, 1
    %2746 = vst [vmem:[%s2743] sm:%s2745] %v2741
    %s2747 = scalar_lea.vmem %s3, 376
    %v2748 = vld [vmem:[%s2747] sm:$0xff]
    %v2749 = vld [vmem:[%s8] ss:$0 sm:$0xff]
    %v2751 = vshra.s32 %v2749, 16
    %v2752 = vand.u32 %v2751, 255
    %s2754 = sor.u32 256, 120
    %2755 = vbcast.lane.b32.xlu0 %v2752, %s2754
    %v2756 = vpop.permute.xlu0 %2755
    %2757 = xla_tuple %v2756, %v2748, %v17
    %2758 = xla_tuple %2757
    %vm2759 = vcmp.ne.s32.totalorder %v2756, 0
    %v2760 = vsel %vm2759, %v2748, %v17
    %2761 = xla_tuple %v2760
    %s2762 = scalar_lea.vmem [#allocation4], 376
    %s2764 = ssub.s32 256, 1
    %2765 = vst [vmem:[%s2762] sm:%s2764] %v2760
    %v2766 = vld [vmem:[%s2] sm:$0xff]
    %v2767 = vld [vmem:[%s8] ss:$0 sm:$0xff]
    %v2769 = vshra.s32 %v2767, 0
    %v2770 = vand.u32 %v2769, 255
    %2772 = vbcast.lane.b32.xlu0 %v2770, 256
    %v2773 = vpop.permute.xlu0 %2772
    %2774 = xla_tuple %v2773, %v2766, %v18
    %2775 = xla_tuple %2774
    %vm2776 = vcmp.ne.s32.totalorder %v2773, 0
    %v2777 = vsel %vm2776, %v2766, %v18
    %2778 = xla_tuple %v2777
    %s2780 = ssub.s32 256, 1
    %2781 = vst [vmem:[#allocation5] sm:%s2780] %v2777
    %s2782 = scalar_lea.vmem %s2, 8
    %v2783 = vld [vmem:[%s2782] sm:$0xff]
    %v2784 = vld [vmem:[%s8] ss:$0 sm:$0xff]
    %v2786 = vshra.s32 %v2784, 0
    %v2787 = vand.u32 %v2786, 255
    %s2789 = sor.u32 256, 8
    %2790 = vbcast.lane.b32.xlu0 %v2787, %s2789
    %v2791 = vpop.permute.xlu0 %2790
    %2792 = xla_tuple %v2791, %v2783, %v18
    %2793 = xla_tuple %2792
    %vm2794 = vcmp.ne.s32.totalorder %v2791, 0
    %v2795 = vsel %vm2794, %v2783, %v18
    %2796 = xla_tuple %v2795
    %s2797 = scalar_lea.vmem [#allocation5], 8
    %s2799 = ssub.s32 256, 1
    %2800 = vst [vmem:[%s2797] sm:%s2799] %v2795
    %s2801 = scalar_lea.vmem %s2, 16
    %v2802 = vld [vmem:[%s2801] sm:$0xff]
    %v2803 = vld [vmem:[%s8] ss:$0 sm:$0xff]
    %v2805 = vshra.s32 %v2803, 0
    %v2806 = vand.u32 %v2805, 255
    %s2808 = sor.u32 256, 16
    %2809 = vbcast.lane.b32.xlu0 %v2806, %s2808
    %v2810 = vpop.permute.xlu0 %2809
    %2811 = xla_tuple %v2810, %v2802, %v18
    %2812 = xla_tuple %2811
    %vm2813 = vcmp.ne.s32.totalorder %v2810, 0
    %v2814 = vsel %vm2813, %v2802, %v18
    %2815 = xla_tuple %v2814
    %s2816 = scalar_lea.vmem [#allocation5], 16
    %s2818 = ssub.s32 256, 1
    %2819 = vst [vmem:[%s2816] sm:%s2818] %v2814
    %s2820 = scalar_lea.vmem %s2, 24
    %v2821 = vld [vmem:[%s2820] sm:$0xff]
    %v2822 = vld [vmem:[%s8] ss:$0 sm:$0xff]
    %v2824 = vshra.s32 %v2822, 0
    %v2825 = vand.u32 %v2824, 255
    %s2827 = sor.u32 256, 24
    %2828 = vbcast.lane.b32.xlu0 %v2825, %s2827
    %v2829 = vpop.permute.xlu0 %2828
    %2830 = xla_tuple %v2829, %v2821, %v18
    %2831 = xla_tuple %2830
    %vm2832 = vcmp.ne.s32.totalorder %v2829, 0
    %v2833 = vsel %vm2832, %v2821, %v18
    %2834 = xla_tuple %v2833
    %s2835 = scalar_lea.vmem [#allocation5], 24
    %s2837 = ssub.s32 256, 1
    %2838 = vst [vmem:[%s2835] sm:%s2837] %v2833
    %s2839 = scalar_lea.vmem %s2, 32
    %v2840 = vld [vmem:[%s2839] sm:$0xff]
    %v2841 = vld [vmem:[%s8] ss:$0 sm:$0xff]
    %v2843 = vshra.s32 %v2841, 0
    %v2844 = vand.u32 %v2843, 255
    %s2846 = sor.u32 256, 32
    %2847 = vbcast.lane.b32.xlu0 %v2844, %s2846
    %v2848 = vpop.permute.xlu0 %2847
    %2849 = xla_tuple %v2848, %v2840, %v18
    %2850 = xla_tuple %2849
    %vm2851 = vcmp.ne.s32.totalorder %v2848, 0
    %v2852 = vsel %vm2851, %v2840, %v18
    %2853 = xla_tuple %v2852
    %s2854 = scalar_lea.vmem [#allocation5], 32
    %s2856 = ssub.s32 256, 1
    %2857 = vst [vmem:[%s2854] sm:%s2856] %v2852
    %s2858 = scalar_lea.vmem %s2, 40
    %v2859 = vld [vmem:[%s2858] sm:$0xff]
    %v2860 = vld [vmem:[%s8] ss:$0 sm:$0xff]
    %v2862 = vshra.s32 %v2860, 0
    %v2863 = vand.u32 %v2862, 255
    %s2865 = sor.u32 256, 40
    %2866 = vbcast.lane.b32.xlu0 %v2863, %s2865
    %v2867 = vpop.permute.xlu0 %2866
    %2868 = xla_tuple %v2867, %v2859, %v18
    %2869 = xla_tuple %2868
    %vm2870 = vcmp.ne.s32.totalorder %v2867, 0
    %v2871 = vsel %vm2870, %v2859, %v18
    %2872 = xla_tuple %v2871
    %s2873 = scalar_lea.vmem [#allocation5], 40
    %s2875 = ssub.s32 256, 1
    %2876 = vst [vmem:[%s2873] sm:%s2875] %v2871
    %s2877 = scalar_lea.vmem %s2, 48
    %v2878 = vld [vmem:[%s2877] sm:$0xff]
    %v2879 = vld [vmem:[%s8] ss:$0 sm:$0xff]
    %v2881 = vshra.s32 %v2879, 0
    %v2882 = vand.u32 %v2881, 255
    %s2884 = sor.u32 256, 48
    %2885 = vbcast.lane.b32.xlu0 %v2882, %s2884
    %v2886 = vpop.permute.xlu0 %2885
    %2887 = xla_tuple %v2886, %v2878, %v18
    %2888 = xla_tuple %2887
    %vm2889 = vcmp.ne.s32.totalorder %v2886, 0
    %v2890 = vsel %vm2889, %v2878, %v18
    %2891 = xla_tuple %v2890
    %s2892 = scalar_lea.vmem [#allocation5], 48
    %s2894 = ssub.s32 256, 1
    %2895 = vst [vmem:[%s2892] sm:%s2894] %v2890
    %s2896 = scalar_lea.vmem %s2, 56
    %v2897 = vld [vmem:[%s2896] sm:$0xff]
    %v2898 = vld [vmem:[%s8] ss:$0 sm:$0xff]
    %v2900 = vshra.s32 %v2898, 0
    %v2901 = vand.u32 %v2900, 255
    %s2903 = sor.u32 256, 56
    %2904 = vbcast.lane.b32.xlu0 %v2901, %s2903
    %v2905 = vpop.permute.xlu0 %2904
    %2906 = xla_tuple %v2905, %v2897, %v18
    %2907 = xla_tuple %2906
    %vm2908 = vcmp.ne.s32.totalorder %v2905, 0
    %v2909 = vsel %vm2908, %v2897, %v18
    %2910 = xla_tuple %v2909
    %s2911 = scalar_lea.vmem [#allocation5], 56
    %s2913 = ssub.s32 256, 1
    %2914 = vst [vmem:[%s2911] sm:%s2913] %v2909
    %s2915 = scalar_lea.vmem %s2, 64
    %v2916 = vld [vmem:[%s2915] sm:$0xff]
    %v2917 = vld [vmem:[%s8] ss:$0 sm:$0xff]
    %v2919 = vshra.s32 %v2917, 0
    %v2920 = vand.u32 %v2919, 255
    %s2922 = sor.u32 256, 64
    %2923 = vbcast.lane.b32.xlu0 %v2920, %s2922
    %v2924 = vpop.permute.xlu0 %2923
    %2925 = xla_tuple %v2924, %v2916, %v18
    %2926 = xla_tuple %2925
    %vm2927 = vcmp.ne.s32.totalorder %v2924, 0
    %v2928 = vsel %vm2927, %v2916, %v18
    %2929 = xla_tuple %v2928
    %s2930 = scalar_lea.vmem [#allocation5], 64
    %s2932 = ssub.s32 256, 1
    %2933 = vst [vmem:[%s2930] sm:%s2932] %v2928
    %s2934 = scalar_lea.vmem %s2, 72
    %v2935 = vld [vmem:[%s2934] sm:$0xff]
    %v2936 = vld [vmem:[%s8] ss:$0 sm:$0xff]
    %v2938 = vshra.s32 %v2936, 0
    %v2939 = vand.u32 %v2938, 255
    %s2941 = sor.u32 256, 72
    %2942 = vbcast.lane.b32.xlu0 %v2939, %s2941
    %v2943 = vpop.permute.xlu0 %2942
    %2944 = xla_tuple %v2943, %v2935, %v18
    %2945 = xla_tuple %2944
    %vm2946 = vcmp.ne.s32.totalorder %v2943, 0
    %v2947 = vsel %vm2946, %v2935, %v18
    %2948 = xla_tuple %v2947
    %s2949 = scalar_lea.vmem [#allocation5], 72
    %s2951 = ssub.s32 256, 1
    %2952 = vst [vmem:[%s2949] sm:%s2951] %v2947
    %s2953 = scalar_lea.vmem %s2, 80
    %v2954 = vld [vmem:[%s2953] sm:$0xff]
    %v2955 = vld [vmem:[%s8] ss:$0 sm:$0xff]
    %v2957 = vshra.s32 %v2955, 0
    %v2958 = vand.u32 %v2957, 255
    %s2960 = sor.u32 256, 80
    %2961 = vbcast.lane.b32.xlu0 %v2958, %s2960
    %v2962 = vpop.permute.xlu0 %2961
    %2963 = xla_tuple %v2962, %v2954, %v18
    %2964 = xla_tuple %2963
    %vm2965 = vcmp.ne.s32.totalorder %v2962, 0
    %v2966 = vsel %vm2965, %v2954, %v18
    %2967 = xla_tuple %v2966
    %s2968 = scalar_lea.vmem [#allocation5], 80
    %s2970 = ssub.s32 256, 1
    %2971 = vst [vmem:[%s2968] sm:%s2970] %v2966
    %s2972 = scalar_lea.vmem %s2, 88
    %v2973 = vld [vmem:[%s2972] sm:$0xff]
    %v2974 = vld [vmem:[%s8] ss:$0 sm:$0xff]
    %v2976 = vshra.s32 %v2974, 0
    %v2977 = vand.u32 %v2976, 255
    %s2979 = sor.u32 256, 88
    %2980 = vbcast.lane.b32.xlu0 %v2977, %s2979
    %v2981 = vpop.permute.xlu0 %2980
    %2982 = xla_tuple %v2981, %v2973, %v18
    %2983 = xla_tuple %2982
    %vm2984 = vcmp.ne.s32.totalorder %v2981, 0
    %v2985 = vsel %vm2984, %v2973, %v18
    %2986 = xla_tuple %v2985
    %s2987 = scalar_lea.vmem [#allocation5], 88
    %s2989 = ssub.s32 256, 1
    %2990 = vst [vmem:[%s2987] sm:%s2989] %v2985
    %s2991 = scalar_lea.vmem %s2, 96
    %v2992 = vld [vmem:[%s2991] sm:$0xff]
    %v2993 = vld [vmem:[%s8] ss:$0 sm:$0xff]
    %v2995 = vshra.s32 %v2993, 0
    %v2996 = vand.u32 %v2995, 255
    %s2998 = sor.u32 256, 96
    %2999 = vbcast.lane.b32.xlu0 %v2996, %s2998
    %v3000 = vpop.permute.xlu0 %2999
    %3001 = xla_tuple %v3000, %v2992, %v18
    %3002 = xla_tuple %3001
    %vm3003 = vcmp.ne.s32.totalorder %v3000, 0
    %v3004 = vsel %vm3003, %v2992, %v18
    %3005 = xla_tuple %v3004
    %s3006 = scalar_lea.vmem [#allocation5], 96
    %s3008 = ssub.s32 256, 1
    %3009 = vst [vmem:[%s3006] sm:%s3008] %v3004
    %s3010 = scalar_lea.vmem %s2, 104
    %v3011 = vld [vmem:[%s3010] sm:$0xff]
    %v3012 = vld [vmem:[%s8] ss:$0 sm:$0xff]
    %v3014 = vshra.s32 %v3012, 0
    %v3015 = vand.u32 %v3014, 255
    %s3017 = sor.u32 256, 104
    %3018 = vbcast.lane.b32.xlu0 %v3015, %s3017
    %v3019 = vpop.permute.xlu0 %3018
    %3020 = xla_tuple %v3019, %v3011, %v18
    %3021 = xla_tuple %3020
    %vm3022 = vcmp.ne.s32.totalorder %v3019, 0
    %v3023 = vsel %vm3022, %v3011, %v18
    %3024 = xla_tuple %v3023
    %s3025 = scalar_lea.vmem [#allocation5], 104
    %s3027 = ssub.s32 256, 1
    %3028 = vst [vmem:[%s3025] sm:%s3027] %v3023
    %s3029 = scalar_lea.vmem %s2, 112
    %v3030 = vld [vmem:[%s3029] sm:$0xff]
    %v3031 = vld [vmem:[%s8] ss:$0 sm:$0xff]
    %v3033 = vshra.s32 %v3031, 0
    %v3034 = vand.u32 %v3033, 255
    %s3036 = sor.u32 256, 112
    %3037 = vbcast.lane.b32.xlu0 %v3034, %s3036
    %v3038 = vpop.permute.xlu0 %3037
    %3039 = xla_tuple %v3038, %v3030, %v18
    %3040 = xla_tuple %3039
    %vm3041 = vcmp.ne.s32.totalorder %v3038, 0
    %v3042 = vsel %vm3041, %v3030, %v18
    %3043 = xla_tuple %v3042
    %s3044 = scalar_lea.vmem [#allocation5], 112
    %s3046 = ssub.s32 256, 1
    %3047 = vst [vmem:[%s3044] sm:%s3046] %v3042
    %s3048 = scalar_lea.vmem %s2, 120
    %v3049 = vld [vmem:[%s3048] sm:$0xff]
    %v3050 = vld [vmem:[%s8] ss:$0 sm:$0xff]
    %v3052 = vshra.s32 %v3050, 0
    %v3053 = vand.u32 %v3052, 255
    %s3055 = sor.u32 256, 120
    %3056 = vbcast.lane.b32.xlu0 %v3053, %s3055
    %v3057 = vpop.permute.xlu0 %3056
    %3058 = xla_tuple %v3057, %v3049, %v18
    %3059 = xla_tuple %3058
    %vm3060 = vcmp.ne.s32.totalorder %v3057, 0
    %v3061 = vsel %vm3060, %v3049, %v18
    %3062 = xla_tuple %v3061
    %s3063 = scalar_lea.vmem [#allocation5], 120
    %s3065 = ssub.s32 256, 1
    %3066 = vst [vmem:[%s3063] sm:%s3065] %v3061
    %s3067 = scalar_lea.vmem %s2, 128
    %v3068 = vld [vmem:[%s3067] sm:$0xff]
    %v3069 = vld [vmem:[%s8] ss:$0 sm:$0xff]
    %v3071 = vshra.s32 %v3069, 8
    %v3072 = vand.u32 %v3071, 255
    %3074 = vbcast.lane.b32.xlu0 %v3072, 256
    %v3075 = vpop.permute.xlu0 %3074
    %3076 = xla_tuple %v3075, %v3068, %v18
    %3077 = xla_tuple %3076
    %vm3078 = vcmp.ne.s32.totalorder %v3075, 0
    %v3079 = vsel %vm3078, %v3068, %v18
    %3080 = xla_tuple %v3079
    %s3081 = scalar_lea.vmem [#allocation5], 128
    %s3083 = ssub.s32 256, 1
    %3084 = vst [vmem:[%s3081] sm:%s3083] %v3079
    %s3085 = scalar_lea.vmem %s2, 136
    %v3086 = vld [vmem:[%s3085] sm:$0xff]
    %v3087 = vld [vmem:[%s8] ss:$0 sm:$0xff]
    %v3089 = vshra.s32 %v3087, 8
    %v3090 = vand.u32 %v3089, 255
    %s3092 = sor.u32 256, 8
    %3093 = vbcast.lane.b32.xlu0 %v3090, %s3092
    %v3094 = vpop.permute.xlu0 %3093
    %3095 = xla_tuple %v3094, %v3086, %v18
    %3096 = xla_tuple %3095
    %vm3097 = vcmp.ne.s32.totalorder %v3094, 0
    %v3098 = vsel %vm3097, %v3086, %v18
    %3099 = xla_tuple %v3098
    %s3100 = scalar_lea.vmem [#allocation5], 136
    %s3102 = ssub.s32 256, 1
    %3103 = vst [vmem:[%s3100] sm:%s3102] %v3098
    %s3104 = scalar_lea.vmem %s2, 144
    %v3105 = vld [vmem:[%s3104] sm:$0xff]
    %v3106 = vld [vmem:[%s8] ss:$0 sm:$0xff]
    %v3108 = vshra.s32 %v3106, 8
    %v3109 = vand.u32 %v3108, 255
    %s3111 = sor.u32 256, 16
    %3112 = vbcast.lane.b32.xlu0 %v3109, %s3111
    %v3113 = vpop.permute.xlu0 %3112
    %3114 = xla_tuple %v3113, %v3105, %v18
    %3115 = xla_tuple %3114
    %vm3116 = vcmp.ne.s32.totalorder %v3113, 0
    %v3117 = vsel %vm3116, %v3105, %v18
    %3118 = xla_tuple %v3117
    %s3119 = scalar_lea.vmem [#allocation5], 144
    %s3121 = ssub.s32 256, 1
    %3122 = vst [vmem:[%s3119] sm:%s3121] %v3117
    %s3123 = scalar_lea.vmem %s2, 152
    %v3124 = vld [vmem:[%s3123] sm:$0xff]
    %v3125 = vld [vmem:[%s8] ss:$0 sm:$0xff]
    %v3127 = vshra.s32 %v3125, 8
    %v3128 = vand.u32 %v3127, 255
    %s3130 = sor.u32 256, 24
    %3131 = vbcast.lane.b32.xlu0 %v3128, %s3130
    %v3132 = vpop.permute.xlu0 %3131
    %3133 = xla_tuple %v3132, %v3124, %v18
    %3134 = xla_tuple %3133
    %vm3135 = vcmp.ne.s32.totalorder %v3132, 0
    %v3136 = vsel %vm3135, %v3124, %v18
    %3137 = xla_tuple %v3136
    %s3138 = scalar_lea.vmem [#allocation5], 152
    %s3140 = ssub.s32 256, 1
    %3141 = vst [vmem:[%s3138] sm:%s3140] %v3136
    %s3142 = scalar_lea.vmem %s2, 160
    %v3143 = vld [vmem:[%s3142] sm:$0xff]
    %v3144 = vld [vmem:[%s8] ss:$0 sm:$0xff]
    %v3146 = vshra.s32 %v3144, 8
    %v3147 = vand.u32 %v3146, 255
    %s3149 = sor.u32 256, 32
    %3150 = vbcast.lane.b32.xlu0 %v3147, %s3149
    %v3151 = vpop.permute.xlu0 %3150
    %3152 = xla_tuple %v3151, %v3143, %v18
    %3153 = xla_tuple %3152
    %vm3154 = vcmp.ne.s32.totalorder %v3151, 0
    %v3155 = vsel %vm3154, %v3143, %v18
    %3156 = xla_tuple %v3155
    %s3157 = scalar_lea.vmem [#allocation5], 160
    %s3159 = ssub.s32 256, 1
    %3160 = vst [vmem:[%s3157] sm:%s3159] %v3155
    %s3161 = scalar_lea.vmem %s2, 168
    %v3162 = vld [vmem:[%s3161] sm:$0xff]
    %v3163 = vld [vmem:[%s8] ss:$0 sm:$0xff]
    %v3165 = vshra.s32 %v3163, 8
    %v3166 = vand.u32 %v3165, 255
    %s3168 = sor.u32 256, 40
    %3169 = vbcast.lane.b32.xlu0 %v3166, %s3168
    %v3170 = vpop.permute.xlu0 %3169
    %3171 = xla_tuple %v3170, %v3162, %v18
    %3172 = xla_tuple %3171
    %vm3173 = vcmp.ne.s32.totalorder %v3170, 0
    %v3174 = vsel %vm3173, %v3162, %v18
    %3175 = xla_tuple %v3174
    %s3176 = scalar_lea.vmem [#allocation5], 168
    %s3178 = ssub.s32 256, 1
    %3179 = vst [vmem:[%s3176] sm:%s3178] %v3174
    %s3180 = scalar_lea.vmem %s2, 176
    %v3181 = vld [vmem:[%s3180] sm:$0xff]
    %v3182 = vld [vmem:[%s8] ss:$0 sm:$0xff]
    %v3184 = vshra.s32 %v3182, 8
    %v3185 = vand.u32 %v3184, 255
    %s3187 = sor.u32 256, 48
    %3188 = vbcast.lane.b32.xlu0 %v3185, %s3187
    %v3189 = vpop.permute.xlu0 %3188
    %3190 = xla_tuple %v3189, %v3181, %v18
    %3191 = xla_tuple %3190
    %vm3192 = vcmp.ne.s32.totalorder %v3189, 0
    %v3193 = vsel %vm3192, %v3181, %v18
    %3194 = xla_tuple %v3193
    %s3195 = scalar_lea.vmem [#allocation5], 176
    %s3197 = ssub.s32 256, 1
    %3198 = vst [vmem:[%s3195] sm:%s3197] %v3193
    %s3199 = scalar_lea.vmem %s2, 184
    %v3200 = vld [vmem:[%s3199] sm:$0xff]
    %v3201 = vld [vmem:[%s8] ss:$0 sm:$0xff]
    %v3203 = vshra.s32 %v3201, 8
    %v3204 = vand.u32 %v3203, 255
    %s3206 = sor.u32 256, 56
    %3207 = vbcast.lane.b32.xlu0 %v3204, %s3206
    %v3208 = vpop.permute.xlu0 %3207
    %3209 = xla_tuple %v3208, %v3200, %v18
    %3210 = xla_tuple %3209
    %vm3211 = vcmp.ne.s32.totalorder %v3208, 0
    %v3212 = vsel %vm3211, %v3200, %v18
    %3213 = xla_tuple %v3212
    %s3214 = scalar_lea.vmem [#allocation5], 184
    %s3216 = ssub.s32 256, 1
    %3217 = vst [vmem:[%s3214] sm:%s3216] %v3212
    %s3218 = scalar_lea.vmem %s2, 192
    %v3219 = vld [vmem:[%s3218] sm:$0xff]
    %v3220 = vld [vmem:[%s8] ss:$0 sm:$0xff]
    %v3222 = vshra.s32 %v3220, 8
    %v3223 = vand.u32 %v3222, 255
    %s3225 = sor.u32 256, 64
    %3226 = vbcast.lane.b32.xlu0 %v3223, %s3225
    %v3227 = vpop.permute.xlu0 %3226
    %3228 = xla_tuple %v3227, %v3219, %v18
    %3229 = xla_tuple %3228
    %vm3230 = vcmp.ne.s32.totalorder %v3227, 0
    %v3231 = vsel %vm3230, %v3219, %v18
    %3232 = xla_tuple %v3231
    %s3233 = scalar_lea.vmem [#allocation5], 192
    %s3235 = ssub.s32 256, 1
    %3236 = vst [vmem:[%s3233] sm:%s3235] %v3231
    %s3237 = scalar_lea.vmem %s2, 200
    %v3238 = vld [vmem:[%s3237] sm:$0xff]
    %v3239 = vld [vmem:[%s8] ss:$0 sm:$0xff]
    %v3241 = vshra.s32 %v3239, 8
    %v3242 = vand.u32 %v3241, 255
    %s3244 = sor.u32 256, 72
    %3245 = vbcast.lane.b32.xlu0 %v3242, %s3244
    %v3246 = vpop.permute.xlu0 %3245
    %3247 = xla_tuple %v3246, %v3238, %v18
    %3248 = xla_tuple %3247
    %vm3249 = vcmp.ne.s32.totalorder %v3246, 0
    %v3250 = vsel %vm3249, %v3238, %v18
    %3251 = xla_tuple %v3250
    %s3252 = scalar_lea.vmem [#allocation5], 200
    %s3254 = ssub.s32 256, 1
    %3255 = vst [vmem:[%s3252] sm:%s3254] %v3250
    %s3256 = scalar_lea.vmem %s2, 208
    %v3257 = vld [vmem:[%s3256] sm:$0xff]
    %v3258 = vld [vmem:[%s8] ss:$0 sm:$0xff]
    %v3260 = vshra.s32 %v3258, 8
    %v3261 = vand.u32 %v3260, 255
    %s3263 = sor.u32 256, 80
    %3264 = vbcast.lane.b32.xlu0 %v3261, %s3263
    %v3265 = vpop.permute.xlu0 %3264
    %3266 = xla_tuple %v3265, %v3257, %v18
    %3267 = xla_tuple %3266
    %vm3268 = vcmp.ne.s32.totalorder %v3265, 0
    %v3269 = vsel %vm3268, %v3257, %v18
    %3270 = xla_tuple %v3269
    %s3271 = scalar_lea.vmem [#allocation5], 208
    %s3273 = ssub.s32 256, 1
    %3274 = vst [vmem:[%s3271] sm:%s3273] %v3269
    %s3275 = scalar_lea.vmem %s2, 216
    %v3276 = vld [vmem:[%s3275] sm:$0xff]
    %v3277 = vld [vmem:[%s8] ss:$0 sm:$0xff]
    %v3279 = vshra.s32 %v3277, 8
    %v3280 = vand.u32 %v3279, 255
    %s3282 = sor.u32 256, 88
    %3283 = vbcast.lane.b32.xlu0 %v3280, %s3282
    %v3284 = vpop.permute.xlu0 %3283
    %3285 = xla_tuple %v3284, %v3276, %v18
    %3286 = xla_tuple %3285
    %vm3287 = vcmp.ne.s32.totalorder %v3284, 0
    %v3288 = vsel %vm3287, %v3276, %v18
    %3289 = xla_tuple %v3288
    %s3290 = scalar_lea.vmem [#allocation5], 216
    %s3292 = ssub.s32 256, 1
    %3293 = vst [vmem:[%s3290] sm:%s3292] %v3288
    %s3294 = scalar_lea.vmem %s2, 224
    %v3295 = vld [vmem:[%s3294] sm:$0xff]
    %v3296 = vld [vmem:[%s8] ss:$0 sm:$0xff]
    %v3298 = vshra.s32 %v3296, 8
    %v3299 = vand.u32 %v3298, 255
    %s3301 = sor.u32 256, 96
    %3302 = vbcast.lane.b32.xlu0 %v3299, %s3301
    %v3303 = vpop.permute.xlu0 %3302
    %3304 = xla_tuple %v3303, %v3295, %v18
    %3305 = xla_tuple %3304
    %vm3306 = vcmp.ne.s32.totalorder %v3303, 0
    %v3307 = vsel %vm3306, %v3295, %v18
    %3308 = xla_tuple %v3307
    %s3309 = scalar_lea.vmem [#allocation5], 224
    %s3311 = ssub.s32 256, 1
    %3312 = vst [vmem:[%s3309] sm:%s3311] %v3307
    %s3313 = scalar_lea.vmem %s2, 232
    %v3314 = vld [vmem:[%s3313] sm:$0xff]
    %v3315 = vld [vmem:[%s8] ss:$0 sm:$0xff]
    %v3317 = vshra.s32 %v3315, 8
    %v3318 = vand.u32 %v3317, 255
    %s3320 = sor.u32 256, 104
    %3321 = vbcast.lane.b32.xlu0 %v3318, %s3320
    %v3322 = vpop.permute.xlu0 %3321
    %3323 = xla_tuple %v3322, %v3314, %v18
    %3324 = xla_tuple %3323
    %vm3325 = vcmp.ne.s32.totalorder %v3322, 0
    %v3326 = vsel %vm3325, %v3314, %v18
    %3327 = xla_tuple %v3326
    %s3328 = scalar_lea.vmem [#allocation5], 232
    %s3330 = ssub.s32 256, 1
    %3331 = vst [vmem:[%s3328] sm:%s3330] %v3326
    %s3332 = scalar_lea.vmem %s2, 240
    %v3333 = vld [vmem:[%s3332] sm:$0xff]
    %v3334 = vld [vmem:[%s8] ss:$0 sm:$0xff]
    %v3336 = vshra.s32 %v3334, 8
    %v3337 = vand.u32 %v3336, 255
    %s3339 = sor.u32 256, 112
    %3340 = vbcast.lane.b32.xlu0 %v3337, %s3339
    %v3341 = vpop.permute.xlu0 %3340
    %3342 = xla_tuple %v3341, %v3333, %v18
    %3343 = xla_tuple %3342
    %vm3344 = vcmp.ne.s32.totalorder %v3341, 0
    %v3345 = vsel %vm3344, %v3333, %v18
    %3346 = xla_tuple %v3345
    %s3347 = scalar_lea.vmem [#allocation5], 240
    %s3349 = ssub.s32 256, 1
    %3350 = vst [vmem:[%s3347] sm:%s3349] %v3345
    %s3351 = scalar_lea.vmem %s2, 248
    %v3352 = vld [vmem:[%s3351] sm:$0xff]
    %v3353 = vld [vmem:[%s8] ss:$0 sm:$0xff]
    %v3355 = vshra.s32 %v3353, 8
    %v3356 = vand.u32 %v3355, 255
    %s3358 = sor.u32 256, 120
    %3359 = vbcast.lane.b32.xlu0 %v3356, %s3358
    %v3360 = vpop.permute.xlu0 %3359
    %3361 = xla_tuple %v3360, %v3352, %v18
    %3362 = xla_tuple %3361
    %vm3363 = vcmp.ne.s32.totalorder %v3360, 0
    %v3364 = vsel %vm3363, %v3352, %v18
    %3365 = xla_tuple %v3364
    %s3366 = scalar_lea.vmem [#allocation5], 248
    %s3368 = ssub.s32 256, 1
    %3369 = vst [vmem:[%s3366] sm:%s3368] %v3364
    %s3370 = scalar_lea.vmem %s2, 256
    %v3371 = vld [vmem:[%s3370] sm:$0xff]
    %v3372 = vld [vmem:[%s8] ss:$0 sm:$0xff]
    %v3374 = vshra.s32 %v3372, 16
    %v3375 = vand.u32 %v3374, 255
    %3377 = vbcast.lane.b32.xlu0 %v3375, 256
    %v3378 = vpop.permute.xlu0 %3377
    %3379 = xla_tuple %v3378, %v3371, %v18
    %3380 = xla_tuple %3379
    %vm3381 = vcmp.ne.s32.totalorder %v3378, 0
    %v3382 = vsel %vm3381, %v3371, %v18
    %3383 = xla_tuple %v3382
    %s3384 = scalar_lea.vmem [#allocation5], 256
    %s3386 = ssub.s32 256, 1
    %3387 = vst [vmem:[%s3384] sm:%s3386] %v3382
    %s3388 = scalar_lea.vmem %s2, 264
    %v3389 = vld [vmem:[%s3388] sm:$0xff]
    %v3390 = vld [vmem:[%s8] ss:$0 sm:$0xff]
    %v3392 = vshra.s32 %v3390, 16
    %v3393 = vand.u32 %v3392, 255
    %s3395 = sor.u32 256, 8
    %3396 = vbcast.lane.b32.xlu0 %v3393, %s3395
    %v3397 = vpop.permute.xlu0 %3396
    %3398 = xla_tuple %v3397, %v3389, %v18
    %3399 = xla_tuple %3398
    %vm3400 = vcmp.ne.s32.totalorder %v3397, 0
    %v3401 = vsel %vm3400, %v3389, %v18
    %3402 = xla_tuple %v3401
    %s3403 = scalar_lea.vmem [#allocation5], 264
    %s3405 = ssub.s32 256, 1
    %3406 = vst [vmem:[%s3403] sm:%s3405] %v3401
    %s3407 = scalar_lea.vmem %s2, 272
    %v3408 = vld [vmem:[%s3407] sm:$0xff]
    %v3409 = vld [vmem:[%s8] ss:$0 sm:$0xff]
    %v3411 = vshra.s32 %v3409, 16
    %v3412 = vand.u32 %v3411, 255
    %s3414 = sor.u32 256, 16
    %3415 = vbcast.lane.b32.xlu0 %v3412, %s3414
    %v3416 = vpop.permute.xlu0 %3415
    %3417 = xla_tuple %v3416, %v3408, %v18
    %3418 = xla_tuple %3417
    %vm3419 = vcmp.ne.s32.totalorder %v3416, 0
    %v3420 = vsel %vm3419, %v3408, %v18
    %3421 = xla_tuple %v3420
    %s3422 = scalar_lea.vmem [#allocation5], 272
    %s3424 = ssub.s32 256, 1
    %3425 = vst [vmem:[%s3422] sm:%s3424] %v3420
    %s3426 = scalar_lea.vmem %s2, 280
    %v3427 = vld [vmem:[%s3426] sm:$0xff]
    %v3428 = vld [vmem:[%s8] ss:$0 sm:$0xff]
    %v3430 = vshra.s32 %v3428, 16
    %v3431 = vand.u32 %v3430, 255
    %s3433 = sor.u32 256, 24
    %3434 = vbcast.lane.b32.xlu0 %v3431, %s3433
    %v3435 = vpop.permute.xlu0 %3434
    %3436 = xla_tuple %v3435, %v3427, %v18
    %3437 = xla_tuple %3436
    %vm3438 = vcmp.ne.s32.totalorder %v3435, 0
    %v3439 = vsel %vm3438, %v3427, %v18
    %3440 = xla_tuple %v3439
    %s3441 = scalar_lea.vmem [#allocation5], 280
    %s3443 = ssub.s32 256, 1
    %3444 = vst [vmem:[%s3441] sm:%s3443] %v3439
    %s3445 = scalar_lea.vmem %s2, 288
    %v3446 = vld [vmem:[%s3445] sm:$0xff]
    %v3447 = vld [vmem:[%s8] ss:$0 sm:$0xff]
    %v3449 = vshra.s32 %v3447, 16
    %v3450 = vand.u32 %v3449, 255
    %s3452 = sor.u32 256, 32
    %3453 = vbcast.lane.b32.xlu0 %v3450, %s3452
    %v3454 = vpop.permute.xlu0 %3453
    %3455 = xla_tuple %v3454, %v3446, %v18
    %3456 = xla_tuple %3455
    %vm3457 = vcmp.ne.s32.totalorder %v3454, 0
    %v3458 = vsel %vm3457, %v3446, %v18
    %3459 = xla_tuple %v3458
    %s3460 = scalar_lea.vmem [#allocation5], 288
    %s3462 = ssub.s32 256, 1
    %3463 = vst [vmem:[%s3460] sm:%s3462] %v3458
    %s3464 = scalar_lea.vmem %s2, 296
    %v3465 = vld [vmem:[%s3464] sm:$0xff]
    %v3466 = vld [vmem:[%s8] ss:$0 sm:$0xff]
    %v3468 = vshra.s32 %v3466, 16
    %v3469 = vand.u32 %v3468, 255
    %s3471 = sor.u32 256, 40
    %3472 = vbcast.lane.b32.xlu0 %v3469, %s3471
    %v3473 = vpop.permute.xlu0 %3472
    %3474 = xla_tuple %v3473, %v3465, %v18
    %3475 = xla_tuple %3474
    %vm3476 = vcmp.ne.s32.totalorder %v3473, 0
    %v3477 = vsel %vm3476, %v3465, %v18
    %3478 = xla_tuple %v3477
    %s3479 = scalar_lea.vmem [#allocation5], 296
    %s3481 = ssub.s32 256, 1
    %3482 = vst [vmem:[%s3479] sm:%s3481] %v3477
    %s3483 = scalar_lea.vmem %s2, 304
    %v3484 = vld [vmem:[%s3483] sm:$0xff]
    %v3485 = vld [vmem:[%s8] ss:$0 sm:$0xff]
    %v3487 = vshra.s32 %v3485, 16
    %v3488 = vand.u32 %v3487, 255
    %s3490 = sor.u32 256, 48
    %3491 = vbcast.lane.b32.xlu0 %v3488, %s3490
    %v3492 = vpop.permute.xlu0 %3491
    %3493 = xla_tuple %v3492, %v3484, %v18
    %3494 = xla_tuple %3493
    %vm3495 = vcmp.ne.s32.totalorder %v3492, 0
    %v3496 = vsel %vm3495, %v3484, %v18
    %3497 = xla_tuple %v3496
    %s3498 = scalar_lea.vmem [#allocation5], 304
    %s3500 = ssub.s32 256, 1
    %3501 = vst [vmem:[%s3498] sm:%s3500] %v3496
    %s3502 = scalar_lea.vmem %s2, 312
    %v3503 = vld [vmem:[%s3502] sm:$0xff]
    %v3504 = vld [vmem:[%s8] ss:$0 sm:$0xff]
    %v3506 = vshra.s32 %v3504, 16
    %v3507 = vand.u32 %v3506, 255
    %s3509 = sor.u32 256, 56
    %3510 = vbcast.lane.b32.xlu0 %v3507, %s3509
    %v3511 = vpop.permute.xlu0 %3510
    %3512 = xla_tuple %v3511, %v3503, %v18
    %3513 = xla_tuple %3512
    %vm3514 = vcmp.ne.s32.totalorder %v3511, 0
    %v3515 = vsel %vm3514, %v3503, %v18
    %3516 = xla_tuple %v3515
    %s3517 = scalar_lea.vmem [#allocation5], 312
    %s3519 = ssub.s32 256, 1
    %3520 = vst [vmem:[%s3517] sm:%s3519] %v3515
    %s3521 = scalar_lea.vmem %s2, 320
    %v3522 = vld [vmem:[%s3521] sm:$0xff]
    %v3523 = vld [vmem:[%s8] ss:$0 sm:$0xff]
    %v3525 = vshra.s32 %v3523, 16
    %v3526 = vand.u32 %v3525, 255
    %s3528 = sor.u32 256, 64
    %3529 = vbcast.lane.b32.xlu0 %v3526, %s3528
    %v3530 = vpop.permute.xlu0 %3529
    %3531 = xla_tuple %v3530, %v3522, %v18
    %3532 = xla_tuple %3531
    %vm3533 = vcmp.ne.s32.totalorder %v3530, 0
    %v3534 = vsel %vm3533, %v3522, %v18
    %3535 = xla_tuple %v3534
    %s3536 = scalar_lea.vmem [#allocation5], 320
    %s3538 = ssub.s32 256, 1
    %3539 = vst [vmem:[%s3536] sm:%s3538] %v3534
    %s3540 = scalar_lea.vmem %s2, 328
    %v3541 = vld [vmem:[%s3540] sm:$0xff]
    %v3542 = vld [vmem:[%s8] ss:$0 sm:$0xff]
    %v3544 = vshra.s32 %v3542, 16
    %v3545 = vand.u32 %v3544, 255
    %s3547 = sor.u32 256, 72
    %3548 = vbcast.lane.b32.xlu0 %v3545, %s3547
    %v3549 = vpop.permute.xlu0 %3548
    %3550 = xla_tuple %v3549, %v3541, %v18
    %3551 = xla_tuple %3550
    %vm3552 = vcmp.ne.s32.totalorder %v3549, 0
    %v3553 = vsel %vm3552, %v3541, %v18
    %3554 = xla_tuple %v3553
    %s3555 = scalar_lea.vmem [#allocation5], 328
    %s3557 = ssub.s32 256, 1
    %3558 = vst [vmem:[%s3555] sm:%s3557] %v3553
    %s3559 = scalar_lea.vmem %s2, 336
    %v3560 = vld [vmem:[%s3559] sm:$0xff]
    %v3561 = vld [vmem:[%s8] ss:$0 sm:$0xff]
    %v3563 = vshra.s32 %v3561, 16
    %v3564 = vand.u32 %v3563, 255
    %s3566 = sor.u32 256, 80
    %3567 = vbcast.lane.b32.xlu0 %v3564, %s3566
    %v3568 = vpop.permute.xlu0 %3567
    %3569 = xla_tuple %v3568, %v3560, %v18
    %3570 = xla_tuple %3569
    %vm3571 = vcmp.ne.s32.totalorder %v3568, 0
    %v3572 = vsel %vm3571, %v3560, %v18
    %3573 = xla_tuple %v3572
    %s3574 = scalar_lea.vmem [#allocation5], 336
    %s3576 = ssub.s32 256, 1
    %3577 = vst [vmem:[%s3574] sm:%s3576] %v3572
    %s3578 = scalar_lea.vmem %s2, 344
    %v3579 = vld [vmem:[%s3578] sm:$0xff]
    %v3580 = vld [vmem:[%s8] ss:$0 sm:$0xff]
    %v3582 = vshra.s32 %v3580, 16
    %v3583 = vand.u32 %v3582, 255
    %s3585 = sor.u32 256, 88
    %3586 = vbcast.lane.b32.xlu0 %v3583, %s3585
    %v3587 = vpop.permute.xlu0 %3586
    %3588 = xla_tuple %v3587, %v3579, %v18
    %3589 = xla_tuple %3588
    %vm3590 = vcmp.ne.s32.totalorder %v3587, 0
    %v3591 = vsel %vm3590, %v3579, %v18
    %3592 = xla_tuple %v3591
    %s3593 = scalar_lea.vmem [#allocation5], 344
    %s3595 = ssub.s32 256, 1
    %3596 = vst [vmem:[%s3593] sm:%s3595] %v3591
    %s3597 = scalar_lea.vmem %s2, 352
    %v3598 = vld [vmem:[%s3597] sm:$0xff]
    %v3599 = vld [vmem:[%s8] ss:$0 sm:$0xff]
    %v3601 = vshra.s32 %v3599, 16
    %v3602 = vand.u32 %v3601, 255
    %s3604 = sor.u32 256, 96
    %3605 = vbcast.lane.b32.xlu0 %v3602, %s3604
    %v3606 = vpop.permute.xlu0 %3605
    %3607 = xla_tuple %v3606, %v3598, %v18
    %3608 = xla_tuple %3607
    %vm3609 = vcmp.ne.s32.totalorder %v3606, 0
    %v3610 = vsel %vm3609, %v3598, %v18
    %3611 = xla_tuple %v3610
    %s3612 = scalar_lea.vmem [#allocation5], 352
    %s3614 = ssub.s32 256, 1
    %3615 = vst [vmem:[%s3612] sm:%s3614] %v3610
    %s3616 = scalar_lea.vmem %s2, 360
    %v3617 = vld [vmem:[%s3616] sm:$0xff]
    %v3618 = vld [vmem:[%s8] ss:$0 sm:$0xff]
    %v3620 = vshra.s32 %v3618, 16
    %v3621 = vand.u32 %v3620, 255
    %s3623 = sor.u32 256, 104
    %3624 = vbcast.lane.b32.xlu0 %v3621, %s3623
    %v3625 = vpop.permute.xlu0 %3624
    %3626 = xla_tuple %v3625, %v3617, %v18
    %3627 = xla_tuple %3626
    %vm3628 = vcmp.ne.s32.totalorder %v3625, 0
    %v3629 = vsel %vm3628, %v3617, %v18
    %3630 = xla_tuple %v3629
    %s3631 = scalar_lea.vmem [#allocation5], 360
    %s3633 = ssub.s32 256, 1
    %3634 = vst [vmem:[%s3631] sm:%s3633] %v3629
    %s3635 = scalar_lea.vmem %s2, 368
    %v3636 = vld [vmem:[%s3635] sm:$0xff]
    %v3637 = vld [vmem:[%s8] ss:$0 sm:$0xff]
    %v3639 = vshra.s32 %v3637, 16
    %v3640 = vand.u32 %v3639, 255
    %s3642 = sor.u32 256, 112
    %3643 = vbcast.lane.b32.xlu0 %v3640, %s3642
    %v3644 = vpop.permute.xlu0 %3643
    %3645 = xla_tuple %v3644, %v3636, %v18
    %3646 = xla_tuple %3645
    %vm3647 = vcmp.ne.s32.totalorder %v3644, 0
    %v3648 = vsel %vm3647, %v3636, %v18
    %3649 = xla_tuple %v3648
    %s3650 = scalar_lea.vmem [#allocation5], 368
    %s3652 = ssub.s32 256, 1
    %3653 = vst [vmem:[%s3650] sm:%s3652] %v3648
    %s3654 = scalar_lea.vmem %s2, 376
    %v3655 = vld [vmem:[%s3654] sm:$0xff]
    %v3656 = vld [vmem:[%s8] ss:$0 sm:$0xff]
    %v3658 = vshra.s32 %v3656, 16
    %v3659 = vand.u32 %v3658, 255
    %s3661 = sor.u32 256, 120
    %3662 = vbcast.lane.b32.xlu0 %v3659, %s3661
    %v3663 = vpop.permute.xlu0 %3662
    %3664 = xla_tuple %v3663, %v3655, %v18
    %3665 = xla_tuple %3664
    %vm3666 = vcmp.ne.s32.totalorder %v3663, 0
    %v3667 = vsel %vm3666, %v3655, %v18
    %3668 = xla_tuple %v3667
    %s3669 = scalar_lea.vmem [#allocation5], 376
    %s3671 = ssub.s32 256, 1
    %3672 = vst [vmem:[%s3669] sm:%s3671] %v3667
    %v3673 = vld [vmem:[%s1] sm:$0xff]
    %v3674 = vld [vmem:[%s7] ss:$0 sm:$0xff]
    %v3676 = vshra.s32 %v3674, 0
    %v3677 = vand.u32 %v3676, 255
    %3679 = vbcast.lane.b32.xlu0 %v3677, 256
    %v3680 = vpop.permute.xlu0 %3679
    %3681 = xla_tuple %v3680, %v3673, %v19
    %3682 = xla_tuple %3681
    %vm3683 = vcmp.ne.s32.totalorder %v3680, 0
    %v3684 = vsel %vm3683, %v3673, %v19
    %3685 = xla_tuple %v3684
    %s3687 = ssub.s32 256, 1
    %3688 = vst [vmem:[#allocation6] sm:%s3687] %v3684
    %s3689 = scalar_lea.vmem %s1, 8
    %v3690 = vld [vmem:[%s3689] sm:$0xff]
    %v3691 = vld [vmem:[%s7] ss:$0 sm:$0xff]
    %v3693 = vshra.s32 %v3691, 0
    %v3694 = vand.u32 %v3693, 255
    %s3696 = sor.u32 256, 8
    %3697 = vbcast.lane.b32.xlu0 %v3694, %s3696
    %v3698 = vpop.permute.xlu0 %3697
    %3699 = xla_tuple %v3698, %v3690, %v19
    %3700 = xla_tuple %3699
    %vm3701 = vcmp.ne.s32.totalorder %v3698, 0
    %v3702 = vsel %vm3701, %v3690, %v19
    %3703 = xla_tuple %v3702
    %s3704 = scalar_lea.vmem [#allocation6], 8
    %s3706 = ssub.s32 256, 1
    %3707 = vst [vmem:[%s3704] sm:%s3706] %v3702
    %s3708 = scalar_lea.vmem %s1, 16
    %v3709 = vld [vmem:[%s3708] sm:$0xff]
    %v3710 = vld [vmem:[%s7] ss:$0 sm:$0xff]
    %v3712 = vshra.s32 %v3710, 0
    %v3713 = vand.u32 %v3712, 255
    %s3715 = sor.u32 256, 16
    %3716 = vbcast.lane.b32.xlu0 %v3713, %s3715
    %v3717 = vpop.permute.xlu0 %3716
    %3718 = xla_tuple %v3717, %v3709, %v19
    %3719 = xla_tuple %3718
    %vm3720 = vcmp.ne.s32.totalorder %v3717, 0
    %v3721 = vsel %vm3720, %v3709, %v19
    %3722 = xla_tuple %v3721
    %s3723 = scalar_lea.vmem [#allocation6], 16
    %s3725 = ssub.s32 256, 1
    %3726 = vst [vmem:[%s3723] sm:%s3725] %v3721
    %s3727 = scalar_lea.vmem %s1, 24
    %v3728 = vld [vmem:[%s3727] sm:$0xff]
    %v3729 = vld [vmem:[%s7] ss:$0 sm:$0xff]
    %v3731 = vshra.s32 %v3729, 0
    %v3732 = vand.u32 %v3731, 255
    %s3734 = sor.u32 256, 24
    %3735 = vbcast.lane.b32.xlu0 %v3732, %s3734
    %v3736 = vpop.permute.xlu0 %3735
    %3737 = xla_tuple %v3736, %v3728, %v19
    %3738 = xla_tuple %3737
    %vm3739 = vcmp.ne.s32.totalorder %v3736, 0
    %v3740 = vsel %vm3739, %v3728, %v19
    %3741 = xla_tuple %v3740
    %s3742 = scalar_lea.vmem [#allocation6], 24
    %s3744 = ssub.s32 256, 1
    %3745 = vst [vmem:[%s3742] sm:%s3744] %v3740
    %s3746 = scalar_lea.vmem %s1, 32
    %v3747 = vld [vmem:[%s3746] sm:$0xff]
    %v3748 = vld [vmem:[%s7] ss:$0 sm:$0xff]
    %v3750 = vshra.s32 %v3748, 0
    %v3751 = vand.u32 %v3750, 255
    %s3753 = sor.u32 256, 32
    %3754 = vbcast.lane.b32.xlu0 %v3751, %s3753
    %v3755 = vpop.permute.xlu0 %3754
    %3756 = xla_tuple %v3755, %v3747, %v19
    %3757 = xla_tuple %3756
    %vm3758 = vcmp.ne.s32.totalorder %v3755, 0
    %v3759 = vsel %vm3758, %v3747, %v19
    %3760 = xla_tuple %v3759
    %s3761 = scalar_lea.vmem [#allocation6], 32
    %s3763 = ssub.s32 256, 1
    %3764 = vst [vmem:[%s3761] sm:%s3763] %v3759
    %s3765 = scalar_lea.vmem %s1, 40
    %v3766 = vld [vmem:[%s3765] sm:$0xff]
    %v3767 = vld [vmem:[%s7] ss:$0 sm:$0xff]
    %v3769 = vshra.s32 %v3767, 0
    %v3770 = vand.u32 %v3769, 255
    %s3772 = sor.u32 256, 40
    %3773 = vbcast.lane.b32.xlu0 %v3770, %s3772
    %v3774 = vpop.permute.xlu0 %3773
    %3775 = xla_tuple %v3774, %v3766, %v19
    %3776 = xla_tuple %3775
    %vm3777 = vcmp.ne.s32.totalorder %v3774, 0
    %v3778 = vsel %vm3777, %v3766, %v19
    %3779 = xla_tuple %v3778
    %s3780 = scalar_lea.vmem [#allocation6], 40
    %s3782 = ssub.s32 256, 1
    %3783 = vst [vmem:[%s3780] sm:%s3782] %v3778
    %s3784 = scalar_lea.vmem %s1, 48
    %v3785 = vld [vmem:[%s3784] sm:$0xff]
    %v3786 = vld [vmem:[%s7] ss:$0 sm:$0xff]
    %v3788 = vshra.s32 %v3786, 0
    %v3789 = vand.u32 %v3788, 255
    %s3791 = sor.u32 256, 48
    %3792 = vbcast.lane.b32.xlu0 %v3789, %s3791
    %v3793 = vpop.permute.xlu0 %3792
    %3794 = xla_tuple %v3793, %v3785, %v19
    %3795 = xla_tuple %3794
    %vm3796 = vcmp.ne.s32.totalorder %v3793, 0
    %v3797 = vsel %vm3796, %v3785, %v19
    %3798 = xla_tuple %v3797
    %s3799 = scalar_lea.vmem [#allocation6], 48
    %s3801 = ssub.s32 256, 1
    %3802 = vst [vmem:[%s3799] sm:%s3801] %v3797
    %s3803 = scalar_lea.vmem %s1, 56
    %v3804 = vld [vmem:[%s3803] sm:$0xff]
    %v3805 = vld [vmem:[%s7] ss:$0 sm:$0xff]
    %v3807 = vshra.s32 %v3805, 0
    %v3808 = vand.u32 %v3807, 255
    %s3810 = sor.u32 256, 56
    %3811 = vbcast.lane.b32.xlu0 %v3808, %s3810
    %v3812 = vpop.permute.xlu0 %3811
    %3813 = xla_tuple %v3812, %v3804, %v19
    %3814 = xla_tuple %3813
    %vm3815 = vcmp.ne.s32.totalorder %v3812, 0
    %v3816 = vsel %vm3815, %v3804, %v19
    %3817 = xla_tuple %v3816
    %s3818 = scalar_lea.vmem [#allocation6], 56
    %s3820 = ssub.s32 256, 1
    %3821 = vst [vmem:[%s3818] sm:%s3820] %v3816
    %s3822 = scalar_lea.vmem %s1, 64
    %v3823 = vld [vmem:[%s3822] sm:$0xff]
    %v3824 = vld [vmem:[%s7] ss:$0 sm:$0xff]
    %v3826 = vshra.s32 %v3824, 0
    %v3827 = vand.u32 %v3826, 255
    %s3829 = sor.u32 256, 64
    %3830 = vbcast.lane.b32.xlu0 %v3827, %s3829
    %v3831 = vpop.permute.xlu0 %3830
    %3832 = xla_tuple %v3831, %v3823, %v19
    %3833 = xla_tuple %3832
    %vm3834 = vcmp.ne.s32.totalorder %v3831, 0
    %v3835 = vsel %vm3834, %v3823, %v19
    %3836 = xla_tuple %v3835
    %s3837 = scalar_lea.vmem [#allocation6], 64
    %s3839 = ssub.s32 256, 1
    %3840 = vst [vmem:[%s3837] sm:%s3839] %v3835
    %s3841 = scalar_lea.vmem %s1, 72
    %v3842 = vld [vmem:[%s3841] sm:$0xff]
    %v3843 = vld [vmem:[%s7] ss:$0 sm:$0xff]
    %v3845 = vshra.s32 %v3843, 0
    %v3846 = vand.u32 %v3845, 255
    %s3848 = sor.u32 256, 72
    %3849 = vbcast.lane.b32.xlu0 %v3846, %s3848
    %v3850 = vpop.permute.xlu0 %3849
    %3851 = xla_tuple %v3850, %v3842, %v19
    %3852 = xla_tuple %3851
    %vm3853 = vcmp.ne.s32.totalorder %v3850, 0
    %v3854 = vsel %vm3853, %v3842, %v19
    %3855 = xla_tuple %v3854
    %s3856 = scalar_lea.vmem [#allocation6], 72
    %s3858 = ssub.s32 256, 1
    %3859 = vst [vmem:[%s3856] sm:%s3858] %v3854
    %s3860 = scalar_lea.vmem %s1, 80
    %v3861 = vld [vmem:[%s3860] sm:$0xff]
    %v3862 = vld [vmem:[%s7] ss:$0 sm:$0xff]
    %v3864 = vshra.s32 %v3862, 0
    %v3865 = vand.u32 %v3864, 255
    %s3867 = sor.u32 256, 80
    %3868 = vbcast.lane.b32.xlu0 %v3865, %s3867
    %v3869 = vpop.permute.xlu0 %3868
    %3870 = xla_tuple %v3869, %v3861, %v19
    %3871 = xla_tuple %3870
    %vm3872 = vcmp.ne.s32.totalorder %v3869, 0
    %v3873 = vsel %vm3872, %v3861, %v19
    %3874 = xla_tuple %v3873
    %s3875 = scalar_lea.vmem [#allocation6], 80
    %s3877 = ssub.s32 256, 1
    %3878 = vst [vmem:[%s3875] sm:%s3877] %v3873
    %s3879 = scalar_lea.vmem %s1, 88
    %v3880 = vld [vmem:[%s3879] sm:$0xff]
    %v3881 = vld [vmem:[%s7] ss:$0 sm:$0xff]
    %v3883 = vshra.s32 %v3881, 0
    %v3884 = vand.u32 %v3883, 255
    %s3886 = sor.u32 256, 88
    %3887 = vbcast.lane.b32.xlu0 %v3884, %s3886
    %v3888 = vpop.permute.xlu0 %3887
    %3889 = xla_tuple %v3888, %v3880, %v19
    %3890 = xla_tuple %3889
    %vm3891 = vcmp.ne.s32.totalorder %v3888, 0
    %v3892 = vsel %vm3891, %v3880, %v19
    %3893 = xla_tuple %v3892
    %s3894 = scalar_lea.vmem [#allocation6], 88
    %s3896 = ssub.s32 256, 1
    %3897 = vst [vmem:[%s3894] sm:%s3896] %v3892
    %s3898 = scalar_lea.vmem %s1, 96
    %v3899 = vld [vmem:[%s3898] sm:$0xff]
    %v3900 = vld [vmem:[%s7] ss:$0 sm:$0xff]
    %v3902 = vshra.s32 %v3900, 0
    %v3903 = vand.u32 %v3902, 255
    %s3905 = sor.u32 256, 96
    %3906 = vbcast.lane.b32.xlu0 %v3903, %s3905
    %v3907 = vpop.permute.xlu0 %3906
    %3908 = xla_tuple %v3907, %v3899, %v19
    %3909 = xla_tuple %3908
    %vm3910 = vcmp.ne.s32.totalorder %v3907, 0
    %v3911 = vsel %vm3910, %v3899, %v19
    %3912 = xla_tuple %v3911
    %s3913 = scalar_lea.vmem [#allocation6], 96
    %s3915 = ssub.s32 256, 1
    %3916 = vst [vmem:[%s3913] sm:%s3915] %v3911
    %s3917 = scalar_lea.vmem %s1, 104
    %v3918 = vld [vmem:[%s3917] sm:$0xff]
    %v3919 = vld [vmem:[%s7] ss:$0 sm:$0xff]
    %v3921 = vshra.s32 %v3919, 0
    %v3922 = vand.u32 %v3921, 255
    %s3924 = sor.u32 256, 104
    %3925 = vbcast.lane.b32.xlu0 %v3922, %s3924
    %v3926 = vpop.permute.xlu0 %3925
    %3927 = xla_tuple %v3926, %v3918, %v19
    %3928 = xla_tuple %3927
    %vm3929 = vcmp.ne.s32.totalorder %v3926, 0
    %v3930 = vsel %vm3929, %v3918, %v19
    %3931 = xla_tuple %v3930
    %s3932 = scalar_lea.vmem [#allocation6], 104
    %s3934 = ssub.s32 256, 1
    %3935 = vst [vmem:[%s3932] sm:%s3934] %v3930
    %s3936 = scalar_lea.vmem %s1, 112
    %v3937 = vld [vmem:[%s3936] sm:$0xff]
    %v3938 = vld [vmem:[%s7] ss:$0 sm:$0xff]
    %v3940 = vshra.s32 %v3938, 0
    %v3941 = vand.u32 %v3940, 255
    %s3943 = sor.u32 256, 112
    %3944 = vbcast.lane.b32.xlu0 %v3941, %s3943
    %v3945 = vpop.permute.xlu0 %3944
    %3946 = xla_tuple %v3945, %v3937, %v19
    %3947 = xla_tuple %3946
    %vm3948 = vcmp.ne.s32.totalorder %v3945, 0
    %v3949 = vsel %vm3948, %v3937, %v19
    %3950 = xla_tuple %v3949
    %s3951 = scalar_lea.vmem [#allocation6], 112
    %s3953 = ssub.s32 256, 1
    %3954 = vst [vmem:[%s3951] sm:%s3953] %v3949
    %s3955 = scalar_lea.vmem %s1, 120
    %v3956 = vld [vmem:[%s3955] sm:$0xff]
    %v3957 = vld [vmem:[%s7] ss:$0 sm:$0xff]
    %v3959 = vshra.s32 %v3957, 0
    %v3960 = vand.u32 %v3959, 255
    %s3962 = sor.u32 256, 120
    %3963 = vbcast.lane.b32.xlu0 %v3960, %s3962
    %v3964 = vpop.permute.xlu0 %3963
    %3965 = xla_tuple %v3964, %v3956, %v19
    %3966 = xla_tuple %3965
    %vm3967 = vcmp.ne.s32.totalorder %v3964, 0
    %v3968 = vsel %vm3967, %v3956, %v19
    %3969 = xla_tuple %v3968
    %s3970 = scalar_lea.vmem [#allocation6], 120
    %s3972 = ssub.s32 256, 1
    %3973 = vst [vmem:[%s3970] sm:%s3972] %v3968
    %s3974 = scalar_lea.vmem %s1, 128
    %v3975 = vld [vmem:[%s3974] sm:$0xff]
    %v3976 = vld [vmem:[%s7] ss:$0 sm:$0xff]
    %v3978 = vshra.s32 %v3976, 8
    %v3979 = vand.u32 %v3978, 255
    %3981 = vbcast.lane.b32.xlu0 %v3979, 256
    %v3982 = vpop.permute.xlu0 %3981
    %3983 = xla_tuple %v3982, %v3975, %v19
    %3984 = xla_tuple %3983
    %vm3985 = vcmp.ne.s32.totalorder %v3982, 0
    %v3986 = vsel %vm3985, %v3975, %v19
    %3987 = xla_tuple %v3986
    %s3988 = scalar_lea.vmem [#allocation6], 128
    %s3990 = ssub.s32 256, 1
    %3991 = vst [vmem:[%s3988] sm:%s3990] %v3986
    %s3992 = scalar_lea.vmem %s1, 136
    %v3993 = vld [vmem:[%s3992] sm:$0xff]
    %v3994 = vld [vmem:[%s7] ss:$0 sm:$0xff]
    %v3996 = vshra.s32 %v3994, 8
    %v3997 = vand.u32 %v3996, 255
    %s3999 = sor.u32 256, 8
    %4000 = vbcast.lane.b32.xlu0 %v3997, %s3999
    %v4001 = vpop.permute.xlu0 %4000
    %4002 = xla_tuple %v4001, %v3993, %v19
    %4003 = xla_tuple %4002
    %vm4004 = vcmp.ne.s32.totalorder %v4001, 0
    %v4005 = vsel %vm4004, %v3993, %v19
    %4006 = xla_tuple %v4005
    %s4007 = scalar_lea.vmem [#allocation6], 136
    %s4009 = ssub.s32 256, 1
    %4010 = vst [vmem:[%s4007] sm:%s4009] %v4005
    %s4011 = scalar_lea.vmem %s1, 144
    %v4012 = vld [vmem:[%s4011] sm:$0xff]
    %v4013 = vld [vmem:[%s7] ss:$0 sm:$0xff]
    %v4015 = vshra.s32 %v4013, 8
    %v4016 = vand.u32 %v4015, 255
    %s4018 = sor.u32 256, 16
    %4019 = vbcast.lane.b32.xlu0 %v4016, %s4018
    %v4020 = vpop.permute.xlu0 %4019
    %4021 = xla_tuple %v4020, %v4012, %v19
    %4022 = xla_tuple %4021
    %vm4023 = vcmp.ne.s32.totalorder %v4020, 0
    %v4024 = vsel %vm4023, %v4012, %v19
    %4025 = xla_tuple %v4024
    %s4026 = scalar_lea.vmem [#allocation6], 144
    %s4028 = ssub.s32 256, 1
    %4029 = vst [vmem:[%s4026] sm:%s4028] %v4024
    %s4030 = scalar_lea.vmem %s1, 152
    %v4031 = vld [vmem:[%s4030] sm:$0xff]
    %v4032 = vld [vmem:[%s7] ss:$0 sm:$0xff]
    %v4034 = vshra.s32 %v4032, 8
    %v4035 = vand.u32 %v4034, 255
    %s4037 = sor.u32 256, 24
    %4038 = vbcast.lane.b32.xlu0 %v4035, %s4037
    %v4039 = vpop.permute.xlu0 %4038
    %4040 = xla_tuple %v4039, %v4031, %v19
    %4041 = xla_tuple %4040
    %vm4042 = vcmp.ne.s32.totalorder %v4039, 0
    %v4043 = vsel %vm4042, %v4031, %v19
    %4044 = xla_tuple %v4043
    %s4045 = scalar_lea.vmem [#allocation6], 152
    %s4047 = ssub.s32 256, 1
    %4048 = vst [vmem:[%s4045] sm:%s4047] %v4043
    %s4049 = scalar_lea.vmem %s1, 160
    %v4050 = vld [vmem:[%s4049] sm:$0xff]
    %v4051 = vld [vmem:[%s7] ss:$0 sm:$0xff]
    %v4053 = vshra.s32 %v4051, 8
    %v4054 = vand.u32 %v4053, 255
    %s4056 = sor.u32 256, 32
    %4057 = vbcast.lane.b32.xlu0 %v4054, %s4056
    %v4058 = vpop.permute.xlu0 %4057
    %4059 = xla_tuple %v4058, %v4050, %v19
    %4060 = xla_tuple %4059
    %vm4061 = vcmp.ne.s32.totalorder %v4058, 0
    %v4062 = vsel %vm4061, %v4050, %v19
    %4063 = xla_tuple %v4062
    %s4064 = scalar_lea.vmem [#allocation6], 160
    %s4066 = ssub.s32 256, 1
    %4067 = vst [vmem:[%s4064] sm:%s4066] %v4062
    %s4068 = scalar_lea.vmem %s1, 168
    %v4069 = vld [vmem:[%s4068] sm:$0xff]
    %v4070 = vld [vmem:[%s7] ss:$0 sm:$0xff]
    %v4072 = vshra.s32 %v4070, 8
    %v4073 = vand.u32 %v4072, 255
    %s4075 = sor.u32 256, 40
    %4076 = vbcast.lane.b32.xlu0 %v4073, %s4075
    %v4077 = vpop.permute.xlu0 %4076
    %4078 = xla_tuple %v4077, %v4069, %v19
    %4079 = xla_tuple %4078
    %vm4080 = vcmp.ne.s32.totalorder %v4077, 0
    %v4081 = vsel %vm4080, %v4069, %v19
    %4082 = xla_tuple %v4081
    %s4083 = scalar_lea.vmem [#allocation6], 168
    %s4085 = ssub.s32 256, 1
    %4086 = vst [vmem:[%s4083] sm:%s4085] %v4081
    %s4087 = scalar_lea.vmem %s1, 176
    %v4088 = vld [vmem:[%s4087] sm:$0xff]
    %v4089 = vld [vmem:[%s7] ss:$0 sm:$0xff]
    %v4091 = vshra.s32 %v4089, 8
    %v4092 = vand.u32 %v4091, 255
    %s4094 = sor.u32 256, 48
    %4095 = vbcast.lane.b32.xlu0 %v4092, %s4094
    %v4096 = vpop.permute.xlu0 %4095
    %4097 = xla_tuple %v4096, %v4088, %v19
    %4098 = xla_tuple %4097
    %vm4099 = vcmp.ne.s32.totalorder %v4096, 0
    %v4100 = vsel %vm4099, %v4088, %v19
    %4101 = xla_tuple %v4100
    %s4102 = scalar_lea.vmem [#allocation6], 176
    %s4104 = ssub.s32 256, 1
    %4105 = vst [vmem:[%s4102] sm:%s4104] %v4100
    %s4106 = scalar_lea.vmem %s1, 184
    %v4107 = vld [vmem:[%s4106] sm:$0xff]
    %v4108 = vld [vmem:[%s7] ss:$0 sm:$0xff]
    %v4110 = vshra.s32 %v4108, 8
    %v4111 = vand.u32 %v4110, 255
    %s4113 = sor.u32 256, 56
    %4114 = vbcast.lane.b32.xlu0 %v4111, %s4113
    %v4115 = vpop.permute.xlu0 %4114
    %4116 = xla_tuple %v4115, %v4107, %v19
    %4117 = xla_tuple %4116
    %vm4118 = vcmp.ne.s32.totalorder %v4115, 0
    %v4119 = vsel %vm4118, %v4107, %v19
    %4120 = xla_tuple %v4119
    %s4121 = scalar_lea.vmem [#allocation6], 184
    %s4123 = ssub.s32 256, 1
    %4124 = vst [vmem:[%s4121] sm:%s4123] %v4119
    %s4125 = scalar_lea.vmem %s1, 192
    %v4126 = vld [vmem:[%s4125] sm:$0xff]
    %v4127 = vld [vmem:[%s7] ss:$0 sm:$0xff]
    %v4129 = vshra.s32 %v4127, 8
    %v4130 = vand.u32 %v4129, 255
    %s4132 = sor.u32 256, 64
    %4133 = vbcast.lane.b32.xlu0 %v4130, %s4132
    %v4134 = vpop.permute.xlu0 %4133
    %4135 = xla_tuple %v4134, %v4126, %v19
    %4136 = xla_tuple %4135
    %vm4137 = vcmp.ne.s32.totalorder %v4134, 0
    %v4138 = vsel %vm4137, %v4126, %v19
    %4139 = xla_tuple %v4138
    %s4140 = scalar_lea.vmem [#allocation6], 192
    %s4142 = ssub.s32 256, 1
    %4143 = vst [vmem:[%s4140] sm:%s4142] %v4138
    %s4144 = scalar_lea.vmem %s1, 200
    %v4145 = vld [vmem:[%s4144] sm:$0xff]
    %v4146 = vld [vmem:[%s7] ss:$0 sm:$0xff]
    %v4148 = vshra.s32 %v4146, 8
    %v4149 = vand.u32 %v4148, 255
    %s4151 = sor.u32 256, 72
    %4152 = vbcast.lane.b32.xlu0 %v4149, %s4151
    %v4153 = vpop.permute.xlu0 %4152
    %4154 = xla_tuple %v4153, %v4145, %v19
    %4155 = xla_tuple %4154
    %vm4156 = vcmp.ne.s32.totalorder %v4153, 0
    %v4157 = vsel %vm4156, %v4145, %v19
    %4158 = xla_tuple %v4157
    %s4159 = scalar_lea.vmem [#allocation6], 200
    %s4161 = ssub.s32 256, 1
    %4162 = vst [vmem:[%s4159] sm:%s4161] %v4157
    %s4163 = scalar_lea.vmem %s1, 208
    %v4164 = vld [vmem:[%s4163] sm:$0xff]
    %v4165 = vld [vmem:[%s7] ss:$0 sm:$0xff]
    %v4167 = vshra.s32 %v4165, 8
    %v4168 = vand.u32 %v4167, 255
    %s4170 = sor.u32 256, 80
    %4171 = vbcast.lane.b32.xlu0 %v4168, %s4170
    %v4172 = vpop.permute.xlu0 %4171
    %4173 = xla_tuple %v4172, %v4164, %v19
    %4174 = xla_tuple %4173
    %vm4175 = vcmp.ne.s32.totalorder %v4172, 0
    %v4176 = vsel %vm4175, %v4164, %v19
    %4177 = xla_tuple %v4176
    %s4178 = scalar_lea.vmem [#allocation6], 208
    %s4180 = ssub.s32 256, 1
    %4181 = vst [vmem:[%s4178] sm:%s4180] %v4176
    %s4182 = scalar_lea.vmem %s1, 216
    %v4183 = vld [vmem:[%s4182] sm:$0xff]
    %v4184 = vld [vmem:[%s7] ss:$0 sm:$0xff]
    %v4186 = vshra.s32 %v4184, 8
    %v4187 = vand.u32 %v4186, 255
    %s4189 = sor.u32 256, 88
    %4190 = vbcast.lane.b32.xlu0 %v4187, %s4189
    %v4191 = vpop.permute.xlu0 %4190
    %4192 = xla_tuple %v4191, %v4183, %v19
    %4193 = xla_tuple %4192
    %vm4194 = vcmp.ne.s32.totalorder %v4191, 0
    %v4195 = vsel %vm4194, %v4183, %v19
    %4196 = xla_tuple %v4195
    %s4197 = scalar_lea.vmem [#allocation6], 216
    %s4199 = ssub.s32 256, 1
    %4200 = vst [vmem:[%s4197] sm:%s4199] %v4195
    %s4201 = scalar_lea.vmem %s1, 224
    %v4202 = vld [vmem:[%s4201] sm:$0xff]
    %v4203 = vld [vmem:[%s7] ss:$0 sm:$0xff]
    %v4205 = vshra.s32 %v4203, 8
    %v4206 = vand.u32 %v4205, 255
    %s4208 = sor.u32 256, 96
    %4209 = vbcast.lane.b32.xlu0 %v4206, %s4208
    %v4210 = vpop.permute.xlu0 %4209
    %4211 = xla_tuple %v4210, %v4202, %v19
    %4212 = xla_tuple %4211
    %vm4213 = vcmp.ne.s32.totalorder %v4210, 0
    %v4214 = vsel %vm4213, %v4202, %v19
    %4215 = xla_tuple %v4214
    %s4216 = scalar_lea.vmem [#allocation6], 224
    %s4218 = ssub.s32 256, 1
    %4219 = vst [vmem:[%s4216] sm:%s4218] %v4214
    %s4220 = scalar_lea.vmem %s1, 232
    %v4221 = vld [vmem:[%s4220] sm:$0xff]
    %v4222 = vld [vmem:[%s7] ss:$0 sm:$0xff]
    %v4224 = vshra.s32 %v4222, 8
    %v4225 = vand.u32 %v4224, 255
    %s4227 = sor.u32 256, 104
    %4228 = vbcast.lane.b32.xlu0 %v4225, %s4227
    %v4229 = vpop.permute.xlu0 %4228
    %4230 = xla_tuple %v4229, %v4221, %v19
    %4231 = xla_tuple %4230
    %vm4232 = vcmp.ne.s32.totalorder %v4229, 0
    %v4233 = vsel %vm4232, %v4221, %v19
    %4234 = xla_tuple %v4233
    %s4235 = scalar_lea.vmem [#allocation6], 232
    %s4237 = ssub.s32 256, 1
    %4238 = vst [vmem:[%s4235] sm:%s4237] %v4233
    %s4239 = scalar_lea.vmem %s1, 240
    %v4240 = vld [vmem:[%s4239] sm:$0xff]
    %v4241 = vld [vmem:[%s7] ss:$0 sm:$0xff]
    %v4243 = vshra.s32 %v4241, 8
    %v4244 = vand.u32 %v4243, 255
    %s4246 = sor.u32 256, 112
    %4247 = vbcast.lane.b32.xlu0 %v4244, %s4246
    %v4248 = vpop.permute.xlu0 %4247
    %4249 = xla_tuple %v4248, %v4240, %v19
    %4250 = xla_tuple %4249
    %vm4251 = vcmp.ne.s32.totalorder %v4248, 0
    %v4252 = vsel %vm4251, %v4240, %v19
    %4253 = xla_tuple %v4252
    %s4254 = scalar_lea.vmem [#allocation6], 240
    %s4256 = ssub.s32 256, 1
    %4257 = vst [vmem:[%s4254] sm:%s4256] %v4252
    %s4258 = scalar_lea.vmem %s1, 248
    %v4259 = vld [vmem:[%s4258] sm:$0xff]
    %v4260 = vld [vmem:[%s7] ss:$0 sm:$0xff]
    %v4262 = vshra.s32 %v4260, 8
    %v4263 = vand.u32 %v4262, 255
    %s4265 = sor.u32 256, 120
    %4266 = vbcast.lane.b32.xlu0 %v4263, %s4265
    %v4267 = vpop.permute.xlu0 %4266
    %4268 = xla_tuple %v4267, %v4259, %v19
    %4269 = xla_tuple %4268
    %vm4270 = vcmp.ne.s32.totalorder %v4267, 0
    %v4271 = vsel %vm4270, %v4259, %v19
    %4272 = xla_tuple %v4271
    %s4273 = scalar_lea.vmem [#allocation6], 248
    %s4275 = ssub.s32 256, 1
    %4276 = vst [vmem:[%s4273] sm:%s4275] %v4271
    %s4277 = scalar_lea.vmem %s1, 256
    %v4278 = vld [vmem:[%s4277] sm:$0xff]
    %v4279 = vld [vmem:[%s7] ss:$0 sm:$0xff]
    %v4281 = vshra.s32 %v4279, 16
    %v4282 = vand.u32 %v4281, 255
    %4284 = vbcast.lane.b32.xlu0 %v4282, 256
    %v4285 = vpop.permute.xlu0 %4284
    %4286 = xla_tuple %v4285, %v4278, %v19
    %4287 = xla_tuple %4286
    %vm4288 = vcmp.ne.s32.totalorder %v4285, 0
    %v4289 = vsel %vm4288, %v4278, %v19
    %4290 = xla_tuple %v4289
    %s4291 = scalar_lea.vmem [#allocation6], 256
    %s4293 = ssub.s32 256, 1
    %4294 = vst [vmem:[%s4291] sm:%s4293] %v4289
    %s4295 = scalar_lea.vmem %s1, 264
    %v4296 = vld [vmem:[%s4295] sm:$0xff]
    %v4297 = vld [vmem:[%s7] ss:$0 sm:$0xff]
    %v4299 = vshra.s32 %v4297, 16
    %v4300 = vand.u32 %v4299, 255
    %s4302 = sor.u32 256, 8
    %4303 = vbcast.lane.b32.xlu0 %v4300, %s4302
    %v4304 = vpop.permute.xlu0 %4303
    %4305 = xla_tuple %v4304, %v4296, %v19
    %4306 = xla_tuple %4305
    %vm4307 = vcmp.ne.s32.totalorder %v4304, 0
    %v4308 = vsel %vm4307, %v4296, %v19
    %4309 = xla_tuple %v4308
    %s4310 = scalar_lea.vmem [#allocation6], 264
    %s4312 = ssub.s32 256, 1
    %4313 = vst [vmem:[%s4310] sm:%s4312] %v4308
    %s4314 = scalar_lea.vmem %s1, 272
    %v4315 = vld [vmem:[%s4314] sm:$0xff]
    %v4316 = vld [vmem:[%s7] ss:$0 sm:$0xff]
    %v4318 = vshra.s32 %v4316, 16
    %v4319 = vand.u32 %v4318, 255
    %s4321 = sor.u32 256, 16
    %4322 = vbcast.lane.b32.xlu0 %v4319, %s4321
    %v4323 = vpop.permute.xlu0 %4322
    %4324 = xla_tuple %v4323, %v4315, %v19
    %4325 = xla_tuple %4324
    %vm4326 = vcmp.ne.s32.totalorder %v4323, 0
    %v4327 = vsel %vm4326, %v4315, %v19
    %4328 = xla_tuple %v4327
    %s4329 = scalar_lea.vmem [#allocation6], 272
    %s4331 = ssub.s32 256, 1
    %4332 = vst [vmem:[%s4329] sm:%s4331] %v4327
    %s4333 = scalar_lea.vmem %s1, 280
    %v4334 = vld [vmem:[%s4333] sm:$0xff]
    %v4335 = vld [vmem:[%s7] ss:$0 sm:$0xff]
    %v4337 = vshra.s32 %v4335, 16
    %v4338 = vand.u32 %v4337, 255
    %s4340 = sor.u32 256, 24
    %4341 = vbcast.lane.b32.xlu0 %v4338, %s4340
    %v4342 = vpop.permute.xlu0 %4341
    %4343 = xla_tuple %v4342, %v4334, %v19
    %4344 = xla_tuple %4343
    %vm4345 = vcmp.ne.s32.totalorder %v4342, 0
    %v4346 = vsel %vm4345, %v4334, %v19
    %4347 = xla_tuple %v4346
    %s4348 = scalar_lea.vmem [#allocation6], 280
    %s4350 = ssub.s32 256, 1
    %4351 = vst [vmem:[%s4348] sm:%s4350] %v4346
    %s4352 = scalar_lea.vmem %s1, 288
    %v4353 = vld [vmem:[%s4352] sm:$0xff]
    %v4354 = vld [vmem:[%s7] ss:$0 sm:$0xff]
    %v4356 = vshra.s32 %v4354, 16
    %v4357 = vand.u32 %v4356, 255
    %s4359 = sor.u32 256, 32
    %4360 = vbcast.lane.b32.xlu0 %v4357, %s4359
    %v4361 = vpop.permute.xlu0 %4360
    %4362 = xla_tuple %v4361, %v4353, %v19
    %4363 = xla_tuple %4362
    %vm4364 = vcmp.ne.s32.totalorder %v4361, 0
    %v4365 = vsel %vm4364, %v4353, %v19
    %4366 = xla_tuple %v4365
    %s4367 = scalar_lea.vmem [#allocation6], 288
    %s4369 = ssub.s32 256, 1
    %4370 = vst [vmem:[%s4367] sm:%s4369] %v4365
    %s4371 = scalar_lea.vmem %s1, 296
    %v4372 = vld [vmem:[%s4371] sm:$0xff]
    %v4373 = vld [vmem:[%s7] ss:$0 sm:$0xff]
    %v4375 = vshra.s32 %v4373, 16
    %v4376 = vand.u32 %v4375, 255
    %s4378 = sor.u32 256, 40
    %4379 = vbcast.lane.b32.xlu0 %v4376, %s4378
    %v4380 = vpop.permute.xlu0 %4379
    %4381 = xla_tuple %v4380, %v4372, %v19
    %4382 = xla_tuple %4381
    %vm4383 = vcmp.ne.s32.totalorder %v4380, 0
    %v4384 = vsel %vm4383, %v4372, %v19
    %4385 = xla_tuple %v4384
    %s4386 = scalar_lea.vmem [#allocation6], 296
    %s4388 = ssub.s32 256, 1
    %4389 = vst [vmem:[%s4386] sm:%s4388] %v4384
    %s4390 = scalar_lea.vmem %s1, 304
    %v4391 = vld [vmem:[%s4390] sm:$0xff]
    %v4392 = vld [vmem:[%s7] ss:$0 sm:$0xff]
    %v4394 = vshra.s32 %v4392, 16
    %v4395 = vand.u32 %v4394, 255
    %s4397 = sor.u32 256, 48
    %4398 = vbcast.lane.b32.xlu0 %v4395, %s4397
    %v4399 = vpop.permute.xlu0 %4398
    %4400 = xla_tuple %v4399, %v4391, %v19
    %4401 = xla_tuple %4400
    %vm4402 = vcmp.ne.s32.totalorder %v4399, 0
    %v4403 = vsel %vm4402, %v4391, %v19
    %4404 = xla_tuple %v4403
    %s4405 = scalar_lea.vmem [#allocation6], 304
    %s4407 = ssub.s32 256, 1
    %4408 = vst [vmem:[%s4405] sm:%s4407] %v4403
    %s4409 = scalar_lea.vmem %s1, 312
    %v4410 = vld [vmem:[%s4409] sm:$0xff]
    %v4411 = vld [vmem:[%s7] ss:$0 sm:$0xff]
    %v4413 = vshra.s32 %v4411, 16
    %v4414 = vand.u32 %v4413, 255
    %s4416 = sor.u32 256, 56
    %4417 = vbcast.lane.b32.xlu0 %v4414, %s4416
    %v4418 = vpop.permute.xlu0 %4417
    %4419 = xla_tuple %v4418, %v4410, %v19
    %4420 = xla_tuple %4419
    %vm4421 = vcmp.ne.s32.totalorder %v4418, 0
    %v4422 = vsel %vm4421, %v4410, %v19
    %4423 = xla_tuple %v4422
    %s4424 = scalar_lea.vmem [#allocation6], 312
    %s4426 = ssub.s32 256, 1
    %4427 = vst [vmem:[%s4424] sm:%s4426] %v4422
    %s4428 = scalar_lea.vmem %s1, 320
    %v4429 = vld [vmem:[%s4428] sm:$0xff]
    %v4430 = vld [vmem:[%s7] ss:$0 sm:$0xff]
    %v4432 = vshra.s32 %v4430, 16
    %v4433 = vand.u32 %v4432, 255
    %s4435 = sor.u32 256, 64
    %4436 = vbcast.lane.b32.xlu0 %v4433, %s4435
    %v4437 = vpop.permute.xlu0 %4436
    %4438 = xla_tuple %v4437, %v4429, %v19
    %4439 = xla_tuple %4438
    %vm4440 = vcmp.ne.s32.totalorder %v4437, 0
    %v4441 = vsel %vm4440, %v4429, %v19
    %4442 = xla_tuple %v4441
    %s4443 = scalar_lea.vmem [#allocation6], 320
    %s4445 = ssub.s32 256, 1
    %4446 = vst [vmem:[%s4443] sm:%s4445] %v4441
    %s4447 = scalar_lea.vmem %s1, 328
    %v4448 = vld [vmem:[%s4447] sm:$0xff]
    %v4449 = vld [vmem:[%s7] ss:$0 sm:$0xff]
    %v4451 = vshra.s32 %v4449, 16
    %v4452 = vand.u32 %v4451, 255
    %s4454 = sor.u32 256, 72
    %4455 = vbcast.lane.b32.xlu0 %v4452, %s4454
    %v4456 = vpop.permute.xlu0 %4455
    %4457 = xla_tuple %v4456, %v4448, %v19
    %4458 = xla_tuple %4457
    %vm4459 = vcmp.ne.s32.totalorder %v4456, 0
    %v4460 = vsel %vm4459, %v4448, %v19
    %4461 = xla_tuple %v4460
    %s4462 = scalar_lea.vmem [#allocation6], 328
    %s4464 = ssub.s32 256, 1
    %4465 = vst [vmem:[%s4462] sm:%s4464] %v4460
    %s4466 = scalar_lea.vmem %s1, 336
    %v4467 = vld [vmem:[%s4466] sm:$0xff]
    %v4468 = vld [vmem:[%s7] ss:$0 sm:$0xff]
    %v4470 = vshra.s32 %v4468, 16
    %v4471 = vand.u32 %v4470, 255
    %s4473 = sor.u32 256, 80
    %4474 = vbcast.lane.b32.xlu0 %v4471, %s4473
    %v4475 = vpop.permute.xlu0 %4474
    %4476 = xla_tuple %v4475, %v4467, %v19
    %4477 = xla_tuple %4476
    %vm4478 = vcmp.ne.s32.totalorder %v4475, 0
    %v4479 = vsel %vm4478, %v4467, %v19
    %4480 = xla_tuple %v4479
    %s4481 = scalar_lea.vmem [#allocation6], 336
    %s4483 = ssub.s32 256, 1
    %4484 = vst [vmem:[%s4481] sm:%s4483] %v4479
    %s4485 = scalar_lea.vmem %s1, 344
    %v4486 = vld [vmem:[%s4485] sm:$0xff]
    %v4487 = vld [vmem:[%s7] ss:$0 sm:$0xff]
    %v4489 = vshra.s32 %v4487, 16
    %v4490 = vand.u32 %v4489, 255
    %s4492 = sor.u32 256, 88
    %4493 = vbcast.lane.b32.xlu0 %v4490, %s4492
    %v4494 = vpop.permute.xlu0 %4493
    %4495 = xla_tuple %v4494, %v4486, %v19
    %4496 = xla_tuple %4495
    %vm4497 = vcmp.ne.s32.totalorder %v4494, 0
    %v4498 = vsel %vm4497, %v4486, %v19
    %4499 = xla_tuple %v4498
    %s4500 = scalar_lea.vmem [#allocation6], 344
    %s4502 = ssub.s32 256, 1
    %4503 = vst [vmem:[%s4500] sm:%s4502] %v4498
    %s4504 = scalar_lea.vmem %s1, 352
    %v4505 = vld [vmem:[%s4504] sm:$0xff]
    %v4506 = vld [vmem:[%s7] ss:$0 sm:$0xff]
    %v4508 = vshra.s32 %v4506, 16
    %v4509 = vand.u32 %v4508, 255
    %s4511 = sor.u32 256, 96
    %4512 = vbcast.lane.b32.xlu0 %v4509, %s4511
    %v4513 = vpop.permute.xlu0 %4512
    %4514 = xla_tuple %v4513, %v4505, %v19
    %4515 = xla_tuple %4514
    %vm4516 = vcmp.ne.s32.totalorder %v4513, 0
    %v4517 = vsel %vm4516, %v4505, %v19
    %4518 = xla_tuple %v4517
    %s4519 = scalar_lea.vmem [#allocation6], 352
    %s4521 = ssub.s32 256, 1
    %4522 = vst [vmem:[%s4519] sm:%s4521] %v4517
    %s4523 = scalar_lea.vmem %s1, 360
    %v4524 = vld [vmem:[%s4523] sm:$0xff]
    %v4525 = vld [vmem:[%s7] ss:$0 sm:$0xff]
    %v4527 = vshra.s32 %v4525, 16
    %v4528 = vand.u32 %v4527, 255
    %s4530 = sor.u32 256, 104
    %4531 = vbcast.lane.b32.xlu0 %v4528, %s4530
    %v4532 = vpop.permute.xlu0 %4531
    %4533 = xla_tuple %v4532, %v4524, %v19
    %4534 = xla_tuple %4533
    %vm4535 = vcmp.ne.s32.totalorder %v4532, 0
    %v4536 = vsel %vm4535, %v4524, %v19
    %4537 = xla_tuple %v4536
    %s4538 = scalar_lea.vmem [#allocation6], 360
    %s4540 = ssub.s32 256, 1
    %4541 = vst [vmem:[%s4538] sm:%s4540] %v4536
    %s4542 = scalar_lea.vmem %s1, 368
    %v4543 = vld [vmem:[%s4542] sm:$0xff]
    %v4544 = vld [vmem:[%s7] ss:$0 sm:$0xff]
    %v4546 = vshra.s32 %v4544, 16
    %v4547 = vand.u32 %v4546, 255
    %s4549 = sor.u32 256, 112
    %4550 = vbcast.lane.b32.xlu0 %v4547, %s4549
    %v4551 = vpop.permute.xlu0 %4550
    %4552 = xla_tuple %v4551, %v4543, %v19
    %4553 = xla_tuple %4552
    %vm4554 = vcmp.ne.s32.totalorder %v4551, 0
    %v4555 = vsel %vm4554, %v4543, %v19
    %4556 = xla_tuple %v4555
    %s4557 = scalar_lea.vmem [#allocation6], 368
    %s4559 = ssub.s32 256, 1
    %4560 = vst [vmem:[%s4557] sm:%s4559] %v4555
    %s4561 = scalar_lea.vmem %s1, 376
    %v4562 = vld [vmem:[%s4561] sm:$0xff]
    %v4563 = vld [vmem:[%s7] ss:$0 sm:$0xff]
    %v4565 = vshra.s32 %v4563, 16
    %v4566 = vand.u32 %v4565, 255
    %s4568 = sor.u32 256, 120
    %4569 = vbcast.lane.b32.xlu0 %v4566, %s4568
    %v4570 = vpop.permute.xlu0 %4569
    %4571 = xla_tuple %v4570, %v4562, %v19
    %4572 = xla_tuple %4571
    %vm4573 = vcmp.ne.s32.totalorder %v4570, 0
    %v4574 = vsel %vm4573, %v4562, %v19
    %4575 = xla_tuple %v4574
    %s4576 = scalar_lea.vmem [#allocation6], 376
    %s4578 = ssub.s32 256, 1
    %4579 = vst [vmem:[%s4576] sm:%s4578] %v4574
    %v4580 = vld [vmem:[%s0] sm:$0xff]
    %v4581 = vld [vmem:[%s7] ss:$0 sm:$0xff]
    %v4583 = vshra.s32 %v4581, 0
    %v4584 = vand.u32 %v4583, 255
    %4586 = vbcast.lane.b32.xlu0 %v4584, 256
    %v4587 = vpop.permute.xlu0 %4586
    %4588 = xla_tuple %v4587, %v4580, %v20
    %4589 = xla_tuple %4588
    %vm4590 = vcmp.ne.s32.totalorder %v4587, 0
    %v4591 = vsel %vm4590, %v4580, %v20
    %4592 = xla_tuple %v4591
    %s4594 = ssub.s32 256, 1
    %4595 = vst [vmem:[#allocation7] sm:%s4594] %v4591
    %s4596 = scalar_lea.vmem %s0, 8
    %v4597 = vld [vmem:[%s4596] sm:$0xff]
    %v4598 = vld [vmem:[%s7] ss:$0 sm:$0xff]
    %v4600 = vshra.s32 %v4598, 0
    %v4601 = vand.u32 %v4600, 255
    %s4603 = sor.u32 256, 8
    %4604 = vbcast.lane.b32.xlu0 %v4601, %s4603
    %v4605 = vpop.permute.xlu0 %4604
    %4606 = xla_tuple %v4605, %v4597, %v20
    %4607 = xla_tuple %4606
    %vm4608 = vcmp.ne.s32.totalorder %v4605, 0
    %v4609 = vsel %vm4608, %v4597, %v20
    %4610 = xla_tuple %v4609
    %s4611 = scalar_lea.vmem [#allocation7], 8
    %s4613 = ssub.s32 256, 1
    %4614 = vst [vmem:[%s4611] sm:%s4613] %v4609
    %s4615 = scalar_lea.vmem %s0, 16
    %v4616 = vld [vmem:[%s4615] sm:$0xff]
    %v4617 = vld [vmem:[%s7] ss:$0 sm:$0xff]
    %v4619 = vshra.s32 %v4617, 0
    %v4620 = vand.u32 %v4619, 255
    %s4622 = sor.u32 256, 16
    %4623 = vbcast.lane.b32.xlu0 %v4620, %s4622
    %v4624 = vpop.permute.xlu0 %4623
    %4625 = xla_tuple %v4624, %v4616, %v20
    %4626 = xla_tuple %4625
    %vm4627 = vcmp.ne.s32.totalorder %v4624, 0
    %v4628 = vsel %vm4627, %v4616, %v20
    %4629 = xla_tuple %v4628
    %s4630 = scalar_lea.vmem [#allocation7], 16
    %s4632 = ssub.s32 256, 1
    %4633 = vst [vmem:[%s4630] sm:%s4632] %v4628
    %s4634 = scalar_lea.vmem %s0, 24
    %v4635 = vld [vmem:[%s4634] sm:$0xff]
    %v4636 = vld [vmem:[%s7] ss:$0 sm:$0xff]
    %v4638 = vshra.s32 %v4636, 0
    %v4639 = vand.u32 %v4638, 255
    %s4641 = sor.u32 256, 24
    %4642 = vbcast.lane.b32.xlu0 %v4639, %s4641
    %v4643 = vpop.permute.xlu0 %4642
    %4644 = xla_tuple %v4643, %v4635, %v20
    %4645 = xla_tuple %4644
    %vm4646 = vcmp.ne.s32.totalorder %v4643, 0
    %v4647 = vsel %vm4646, %v4635, %v20
    %4648 = xla_tuple %v4647
    %s4649 = scalar_lea.vmem [#allocation7], 24
    %s4651 = ssub.s32 256, 1
    %4652 = vst [vmem:[%s4649] sm:%s4651] %v4647
    %s4653 = scalar_lea.vmem %s0, 32
    %v4654 = vld [vmem:[%s4653] sm:$0xff]
    %v4655 = vld [vmem:[%s7] ss:$0 sm:$0xff]
    %v4657 = vshra.s32 %v4655, 0
    %v4658 = vand.u32 %v4657, 255
    %s4660 = sor.u32 256, 32
    %4661 = vbcast.lane.b32.xlu0 %v4658, %s4660
    %v4662 = vpop.permute.xlu0 %4661
    %4663 = xla_tuple %v4662, %v4654, %v20
    %4664 = xla_tuple %4663
    %vm4665 = vcmp.ne.s32.totalorder %v4662, 0
    %v4666 = vsel %vm4665, %v4654, %v20
    %4667 = xla_tuple %v4666
    %s4668 = scalar_lea.vmem [#allocation7], 32
    %s4670 = ssub.s32 256, 1
    %4671 = vst [vmem:[%s4668] sm:%s4670] %v4666
    %s4672 = scalar_lea.vmem %s0, 40
    %v4673 = vld [vmem:[%s4672] sm:$0xff]
    %v4674 = vld [vmem:[%s7] ss:$0 sm:$0xff]
    %v4676 = vshra.s32 %v4674, 0
    %v4677 = vand.u32 %v4676, 255
    %s4679 = sor.u32 256, 40
    %4680 = vbcast.lane.b32.xlu0 %v4677, %s4679
    %v4681 = vpop.permute.xlu0 %4680
    %4682 = xla_tuple %v4681, %v4673, %v20
    %4683 = xla_tuple %4682
    %vm4684 = vcmp.ne.s32.totalorder %v4681, 0
    %v4685 = vsel %vm4684, %v4673, %v20
    %4686 = xla_tuple %v4685
    %s4687 = scalar_lea.vmem [#allocation7], 40
    %s4689 = ssub.s32 256, 1
    %4690 = vst [vmem:[%s4687] sm:%s4689] %v4685
    %s4691 = scalar_lea.vmem %s0, 48
    %v4692 = vld [vmem:[%s4691] sm:$0xff]
    %v4693 = vld [vmem:[%s7] ss:$0 sm:$0xff]
    %v4695 = vshra.s32 %v4693, 0
    %v4696 = vand.u32 %v4695, 255
    %s4698 = sor.u32 256, 48
    %4699 = vbcast.lane.b32.xlu0 %v4696, %s4698
    %v4700 = vpop.permute.xlu0 %4699
    %4701 = xla_tuple %v4700, %v4692, %v20
    %4702 = xla_tuple %4701
    %vm4703 = vcmp.ne.s32.totalorder %v4700, 0
    %v4704 = vsel %vm4703, %v4692, %v20
    %4705 = xla_tuple %v4704
    %s4706 = scalar_lea.vmem [#allocation7], 48
    %s4708 = ssub.s32 256, 1
    %4709 = vst [vmem:[%s4706] sm:%s4708] %v4704
    %s4710 = scalar_lea.vmem %s0, 56
    %v4711 = vld [vmem:[%s4710] sm:$0xff]
    %v4712 = vld [vmem:[%s7] ss:$0 sm:$0xff]
    %v4714 = vshra.s32 %v4712, 0
    %v4715 = vand.u32 %v4714, 255
    %s4717 = sor.u32 256, 56
    %4718 = vbcast.lane.b32.xlu0 %v4715, %s4717
    %v4719 = vpop.permute.xlu0 %4718
    %4720 = xla_tuple %v4719, %v4711, %v20
    %4721 = xla_tuple %4720
    %vm4722 = vcmp.ne.s32.totalorder %v4719, 0
    %v4723 = vsel %vm4722, %v4711, %v20
    %4724 = xla_tuple %v4723
    %s4725 = scalar_lea.vmem [#allocation7], 56
    %s4727 = ssub.s32 256, 1
    %4728 = vst [vmem:[%s4725] sm:%s4727] %v4723
    %s4729 = scalar_lea.vmem %s0, 64
    %v4730 = vld [vmem:[%s4729] sm:$0xff]
    %v4731 = vld [vmem:[%s7] ss:$0 sm:$0xff]
    %v4733 = vshra.s32 %v4731, 0
    %v4734 = vand.u32 %v4733, 255
    %s4736 = sor.u32 256, 64
    %4737 = vbcast.lane.b32.xlu0 %v4734, %s4736
    %v4738 = vpop.permute.xlu0 %4737
    %4739 = xla_tuple %v4738, %v4730, %v20
    %4740 = xla_tuple %4739
    %vm4741 = vcmp.ne.s32.totalorder %v4738, 0
    %v4742 = vsel %vm4741, %v4730, %v20
    %4743 = xla_tuple %v4742
    %s4744 = scalar_lea.vmem [#allocation7], 64
    %s4746 = ssub.s32 256, 1
    %4747 = vst [vmem:[%s4744] sm:%s4746] %v4742
    %s4748 = scalar_lea.vmem %s0, 72
    %v4749 = vld [vmem:[%s4748] sm:$0xff]
    %v4750 = vld [vmem:[%s7] ss:$0 sm:$0xff]
    %v4752 = vshra.s32 %v4750, 0
    %v4753 = vand.u32 %v4752, 255
    %s4755 = sor.u32 256, 72
    %4756 = vbcast.lane.b32.xlu0 %v4753, %s4755
    %v4757 = vpop.permute.xlu0 %4756
    %4758 = xla_tuple %v4757, %v4749, %v20
    %4759 = xla_tuple %4758
    %vm4760 = vcmp.ne.s32.totalorder %v4757, 0
    %v4761 = vsel %vm4760, %v4749, %v20
    %4762 = xla_tuple %v4761
    %s4763 = scalar_lea.vmem [#allocation7], 72
    %s4765 = ssub.s32 256, 1
    %4766 = vst [vmem:[%s4763] sm:%s4765] %v4761
    %s4767 = scalar_lea.vmem %s0, 80
    %v4768 = vld [vmem:[%s4767] sm:$0xff]
    %v4769 = vld [vmem:[%s7] ss:$0 sm:$0xff]
    %v4771 = vshra.s32 %v4769, 0
    %v4772 = vand.u32 %v4771, 255
    %s4774 = sor.u32 256, 80
    %4775 = vbcast.lane.b32.xlu0 %v4772, %s4774
    %v4776 = vpop.permute.xlu0 %4775
    %4777 = xla_tuple %v4776, %v4768, %v20
    %4778 = xla_tuple %4777
    %vm4779 = vcmp.ne.s32.totalorder %v4776, 0
    %v4780 = vsel %vm4779, %v4768, %v20
    %4781 = xla_tuple %v4780
    %s4782 = scalar_lea.vmem [#allocation7], 80
    %s4784 = ssub.s32 256, 1
    %4785 = vst [vmem:[%s4782] sm:%s4784] %v4780
    %s4786 = scalar_lea.vmem %s0, 88
    %v4787 = vld [vmem:[%s4786] sm:$0xff]
    %v4788 = vld [vmem:[%s7] ss:$0 sm:$0xff]
    %v4790 = vshra.s32 %v4788, 0
    %v4791 = vand.u32 %v4790, 255
    %s4793 = sor.u32 256, 88
    %4794 = vbcast.lane.b32.xlu0 %v4791, %s4793
    %v4795 = vpop.permute.xlu0 %4794
    %4796 = xla_tuple %v4795, %v4787, %v20
    %4797 = xla_tuple %4796
    %vm4798 = vcmp.ne.s32.totalorder %v4795, 0
    %v4799 = vsel %vm4798, %v4787, %v20
    %4800 = xla_tuple %v4799
    %s4801 = scalar_lea.vmem [#allocation7], 88
    %s4803 = ssub.s32 256, 1
    %4804 = vst [vmem:[%s4801] sm:%s4803] %v4799
    %s4805 = scalar_lea.vmem %s0, 96
    %v4806 = vld [vmem:[%s4805] sm:$0xff]
    %v4807 = vld [vmem:[%s7] ss:$0 sm:$0xff]
    %v4809 = vshra.s32 %v4807, 0
    %v4810 = vand.u32 %v4809, 255
    %s4812 = sor.u32 256, 96
    %4813 = vbcast.lane.b32.xlu0 %v4810, %s4812
    %v4814 = vpop.permute.xlu0 %4813
    %4815 = xla_tuple %v4814, %v4806, %v20
    %4816 = xla_tuple %4815
    %vm4817 = vcmp.ne.s32.totalorder %v4814, 0
    %v4818 = vsel %vm4817, %v4806, %v20
    %4819 = xla_tuple %v4818
    %s4820 = scalar_lea.vmem [#allocation7], 96
    %s4822 = ssub.s32 256, 1
    %4823 = vst [vmem:[%s4820] sm:%s4822] %v4818
    %s4824 = scalar_lea.vmem %s0, 104
    %v4825 = vld [vmem:[%s4824] sm:$0xff]
    %v4826 = vld [vmem:[%s7] ss:$0 sm:$0xff]
    %v4828 = vshra.s32 %v4826, 0
    %v4829 = vand.u32 %v4828, 255
    %s4831 = sor.u32 256, 104
    %4832 = vbcast.lane.b32.xlu0 %v4829, %s4831
    %v4833 = vpop.permute.xlu0 %4832
    %4834 = xla_tuple %v4833, %v4825, %v20
    %4835 = xla_tuple %4834
    %vm4836 = vcmp.ne.s32.totalorder %v4833, 0
    %v4837 = vsel %vm4836, %v4825, %v20
    %4838 = xla_tuple %v4837
    %s4839 = scalar_lea.vmem [#allocation7], 104
    %s4841 = ssub.s32 256, 1
    %4842 = vst [vmem:[%s4839] sm:%s4841] %v4837
    %s4843 = scalar_lea.vmem %s0, 112
    %v4844 = vld [vmem:[%s4843] sm:$0xff]
    %v4845 = vld [vmem:[%s7] ss:$0 sm:$0xff]
    %v4847 = vshra.s32 %v4845, 0
    %v4848 = vand.u32 %v4847, 255
    %s4850 = sor.u32 256, 112
    %4851 = vbcast.lane.b32.xlu0 %v4848, %s4850
    %v4852 = vpop.permute.xlu0 %4851
    %4853 = xla_tuple %v4852, %v4844, %v20
    %4854 = xla_tuple %4853
    %vm4855 = vcmp.ne.s32.totalorder %v4852, 0
    %v4856 = vsel %vm4855, %v4844, %v20
    %4857 = xla_tuple %v4856
    %s4858 = scalar_lea.vmem [#allocation7], 112
    %s4860 = ssub.s32 256, 1
    %4861 = vst [vmem:[%s4858] sm:%s4860] %v4856
    %s4862 = scalar_lea.vmem %s0, 120
    %v4863 = vld [vmem:[%s4862] sm:$0xff]
    %v4864 = vld [vmem:[%s7] ss:$0 sm:$0xff]
    %v4866 = vshra.s32 %v4864, 0
    %v4867 = vand.u32 %v4866, 255
    %s4869 = sor.u32 256, 120
    %4870 = vbcast.lane.b32.xlu0 %v4867, %s4869
    %v4871 = vpop.permute.xlu0 %4870
    %4872 = xla_tuple %v4871, %v4863, %v20
    %4873 = xla_tuple %4872
    %vm4874 = vcmp.ne.s32.totalorder %v4871, 0
    %v4875 = vsel %vm4874, %v4863, %v20
    %4876 = xla_tuple %v4875
    %s4877 = scalar_lea.vmem [#allocation7], 120
    %s4879 = ssub.s32 256, 1
    %4880 = vst [vmem:[%s4877] sm:%s4879] %v4875
    %s4881 = scalar_lea.vmem %s0, 128
    %v4882 = vld [vmem:[%s4881] sm:$0xff]
    %v4883 = vld [vmem:[%s7] ss:$0 sm:$0xff]
    %v4885 = vshra.s32 %v4883, 8
    %v4886 = vand.u32 %v4885, 255
    %4888 = vbcast.lane.b32.xlu0 %v4886, 256
    %v4889 = vpop.permute.xlu0 %4888
    %4890 = xla_tuple %v4889, %v4882, %v20
    %4891 = xla_tuple %4890
    %vm4892 = vcmp.ne.s32.totalorder %v4889, 0
    %v4893 = vsel %vm4892, %v4882, %v20
    %4894 = xla_tuple %v4893
    %s4895 = scalar_lea.vmem [#allocation7], 128
    %s4897 = ssub.s32 256, 1
    %4898 = vst [vmem:[%s4895] sm:%s4897] %v4893
    %s4899 = scalar_lea.vmem %s0, 136
    %v4900 = vld [vmem:[%s4899] sm:$0xff]
    %v4901 = vld [vmem:[%s7] ss:$0 sm:$0xff]
    %v4903 = vshra.s32 %v4901, 8
    %v4904 = vand.u32 %v4903, 255
    %s4906 = sor.u32 256, 8
    %4907 = vbcast.lane.b32.xlu0 %v4904, %s4906
    %v4908 = vpop.permute.xlu0 %4907
    %4909 = xla_tuple %v4908, %v4900, %v20
    %4910 = xla_tuple %4909
    %vm4911 = vcmp.ne.s32.totalorder %v4908, 0
    %v4912 = vsel %vm4911, %v4900, %v20
    %4913 = xla_tuple %v4912
    %s4914 = scalar_lea.vmem [#allocation7], 136
    %s4916 = ssub.s32 256, 1
    %4917 = vst [vmem:[%s4914] sm:%s4916] %v4912
    %s4918 = scalar_lea.vmem %s0, 144
    %v4919 = vld [vmem:[%s4918] sm:$0xff]
    %v4920 = vld [vmem:[%s7] ss:$0 sm:$0xff]
    %v4922 = vshra.s32 %v4920, 8
    %v4923 = vand.u32 %v4922, 255
    %s4925 = sor.u32 256, 16
    %4926 = vbcast.lane.b32.xlu0 %v4923, %s4925
    %v4927 = vpop.permute.xlu0 %4926
    %4928 = xla_tuple %v4927, %v4919, %v20
    %4929 = xla_tuple %4928
    %vm4930 = vcmp.ne.s32.totalorder %v4927, 0
    %v4931 = vsel %vm4930, %v4919, %v20
    %4932 = xla_tuple %v4931
    %s4933 = scalar_lea.vmem [#allocation7], 144
    %s4935 = ssub.s32 256, 1
    %4936 = vst [vmem:[%s4933] sm:%s4935] %v4931
    %s4937 = scalar_lea.vmem %s0, 152
    %v4938 = vld [vmem:[%s4937] sm:$0xff]
    %v4939 = vld [vmem:[%s7] ss:$0 sm:$0xff]
    %v4941 = vshra.s32 %v4939, 8
    %v4942 = vand.u32 %v4941, 255
    %s4944 = sor.u32 256, 24
    %4945 = vbcast.lane.b32.xlu0 %v4942, %s4944
    %v4946 = vpop.permute.xlu0 %4945
    %4947 = xla_tuple %v4946, %v4938, %v20
    %4948 = xla_tuple %4947
    %vm4949 = vcmp.ne.s32.totalorder %v4946, 0
    %v4950 = vsel %vm4949, %v4938, %v20
    %4951 = xla_tuple %v4950
    %s4952 = scalar_lea.vmem [#allocation7], 152
    %s4954 = ssub.s32 256, 1
    %4955 = vst [vmem:[%s4952] sm:%s4954] %v4950
    %s4956 = scalar_lea.vmem %s0, 160
    %v4957 = vld [vmem:[%s4956] sm:$0xff]
    %v4958 = vld [vmem:[%s7] ss:$0 sm:$0xff]
    %v4960 = vshra.s32 %v4958, 8
    %v4961 = vand.u32 %v4960, 255
    %s4963 = sor.u32 256, 32
    %4964 = vbcast.lane.b32.xlu0 %v4961, %s4963
    %v4965 = vpop.permute.xlu0 %4964
    %4966 = xla_tuple %v4965, %v4957, %v20
    %4967 = xla_tuple %4966
    %vm4968 = vcmp.ne.s32.totalorder %v4965, 0
    %v4969 = vsel %vm4968, %v4957, %v20
    %4970 = xla_tuple %v4969
    %s4971 = scalar_lea.vmem [#allocation7], 160
    %s4973 = ssub.s32 256, 1
    %4974 = vst [vmem:[%s4971] sm:%s4973] %v4969
    %s4975 = scalar_lea.vmem %s0, 168
    %v4976 = vld [vmem:[%s4975] sm:$0xff]
    %v4977 = vld [vmem:[%s7] ss:$0 sm:$0xff]
    %v4979 = vshra.s32 %v4977, 8
    %v4980 = vand.u32 %v4979, 255
    %s4982 = sor.u32 256, 40
    %4983 = vbcast.lane.b32.xlu0 %v4980, %s4982
    %v4984 = vpop.permute.xlu0 %4983
    %4985 = xla_tuple %v4984, %v4976, %v20
    %4986 = xla_tuple %4985
    %vm4987 = vcmp.ne.s32.totalorder %v4984, 0
    %v4988 = vsel %vm4987, %v4976, %v20
    %4989 = xla_tuple %v4988
    %s4990 = scalar_lea.vmem [#allocation7], 168
    %s4992 = ssub.s32 256, 1
    %4993 = vst [vmem:[%s4990] sm:%s4992] %v4988
    %s4994 = scalar_lea.vmem %s0, 176
    %v4995 = vld [vmem:[%s4994] sm:$0xff]
    %v4996 = vld [vmem:[%s7] ss:$0 sm:$0xff]
    %v4998 = vshra.s32 %v4996, 8
    %v4999 = vand.u32 %v4998, 255
    %s5001 = sor.u32 256, 48
    %5002 = vbcast.lane.b32.xlu0 %v4999, %s5001
    %v5003 = vpop.permute.xlu0 %5002
    %5004 = xla_tuple %v5003, %v4995, %v20
    %5005 = xla_tuple %5004
    %vm5006 = vcmp.ne.s32.totalorder %v5003, 0
    %v5007 = vsel %vm5006, %v4995, %v20
    %5008 = xla_tuple %v5007
    %s5009 = scalar_lea.vmem [#allocation7], 176
    %s5011 = ssub.s32 256, 1
    %5012 = vst [vmem:[%s5009] sm:%s5011] %v5007
    %s5013 = scalar_lea.vmem %s0, 184
    %v5014 = vld [vmem:[%s5013] sm:$0xff]
    %v5015 = vld [vmem:[%s7] ss:$0 sm:$0xff]
    %v5017 = vshra.s32 %v5015, 8
    %v5018 = vand.u32 %v5017, 255
    %s5020 = sor.u32 256, 56
    %5021 = vbcast.lane.b32.xlu0 %v5018, %s5020
    %v5022 = vpop.permute.xlu0 %5021
    %5023 = xla_tuple %v5022, %v5014, %v20
    %5024 = xla_tuple %5023
    %vm5025 = vcmp.ne.s32.totalorder %v5022, 0
    %v5026 = vsel %vm5025, %v5014, %v20
    %5027 = xla_tuple %v5026
    %s5028 = scalar_lea.vmem [#allocation7], 184
    %s5030 = ssub.s32 256, 1
    %5031 = vst [vmem:[%s5028] sm:%s5030] %v5026
    %s5032 = scalar_lea.vmem %s0, 192
    %v5033 = vld [vmem:[%s5032] sm:$0xff]
    %v5034 = vld [vmem:[%s7] ss:$0 sm:$0xff]
    %v5036 = vshra.s32 %v5034, 8
    %v5037 = vand.u32 %v5036, 255
    %s5039 = sor.u32 256, 64
    %5040 = vbcast.lane.b32.xlu0 %v5037, %s5039
    %v5041 = vpop.permute.xlu0 %5040
    %5042 = xla_tuple %v5041, %v5033, %v20
    %5043 = xla_tuple %5042
    %vm5044 = vcmp.ne.s32.totalorder %v5041, 0
    %v5045 = vsel %vm5044, %v5033, %v20
    %5046 = xla_tuple %v5045
    %s5047 = scalar_lea.vmem [#allocation7], 192
    %s5049 = ssub.s32 256, 1
    %5050 = vst [vmem:[%s5047] sm:%s5049] %v5045
    %s5051 = scalar_lea.vmem %s0, 200
    %v5052 = vld [vmem:[%s5051] sm:$0xff]
    %v5053 = vld [vmem:[%s7] ss:$0 sm:$0xff]
    %v5055 = vshra.s32 %v5053, 8
    %v5056 = vand.u32 %v5055, 255
    %s5058 = sor.u32 256, 72
    %5059 = vbcast.lane.b32.xlu0 %v5056, %s5058
    %v5060 = vpop.permute.xlu0 %5059
    %5061 = xla_tuple %v5060, %v5052, %v20
    %5062 = xla_tuple %5061
    %vm5063 = vcmp.ne.s32.totalorder %v5060, 0
    %v5064 = vsel %vm5063, %v5052, %v20
    %5065 = xla_tuple %v5064
    %s5066 = scalar_lea.vmem [#allocation7], 200
    %s5068 = ssub.s32 256, 1
    %5069 = vst [vmem:[%s5066] sm:%s5068] %v5064
    %s5070 = scalar_lea.vmem %s0, 208
    %v5071 = vld [vmem:[%s5070] sm:$0xff]
    %v5072 = vld [vmem:[%s7] ss:$0 sm:$0xff]
    %v5074 = vshra.s32 %v5072, 8
    %v5075 = vand.u32 %v5074, 255
    %s5077 = sor.u32 256, 80
    %5078 = vbcast.lane.b32.xlu0 %v5075, %s5077
    %v5079 = vpop.permute.xlu0 %5078
    %5080 = xla_tuple %v5079, %v5071, %v20
    %5081 = xla_tuple %5080
    %vm5082 = vcmp.ne.s32.totalorder %v5079, 0
    %v5083 = vsel %vm5082, %v5071, %v20
    %5084 = xla_tuple %v5083
    %s5085 = scalar_lea.vmem [#allocation7], 208
    %s5087 = ssub.s32 256, 1
    %5088 = vst [vmem:[%s5085] sm:%s5087] %v5083
    %s5089 = scalar_lea.vmem %s0, 216
    %v5090 = vld [vmem:[%s5089] sm:$0xff]
    %v5091 = vld [vmem:[%s7] ss:$0 sm:$0xff]
    %v5093 = vshra.s32 %v5091, 8
    %v5094 = vand.u32 %v5093, 255
    %s5096 = sor.u32 256, 88
    %5097 = vbcast.lane.b32.xlu0 %v5094, %s5096
    %v5098 = vpop.permute.xlu0 %5097
    %5099 = xla_tuple %v5098, %v5090, %v20
    %5100 = xla_tuple %5099
    %vm5101 = vcmp.ne.s32.totalorder %v5098, 0
    %v5102 = vsel %vm5101, %v5090, %v20
    %5103 = xla_tuple %v5102
    %s5104 = scalar_lea.vmem [#allocation7], 216
    %s5106 = ssub.s32 256, 1
    %5107 = vst [vmem:[%s5104] sm:%s5106] %v5102
    %s5108 = scalar_lea.vmem %s0, 224
    %v5109 = vld [vmem:[%s5108] sm:$0xff]
    %v5110 = vld [vmem:[%s7] ss:$0 sm:$0xff]
    %v5112 = vshra.s32 %v5110, 8
    %v5113 = vand.u32 %v5112, 255
    %s5115 = sor.u32 256, 96
    %5116 = vbcast.lane.b32.xlu0 %v5113, %s5115
    %v5117 = vpop.permute.xlu0 %5116
    %5118 = xla_tuple %v5117, %v5109, %v20
    %5119 = xla_tuple %5118
    %vm5120 = vcmp.ne.s32.totalorder %v5117, 0
    %v5121 = vsel %vm5120, %v5109, %v20
    %5122 = xla_tuple %v5121
    %s5123 = scalar_lea.vmem [#allocation7], 224
    %s5125 = ssub.s32 256, 1
    %5126 = vst [vmem:[%s5123] sm:%s5125] %v5121
    %s5127 = scalar_lea.vmem %s0, 232
    %v5128 = vld [vmem:[%s5127] sm:$0xff]
    %v5129 = vld [vmem:[%s7] ss:$0 sm:$0xff]
    %v5131 = vshra.s32 %v5129, 8
    %v5132 = vand.u32 %v5131, 255
    %s5134 = sor.u32 256, 104
    %5135 = vbcast.lane.b32.xlu0 %v5132, %s5134
    %v5136 = vpop.permute.xlu0 %5135
    %5137 = xla_tuple %v5136, %v5128, %v20
    %5138 = xla_tuple %5137
    %vm5139 = vcmp.ne.s32.totalorder %v5136, 0
    %v5140 = vsel %vm5139, %v5128, %v20
    %5141 = xla_tuple %v5140
    %s5142 = scalar_lea.vmem [#allocation7], 232
    %s5144 = ssub.s32 256, 1
    %5145 = vst [vmem:[%s5142] sm:%s5144] %v5140
    %s5146 = scalar_lea.vmem %s0, 240
    %v5147 = vld [vmem:[%s5146] sm:$0xff]
    %v5148 = vld [vmem:[%s7] ss:$0 sm:$0xff]
    %v5150 = vshra.s32 %v5148, 8
    %v5151 = vand.u32 %v5150, 255
    %s5153 = sor.u32 256, 112
    %5154 = vbcast.lane.b32.xlu0 %v5151, %s5153
    %v5155 = vpop.permute.xlu0 %5154
    %5156 = xla_tuple %v5155, %v5147, %v20
    %5157 = xla_tuple %5156
    %vm5158 = vcmp.ne.s32.totalorder %v5155, 0
    %v5159 = vsel %vm5158, %v5147, %v20
    %5160 = xla_tuple %v5159
    %s5161 = scalar_lea.vmem [#allocation7], 240
    %s5163 = ssub.s32 256, 1
    %5164 = vst [vmem:[%s5161] sm:%s5163] %v5159
    %s5165 = scalar_lea.vmem %s0, 248
    %v5166 = vld [vmem:[%s5165] sm:$0xff]
    %v5167 = vld [vmem:[%s7] ss:$0 sm:$0xff]
    %v5169 = vshra.s32 %v5167, 8
    %v5170 = vand.u32 %v5169, 255
    %s5172 = sor.u32 256, 120
    %5173 = vbcast.lane.b32.xlu0 %v5170, %s5172
    %v5174 = vpop.permute.xlu0 %5173
    %5175 = xla_tuple %v5174, %v5166, %v20
    %5176 = xla_tuple %5175
    %vm5177 = vcmp.ne.s32.totalorder %v5174, 0
    %v5178 = vsel %vm5177, %v5166, %v20
    %5179 = xla_tuple %v5178
    %s5180 = scalar_lea.vmem [#allocation7], 248
    %s5182 = ssub.s32 256, 1
    %5183 = vst [vmem:[%s5180] sm:%s5182] %v5178
    %s5184 = scalar_lea.vmem %s0, 256
    %v5185 = vld [vmem:[%s5184] sm:$0xff]
    %v5186 = vld [vmem:[%s7] ss:$0 sm:$0xff]
    %v5188 = vshra.s32 %v5186, 16
    %v5189 = vand.u32 %v5188, 255
    %5191 = vbcast.lane.b32.xlu0 %v5189, 256
    %v5192 = vpop.permute.xlu0 %5191
    %5193 = xla_tuple %v5192, %v5185, %v20
    %5194 = xla_tuple %5193
    %vm5195 = vcmp.ne.s32.totalorder %v5192, 0
    %v5196 = vsel %vm5195, %v5185, %v20
    %5197 = xla_tuple %v5196
    %s5198 = scalar_lea.vmem [#allocation7], 256
    %s5200 = ssub.s32 256, 1
    %5201 = vst [vmem:[%s5198] sm:%s5200] %v5196
    %s5202 = scalar_lea.vmem %s0, 264
    %v5203 = vld [vmem:[%s5202] sm:$0xff]
    %v5204 = vld [vmem:[%s7] ss:$0 sm:$0xff]
    %v5206 = vshra.s32 %v5204, 16
    %v5207 = vand.u32 %v5206, 255
    %s5209 = sor.u32 256, 8
    %5210 = vbcast.lane.b32.xlu0 %v5207, %s5209
    %v5211 = vpop.permute.xlu0 %5210
    %5212 = xla_tuple %v5211, %v5203, %v20
    %5213 = xla_tuple %5212
    %vm5214 = vcmp.ne.s32.totalorder %v5211, 0
    %v5215 = vsel %vm5214, %v5203, %v20
    %5216 = xla_tuple %v5215
    %s5217 = scalar_lea.vmem [#allocation7], 264
    %s5219 = ssub.s32 256, 1
    %5220 = vst [vmem:[%s5217] sm:%s5219] %v5215
    %s5221 = scalar_lea.vmem %s0, 272
    %v5222 = vld [vmem:[%s5221] sm:$0xff]
    %v5223 = vld [vmem:[%s7] ss:$0 sm:$0xff]
    %v5225 = vshra.s32 %v5223, 16
    %v5226 = vand.u32 %v5225, 255
    %s5228 = sor.u32 256, 16
    %5229 = vbcast.lane.b32.xlu0 %v5226, %s5228
    %v5230 = vpop.permute.xlu0 %5229
    %5231 = xla_tuple %v5230, %v5222, %v20
    %5232 = xla_tuple %5231
    %vm5233 = vcmp.ne.s32.totalorder %v5230, 0
    %v5234 = vsel %vm5233, %v5222, %v20
    %5235 = xla_tuple %v5234
    %s5236 = scalar_lea.vmem [#allocation7], 272
    %s5238 = ssub.s32 256, 1
    %5239 = vst [vmem:[%s5236] sm:%s5238] %v5234
    %s5240 = scalar_lea.vmem %s0, 280
    %v5241 = vld [vmem:[%s5240] sm:$0xff]
    %v5242 = vld [vmem:[%s7] ss:$0 sm:$0xff]
    %v5244 = vshra.s32 %v5242, 16
    %v5245 = vand.u32 %v5244, 255
    %s5247 = sor.u32 256, 24
    %5248 = vbcast.lane.b32.xlu0 %v5245, %s5247
    %v5249 = vpop.permute.xlu0 %5248
    %5250 = xla_tuple %v5249, %v5241, %v20
    %5251 = xla_tuple %5250
    %vm5252 = vcmp.ne.s32.totalorder %v5249, 0
    %v5253 = vsel %vm5252, %v5241, %v20
    %5254 = xla_tuple %v5253
    %s5255 = scalar_lea.vmem [#allocation7], 280
    %s5257 = ssub.s32 256, 1
    %5258 = vst [vmem:[%s5255] sm:%s5257] %v5253
    %s5259 = scalar_lea.vmem %s0, 288
    %v5260 = vld [vmem:[%s5259] sm:$0xff]
    %v5261 = vld [vmem:[%s7] ss:$0 sm:$0xff]
    %v5263 = vshra.s32 %v5261, 16
    %v5264 = vand.u32 %v5263, 255
    %s5266 = sor.u32 256, 32
    %5267 = vbcast.lane.b32.xlu0 %v5264, %s5266
    %v5268 = vpop.permute.xlu0 %5267
    %5269 = xla_tuple %v5268, %v5260, %v20
    %5270 = xla_tuple %5269
    %vm5271 = vcmp.ne.s32.totalorder %v5268, 0
    %v5272 = vsel %vm5271, %v5260, %v20
    %5273 = xla_tuple %v5272
    %s5274 = scalar_lea.vmem [#allocation7], 288
    %s5276 = ssub.s32 256, 1
    %5277 = vst [vmem:[%s5274] sm:%s5276] %v5272
    %s5278 = scalar_lea.vmem %s0, 296
    %v5279 = vld [vmem:[%s5278] sm:$0xff]
    %v5280 = vld [vmem:[%s7] ss:$0 sm:$0xff]
    %v5282 = vshra.s32 %v5280, 16
    %v5283 = vand.u32 %v5282, 255
    %s5285 = sor.u32 256, 40
    %5286 = vbcast.lane.b32.xlu0 %v5283, %s5285
    %v5287 = vpop.permute.xlu0 %5286
    %5288 = xla_tuple %v5287, %v5279, %v20
    %5289 = xla_tuple %5288
    %vm5290 = vcmp.ne.s32.totalorder %v5287, 0
    %v5291 = vsel %vm5290, %v5279, %v20
    %5292 = xla_tuple %v5291
    %s5293 = scalar_lea.vmem [#allocation7], 296
    %s5295 = ssub.s32 256, 1
    %5296 = vst [vmem:[%s5293] sm:%s5295] %v5291
    %s5297 = scalar_lea.vmem %s0, 304
    %v5298 = vld [vmem:[%s5297] sm:$0xff]
    %v5299 = vld [vmem:[%s7] ss:$0 sm:$0xff]
    %v5301 = vshra.s32 %v5299, 16
    %v5302 = vand.u32 %v5301, 255
    %s5304 = sor.u32 256, 48
    %5305 = vbcast.lane.b32.xlu0 %v5302, %s5304
    %v5306 = vpop.permute.xlu0 %5305
    %5307 = xla_tuple %v5306, %v5298, %v20
    %5308 = xla_tuple %5307
    %vm5309 = vcmp.ne.s32.totalorder %v5306, 0
    %v5310 = vsel %vm5309, %v5298, %v20
    %5311 = xla_tuple %v5310
    %s5312 = scalar_lea.vmem [#allocation7], 304
    %s5314 = ssub.s32 256, 1
    %5315 = vst [vmem:[%s5312] sm:%s5314] %v5310
    %s5316 = scalar_lea.vmem %s0, 312
    %v5317 = vld [vmem:[%s5316] sm:$0xff]
    %v5318 = vld [vmem:[%s7] ss:$0 sm:$0xff]
    %v5320 = vshra.s32 %v5318, 16
    %v5321 = vand.u32 %v5320, 255
    %s5323 = sor.u32 256, 56
    %5324 = vbcast.lane.b32.xlu0 %v5321, %s5323
    %v5325 = vpop.permute.xlu0 %5324
    %5326 = xla_tuple %v5325, %v5317, %v20
    %5327 = xla_tuple %5326
    %vm5328 = vcmp.ne.s32.totalorder %v5325, 0
    %v5329 = vsel %vm5328, %v5317, %v20
    %5330 = xla_tuple %v5329
    %s5331 = scalar_lea.vmem [#allocation7], 312
    %s5333 = ssub.s32 256, 1
    %5334 = vst [vmem:[%s5331] sm:%s5333] %v5329
    %s5335 = scalar_lea.vmem %s0, 320
    %v5336 = vld [vmem:[%s5335] sm:$0xff]
    %v5337 = vld [vmem:[%s7] ss:$0 sm:$0xff]
    %v5339 = vshra.s32 %v5337, 16
    %v5340 = vand.u32 %v5339, 255
    %s5342 = sor.u32 256, 64
    %5343 = vbcast.lane.b32.xlu0 %v5340, %s5342
    %v5344 = vpop.permute.xlu0 %5343
    %5345 = xla_tuple %v5344, %v5336, %v20
    %5346 = xla_tuple %5345
    %vm5347 = vcmp.ne.s32.totalorder %v5344, 0
    %v5348 = vsel %vm5347, %v5336, %v20
    %5349 = xla_tuple %v5348
    %s5350 = scalar_lea.vmem [#allocation7], 320
    %s5352 = ssub.s32 256, 1
    %5353 = vst [vmem:[%s5350] sm:%s5352] %v5348
    %s5354 = scalar_lea.vmem %s0, 328
    %v5355 = vld [vmem:[%s5354] sm:$0xff]
    %v5356 = vld [vmem:[%s7] ss:$0 sm:$0xff]
    %v5358 = vshra.s32 %v5356, 16
    %v5359 = vand.u32 %v5358, 255
    %s5361 = sor.u32 256, 72
    %5362 = vbcast.lane.b32.xlu0 %v5359, %s5361
    %v5363 = vpop.permute.xlu0 %5362
    %5364 = xla_tuple %v5363, %v5355, %v20
    %5365 = xla_tuple %5364
    %vm5366 = vcmp.ne.s32.totalorder %v5363, 0
    %v5367 = vsel %vm5366, %v5355, %v20
    %5368 = xla_tuple %v5367
    %s5369 = scalar_lea.vmem [#allocation7], 328
    %s5371 = ssub.s32 256, 1
    %5372 = vst [vmem:[%s5369] sm:%s5371] %v5367
    %s5373 = scalar_lea.vmem %s0, 336
    %v5374 = vld [vmem:[%s5373] sm:$0xff]
    %v5375 = vld [vmem:[%s7] ss:$0 sm:$0xff]
    %v5377 = vshra.s32 %v5375, 16
    %v5378 = vand.u32 %v5377, 255
    %s5380 = sor.u32 256, 80
    %5381 = vbcast.lane.b32.xlu0 %v5378, %s5380
    %v5382 = vpop.permute.xlu0 %5381
    %5383 = xla_tuple %v5382, %v5374, %v20
    %5384 = xla_tuple %5383
    %vm5385 = vcmp.ne.s32.totalorder %v5382, 0
    %v5386 = vsel %vm5385, %v5374, %v20
    %5387 = xla_tuple %v5386
    %s5388 = scalar_lea.vmem [#allocation7], 336
    %s5390 = ssub.s32 256, 1
    %5391 = vst [vmem:[%s5388] sm:%s5390] %v5386
    %s5392 = scalar_lea.vmem %s0, 344
    %v5393 = vld [vmem:[%s5392] sm:$0xff]
    %v5394 = vld [vmem:[%s7] ss:$0 sm:$0xff]
    %v5396 = vshra.s32 %v5394, 16
    %v5397 = vand.u32 %v5396, 255
    %s5399 = sor.u32 256, 88
    %5400 = vbcast.lane.b32.xlu0 %v5397, %s5399
    %v5401 = vpop.permute.xlu0 %5400
    %5402 = xla_tuple %v5401, %v5393, %v20
    %5403 = xla_tuple %5402
    %vm5404 = vcmp.ne.s32.totalorder %v5401, 0
    %v5405 = vsel %vm5404, %v5393, %v20
    %5406 = xla_tuple %v5405
    %s5407 = scalar_lea.vmem [#allocation7], 344
    %s5409 = ssub.s32 256, 1
    %5410 = vst [vmem:[%s5407] sm:%s5409] %v5405
    %s5411 = scalar_lea.vmem %s0, 352
    %v5412 = vld [vmem:[%s5411] sm:$0xff]
    %v5413 = vld [vmem:[%s7] ss:$0 sm:$0xff]
    %v5415 = vshra.s32 %v5413, 16
    %v5416 = vand.u32 %v5415, 255
    %s5418 = sor.u32 256, 96
    %5419 = vbcast.lane.b32.xlu0 %v5416, %s5418
    %v5420 = vpop.permute.xlu0 %5419
    %5421 = xla_tuple %v5420, %v5412, %v20
    %5422 = xla_tuple %5421
    %vm5423 = vcmp.ne.s32.totalorder %v5420, 0
    %v5424 = vsel %vm5423, %v5412, %v20
    %5425 = xla_tuple %v5424
    %s5426 = scalar_lea.vmem [#allocation7], 352
    %s5428 = ssub.s32 256, 1
    %5429 = vst [vmem:[%s5426] sm:%s5428] %v5424
    %s5430 = scalar_lea.vmem %s0, 360
    %v5431 = vld [vmem:[%s5430] sm:$0xff]
    %v5432 = vld [vmem:[%s7] ss:$0 sm:$0xff]
    %v5434 = vshra.s32 %v5432, 16
    %v5435 = vand.u32 %v5434, 255
    %s5437 = sor.u32 256, 104
    %5438 = vbcast.lane.b32.xlu0 %v5435, %s5437
    %v5439 = vpop.permute.xlu0 %5438
    %5440 = xla_tuple %v5439, %v5431, %v20
    %5441 = xla_tuple %5440
    %vm5442 = vcmp.ne.s32.totalorder %v5439, 0
    %v5443 = vsel %vm5442, %v5431, %v20
    %5444 = xla_tuple %v5443
    %s5445 = scalar_lea.vmem [#allocation7], 360
    %s5447 = ssub.s32 256, 1
    %5448 = vst [vmem:[%s5445] sm:%s5447] %v5443
    %s5449 = scalar_lea.vmem %s0, 368
    %v5450 = vld [vmem:[%s5449] sm:$0xff]
    %v5451 = vld [vmem:[%s7] ss:$0 sm:$0xff]
    %v5453 = vshra.s32 %v5451, 16
    %v5454 = vand.u32 %v5453, 255
    %s5456 = sor.u32 256, 112
    %5457 = vbcast.lane.b32.xlu0 %v5454, %s5456
    %v5458 = vpop.permute.xlu0 %5457
    %5459 = xla_tuple %v5458, %v5450, %v20
    %5460 = xla_tuple %5459
    %vm5461 = vcmp.ne.s32.totalorder %v5458, 0
    %v5462 = vsel %vm5461, %v5450, %v20
    %5463 = xla_tuple %v5462
    %s5464 = scalar_lea.vmem [#allocation7], 368
    %s5466 = ssub.s32 256, 1
    %5467 = vst [vmem:[%s5464] sm:%s5466] %v5462
    %s5468 = scalar_lea.vmem %s0, 376
    %v5469 = vld [vmem:[%s5468] sm:$0xff]
    %v5470 = vld [vmem:[%s7] ss:$0 sm:$0xff]
    %v5472 = vshra.s32 %v5470, 16
    %v5473 = vand.u32 %v5472, 255
    %s5475 = sor.u32 256, 120
    %5476 = vbcast.lane.b32.xlu0 %v5473, %s5475
    %v5477 = vpop.permute.xlu0 %5476
    %5478 = xla_tuple %v5477, %v5469, %v20
    %5479 = xla_tuple %5478
    %vm5480 = vcmp.ne.s32.totalorder %v5477, 0
    %v5481 = vsel %vm5480, %v5469, %v20
    %5482 = xla_tuple %v5481
    %s5483 = scalar_lea.vmem [#allocation7], 376
    %s5485 = ssub.s32 256, 1
    %5486 = vst [vmem:[%s5483] sm:%s5485] %v5481
    %v5487 = vld [vmem:[#allocation2] sm:$0xff]
    %v5488 = vld [vmem:[#allocation2 + $0x8] sm:$0xff]
    %v5489 = vld [vmem:[#allocation2 + $0x10] sm:$0xff]
    %v5490 = vld [vmem:[#allocation2 + $0x18] sm:$0xff]
    %v5491 = vld [vmem:[#allocation2 + $0x20] sm:$0xff]
    %v5492 = vld [vmem:[#allocation2 + $0x28] sm:$0xff]
    %v5493 = vld [vmem:[#allocation2 + $0x30] sm:$0xff]
    %v5494 = vld [vmem:[#allocation2 + $0x38] sm:$0xff]
    %v5495 = vld [vmem:[#allocation2 + $0x40] sm:$0xff]
    %v5496 = vld [vmem:[#allocation2 + $0x48] sm:$0xff]
    %v5497 = vld [vmem:[#allocation2 + $0x50] sm:$0xff]
    %v5498 = vld [vmem:[#allocation2 + $0x58] sm:$0xff]
    %v5499 = vld [vmem:[#allocation2 + $0x60] sm:$0xff]
    %v5500 = vld [vmem:[#allocation2 + $0x68] sm:$0xff]
    %v5501 = vld [vmem:[#allocation2 + $0x70] sm:$0xff]
    %v5502 = vld [vmem:[#allocation2 + $0x78] sm:$0xff]
    %v5503 = vld [vmem:[#allocation2 + $0x80] sm:$0xff]
    %v5504 = vld [vmem:[#allocation2 + $0x88] sm:$0xff]
    %v5505 = vld [vmem:[#allocation2 + $0x90] sm:$0xff]
    %v5506 = vld [vmem:[#allocation2 + $0x98] sm:$0xff]
    %v5507 = vld [vmem:[#allocation2 + $0xa0] sm:$0xff]
    %v5508 = vld [vmem:[#allocation2 + $0xa8] sm:$0xff]
    %v5509 = vld [vmem:[#allocation2 + $0xb0] sm:$0xff]
    %v5510 = vld [vmem:[#allocation2 + $0xb8] sm:$0xff]
    %v5511 = vld [vmem:[#allocation2 + $0xc0] sm:$0xff]
    %v5512 = vld [vmem:[#allocation2 + $0xc8] sm:$0xff]
    %v5513 = vld [vmem:[#allocation2 + $0xd0] sm:$0xff]
    %v5514 = vld [vmem:[#allocation2 + $0xd8] sm:$0xff]
    %v5515 = vld [vmem:[#allocation2 + $0xe0] sm:$0xff]
    %v5516 = vld [vmem:[#allocation2 + $0xe8] sm:$0xff]
    %v5517 = vld [vmem:[#allocation2 + $0xf0] sm:$0xff]
    %v5518 = vld [vmem:[#allocation2 + $0xf8] sm:$0xff]
    %v5519 = vld [vmem:[#allocation2 + $0x100] sm:$0xff]
    %v5520 = vld [vmem:[#allocation2 + $0x108] sm:$0xff]
    %v5521 = vld [vmem:[#allocation2 + $0x110] sm:$0xff]
    %v5522 = vld [vmem:[#allocation2 + $0x118] sm:$0xff]
    %v5523 = vld [vmem:[#allocation2 + $0x120] sm:$0xff]
    %v5524 = vld [vmem:[#allocation2 + $0x128] sm:$0xff]
    %v5525 = vld [vmem:[#allocation2 + $0x130] sm:$0xff]
    %v5526 = vld [vmem:[#allocation2 + $0x138] sm:$0xff]
    %v5527 = vld [vmem:[#allocation2 + $0x140] sm:$0xff]
    %v5528 = vld [vmem:[#allocation2 + $0x148] sm:$0xff]
    %v5529 = vld [vmem:[#allocation2 + $0x150] sm:$0xff]
    %v5530 = vld [vmem:[#allocation2 + $0x158] sm:$0xff]
    %v5531 = vld [vmem:[#allocation2 + $0x160] sm:$0xff]
    %v5532 = vld [vmem:[#allocation2 + $0x168] sm:$0xff]
    %v5533 = vld [vmem:[#allocation2 + $0x170] sm:$0xff]
    %v5534 = vld [vmem:[#allocation2 + $0x178] sm:$0xff]
    %v5535 = vld [vmem:[#allocation3] sm:$0xff]
    %v5536 = vld [vmem:[#allocation3 + $0x8] sm:$0xff]
    %v5537 = vld [vmem:[#allocation3 + $0x10] sm:$0xff]
    %v5538 = vld [vmem:[#allocation3 + $0x18] sm:$0xff]
    %v5539 = vld [vmem:[#allocation3 + $0x20] sm:$0xff]
    %v5540 = vld [vmem:[#allocation3 + $0x28] sm:$0xff]
    %v5541 = vld [vmem:[#allocation3 + $0x30] sm:$0xff]
    %v5542 = vld [vmem:[#allocation3 + $0x38] sm:$0xff]
    %v5543 = vld [vmem:[#allocation3 + $0x40] sm:$0xff]
    %v5544 = vld [vmem:[#allocation3 + $0x48] sm:$0xff]
    %v5545 = vld [vmem:[#allocation3 + $0x50] sm:$0xff]
    %v5546 = vld [vmem:[#allocation3 + $0x58] sm:$0xff]
    %v5547 = vld [vmem:[#allocation3 + $0x60] sm:$0xff]
    %v5548 = vld [vmem:[#allocation3 + $0x68] sm:$0xff]
    %v5549 = vld [vmem:[#allocation3 + $0x70] sm:$0xff]
    %v5550 = vld [vmem:[#allocation3 + $0x78] sm:$0xff]
    %v5551 = vld [vmem:[#allocation3 + $0x80] sm:$0xff]
    %v5552 = vld [vmem:[#allocation3 + $0x88] sm:$0xff]
    %v5553 = vld [vmem:[#allocation3 + $0x90] sm:$0xff]
    %v5554 = vld [vmem:[#allocation3 + $0x98] sm:$0xff]
    %v5555 = vld [vmem:[#allocation3 + $0xa0] sm:$0xff]
    %v5556 = vld [vmem:[#allocation3 + $0xa8] sm:$0xff]
    %v5557 = vld [vmem:[#allocation3 + $0xb0] sm:$0xff]
    %v5558 = vld [vmem:[#allocation3 + $0xb8] sm:$0xff]
    %v5559 = vld [vmem:[#allocation3 + $0xc0] sm:$0xff]
    %v5560 = vld [vmem:[#allocation3 + $0xc8] sm:$0xff]
    %v5561 = vld [vmem:[#allocation3 + $0xd0] sm:$0xff]
    %v5562 = vld [vmem:[#allocation3 + $0xd8] sm:$0xff]
    %v5563 = vld [vmem:[#allocation3 + $0xe0] sm:$0xff]
    %v5564 = vld [vmem:[#allocation3 + $0xe8] sm:$0xff]
    %v5565 = vld [vmem:[#allocation3 + $0xf0] sm:$0xff]
    %v5566 = vld [vmem:[#allocation3 + $0xf8] sm:$0xff]
    %v5567 = vld [vmem:[#allocation3 + $0x100] sm:$0xff]
    %v5568 = vld [vmem:[#allocation3 + $0x108] sm:$0xff]
    %v5569 = vld [vmem:[#allocation3 + $0x110] sm:$0xff]
    %v5570 = vld [vmem:[#allocation3 + $0x118] sm:$0xff]
    %v5571 = vld [vmem:[#allocation3 + $0x120] sm:$0xff]
    %v5572 = vld [vmem:[#allocation3 + $0x128] sm:$0xff]
    %v5573 = vld [vmem:[#allocation3 + $0x130] sm:$0xff]
    %v5574 = vld [vmem:[#allocation3 + $0x138] sm:$0xff]
    %v5575 = vld [vmem:[#allocation3 + $0x140] sm:$0xff]
    %v5576 = vld [vmem:[#allocation3 + $0x148] sm:$0xff]
    %v5577 = vld [vmem:[#allocation3 + $0x150] sm:$0xff]
    %v5578 = vld [vmem:[#allocation3 + $0x158] sm:$0xff]
    %v5579 = vld [vmem:[#allocation3 + $0x160] sm:$0xff]
    %v5580 = vld [vmem:[#allocation3 + $0x168] sm:$0xff]
    %v5581 = vld [vmem:[#allocation3 + $0x170] sm:$0xff]
    %v5582 = vld [vmem:[#allocation3 + $0x178] sm:$0xff]
    %v5583 = vld [vmem:[#allocation4] sm:$0xff]
    %v5584 = vld [vmem:[#allocation4 + $0x8] sm:$0xff]
    %v5585 = vld [vmem:[#allocation4 + $0x10] sm:$0xff]
    %v5586 = vld [vmem:[#allocation4 + $0x18] sm:$0xff]
    %v5587 = vld [vmem:[#allocation4 + $0x20] sm:$0xff]
    %v5588 = vld [vmem:[#allocation4 + $0x28] sm:$0xff]
    %v5589 = vld [vmem:[#allocation4 + $0x30] sm:$0xff]
    %v5590 = vld [vmem:[#allocation4 + $0x38] sm:$0xff]
    %v5591 = vld [vmem:[#allocation4 + $0x40] sm:$0xff]
    %v5592 = vld [vmem:[#allocation4 + $0x48] sm:$0xff]
    %v5593 = vld [vmem:[#allocation4 + $0x50] sm:$0xff]
    %v5594 = vld [vmem:[#allocation4 + $0x58] sm:$0xff]
    %v5595 = vld [vmem:[#allocation4 + $0x60] sm:$0xff]
    %v5596 = vld [vmem:[#allocation4 + $0x68] sm:$0xff]
    %v5597 = vld [vmem:[#allocation4 + $0x70] sm:$0xff]
    %v5598 = vld [vmem:[#allocation4 + $0x78] sm:$0xff]
    %v5599 = vld [vmem:[#allocation4 + $0x80] sm:$0xff]
    %v5600 = vld [vmem:[#allocation4 + $0x88] sm:$0xff]
    %v5601 = vld [vmem:[#allocation4 + $0x90] sm:$0xff]
    %v5602 = vld [vmem:[#allocation4 + $0x98] sm:$0xff]
    %v5603 = vld [vmem:[#allocation4 + $0xa0] sm:$0xff]
    %v5604 = vld [vmem:[#allocation4 + $0xa8] sm:$0xff]
    %v5605 = vld [vmem:[#allocation4 + $0xb0] sm:$0xff]
    %v5606 = vld [vmem:[#allocation4 + $0xb8] sm:$0xff]
    %v5607 = vld [vmem:[#allocation4 + $0xc0] sm:$0xff]
    %v5608 = vld [vmem:[#allocation4 + $0xc8] sm:$0xff]
    %v5609 = vld [vmem:[#allocation4 + $0xd0] sm:$0xff]
    %v5610 = vld [vmem:[#allocation4 + $0xd8] sm:$0xff]
    %v5611 = vld [vmem:[#allocation4 + $0xe0] sm:$0xff]
    %v5612 = vld [vmem:[#allocation4 + $0xe8] sm:$0xff]
    %v5613 = vld [vmem:[#allocation4 + $0xf0] sm:$0xff]
    %v5614 = vld [vmem:[#allocation4 + $0xf8] sm:$0xff]
    %v5615 = vld [vmem:[#allocation4 + $0x100] sm:$0xff]
    %v5616 = vld [vmem:[#allocation4 + $0x108] sm:$0xff]
    %v5617 = vld [vmem:[#allocation4 + $0x110] sm:$0xff]
    %v5618 = vld [vmem:[#allocation4 + $0x118] sm:$0xff]
    %v5619 = vld [vmem:[#allocation4 + $0x120] sm:$0xff]
    %v5620 = vld [vmem:[#allocation4 + $0x128] sm:$0xff]
    %v5621 = vld [vmem:[#allocation4 + $0x130] sm:$0xff]
    %v5622 = vld [vmem:[#allocation4 + $0x138] sm:$0xff]
    %v5623 = vld [vmem:[#allocation4 + $0x140] sm:$0xff]
    %v5624 = vld [vmem:[#allocation4 + $0x148] sm:$0xff]
    %v5625 = vld [vmem:[#allocation4 + $0x150] sm:$0xff]
    %v5626 = vld [vmem:[#allocation4 + $0x158] sm:$0xff]
    %v5627 = vld [vmem:[#allocation4 + $0x160] sm:$0xff]
    %v5628 = vld [vmem:[#allocation4 + $0x168] sm:$0xff]
    %v5629 = vld [vmem:[#allocation4 + $0x170] sm:$0xff]
    %v5630 = vld [vmem:[#allocation4 + $0x178] sm:$0xff]
    %v5631 = vld [vmem:[#allocation5] sm:$0xff]
    %v5632 = vld [vmem:[#allocation5 + $0x8] sm:$0xff]
    %v5633 = vld [vmem:[#allocation5 + $0x10] sm:$0xff]
    %v5634 = vld [vmem:[#allocation5 + $0x18] sm:$0xff]
    %v5635 = vld [vmem:[#allocation5 + $0x20] sm:$0xff]
    %v5636 = vld [vmem:[#allocation5 + $0x28] sm:$0xff]
    %v5637 = vld [vmem:[#allocation5 + $0x30] sm:$0xff]
    %v5638 = vld [vmem:[#allocation5 + $0x38] sm:$0xff]
    %v5639 = vld [vmem:[#allocation5 + $0x40] sm:$0xff]
    %v5640 = vld [vmem:[#allocation5 + $0x48] sm:$0xff]
    %v5641 = vld [vmem:[#allocation5 + $0x50] sm:$0xff]
    %v5642 = vld [vmem:[#allocation5 + $0x58] sm:$0xff]
    %v5643 = vld [vmem:[#allocation5 + $0x60] sm:$0xff]
    %v5644 = vld [vmem:[#allocation5 + $0x68] sm:$0xff]
    %v5645 = vld [vmem:[#allocation5 + $0x70] sm:$0xff]
    %v5646 = vld [vmem:[#allocation5 + $0x78] sm:$0xff]
    %v5647 = vld [vmem:[#allocation5 + $0x80] sm:$0xff]
    %v5648 = vld [vmem:[#allocation5 + $0x88] sm:$0xff]
    %v5649 = vld [vmem:[#allocation5 + $0x90] sm:$0xff]
    %v5650 = vld [vmem:[#allocation5 + $0x98] sm:$0xff]
    %v5651 = vld [vmem:[#allocation5 + $0xa0] sm:$0xff]
    %v5652 = vld [vmem:[#allocation5 + $0xa8] sm:$0xff]
    %v5653 = vld [vmem:[#allocation5 + $0xb0] sm:$0xff]
    %v5654 = vld [vmem:[#allocation5 + $0xb8] sm:$0xff]
    %v5655 = vld [vmem:[#allocation5 + $0xc0] sm:$0xff]
    %v5656 = vld [vmem:[#allocation5 + $0xc8] sm:$0xff]
    %v5657 = vld [vmem:[#allocation5 + $0xd0] sm:$0xff]
    %v5658 = vld [vmem:[#allocation5 + $0xd8] sm:$0xff]
    %v5659 = vld [vmem:[#allocation5 + $0xe0] sm:$0xff]
    %v5660 = vld [vmem:[#allocation5 + $0xe8] sm:$0xff]
    %v5661 = vld [vmem:[#allocation5 + $0xf0] sm:$0xff]
    %v5662 = vld [vmem:[#allocation5 + $0xf8] sm:$0xff]
    %v5663 = vld [vmem:[#allocation5 + $0x100] sm:$0xff]
    %v5664 = vld [vmem:[#allocation5 + $0x108] sm:$0xff]
    %v5665 = vld [vmem:[#allocation5 + $0x110] sm:$0xff]
    %v5666 = vld [vmem:[#allocation5 + $0x118] sm:$0xff]
    %v5667 = vld [vmem:[#allocation5 + $0x120] sm:$0xff]
    %v5668 = vld [vmem:[#allocation5 + $0x128] sm:$0xff]
    %v5669 = vld [vmem:[#allocation5 + $0x130] sm:$0xff]
    %v5670 = vld [vmem:[#allocation5 + $0x138] sm:$0xff]
    %v5671 = vld [vmem:[#allocation5 + $0x140] sm:$0xff]
    %v5672 = vld [vmem:[#allocation5 + $0x148] sm:$0xff]
    %v5673 = vld [vmem:[#allocation5 + $0x150] sm:$0xff]
    %v5674 = vld [vmem:[#allocation5 + $0x158] sm:$0xff]
    %v5675 = vld [vmem:[#allocation5 + $0x160] sm:$0xff]
    %v5676 = vld [vmem:[#allocation5 + $0x168] sm:$0xff]
    %v5677 = vld [vmem:[#allocation5 + $0x170] sm:$0xff]
    %v5678 = vld [vmem:[#allocation5 + $0x178] sm:$0xff]
    %v5679 = vld [vmem:[#allocation6] sm:$0xff]
    %v5680 = vld [vmem:[#allocation6 + $0x8] sm:$0xff]
    %v5681 = vld [vmem:[#allocation6 + $0x10] sm:$0xff]
    %v5682 = vld [vmem:[#allocation6 + $0x18] sm:$0xff]
    %v5683 = vld [vmem:[#allocation6 + $0x20] sm:$0xff]
    %v5684 = vld [vmem:[#allocation6 + $0x28] sm:$0xff]
    %v5685 = vld [vmem:[#allocation6 + $0x30] sm:$0xff]
    %v5686 = vld [vmem:[#allocation6 + $0x38] sm:$0xff]
    %v5687 = vld [vmem:[#allocation6 + $0x40] sm:$0xff]
    %v5688 = vld [vmem:[#allocation6 + $0x48] sm:$0xff]
    %v5689 = vld [vmem:[#allocation6 + $0x50] sm:$0xff]
    %v5690 = vld [vmem:[#allocation6 + $0x58] sm:$0xff]
    %v5691 = vld [vmem:[#allocation6 + $0x60] sm:$0xff]
    %v5692 = vld [vmem:[#allocation6 + $0x68] sm:$0xff]
    %v5693 = vld [vmem:[#allocation6 + $0x70] sm:$0xff]
    %v5694 = vld [vmem:[#allocation6 + $0x78] sm:$0xff]
    %v5695 = vld [vmem:[#allocation6 + $0x80] sm:$0xff]
    %v5696 = vld [vmem:[#allocation6 + $0x88] sm:$0xff]
    %v5697 = vld [vmem:[#allocation6 + $0x90] sm:$0xff]
    %v5698 = vld [vmem:[#allocation6 + $0x98] sm:$0xff]
    %v5699 = vld [vmem:[#allocation6 + $0xa0] sm:$0xff]
    %v5700 = vld [vmem:[#allocation6 + $0xa8] sm:$0xff]
    %v5701 = vld [vmem:[#allocation6 + $0xb0] sm:$0xff]
    %v5702 = vld [vmem:[#allocation6 + $0xb8] sm:$0xff]
    %v5703 = vld [vmem:[#allocation6 + $0xc0] sm:$0xff]
    %v5704 = vld [vmem:[#allocation6 + $0xc8] sm:$0xff]
    %v5705 = vld [vmem:[#allocation6 + $0xd0] sm:$0xff]
    %v5706 = vld [vmem:[#allocation6 + $0xd8] sm:$0xff]
    %v5707 = vld [vmem:[#allocation6 + $0xe0] sm:$0xff]
    %v5708 = vld [vmem:[#allocation6 + $0xe8] sm:$0xff]
    %v5709 = vld [vmem:[#allocation6 + $0xf0] sm:$0xff]
    %v5710 = vld [vmem:[#allocation6 + $0xf8] sm:$0xff]
    %v5711 = vld [vmem:[#allocation6 + $0x100] sm:$0xff]
    %v5712 = vld [vmem:[#allocation6 + $0x108] sm:$0xff]
    %v5713 = vld [vmem:[#allocation6 + $0x110] sm:$0xff]
    %v5714 = vld [vmem:[#allocation6 + $0x118] sm:$0xff]
    %v5715 = vld [vmem:[#allocation6 + $0x120] sm:$0xff]
    %v5716 = vld [vmem:[#allocation6 + $0x128] sm:$0xff]
    %v5717 = vld [vmem:[#allocation6 + $0x130] sm:$0xff]
    %v5718 = vld [vmem:[#allocation6 + $0x138] sm:$0xff]
    %v5719 = vld [vmem:[#allocation6 + $0x140] sm:$0xff]
    %v5720 = vld [vmem:[#allocation6 + $0x148] sm:$0xff]
    %v5721 = vld [vmem:[#allocation6 + $0x150] sm:$0xff]
    %v5722 = vld [vmem:[#allocation6 + $0x158] sm:$0xff]
    %v5723 = vld [vmem:[#allocation6 + $0x160] sm:$0xff]
    %v5724 = vld [vmem:[#allocation6 + $0x168] sm:$0xff]
    %v5725 = vld [vmem:[#allocation6 + $0x170] sm:$0xff]
    %v5726 = vld [vmem:[#allocation6 + $0x178] sm:$0xff]
    %v5727 = vld [vmem:[#allocation7] sm:$0xff]
    %v5728 = vld [vmem:[#allocation7 + $0x8] sm:$0xff]
    %v5729 = vld [vmem:[#allocation7 + $0x10] sm:$0xff]
    %v5730 = vld [vmem:[#allocation7 + $0x18] sm:$0xff]
    %v5731 = vld [vmem:[#allocation7 + $0x20] sm:$0xff]
    %v5732 = vld [vmem:[#allocation7 + $0x28] sm:$0xff]
    %v5733 = vld [vmem:[#allocation7 + $0x30] sm:$0xff]
    %v5734 = vld [vmem:[#allocation7 + $0x38] sm:$0xff]
    %v5735 = vld [vmem:[#allocation7 + $0x40] sm:$0xff]
    %v5736 = vld [vmem:[#allocation7 + $0x48] sm:$0xff]
    %v5737 = vld [vmem:[#allocation7 + $0x50] sm:$0xff]
    %v5738 = vld [vmem:[#allocation7 + $0x58] sm:$0xff]
    %v5739 = vld [vmem:[#allocation7 + $0x60] sm:$0xff]
    %v5740 = vld [vmem:[#allocation7 + $0x68] sm:$0xff]
    %v5741 = vld [vmem:[#allocation7 + $0x70] sm:$0xff]
    %v5742 = vld [vmem:[#allocation7 + $0x78] sm:$0xff]
    %v5743 = vld [vmem:[#allocation7 + $0x80] sm:$0xff]
    %v5744 = vld [vmem:[#allocation7 + $0x88] sm:$0xff]
    %v5745 = vld [vmem:[#allocation7 + $0x90] sm:$0xff]
    %v5746 = vld [vmem:[#allocation7 + $0x98] sm:$0xff]
    %v5747 = vld [vmem:[#allocation7 + $0xa0] sm:$0xff]
    %v5748 = vld [vmem:[#allocation7 + $0xa8] sm:$0xff]
    %v5749 = vld [vmem:[#allocation7 + $0xb0] sm:$0xff]
    %v5750 = vld [vmem:[#allocation7 + $0xb8] sm:$0xff]
    %v5751 = vld [vmem:[#allocation7 + $0xc0] sm:$0xff]
    %v5752 = vld [vmem:[#allocation7 + $0xc8] sm:$0xff]
    %v5753 = vld [vmem:[#allocation7 + $0xd0] sm:$0xff]
    %v5754 = vld [vmem:[#allocation7 + $0xd8] sm:$0xff]
    %v5755 = vld [vmem:[#allocation7 + $0xe0] sm:$0xff]
    %v5756 = vld [vmem:[#allocation7 + $0xe8] sm:$0xff]
    %v5757 = vld [vmem:[#allocation7 + $0xf0] sm:$0xff]
    %v5758 = vld [vmem:[#allocation7 + $0xf8] sm:$0xff]
    %v5759 = vld [vmem:[#allocation7 + $0x100] sm:$0xff]
    %v5760 = vld [vmem:[#allocation7 + $0x108] sm:$0xff]
    %v5761 = vld [vmem:[#allocation7 + $0x110] sm:$0xff]
    %v5762 = vld [vmem:[#allocation7 + $0x118] sm:$0xff]
    %v5763 = vld [vmem:[#allocation7 + $0x120] sm:$0xff]
    %v5764 = vld [vmem:[#allocation7 + $0x128] sm:$0xff]
    %v5765 = vld [vmem:[#allocation7 + $0x130] sm:$0xff]
    %v5766 = vld [vmem:[#allocation7 + $0x138] sm:$0xff]
    %v5767 = vld [vmem:[#allocation7 + $0x140] sm:$0xff]
    %v5768 = vld [vmem:[#allocation7 + $0x148] sm:$0xff]
    %v5769 = vld [vmem:[#allocation7 + $0x150] sm:$0xff]
    %v5770 = vld [vmem:[#allocation7 + $0x158] sm:$0xff]
    %v5771 = vld [vmem:[#allocation7 + $0x160] sm:$0xff]
    %v5772 = vld [vmem:[#allocation7 + $0x168] sm:$0xff]
    %v5773 = vld [vmem:[#allocation7 + $0x170] sm:$0xff]
    %v5774 = vld [vmem:[#allocation7 + $0x178] sm:$0xff]
    %v5775 = vmul.f32 %v5487, %v5535
    %v5776 = vmul.f32 %v5488, %v5536
    %v5777 = vmul.f32 %v5489, %v5537
    %v5778 = vmul.f32 %v5490, %v5538
    %v5779 = vmul.f32 %v5491, %v5539
    %v5780 = vmul.f32 %v5492, %v5540
    %v5781 = vmul.f32 %v5493, %v5541
    %v5782 = vmul.f32 %v5494, %v5542
    %v5783 = vmul.f32 %v5495, %v5543
    %v5784 = vmul.f32 %v5496, %v5544
    %v5785 = vmul.f32 %v5497, %v5545
    %v5786 = vmul.f32 %v5498, %v5546
    %v5787 = vmul.f32 %v5499, %v5547
    %v5788 = vmul.f32 %v5500, %v5548
    %v5789 = vmul.f32 %v5501, %v5549
    %v5790 = vmul.f32 %v5502, %v5550
    %v5791 = vmul.f32 %v5503, %v5551
    %v5792 = vmul.f32 %v5504, %v5552
    %v5793 = vmul.f32 %v5505, %v5553
    %v5794 = vmul.f32 %v5506, %v5554
    %v5795 = vmul.f32 %v5507, %v5555
    %v5796 = vmul.f32 %v5508, %v5556
    %v5797 = vmul.f32 %v5509, %v5557
    %v5798 = vmul.f32 %v5510, %v5558
    %v5799 = vmul.f32 %v5511, %v5559
    %v5800 = vmul.f32 %v5512, %v5560
    %v5801 = vmul.f32 %v5513, %v5561
    %v5802 = vmul.f32 %v5514, %v5562
    %v5803 = vmul.f32 %v5515, %v5563
    %v5804 = vmul.f32 %v5516, %v5564
    %v5805 = vmul.f32 %v5517, %v5565
    %v5806 = vmul.f32 %v5518, %v5566
    %v5807 = vmul.f32 %v5519, %v5567
    %v5808 = vmul.f32 %v5520, %v5568
    %v5809 = vmul.f32 %v5521, %v5569
    %v5810 = vmul.f32 %v5522, %v5570
    %v5811 = vmul.f32 %v5523, %v5571
    %v5812 = vmul.f32 %v5524, %v5572
    %v5813 = vmul.f32 %v5525, %v5573
    %v5814 = vmul.f32 %v5526, %v5574
    %v5815 = vmul.f32 %v5527, %v5575
    %v5816 = vmul.f32 %v5528, %v5576
    %v5817 = vmul.f32 %v5529, %v5577
    %v5818 = vmul.f32 %v5530, %v5578
    %v5819 = vmul.f32 %v5531, %v5579
    %v5820 = vmul.f32 %v5532, %v5580
    %v5821 = vmul.f32 %v5533, %v5581
    %v5822 = vmul.f32 %v5534, %v5582
    %vm5823 = vcmask 261120
    %v5824 = vsel %vm5823, %v5775, 0.0
    %5825 = vadd.xlane.f32.xlu0 %v5824
    %v5826 = vpop.xlane.xlu0 %5825
    %v5827 = vsel %vm5823, %v5776, 0.0
    %5828 = vadd.xlane.f32.xlu0 %v5827
    %v5829 = vpop.xlane.xlu0 %5828
    %v5830 = vsel %vm5823, %v5777, 0.0
    %5831 = vadd.xlane.f32.xlu0 %v5830
    %v5832 = vpop.xlane.xlu0 %5831
    %v5833 = vsel %vm5823, %v5778, 0.0
    %5834 = vadd.xlane.f32.xlu0 %v5833
    %v5835 = vpop.xlane.xlu0 %5834
    %v5836 = vsel %vm5823, %v5779, 0.0
    %5837 = vadd.xlane.f32.xlu0 %v5836
    %v5838 = vpop.xlane.xlu0 %5837
    %v5839 = vsel %vm5823, %v5780, 0.0
    %5840 = vadd.xlane.f32.xlu0 %v5839
    %v5841 = vpop.xlane.xlu0 %5840
    %v5842 = vsel %vm5823, %v5781, 0.0
    %5843 = vadd.xlane.f32.xlu0 %v5842
    %v5844 = vpop.xlane.xlu0 %5843
    %v5845 = vsel %vm5823, %v5782, 0.0
    %5846 = vadd.xlane.f32.xlu0 %v5845
    %v5847 = vpop.xlane.xlu0 %5846
    %v5848 = vsel %vm5823, %v5783, 0.0
    %5849 = vadd.xlane.f32.xlu0 %v5848
    %v5850 = vpop.xlane.xlu0 %5849
    %v5851 = vsel %vm5823, %v5784, 0.0
    %5852 = vadd.xlane.f32.xlu0 %v5851
    %v5853 = vpop.xlane.xlu0 %5852
    %v5854 = vsel %vm5823, %v5785, 0.0
    %5855 = vadd.xlane.f32.xlu0 %v5854
    %v5856 = vpop.xlane.xlu0 %5855
    %v5857 = vsel %vm5823, %v5786, 0.0
    %5858 = vadd.xlane.f32.xlu0 %v5857
    %v5859 = vpop.xlane.xlu0 %5858
    %v5860 = vsel %vm5823, %v5787, 0.0
    %5861 = vadd.xlane.f32.xlu0 %v5860
    %v5862 = vpop.xlane.xlu0 %5861
    %v5863 = vsel %vm5823, %v5788, 0.0
    %5864 = vadd.xlane.f32.xlu0 %v5863
    %v5865 = vpop.xlane.xlu0 %5864
    %v5866 = vsel %vm5823, %v5789, 0.0
    %5867 = vadd.xlane.f32.xlu0 %v5866
    %v5868 = vpop.xlane.xlu0 %5867
    %v5869 = vsel %vm5823, %v5790, 0.0
    %5870 = vadd.xlane.f32.xlu0 %v5869
    %v5871 = vpop.xlane.xlu0 %5870
    %v5872 = vsel %vm5823, %v5791, 0.0
    %5873 = vadd.xlane.f32.xlu0 %v5872
    %v5874 = vpop.xlane.xlu0 %5873
    %v5875 = vsel %vm5823, %v5792, 0.0
    %5876 = vadd.xlane.f32.xlu0 %v5875
    %v5877 = vpop.xlane.xlu0 %5876
    %v5878 = vsel %vm5823, %v5793, 0.0
    %5879 = vadd.xlane.f32.xlu0 %v5878
    %v5880 = vpop.xlane.xlu0 %5879
    %v5881 = vsel %vm5823, %v5794, 0.0
    %5882 = vadd.xlane.f32.xlu0 %v5881
    %v5883 = vpop.xlane.xlu0 %5882
    %v5884 = vsel %vm5823, %v5795, 0.0
    %5885 = vadd.xlane.f32.xlu0 %v5884
    %v5886 = vpop.xlane.xlu0 %5885
    %v5887 = vsel %vm5823, %v5796, 0.0
    %5888 = vadd.xlane.f32.xlu0 %v5887
    %v5889 = vpop.xlane.xlu0 %5888
    %v5890 = vsel %vm5823, %v5797, 0.0
    %5891 = vadd.xlane.f32.xlu0 %v5890
    %v5892 = vpop.xlane.xlu0 %5891
    %v5893 = vsel %vm5823, %v5798, 0.0
    %5894 = vadd.xlane.f32.xlu0 %v5893
    %v5895 = vpop.xlane.xlu0 %5894
    %v5896 = vsel %vm5823, %v5799, 0.0
    %5897 = vadd.xlane.f32.xlu0 %v5896
    %v5898 = vpop.xlane.xlu0 %5897
    %v5899 = vsel %vm5823, %v5800, 0.0
    %5900 = vadd.xlane.f32.xlu0 %v5899
    %v5901 = vpop.xlane.xlu0 %5900
    %v5902 = vsel %vm5823, %v5801, 0.0
    %5903 = vadd.xlane.f32.xlu0 %v5902
    %v5904 = vpop.xlane.xlu0 %5903
    %v5905 = vsel %vm5823, %v5802, 0.0
    %5906 = vadd.xlane.f32.xlu0 %v5905
    %v5907 = vpop.xlane.xlu0 %5906
    %v5908 = vsel %vm5823, %v5803, 0.0
    %5909 = vadd.xlane.f32.xlu0 %v5908
    %v5910 = vpop.xlane.xlu0 %5909
    %v5911 = vsel %vm5823, %v5804, 0.0
    %5912 = vadd.xlane.f32.xlu0 %v5911
    %v5913 = vpop.xlane.xlu0 %5912
    %v5914 = vsel %vm5823, %v5805, 0.0
    %5915 = vadd.xlane.f32.xlu0 %v5914
    %v5916 = vpop.xlane.xlu0 %5915
    %v5917 = vsel %vm5823, %v5806, 0.0
    %5918 = vadd.xlane.f32.xlu0 %v5917
    %v5919 = vpop.xlane.xlu0 %5918
    %v5920 = vsel %vm5823, %v5807, 0.0
    %5921 = vadd.xlane.f32.xlu0 %v5920
    %v5922 = vpop.xlane.xlu0 %5921
    %v5923 = vsel %vm5823, %v5808, 0.0
    %5924 = vadd.xlane.f32.xlu0 %v5923
    %v5925 = vpop.xlane.xlu0 %5924
    %v5926 = vsel %vm5823, %v5809, 0.0
    %5927 = vadd.xlane.f32.xlu0 %v5926
    %v5928 = vpop.xlane.xlu0 %5927
    %v5929 = vsel %vm5823, %v5810, 0.0
    %5930 = vadd.xlane.f32.xlu0 %v5929
    %v5931 = vpop.xlane.xlu0 %5930
    %v5932 = vsel %vm5823, %v5811, 0.0
    %5933 = vadd.xlane.f32.xlu0 %v5932
    %v5934 = vpop.xlane.xlu0 %5933
    %v5935 = vsel %vm5823, %v5812, 0.0
    %5936 = vadd.xlane.f32.xlu0 %v5935
    %v5937 = vpop.xlane.xlu0 %5936
    %v5938 = vsel %vm5823, %v5813, 0.0
    %5939 = vadd.xlane.f32.xlu0 %v5938
    %v5940 = vpop.xlane.xlu0 %5939
    %v5941 = vsel %vm5823, %v5814, 0.0
    %5942 = vadd.xlane.f32.xlu0 %v5941
    %v5943 = vpop.xlane.xlu0 %5942
    %v5944 = vsel %vm5823, %v5815, 0.0
    %5945 = vadd.xlane.f32.xlu0 %v5944
    %v5946 = vpop.xlane.xlu0 %5945
    %v5947 = vsel %vm5823, %v5816, 0.0
    %5948 = vadd.xlane.f32.xlu0 %v5947
    %v5949 = vpop.xlane.xlu0 %5948
    %v5950 = vsel %vm5823, %v5817, 0.0
    %5951 = vadd.xlane.f32.xlu0 %v5950
    %v5952 = vpop.xlane.xlu0 %5951
    %v5953 = vsel %vm5823, %v5818, 0.0
    %5954 = vadd.xlane.f32.xlu0 %v5953
    %v5955 = vpop.xlane.xlu0 %5954
    %v5956 = vsel %vm5823, %v5819, 0.0
    %5957 = vadd.xlane.f32.xlu0 %v5956
    %v5958 = vpop.xlane.xlu0 %5957
    %v5959 = vsel %vm5823, %v5820, 0.0
    %5960 = vadd.xlane.f32.xlu0 %v5959
    %v5961 = vpop.xlane.xlu0 %5960
    %v5962 = vsel %vm5823, %v5821, 0.0
    %5963 = vadd.xlane.f32.xlu0 %v5962
    %v5964 = vpop.xlane.xlu0 %5963
    %v5965 = vsel %vm5823, %v5822, 0.0
    %5966 = vadd.xlane.f32.xlu0 %v5965
    %v5967 = vpop.xlane.xlu0 %5966
    %v5968 = vmul.f32 %v5826, %v5631
    %v5969 = vmul.f32 %v5829, %v5632
    %v5970 = vmul.f32 %v5832, %v5633
    %v5971 = vmul.f32 %v5835, %v5634
    %v5972 = vmul.f32 %v5838, %v5635
    %v5973 = vmul.f32 %v5841, %v5636
    %v5974 = vmul.f32 %v5844, %v5637
    %v5975 = vmul.f32 %v5847, %v5638
    %v5976 = vmul.f32 %v5850, %v5639
    %v5977 = vmul.f32 %v5853, %v5640
    %v5978 = vmul.f32 %v5856, %v5641
    %v5979 = vmul.f32 %v5859, %v5642
    %v5980 = vmul.f32 %v5862, %v5643
    %v5981 = vmul.f32 %v5865, %v5644
    %v5982 = vmul.f32 %v5868, %v5645
    %v5983 = vmul.f32 %v5871, %v5646
    %v5984 = vmul.f32 %v5874, %v5647
    %v5985 = vmul.f32 %v5877, %v5648
    %v5986 = vmul.f32 %v5880, %v5649
    %v5987 = vmul.f32 %v5883, %v5650
    %v5988 = vmul.f32 %v5886, %v5651
    %v5989 = vmul.f32 %v5889, %v5652
    %v5990 = vmul.f32 %v5892, %v5653
    %v5991 = vmul.f32 %v5895, %v5654
    %v5992 = vmul.f32 %v5898, %v5655
    %v5993 = vmul.f32 %v5901, %v5656
    %v5994 = vmul.f32 %v5904, %v5657
    %v5995 = vmul.f32 %v5907, %v5658
    %v5996 = vmul.f32 %v5910, %v5659
    %v5997 = vmul.f32 %v5913, %v5660
    %v5998 = vmul.f32 %v5916, %v5661
    %v5999 = vmul.f32 %v5919, %v5662
    %v6000 = vmul.f32 %v5922, %v5663
    %v6001 = vmul.f32 %v5925, %v5664
    %v6002 = vmul.f32 %v5928, %v5665
    %v6003 = vmul.f32 %v5931, %v5666
    %v6004 = vmul.f32 %v5934, %v5667
    %v6005 = vmul.f32 %v5937, %v5668
    %v6006 = vmul.f32 %v5940, %v5669
    %v6007 = vmul.f32 %v5943, %v5670
    %v6008 = vmul.f32 %v5946, %v5671
    %v6009 = vmul.f32 %v5949, %v5672
    %v6010 = vmul.f32 %v5952, %v5673
    %v6011 = vmul.f32 %v5955, %v5674
    %v6012 = vmul.f32 %v5958, %v5675
    %v6013 = vmul.f32 %v5961, %v5676
    %v6014 = vmul.f32 %v5964, %v5677
    %v6015 = vmul.f32 %v5967, %v5678
    %v6016 = vadd.f32 %v5487, %v5968
    %v6017 = vadd.f32 %v5488, %v5969
    %v6018 = vadd.f32 %v5489, %v5970
    %v6019 = vadd.f32 %v5490, %v5971
    %v6020 = vadd.f32 %v5491, %v5972
    %v6021 = vadd.f32 %v5492, %v5973
    %v6022 = vadd.f32 %v5493, %v5974
    %v6023 = vadd.f32 %v5494, %v5975
    %v6024 = vadd.f32 %v5495, %v5976
    %v6025 = vadd.f32 %v5496, %v5977
    %v6026 = vadd.f32 %v5497, %v5978
    %v6027 = vadd.f32 %v5498, %v5979
    %v6028 = vadd.f32 %v5499, %v5980
    %v6029 = vadd.f32 %v5500, %v5981
    %v6030 = vadd.f32 %v5501, %v5982
    %v6031 = vadd.f32 %v5502, %v5983
    %v6032 = vadd.f32 %v5503, %v5984
    %v6033 = vadd.f32 %v5504, %v5985
    %v6034 = vadd.f32 %v5505, %v5986
    %v6035 = vadd.f32 %v5506, %v5987
    %v6036 = vadd.f32 %v5507, %v5988
    %v6037 = vadd.f32 %v5508, %v5989
    %v6038 = vadd.f32 %v5509, %v5990
    %v6039 = vadd.f32 %v5510, %v5991
    %v6040 = vadd.f32 %v5511, %v5992
    %v6041 = vadd.f32 %v5512, %v5993
    %v6042 = vadd.f32 %v5513, %v5994
    %v6043 = vadd.f32 %v5514, %v5995
    %v6044 = vadd.f32 %v5515, %v5996
    %v6045 = vadd.f32 %v5516, %v5997
    %v6046 = vadd.f32 %v5517, %v5998
    %v6047 = vadd.f32 %v5518, %v5999
    %v6048 = vadd.f32 %v5519, %v6000
    %v6049 = vadd.f32 %v5520, %v6001
    %v6050 = vadd.f32 %v5521, %v6002
    %v6051 = vadd.f32 %v5522, %v6003
    %v6052 = vadd.f32 %v5523, %v6004
    %v6053 = vadd.f32 %v5524, %v6005
    %v6054 = vadd.f32 %v5525, %v6006
    %v6055 = vadd.f32 %v5526, %v6007
    %v6056 = vadd.f32 %v5527, %v6008
    %v6057 = vadd.f32 %v5528, %v6009
    %v6058 = vadd.f32 %v5529, %v6010
    %v6059 = vadd.f32 %v5530, %v6011
    %v6060 = vadd.f32 %v5531, %v6012
    %v6061 = vadd.f32 %v5532, %v6013
    %v6062 = vadd.f32 %v5533, %v6014
    %v6063 = vadd.f32 %v5534, %v6015
    %v6064 = vmul.f32 %v6016, %v6016
    %v6065 = vmul.f32 %v6017, %v6017
    %v6066 = vmul.f32 %v6018, %v6018
    %v6067 = vmul.f32 %v6019, %v6019
    %v6068 = vmul.f32 %v6020, %v6020
    %v6069 = vmul.f32 %v6021, %v6021
    %v6070 = vmul.f32 %v6022, %v6022
    %v6071 = vmul.f32 %v6023, %v6023
    %v6072 = vmul.f32 %v6024, %v6024
    %v6073 = vmul.f32 %v6025, %v6025
    %v6074 = vmul.f32 %v6026, %v6026
    %v6075 = vmul.f32 %v6027, %v6027
    %v6076 = vmul.f32 %v6028, %v6028
    %v6077 = vmul.f32 %v6029, %v6029
    %v6078 = vmul.f32 %v6030, %v6030
    %v6079 = vmul.f32 %v6031, %v6031
    %v6080 = vmul.f32 %v6032, %v6032
    %v6081 = vmul.f32 %v6033, %v6033
    %v6082 = vmul.f32 %v6034, %v6034
    %v6083 = vmul.f32 %v6035, %v6035
    %v6084 = vmul.f32 %v6036, %v6036
    %v6085 = vmul.f32 %v6037, %v6037
    %v6086 = vmul.f32 %v6038, %v6038
    %v6087 = vmul.f32 %v6039, %v6039
    %v6088 = vmul.f32 %v6040, %v6040
    %v6089 = vmul.f32 %v6041, %v6041
    %v6090 = vmul.f32 %v6042, %v6042
    %v6091 = vmul.f32 %v6043, %v6043
    %v6092 = vmul.f32 %v6044, %v6044
    %v6093 = vmul.f32 %v6045, %v6045
    %v6094 = vmul.f32 %v6046, %v6046
    %v6095 = vmul.f32 %v6047, %v6047
    %v6096 = vmul.f32 %v6048, %v6048
    %v6097 = vmul.f32 %v6049, %v6049
    %v6098 = vmul.f32 %v6050, %v6050
    %v6099 = vmul.f32 %v6051, %v6051
    %v6100 = vmul.f32 %v6052, %v6052
    %v6101 = vmul.f32 %v6053, %v6053
    %v6102 = vmul.f32 %v6054, %v6054
    %v6103 = vmul.f32 %v6055, %v6055
    %v6104 = vmul.f32 %v6056, %v6056
    %v6105 = vmul.f32 %v6057, %v6057
    %v6106 = vmul.f32 %v6058, %v6058
    %v6107 = vmul.f32 %v6059, %v6059
    %v6108 = vmul.f32 %v6060, %v6060
    %v6109 = vmul.f32 %v6061, %v6061
    %v6110 = vmul.f32 %v6062, %v6062
    %v6111 = vmul.f32 %v6063, %v6063
    %v6112 = vsel %vm5823, %v6064, 0.0
    %6113 = vadd.xlane.f32.xlu0 %v6112
    %v6114 = vpop.xlane.xlu0 %6113
    %v6115 = vsel %vm5823, %v6065, 0.0
    %6116 = vadd.xlane.f32.xlu0 %v6115
    %v6117 = vpop.xlane.xlu0 %6116
    %v6118 = vsel %vm5823, %v6066, 0.0
    %6119 = vadd.xlane.f32.xlu0 %v6118
    %v6120 = vpop.xlane.xlu0 %6119
    %v6121 = vsel %vm5823, %v6067, 0.0
    %6122 = vadd.xlane.f32.xlu0 %v6121
    %v6123 = vpop.xlane.xlu0 %6122
    %v6124 = vsel %vm5823, %v6068, 0.0
    %6125 = vadd.xlane.f32.xlu0 %v6124
    %v6126 = vpop.xlane.xlu0 %6125
    %v6127 = vsel %vm5823, %v6069, 0.0
    %6128 = vadd.xlane.f32.xlu0 %v6127
    %v6129 = vpop.xlane.xlu0 %6128
    %v6130 = vsel %vm5823, %v6070, 0.0
    %6131 = vadd.xlane.f32.xlu0 %v6130
    %v6132 = vpop.xlane.xlu0 %6131
    %v6133 = vsel %vm5823, %v6071, 0.0
    %6134 = vadd.xlane.f32.xlu0 %v6133
    %v6135 = vpop.xlane.xlu0 %6134
    %v6136 = vsel %vm5823, %v6072, 0.0
    %6137 = vadd.xlane.f32.xlu0 %v6136
    %v6138 = vpop.xlane.xlu0 %6137
    %v6139 = vsel %vm5823, %v6073, 0.0
    %6140 = vadd.xlane.f32.xlu0 %v6139
    %v6141 = vpop.xlane.xlu0 %6140
    %v6142 = vsel %vm5823, %v6074, 0.0
    %6143 = vadd.xlane.f32.xlu0 %v6142
    %v6144 = vpop.xlane.xlu0 %6143
    %v6145 = vsel %vm5823, %v6075, 0.0
    %6146 = vadd.xlane.f32.xlu0 %v6145
    %v6147 = vpop.xlane.xlu0 %6146
    %v6148 = vsel %vm5823, %v6076, 0.0
    %6149 = vadd.xlane.f32.xlu0 %v6148
    %v6150 = vpop.xlane.xlu0 %6149
    %v6151 = vsel %vm5823, %v6077, 0.0
    %6152 = vadd.xlane.f32.xlu0 %v6151
    %v6153 = vpop.xlane.xlu0 %6152
    %v6154 = vsel %vm5823, %v6078, 0.0
    %6155 = vadd.xlane.f32.xlu0 %v6154
    %v6156 = vpop.xlane.xlu0 %6155
    %v6157 = vsel %vm5823, %v6079, 0.0
    %6158 = vadd.xlane.f32.xlu0 %v6157
    %v6159 = vpop.xlane.xlu0 %6158
    %v6160 = vsel %vm5823, %v6080, 0.0
    %6161 = vadd.xlane.f32.xlu0 %v6160
    %v6162 = vpop.xlane.xlu0 %6161
    %v6163 = vsel %vm5823, %v6081, 0.0
    %6164 = vadd.xlane.f32.xlu0 %v6163
    %v6165 = vpop.xlane.xlu0 %6164
    %v6166 = vsel %vm5823, %v6082, 0.0
    %6167 = vadd.xlane.f32.xlu0 %v6166
    %v6168 = vpop.xlane.xlu0 %6167
    %v6169 = vsel %vm5823, %v6083, 0.0
    %6170 = vadd.xlane.f32.xlu0 %v6169
    %v6171 = vpop.xlane.xlu0 %6170
    %v6172 = vsel %vm5823, %v6084, 0.0
    %6173 = vadd.xlane.f32.xlu0 %v6172
    %v6174 = vpop.xlane.xlu0 %6173
    %v6175 = vsel %vm5823, %v6085, 0.0
    %6176 = vadd.xlane.f32.xlu0 %v6175
    %v6177 = vpop.xlane.xlu0 %6176
    %v6178 = vsel %vm5823, %v6086, 0.0
    %6179 = vadd.xlane.f32.xlu0 %v6178
    %v6180 = vpop.xlane.xlu0 %6179
    %v6181 = vsel %vm5823, %v6087, 0.0
    %6182 = vadd.xlane.f32.xlu0 %v6181
    %v6183 = vpop.xlane.xlu0 %6182
    %v6184 = vsel %vm5823, %v6088, 0.0
    %6185 = vadd.xlane.f32.xlu0 %v6184
    %v6186 = vpop.xlane.xlu0 %6185
    %v6187 = vsel %vm5823, %v6089, 0.0
    %6188 = vadd.xlane.f32.xlu0 %v6187
    %v6189 = vpop.xlane.xlu0 %6188
    %v6190 = vsel %vm5823, %v6090, 0.0
    %6191 = vadd.xlane.f32.xlu0 %v6190
    %v6192 = vpop.xlane.xlu0 %6191
    %v6193 = vsel %vm5823, %v6091, 0.0
    %6194 = vadd.xlane.f32.xlu0 %v6193
    %v6195 = vpop.xlane.xlu0 %6194
    %v6196 = vsel %vm5823, %v6092, 0.0
    %6197 = vadd.xlane.f32.xlu0 %v6196
    %v6198 = vpop.xlane.xlu0 %6197
    %v6199 = vsel %vm5823, %v6093, 0.0
    %6200 = vadd.xlane.f32.xlu0 %v6199
    %v6201 = vpop.xlane.xlu0 %6200
    %v6202 = vsel %vm5823, %v6094, 0.0
    %6203 = vadd.xlane.f32.xlu0 %v6202
    %v6204 = vpop.xlane.xlu0 %6203
    %v6205 = vsel %vm5823, %v6095, 0.0
    %6206 = vadd.xlane.f32.xlu0 %v6205
    %v6207 = vpop.xlane.xlu0 %6206
    %v6208 = vsel %vm5823, %v6096, 0.0
    %6209 = vadd.xlane.f32.xlu0 %v6208
    %v6210 = vpop.xlane.xlu0 %6209
    %v6211 = vsel %vm5823, %v6097, 0.0
    %6212 = vadd.xlane.f32.xlu0 %v6211
    %v6213 = vpop.xlane.xlu0 %6212
    %v6214 = vsel %vm5823, %v6098, 0.0
    %6215 = vadd.xlane.f32.xlu0 %v6214
    %v6216 = vpop.xlane.xlu0 %6215
    %v6217 = vsel %vm5823, %v6099, 0.0
    %6218 = vadd.xlane.f32.xlu0 %v6217
    %v6219 = vpop.xlane.xlu0 %6218
    %v6220 = vsel %vm5823, %v6100, 0.0
    %6221 = vadd.xlane.f32.xlu0 %v6220
    %v6222 = vpop.xlane.xlu0 %6221
    %v6223 = vsel %vm5823, %v6101, 0.0
    %6224 = vadd.xlane.f32.xlu0 %v6223
    %v6225 = vpop.xlane.xlu0 %6224
    %v6226 = vsel %vm5823, %v6102, 0.0
    %6227 = vadd.xlane.f32.xlu0 %v6226
    %v6228 = vpop.xlane.xlu0 %6227
    %v6229 = vsel %vm5823, %v6103, 0.0
    %6230 = vadd.xlane.f32.xlu0 %v6229
    %v6231 = vpop.xlane.xlu0 %6230
    %v6232 = vsel %vm5823, %v6104, 0.0
    %6233 = vadd.xlane.f32.xlu0 %v6232
    %v6234 = vpop.xlane.xlu0 %6233
    %v6235 = vsel %vm5823, %v6105, 0.0
    %6236 = vadd.xlane.f32.xlu0 %v6235
    %v6237 = vpop.xlane.xlu0 %6236
    %v6238 = vsel %vm5823, %v6106, 0.0
    %6239 = vadd.xlane.f32.xlu0 %v6238
    %v6240 = vpop.xlane.xlu0 %6239
    %v6241 = vsel %vm5823, %v6107, 0.0
    %6242 = vadd.xlane.f32.xlu0 %v6241
    %v6243 = vpop.xlane.xlu0 %6242
    %v6244 = vsel %vm5823, %v6108, 0.0
    %6245 = vadd.xlane.f32.xlu0 %v6244
    %v6246 = vpop.xlane.xlu0 %6245
    %v6247 = vsel %vm5823, %v6109, 0.0
    %6248 = vadd.xlane.f32.xlu0 %v6247
    %v6249 = vpop.xlane.xlu0 %6248
    %v6250 = vsel %vm5823, %v6110, 0.0
    %6251 = vadd.xlane.f32.xlu0 %v6250
    %v6252 = vpop.xlane.xlu0 %6251
    %v6253 = vsel %vm5823, %v6111, 0.0
    %6254 = vadd.xlane.f32.xlu0 %v6253
    %v6255 = vpop.xlane.xlu0 %6254
    %v6256 = vmax.f32 %v6114, 1e-24
    %v6257 = vmax.f32 %v6117, 1e-24
    %v6258 = vmax.f32 %v6120, 1e-24
    %v6259 = vmax.f32 %v6123, 1e-24
    %v6260 = vmax.f32 %v6126, 1e-24
    %v6261 = vmax.f32 %v6129, 1e-24
    %v6262 = vmax.f32 %v6132, 1e-24
    %v6263 = vmax.f32 %v6135, 1e-24
    %v6264 = vmax.f32 %v6138, 1e-24
    %v6265 = vmax.f32 %v6141, 1e-24
    %v6266 = vmax.f32 %v6144, 1e-24
    %v6267 = vmax.f32 %v6147, 1e-24
    %v6268 = vmax.f32 %v6150, 1e-24
    %v6269 = vmax.f32 %v6153, 1e-24
    %v6270 = vmax.f32 %v6156, 1e-24
    %v6271 = vmax.f32 %v6159, 1e-24
    %v6272 = vmax.f32 %v6162, 1e-24
    %v6273 = vmax.f32 %v6165, 1e-24
    %v6274 = vmax.f32 %v6168, 1e-24
    %v6275 = vmax.f32 %v6171, 1e-24
    %v6276 = vmax.f32 %v6174, 1e-24
    %v6277 = vmax.f32 %v6177, 1e-24
    %v6278 = vmax.f32 %v6180, 1e-24
    %v6279 = vmax.f32 %v6183, 1e-24
    %v6280 = vmax.f32 %v6186, 1e-24
    %v6281 = vmax.f32 %v6189, 1e-24
    %v6282 = vmax.f32 %v6192, 1e-24
    %v6283 = vmax.f32 %v6195, 1e-24
    %v6284 = vmax.f32 %v6198, 1e-24
    %v6285 = vmax.f32 %v6201, 1e-24
    %v6286 = vmax.f32 %v6204, 1e-24
    %v6287 = vmax.f32 %v6207, 1e-24
    %v6288 = vmax.f32 %v6210, 1e-24
    %v6289 = vmax.f32 %v6213, 1e-24
    %v6290 = vmax.f32 %v6216, 1e-24
    %v6291 = vmax.f32 %v6219, 1e-24
    %v6292 = vmax.f32 %v6222, 1e-24
    %v6293 = vmax.f32 %v6225, 1e-24
    %v6294 = vmax.f32 %v6228, 1e-24
    %v6295 = vmax.f32 %v6231, 1e-24
    %v6296 = vmax.f32 %v6234, 1e-24
    %v6297 = vmax.f32 %v6237, 1e-24
    %v6298 = vmax.f32 %v6240, 1e-24
    %v6299 = vmax.f32 %v6243, 1e-24
    %v6300 = vmax.f32 %v6246, 1e-24
    %v6301 = vmax.f32 %v6249, 1e-24
    %v6302 = vmax.f32 %v6252, 1e-24
    %v6303 = vmax.f32 %v6255, 1e-24
    %v6304 = vrsqrt.pop %v6256
    %v6305 = vrsqrt.pop %v6257
    %v6306 = vrsqrt.pop %v6258
    %v6307 = vrsqrt.pop %v6259
    %v6308 = vrsqrt.pop %v6260
    %v6309 = vrsqrt.pop %v6261
    %v6310 = vrsqrt.pop %v6262
    %v6311 = vrsqrt.pop %v6263
    %v6312 = vrsqrt.pop %v6264
    %v6313 = vrsqrt.pop %v6265
    %v6314 = vrsqrt.pop %v6266
    %v6315 = vrsqrt.pop %v6267
    %v6316 = vrsqrt.pop %v6268
    %v6317 = vrsqrt.pop %v6269
    %v6318 = vrsqrt.pop %v6270
    %v6319 = vrsqrt.pop %v6271
    %v6320 = vrsqrt.pop %v6272
    %v6321 = vrsqrt.pop %v6273
    %v6322 = vrsqrt.pop %v6274
    %v6323 = vrsqrt.pop %v6275
    %v6324 = vrsqrt.pop %v6276
    %v6325 = vrsqrt.pop %v6277
    %v6326 = vrsqrt.pop %v6278
    %v6327 = vrsqrt.pop %v6279
    %v6328 = vrsqrt.pop %v6280
    %v6329 = vrsqrt.pop %v6281
    %v6330 = vrsqrt.pop %v6282
    %v6331 = vrsqrt.pop %v6283
    %v6332 = vrsqrt.pop %v6284
    %v6333 = vrsqrt.pop %v6285
    %v6334 = vrsqrt.pop %v6286
    %v6335 = vrsqrt.pop %v6287
    %v6336 = vrsqrt.pop %v6288
    %v6337 = vrsqrt.pop %v6289
    %v6338 = vrsqrt.pop %v6290
    %v6339 = vrsqrt.pop %v6291
    %v6340 = vrsqrt.pop %v6292
    %v6341 = vrsqrt.pop %v6293
    %v6342 = vrsqrt.pop %v6294
    %v6343 = vrsqrt.pop %v6295
    %v6344 = vrsqrt.pop %v6296
    %v6345 = vrsqrt.pop %v6297
    %v6346 = vrsqrt.pop %v6298
    %v6347 = vrsqrt.pop %v6299
    %v6348 = vrsqrt.pop %v6300
    %v6349 = vrsqrt.pop %v6301
    %v6350 = vrsqrt.pop %v6302
    %v6351 = vrsqrt.pop %v6303
    %v6352 = vmul.f32 %v6016, %v6304
    %v6353 = vmul.f32 %v6017, %v6305
    %v6354 = vmul.f32 %v6018, %v6306
    %v6355 = vmul.f32 %v6019, %v6307
    %v6356 = vmul.f32 %v6020, %v6308
    %v6357 = vmul.f32 %v6021, %v6309
    %v6358 = vmul.f32 %v6022, %v6310
    %v6359 = vmul.f32 %v6023, %v6311
    %v6360 = vmul.f32 %v6024, %v6312
    %v6361 = vmul.f32 %v6025, %v6313
    %v6362 = vmul.f32 %v6026, %v6314
    %v6363 = vmul.f32 %v6027, %v6315
    %v6364 = vmul.f32 %v6028, %v6316
    %v6365 = vmul.f32 %v6029, %v6317
    %v6366 = vmul.f32 %v6030, %v6318
    %v6367 = vmul.f32 %v6031, %v6319
    %v6368 = vmul.f32 %v6032, %v6320
    %v6369 = vmul.f32 %v6033, %v6321
    %v6370 = vmul.f32 %v6034, %v6322
    %v6371 = vmul.f32 %v6035, %v6323
    %v6372 = vmul.f32 %v6036, %v6324
    %v6373 = vmul.f32 %v6037, %v6325
    %v6374 = vmul.f32 %v6038, %v6326
    %v6375 = vmul.f32 %v6039, %v6327
    %v6376 = vmul.f32 %v6040, %v6328
    %v6377 = vmul.f32 %v6041, %v6329
    %v6378 = vmul.f32 %v6042, %v6330
    %v6379 = vmul.f32 %v6043, %v6331
    %v6380 = vmul.f32 %v6044, %v6332
    %v6381 = vmul.f32 %v6045, %v6333
    %v6382 = vmul.f32 %v6046, %v6334
    %v6383 = vmul.f32 %v6047, %v6335
    %v6384 = vmul.f32 %v6048, %v6336
    %v6385 = vmul.f32 %v6049, %v6337
    %v6386 = vmul.f32 %v6050, %v6338
    %v6387 = vmul.f32 %v6051, %v6339
    %v6388 = vmul.f32 %v6052, %v6340
    %v6389 = vmul.f32 %v6053, %v6341
    %v6390 = vmul.f32 %v6054, %v6342
    %v6391 = vmul.f32 %v6055, %v6343
    %v6392 = vmul.f32 %v6056, %v6344
    %v6393 = vmul.f32 %v6057, %v6345
    %v6394 = vmul.f32 %v6058, %v6346
    %v6395 = vmul.f32 %v6059, %v6347
    %v6396 = vmul.f32 %v6060, %v6348
    %v6397 = vmul.f32 %v6061, %v6349
    %v6398 = vmul.f32 %v6062, %v6350
    %v6399 = vmul.f32 %v6063, %v6351
    %v6400 = vmul.f32 %v5679, %v5727
    %v6401 = vmul.f32 %v5680, %v5728
    %v6402 = vmul.f32 %v5681, %v5729
    %v6403 = vmul.f32 %v5682, %v5730
    %v6404 = vmul.f32 %v5683, %v5731
    %v6405 = vmul.f32 %v5684, %v5732
    %v6406 = vmul.f32 %v5685, %v5733
    %v6407 = vmul.f32 %v5686, %v5734
    %v6408 = vmul.f32 %v5687, %v5735
    %v6409 = vmul.f32 %v5688, %v5736
    %v6410 = vmul.f32 %v5689, %v5737
    %v6411 = vmul.f32 %v5690, %v5738
    %v6412 = vmul.f32 %v5691, %v5739
    %v6413 = vmul.f32 %v5692, %v5740
    %v6414 = vmul.f32 %v5693, %v5741
    %v6415 = vmul.f32 %v5694, %v5742
    %v6416 = vmul.f32 %v5695, %v5743
    %v6417 = vmul.f32 %v5696, %v5744
    %v6418 = vmul.f32 %v5697, %v5745
    %v6419 = vmul.f32 %v5698, %v5746
    %v6420 = vmul.f32 %v5699, %v5747
    %v6421 = vmul.f32 %v5700, %v5748
    %v6422 = vmul.f32 %v5701, %v5749
    %v6423 = vmul.f32 %v5702, %v5750
    %v6424 = vmul.f32 %v5703, %v5751
    %v6425 = vmul.f32 %v5704, %v5752
    %v6426 = vmul.f32 %v5705, %v5753
    %v6427 = vmul.f32 %v5706, %v5754
    %v6428 = vmul.f32 %v5707, %v5755
    %v6429 = vmul.f32 %v5708, %v5756
    %v6430 = vmul.f32 %v5709, %v5757
    %v6431 = vmul.f32 %v5710, %v5758
    %v6432 = vmul.f32 %v5711, %v5759
    %v6433 = vmul.f32 %v5712, %v5760
    %v6434 = vmul.f32 %v5713, %v5761
    %v6435 = vmul.f32 %v5714, %v5762
    %v6436 = vmul.f32 %v5715, %v5763
    %v6437 = vmul.f32 %v5716, %v5764
    %v6438 = vmul.f32 %v5717, %v5765
    %v6439 = vmul.f32 %v5718, %v5766
    %v6440 = vmul.f32 %v5719, %v5767
    %v6441 = vmul.f32 %v5720, %v5768
    %v6442 = vmul.f32 %v5721, %v5769
    %v6443 = vmul.f32 %v5722, %v5770
    %v6444 = vmul.f32 %v5723, %v5771
    %v6445 = vmul.f32 %v5724, %v5772
    %v6446 = vmul.f32 %v5725, %v5773
    %v6447 = vmul.f32 %v5726, %v5774
    %v6448 = vsel %vm5823, %v6400, 0.0
    %6449 = vadd.xlane.f32.xlu0 %v6448
    %v6450 = vpop.xlane.xlu0 %6449
    %v6451 = vsel %vm5823, %v6401, 0.0
    %6452 = vadd.xlane.f32.xlu0 %v6451
    %v6453 = vpop.xlane.xlu0 %6452
    %v6454 = vsel %vm5823, %v6402, 0.0
    %6455 = vadd.xlane.f32.xlu0 %v6454
    %v6456 = vpop.xlane.xlu0 %6455
    %v6457 = vsel %vm5823, %v6403, 0.0
    %6458 = vadd.xlane.f32.xlu0 %v6457
    %v6459 = vpop.xlane.xlu0 %6458
    %v6460 = vsel %vm5823, %v6404, 0.0
    %6461 = vadd.xlane.f32.xlu0 %v6460
    %v6462 = vpop.xlane.xlu0 %6461
    %v6463 = vsel %vm5823, %v6405, 0.0
    %6464 = vadd.xlane.f32.xlu0 %v6463
    %v6465 = vpop.xlane.xlu0 %6464
    %v6466 = vsel %vm5823, %v6406, 0.0
    %6467 = vadd.xlane.f32.xlu0 %v6466
    %v6468 = vpop.xlane.xlu0 %6467
    %v6469 = vsel %vm5823, %v6407, 0.0
    %6470 = vadd.xlane.f32.xlu0 %v6469
    %v6471 = vpop.xlane.xlu0 %6470
    %v6472 = vsel %vm5823, %v6408, 0.0
    %6473 = vadd.xlane.f32.xlu0 %v6472
    %v6474 = vpop.xlane.xlu0 %6473
    %v6475 = vsel %vm5823, %v6409, 0.0
    %6476 = vadd.xlane.f32.xlu0 %v6475
    %v6477 = vpop.xlane.xlu0 %6476
    %v6478 = vsel %vm5823, %v6410, 0.0
    %6479 = vadd.xlane.f32.xlu0 %v6478
    %v6480 = vpop.xlane.xlu0 %6479
    %v6481 = vsel %vm5823, %v6411, 0.0
    %6482 = vadd.xlane.f32.xlu0 %v6481
    %v6483 = vpop.xlane.xlu0 %6482
    %v6484 = vsel %vm5823, %v6412, 0.0
    %6485 = vadd.xlane.f32.xlu0 %v6484
    %v6486 = vpop.xlane.xlu0 %6485
    %v6487 = vsel %vm5823, %v6413, 0.0
    %6488 = vadd.xlane.f32.xlu0 %v6487
    %v6489 = vpop.xlane.xlu0 %6488
    %v6490 = vsel %vm5823, %v6414, 0.0
    %6491 = vadd.xlane.f32.xlu0 %v6490
    %v6492 = vpop.xlane.xlu0 %6491
    %v6493 = vsel %vm5823, %v6415, 0.0
    %6494 = vadd.xlane.f32.xlu0 %v6493
    %v6495 = vpop.xlane.xlu0 %6494
    %v6496 = vsel %vm5823, %v6416, 0.0
    %6497 = vadd.xlane.f32.xlu0 %v6496
    %v6498 = vpop.xlane.xlu0 %6497
    %v6499 = vsel %vm5823, %v6417, 0.0
    %6500 = vadd.xlane.f32.xlu0 %v6499
    %v6501 = vpop.xlane.xlu0 %6500
    %v6502 = vsel %vm5823, %v6418, 0.0
    %6503 = vadd.xlane.f32.xlu0 %v6502
    %v6504 = vpop.xlane.xlu0 %6503
    %v6505 = vsel %vm5823, %v6419, 0.0
    %6506 = vadd.xlane.f32.xlu0 %v6505
    %v6507 = vpop.xlane.xlu0 %6506
    %v6508 = vsel %vm5823, %v6420, 0.0
    %6509 = vadd.xlane.f32.xlu0 %v6508
    %v6510 = vpop.xlane.xlu0 %6509
    %v6511 = vsel %vm5823, %v6421, 0.0
    %6512 = vadd.xlane.f32.xlu0 %v6511
    %v6513 = vpop.xlane.xlu0 %6512
    %v6514 = vsel %vm5823, %v6422, 0.0
    %6515 = vadd.xlane.f32.xlu0 %v6514
    %v6516 = vpop.xlane.xlu0 %6515
    %v6517 = vsel %vm5823, %v6423, 0.0
    %6518 = vadd.xlane.f32.xlu0 %v6517
    %v6519 = vpop.xlane.xlu0 %6518
    %v6520 = vsel %vm5823, %v6424, 0.0
    %6521 = vadd.xlane.f32.xlu0 %v6520
    %v6522 = vpop.xlane.xlu0 %6521
    %v6523 = vsel %vm5823, %v6425, 0.0
    %6524 = vadd.xlane.f32.xlu0 %v6523
    %v6525 = vpop.xlane.xlu0 %6524
    %v6526 = vsel %vm5823, %v6426, 0.0
    %6527 = vadd.xlane.f32.xlu0 %v6526
    %v6528 = vpop.xlane.xlu0 %6527
    %v6529 = vsel %vm5823, %v6427, 0.0
    %6530 = vadd.xlane.f32.xlu0 %v6529
    %v6531 = vpop.xlane.xlu0 %6530
    %v6532 = vsel %vm5823, %v6428, 0.0
    %6533 = vadd.xlane.f32.xlu0 %v6532
    %v6534 = vpop.xlane.xlu0 %6533
    %v6535 = vsel %vm5823, %v6429, 0.0
    %6536 = vadd.xlane.f32.xlu0 %v6535
    %v6537 = vpop.xlane.xlu0 %6536
    %v6538 = vsel %vm5823, %v6430, 0.0
    %6539 = vadd.xlane.f32.xlu0 %v6538
    %v6540 = vpop.xlane.xlu0 %6539
    %v6541 = vsel %vm5823, %v6431, 0.0
    %6542 = vadd.xlane.f32.xlu0 %v6541
    %v6543 = vpop.xlane.xlu0 %6542
    %v6544 = vsel %vm5823, %v6432, 0.0
    %6545 = vadd.xlane.f32.xlu0 %v6544
    %v6546 = vpop.xlane.xlu0 %6545
    %v6547 = vsel %vm5823, %v6433, 0.0
    %6548 = vadd.xlane.f32.xlu0 %v6547
    %v6549 = vpop.xlane.xlu0 %6548
    %v6550 = vsel %vm5823, %v6434, 0.0
    %6551 = vadd.xlane.f32.xlu0 %v6550
    %v6552 = vpop.xlane.xlu0 %6551
    %v6553 = vsel %vm5823, %v6435, 0.0
    %6554 = vadd.xlane.f32.xlu0 %v6553
    %v6555 = vpop.xlane.xlu0 %6554
    %v6556 = vsel %vm5823, %v6436, 0.0
    %6557 = vadd.xlane.f32.xlu0 %v6556
    %v6558 = vpop.xlane.xlu0 %6557
    %v6559 = vsel %vm5823, %v6437, 0.0
    %6560 = vadd.xlane.f32.xlu0 %v6559
    %v6561 = vpop.xlane.xlu0 %6560
    %v6562 = vsel %vm5823, %v6438, 0.0
    %6563 = vadd.xlane.f32.xlu0 %v6562
    %v6564 = vpop.xlane.xlu0 %6563
    %v6565 = vsel %vm5823, %v6439, 0.0
    %6566 = vadd.xlane.f32.xlu0 %v6565
    %v6567 = vpop.xlane.xlu0 %6566
    %v6568 = vsel %vm5823, %v6440, 0.0
    %6569 = vadd.xlane.f32.xlu0 %v6568
    %v6570 = vpop.xlane.xlu0 %6569
    %v6571 = vsel %vm5823, %v6441, 0.0
    %6572 = vadd.xlane.f32.xlu0 %v6571
    %v6573 = vpop.xlane.xlu0 %6572
    %v6574 = vsel %vm5823, %v6442, 0.0
    %6575 = vadd.xlane.f32.xlu0 %v6574
    %v6576 = vpop.xlane.xlu0 %6575
    %v6577 = vsel %vm5823, %v6443, 0.0
    %6578 = vadd.xlane.f32.xlu0 %v6577
    %v6579 = vpop.xlane.xlu0 %6578
    %v6580 = vsel %vm5823, %v6444, 0.0
    %6581 = vadd.xlane.f32.xlu0 %v6580
    %v6582 = vpop.xlane.xlu0 %6581
    %v6583 = vsel %vm5823, %v6445, 0.0
    %6584 = vadd.xlane.f32.xlu0 %v6583
    %v6585 = vpop.xlane.xlu0 %6584
    %v6586 = vsel %vm5823, %v6446, 0.0
    %6587 = vadd.xlane.f32.xlu0 %v6586
    %v6588 = vpop.xlane.xlu0 %6587
    %v6589 = vsel %vm5823, %v6447, 0.0
    %6590 = vadd.xlane.f32.xlu0 %v6589
    %v6591 = vpop.xlane.xlu0 %6590
    %v6592 = vmul.f32 %v6450, %v5631
    %v6593 = vmul.f32 %v6453, %v5632
    %v6594 = vmul.f32 %v6456, %v5633
    %v6595 = vmul.f32 %v6459, %v5634
    %v6596 = vmul.f32 %v6462, %v5635
    %v6597 = vmul.f32 %v6465, %v5636
    %v6598 = vmul.f32 %v6468, %v5637
    %v6599 = vmul.f32 %v6471, %v5638
    %v6600 = vmul.f32 %v6474, %v5639
    %v6601 = vmul.f32 %v6477, %v5640
    %v6602 = vmul.f32 %v6480, %v5641
    %v6603 = vmul.f32 %v6483, %v5642
    %v6604 = vmul.f32 %v6486, %v5643
    %v6605 = vmul.f32 %v6489, %v5644
    %v6606 = vmul.f32 %v6492, %v5645
    %v6607 = vmul.f32 %v6495, %v5646
    %v6608 = vmul.f32 %v6498, %v5647
    %v6609 = vmul.f32 %v6501, %v5648
    %v6610 = vmul.f32 %v6504, %v5649
    %v6611 = vmul.f32 %v6507, %v5650
    %v6612 = vmul.f32 %v6510, %v5651
    %v6613 = vmul.f32 %v6513, %v5652
    %v6614 = vmul.f32 %v6516, %v5653
    %v6615 = vmul.f32 %v6519, %v5654
    %v6616 = vmul.f32 %v6522, %v5655
    %v6617 = vmul.f32 %v6525, %v5656
    %v6618 = vmul.f32 %v6528, %v5657
    %v6619 = vmul.f32 %v6531, %v5658
    %v6620 = vmul.f32 %v6534, %v5659
    %v6621 = vmul.f32 %v6537, %v5660
    %v6622 = vmul.f32 %v6540, %v5661
    %v6623 = vmul.f32 %v6543, %v5662
    %v6624 = vmul.f32 %v6546, %v5663
    %v6625 = vmul.f32 %v6549, %v5664
    %v6626 = vmul.f32 %v6552, %v5665
    %v6627 = vmul.f32 %v6555, %v5666
    %v6628 = vmul.f32 %v6558, %v5667
    %v6629 = vmul.f32 %v6561, %v5668
    %v6630 = vmul.f32 %v6564, %v5669
    %v6631 = vmul.f32 %v6567, %v5670
    %v6632 = vmul.f32 %v6570, %v5671
    %v6633 = vmul.f32 %v6573, %v5672
    %v6634 = vmul.f32 %v6576, %v5673
    %v6635 = vmul.f32 %v6579, %v5674
    %v6636 = vmul.f32 %v6582, %v5675
    %v6637 = vmul.f32 %v6585, %v5676
    %v6638 = vmul.f32 %v6588, %v5677
    %v6639 = vmul.f32 %v6591, %v5678
    %v6640 = vadd.f32 %v5679, %v6592
    %v6641 = vadd.f32 %v5680, %v6593
    %v6642 = vadd.f32 %v5681, %v6594
    %v6643 = vadd.f32 %v5682, %v6595
    %v6644 = vadd.f32 %v5683, %v6596
    %v6645 = vadd.f32 %v5684, %v6597
    %v6646 = vadd.f32 %v5685, %v6598
    %v6647 = vadd.f32 %v5686, %v6599
    %v6648 = vadd.f32 %v5687, %v6600
    %v6649 = vadd.f32 %v5688, %v6601
    %v6650 = vadd.f32 %v5689, %v6602
    %v6651 = vadd.f32 %v5690, %v6603
    %v6652 = vadd.f32 %v5691, %v6604
    %v6653 = vadd.f32 %v5692, %v6605
    %v6654 = vadd.f32 %v5693, %v6606
    %v6655 = vadd.f32 %v5694, %v6607
    %v6656 = vadd.f32 %v5695, %v6608
    %v6657 = vadd.f32 %v5696, %v6609
    %v6658 = vadd.f32 %v5697, %v6610
    %v6659 = vadd.f32 %v5698, %v6611
    %v6660 = vadd.f32 %v5699, %v6612
    %v6661 = vadd.f32 %v5700, %v6613
    %v6662 = vadd.f32 %v5701, %v6614
    %v6663 = vadd.f32 %v5702, %v6615
    %v6664 = vadd.f32 %v5703, %v6616
    %v6665 = vadd.f32 %v5704, %v6617
    %v6666 = vadd.f32 %v5705, %v6618
    %v6667 = vadd.f32 %v5706, %v6619
    %v6668 = vadd.f32 %v5707, %v6620
    %v6669 = vadd.f32 %v5708, %v6621
    %v6670 = vadd.f32 %v5709, %v6622
    %v6671 = vadd.f32 %v5710, %v6623
    %v6672 = vadd.f32 %v5711, %v6624
    %v6673 = vadd.f32 %v5712, %v6625
    %v6674 = vadd.f32 %v5713, %v6626
    %v6675 = vadd.f32 %v5714, %v6627
    %v6676 = vadd.f32 %v5715, %v6628
    %v6677 = vadd.f32 %v5716, %v6629
    %v6678 = vadd.f32 %v5717, %v6630
    %v6679 = vadd.f32 %v5718, %v6631
    %v6680 = vadd.f32 %v5719, %v6632
    %v6681 = vadd.f32 %v5720, %v6633
    %v6682 = vadd.f32 %v5721, %v6634
    %v6683 = vadd.f32 %v5722, %v6635
    %v6684 = vadd.f32 %v5723, %v6636
    %v6685 = vadd.f32 %v5724, %v6637
    %v6686 = vadd.f32 %v5725, %v6638
    %v6687 = vadd.f32 %v5726, %v6639
    %v6688 = vmul.f32 %v6640, %v6640
    %v6689 = vmul.f32 %v6641, %v6641
    %v6690 = vmul.f32 %v6642, %v6642
    %v6691 = vmul.f32 %v6643, %v6643
    %v6692 = vmul.f32 %v6644, %v6644
    %v6693 = vmul.f32 %v6645, %v6645
    %v6694 = vmul.f32 %v6646, %v6646
    %v6695 = vmul.f32 %v6647, %v6647
    %v6696 = vmul.f32 %v6648, %v6648
    %v6697 = vmul.f32 %v6649, %v6649
    %v6698 = vmul.f32 %v6650, %v6650
    %v6699 = vmul.f32 %v6651, %v6651
    %v6700 = vmul.f32 %v6652, %v6652
    %v6701 = vmul.f32 %v6653, %v6653
    %v6702 = vmul.f32 %v6654, %v6654
    %v6703 = vmul.f32 %v6655, %v6655
    %v6704 = vmul.f32 %v6656, %v6656
    %v6705 = vmul.f32 %v6657, %v6657
    %v6706 = vmul.f32 %v6658, %v6658
    %v6707 = vmul.f32 %v6659, %v6659
    %v6708 = vmul.f32 %v6660, %v6660
    %v6709 = vmul.f32 %v6661, %v6661
    %v6710 = vmul.f32 %v6662, %v6662
    %v6711 = vmul.f32 %v6663, %v6663
    %v6712 = vmul.f32 %v6664, %v6664
    %v6713 = vmul.f32 %v6665, %v6665
    %v6714 = vmul.f32 %v6666, %v6666
    %v6715 = vmul.f32 %v6667, %v6667
    %v6716 = vmul.f32 %v6668, %v6668
    %v6717 = vmul.f32 %v6669, %v6669
    %v6718 = vmul.f32 %v6670, %v6670
    %v6719 = vmul.f32 %v6671, %v6671
    %v6720 = vmul.f32 %v6672, %v6672
    %v6721 = vmul.f32 %v6673, %v6673
    %v6722 = vmul.f32 %v6674, %v6674
    %v6723 = vmul.f32 %v6675, %v6675
    %v6724 = vmul.f32 %v6676, %v6676
    %v6725 = vmul.f32 %v6677, %v6677
    %v6726 = vmul.f32 %v6678, %v6678
    %v6727 = vmul.f32 %v6679, %v6679
    %v6728 = vmul.f32 %v6680, %v6680
    %v6729 = vmul.f32 %v6681, %v6681
    %v6730 = vmul.f32 %v6682, %v6682
    %v6731 = vmul.f32 %v6683, %v6683
    %v6732 = vmul.f32 %v6684, %v6684
    %v6733 = vmul.f32 %v6685, %v6685
    %v6734 = vmul.f32 %v6686, %v6686
    %v6735 = vmul.f32 %v6687, %v6687
    %v6736 = vsel %vm5823, %v6688, 0.0
    %6737 = vadd.xlane.f32.xlu0 %v6736
    %v6738 = vpop.xlane.xlu0 %6737
    %v6739 = vsel %vm5823, %v6689, 0.0
    %6740 = vadd.xlane.f32.xlu0 %v6739
    %v6741 = vpop.xlane.xlu0 %6740
    %v6742 = vsel %vm5823, %v6690, 0.0
    %6743 = vadd.xlane.f32.xlu0 %v6742
    %v6744 = vpop.xlane.xlu0 %6743
    %v6745 = vsel %vm5823, %v6691, 0.0
    %6746 = vadd.xlane.f32.xlu0 %v6745
    %v6747 = vpop.xlane.xlu0 %6746
    %v6748 = vsel %vm5823, %v6692, 0.0
    %6749 = vadd.xlane.f32.xlu0 %v6748
    %v6750 = vpop.xlane.xlu0 %6749
    %v6751 = vsel %vm5823, %v6693, 0.0
    %6752 = vadd.xlane.f32.xlu0 %v6751
    %v6753 = vpop.xlane.xlu0 %6752
    %v6754 = vsel %vm5823, %v6694, 0.0
    %6755 = vadd.xlane.f32.xlu0 %v6754
    %v6756 = vpop.xlane.xlu0 %6755
    %v6757 = vsel %vm5823, %v6695, 0.0
    %6758 = vadd.xlane.f32.xlu0 %v6757
    %v6759 = vpop.xlane.xlu0 %6758
    %v6760 = vsel %vm5823, %v6696, 0.0
    %6761 = vadd.xlane.f32.xlu0 %v6760
    %v6762 = vpop.xlane.xlu0 %6761
    %v6763 = vsel %vm5823, %v6697, 0.0
    %6764 = vadd.xlane.f32.xlu0 %v6763
    %v6765 = vpop.xlane.xlu0 %6764
    %v6766 = vsel %vm5823, %v6698, 0.0
    %6767 = vadd.xlane.f32.xlu0 %v6766
    %v6768 = vpop.xlane.xlu0 %6767
    %v6769 = vsel %vm5823, %v6699, 0.0
    %6770 = vadd.xlane.f32.xlu0 %v6769
    %v6771 = vpop.xlane.xlu0 %6770
    %v6772 = vsel %vm5823, %v6700, 0.0
    %6773 = vadd.xlane.f32.xlu0 %v6772
    %v6774 = vpop.xlane.xlu0 %6773
    %v6775 = vsel %vm5823, %v6701, 0.0
    %6776 = vadd.xlane.f32.xlu0 %v6775
    %v6777 = vpop.xlane.xlu0 %6776
    %v6778 = vsel %vm5823, %v6702, 0.0
    %6779 = vadd.xlane.f32.xlu0 %v6778
    %v6780 = vpop.xlane.xlu0 %6779
    %v6781 = vsel %vm5823, %v6703, 0.0
    %6782 = vadd.xlane.f32.xlu0 %v6781
    %v6783 = vpop.xlane.xlu0 %6782
    %v6784 = vsel %vm5823, %v6704, 0.0
    %6785 = vadd.xlane.f32.xlu0 %v6784
    %v6786 = vpop.xlane.xlu0 %6785
    %v6787 = vsel %vm5823, %v6705, 0.0
    %6788 = vadd.xlane.f32.xlu0 %v6787
    %v6789 = vpop.xlane.xlu0 %6788
    %v6790 = vsel %vm5823, %v6706, 0.0
    %6791 = vadd.xlane.f32.xlu0 %v6790
    %v6792 = vpop.xlane.xlu0 %6791
    %v6793 = vsel %vm5823, %v6707, 0.0
    %6794 = vadd.xlane.f32.xlu0 %v6793
    %v6795 = vpop.xlane.xlu0 %6794
    %v6796 = vsel %vm5823, %v6708, 0.0
    %6797 = vadd.xlane.f32.xlu0 %v6796
    %v6798 = vpop.xlane.xlu0 %6797
    %v6799 = vsel %vm5823, %v6709, 0.0
    %6800 = vadd.xlane.f32.xlu0 %v6799
    %v6801 = vpop.xlane.xlu0 %6800
    %v6802 = vsel %vm5823, %v6710, 0.0
    %6803 = vadd.xlane.f32.xlu0 %v6802
    %v6804 = vpop.xlane.xlu0 %6803
    %v6805 = vsel %vm5823, %v6711, 0.0
    %6806 = vadd.xlane.f32.xlu0 %v6805
    %v6807 = vpop.xlane.xlu0 %6806
    %v6808 = vsel %vm5823, %v6712, 0.0
    %6809 = vadd.xlane.f32.xlu0 %v6808
    %v6810 = vpop.xlane.xlu0 %6809
    %v6811 = vsel %vm5823, %v6713, 0.0
    %6812 = vadd.xlane.f32.xlu0 %v6811
    %v6813 = vpop.xlane.xlu0 %6812
    %v6814 = vsel %vm5823, %v6714, 0.0
    %6815 = vadd.xlane.f32.xlu0 %v6814
    %v6816 = vpop.xlane.xlu0 %6815
    %v6817 = vsel %vm5823, %v6715, 0.0
    %6818 = vadd.xlane.f32.xlu0 %v6817
    %v6819 = vpop.xlane.xlu0 %6818
    %v6820 = vsel %vm5823, %v6716, 0.0
    %6821 = vadd.xlane.f32.xlu0 %v6820
    %v6822 = vpop.xlane.xlu0 %6821
    %v6823 = vsel %vm5823, %v6717, 0.0
    %6824 = vadd.xlane.f32.xlu0 %v6823
    %v6825 = vpop.xlane.xlu0 %6824
    %v6826 = vsel %vm5823, %v6718, 0.0
    %6827 = vadd.xlane.f32.xlu0 %v6826
    %v6828 = vpop.xlane.xlu0 %6827
    %v6829 = vsel %vm5823, %v6719, 0.0
    %6830 = vadd.xlane.f32.xlu0 %v6829
    %v6831 = vpop.xlane.xlu0 %6830
    %v6832 = vsel %vm5823, %v6720, 0.0
    %6833 = vadd.xlane.f32.xlu0 %v6832
    %v6834 = vpop.xlane.xlu0 %6833
    %v6835 = vsel %vm5823, %v6721, 0.0
    %6836 = vadd.xlane.f32.xlu0 %v6835
    %v6837 = vpop.xlane.xlu0 %6836
    %v6838 = vsel %vm5823, %v6722, 0.0
    %6839 = vadd.xlane.f32.xlu0 %v6838
    %v6840 = vpop.xlane.xlu0 %6839
    %v6841 = vsel %vm5823, %v6723, 0.0
    %6842 = vadd.xlane.f32.xlu0 %v6841
    %v6843 = vpop.xlane.xlu0 %6842
    %v6844 = vsel %vm5823, %v6724, 0.0
    %6845 = vadd.xlane.f32.xlu0 %v6844
    %v6846 = vpop.xlane.xlu0 %6845
    %v6847 = vsel %vm5823, %v6725, 0.0
    %6848 = vadd.xlane.f32.xlu0 %v6847
    %v6849 = vpop.xlane.xlu0 %6848
    %v6850 = vsel %vm5823, %v6726, 0.0
    %6851 = vadd.xlane.f32.xlu0 %v6850
    %v6852 = vpop.xlane.xlu0 %6851
    %v6853 = vsel %vm5823, %v6727, 0.0
    %6854 = vadd.xlane.f32.xlu0 %v6853
    %v6855 = vpop.xlane.xlu0 %6854
    %v6856 = vsel %vm5823, %v6728, 0.0
    %6857 = vadd.xlane.f32.xlu0 %v6856
    %v6858 = vpop.xlane.xlu0 %6857
    %v6859 = vsel %vm5823, %v6729, 0.0
    %6860 = vadd.xlane.f32.xlu0 %v6859
    %v6861 = vpop.xlane.xlu0 %6860
    %v6862 = vsel %vm5823, %v6730, 0.0
    %6863 = vadd.xlane.f32.xlu0 %v6862
    %v6864 = vpop.xlane.xlu0 %6863
    %v6865 = vsel %vm5823, %v6731, 0.0
    %6866 = vadd.xlane.f32.xlu0 %v6865
    %v6867 = vpop.xlane.xlu0 %6866
    %v6868 = vsel %vm5823, %v6732, 0.0
    %6869 = vadd.xlane.f32.xlu0 %v6868
    %v6870 = vpop.xlane.xlu0 %6869
    %v6871 = vsel %vm5823, %v6733, 0.0
    %6872 = vadd.xlane.f32.xlu0 %v6871
    %v6873 = vpop.xlane.xlu0 %6872
    %v6874 = vsel %vm5823, %v6734, 0.0
    %6875 = vadd.xlane.f32.xlu0 %v6874
    %v6876 = vpop.xlane.xlu0 %6875
    %v6877 = vsel %vm5823, %v6735, 0.0
    %6878 = vadd.xlane.f32.xlu0 %v6877
    %v6879 = vpop.xlane.xlu0 %6878
    %v6880 = vmax.f32 %v6738, 1e-24
    %v6881 = vmax.f32 %v6741, 1e-24
    %v6882 = vmax.f32 %v6744, 1e-24
    %v6883 = vmax.f32 %v6747, 1e-24
    %v6884 = vmax.f32 %v6750, 1e-24
    %v6885 = vmax.f32 %v6753, 1e-24
    %v6886 = vmax.f32 %v6756, 1e-24
    %v6887 = vmax.f32 %v6759, 1e-24
    %v6888 = vmax.f32 %v6762, 1e-24
    %v6889 = vmax.f32 %v6765, 1e-24
    %v6890 = vmax.f32 %v6768, 1e-24
    %v6891 = vmax.f32 %v6771, 1e-24
    %v6892 = vmax.f32 %v6774, 1e-24
    %v6893 = vmax.f32 %v6777, 1e-24
    %v6894 = vmax.f32 %v6780, 1e-24
    %v6895 = vmax.f32 %v6783, 1e-24
    %v6896 = vmax.f32 %v6786, 1e-24
    %v6897 = vmax.f32 %v6789, 1e-24
    %v6898 = vmax.f32 %v6792, 1e-24
    %v6899 = vmax.f32 %v6795, 1e-24
    %v6900 = vmax.f32 %v6798, 1e-24
    %v6901 = vmax.f32 %v6801, 1e-24
    %v6902 = vmax.f32 %v6804, 1e-24
    %v6903 = vmax.f32 %v6807, 1e-24
    %v6904 = vmax.f32 %v6810, 1e-24
    %v6905 = vmax.f32 %v6813, 1e-24
    %v6906 = vmax.f32 %v6816, 1e-24
    %v6907 = vmax.f32 %v6819, 1e-24
    %v6908 = vmax.f32 %v6822, 1e-24
    %v6909 = vmax.f32 %v6825, 1e-24
    %v6910 = vmax.f32 %v6828, 1e-24
    %v6911 = vmax.f32 %v6831, 1e-24
    %v6912 = vmax.f32 %v6834, 1e-24
    %v6913 = vmax.f32 %v6837, 1e-24
    %v6914 = vmax.f32 %v6840, 1e-24
    %v6915 = vmax.f32 %v6843, 1e-24
    %v6916 = vmax.f32 %v6846, 1e-24
    %v6917 = vmax.f32 %v6849, 1e-24
    %v6918 = vmax.f32 %v6852, 1e-24
    %v6919 = vmax.f32 %v6855, 1e-24
    %v6920 = vmax.f32 %v6858, 1e-24
    %v6921 = vmax.f32 %v6861, 1e-24
    %v6922 = vmax.f32 %v6864, 1e-24
    %v6923 = vmax.f32 %v6867, 1e-24
    %v6924 = vmax.f32 %v6870, 1e-24
    %v6925 = vmax.f32 %v6873, 1e-24
    %v6926 = vmax.f32 %v6876, 1e-24
    %v6927 = vmax.f32 %v6879, 1e-24
    %v6928 = vrsqrt.pop %v6880
    %v6929 = vrsqrt.pop %v6881
    %v6930 = vrsqrt.pop %v6882
    %v6931 = vrsqrt.pop %v6883
    %v6932 = vrsqrt.pop %v6884
    %v6933 = vrsqrt.pop %v6885
    %v6934 = vrsqrt.pop %v6886
    %v6935 = vrsqrt.pop %v6887
    %v6936 = vrsqrt.pop %v6888
    %v6937 = vrsqrt.pop %v6889
    %v6938 = vrsqrt.pop %v6890
    %v6939 = vrsqrt.pop %v6891
    %v6940 = vrsqrt.pop %v6892
    %v6941 = vrsqrt.pop %v6893
    %v6942 = vrsqrt.pop %v6894
    %v6943 = vrsqrt.pop %v6895
    %v6944 = vrsqrt.pop %v6896
    %v6945 = vrsqrt.pop %v6897
    %v6946 = vrsqrt.pop %v6898
    %v6947 = vrsqrt.pop %v6899
    %v6948 = vrsqrt.pop %v6900
    %v6949 = vrsqrt.pop %v6901
    %v6950 = vrsqrt.pop %v6902
    %v6951 = vrsqrt.pop %v6903
    %v6952 = vrsqrt.pop %v6904
    %v6953 = vrsqrt.pop %v6905
    %v6954 = vrsqrt.pop %v6906
    %v6955 = vrsqrt.pop %v6907
    %v6956 = vrsqrt.pop %v6908
    %v6957 = vrsqrt.pop %v6909
    %v6958 = vrsqrt.pop %v6910
    %v6959 = vrsqrt.pop %v6911
    %v6960 = vrsqrt.pop %v6912
    %v6961 = vrsqrt.pop %v6913
    %v6962 = vrsqrt.pop %v6914
    %v6963 = vrsqrt.pop %v6915
    %v6964 = vrsqrt.pop %v6916
    %v6965 = vrsqrt.pop %v6917
    %v6966 = vrsqrt.pop %v6918
    %v6967 = vrsqrt.pop %v6919
    %v6968 = vrsqrt.pop %v6920
    %v6969 = vrsqrt.pop %v6921
    %v6970 = vrsqrt.pop %v6922
    %v6971 = vrsqrt.pop %v6923
    %v6972 = vrsqrt.pop %v6924
    %v6973 = vrsqrt.pop %v6925
    %v6974 = vrsqrt.pop %v6926
    %v6975 = vrsqrt.pop %v6927
    %v6976 = vmul.f32 %v6640, %v6928
    %v6977 = vmul.f32 %v6641, %v6929
    %v6978 = vmul.f32 %v6642, %v6930
    %v6979 = vmul.f32 %v6643, %v6931
    %v6980 = vmul.f32 %v6644, %v6932
    %v6981 = vmul.f32 %v6645, %v6933
    %v6982 = vmul.f32 %v6646, %v6934
    %v6983 = vmul.f32 %v6647, %v6935
    %v6984 = vmul.f32 %v6648, %v6936
    %v6985 = vmul.f32 %v6649, %v6937
    %v6986 = vmul.f32 %v6650, %v6938
    %v6987 = vmul.f32 %v6651, %v6939
    %v6988 = vmul.f32 %v6652, %v6940
    %v6989 = vmul.f32 %v6653, %v6941
    %v6990 = vmul.f32 %v6654, %v6942
    %v6991 = vmul.f32 %v6655, %v6943
    %v6992 = vmul.f32 %v6656, %v6944
    %v6993 = vmul.f32 %v6657, %v6945
    %v6994 = vmul.f32 %v6658, %v6946
    %v6995 = vmul.f32 %v6659, %v6947
    %v6996 = vmul.f32 %v6660, %v6948
    %v6997 = vmul.f32 %v6661, %v6949
    %v6998 = vmul.f32 %v6662, %v6950
    %v6999 = vmul.f32 %v6663, %v6951
    %v7000 = vmul.f32 %v6664, %v6952
    %v7001 = vmul.f32 %v6665, %v6953
    %v7002 = vmul.f32 %v6666, %v6954
    %v7003 = vmul.f32 %v6667, %v6955
    %v7004 = vmul.f32 %v6668, %v6956
    %v7005 = vmul.f32 %v6669, %v6957
    %v7006 = vmul.f32 %v6670, %v6958
    %v7007 = vmul.f32 %v6671, %v6959
    %v7008 = vmul.f32 %v6672, %v6960
    %v7009 = vmul.f32 %v6673, %v6961
    %v7010 = vmul.f32 %v6674, %v6962
    %v7011 = vmul.f32 %v6675, %v6963
    %v7012 = vmul.f32 %v6676, %v6964
    %v7013 = vmul.f32 %v6677, %v6965
    %v7014 = vmul.f32 %v6678, %v6966
    %v7015 = vmul.f32 %v6679, %v6967
    %v7016 = vmul.f32 %v6680, %v6968
    %v7017 = vmul.f32 %v6681, %v6969
    %v7018 = vmul.f32 %v6682, %v6970
    %v7019 = vmul.f32 %v6683, %v6971
    %v7020 = vmul.f32 %v6684, %v6972
    %v7021 = vmul.f32 %v6685, %v6973
    %v7022 = vmul.f32 %v6686, %v6974
    %v7023 = vmul.f32 %v6687, %v6975
    %v7024 = vmul.f32 %v5583, %v5583
    %v7025 = vmul.f32 %v5584, %v5584
    %v7026 = vmul.f32 %v5585, %v5585
    %v7027 = vmul.f32 %v5586, %v5586
    %v7028 = vmul.f32 %v5587, %v5587
    %v7029 = vmul.f32 %v5588, %v5588
    %v7030 = vmul.f32 %v5589, %v5589
    %v7031 = vmul.f32 %v5590, %v5590
    %v7032 = vmul.f32 %v5591, %v5591
    %v7033 = vmul.f32 %v5592, %v5592
    %v7034 = vmul.f32 %v5593, %v5593
    %v7035 = vmul.f32 %v5594, %v5594
    %v7036 = vmul.f32 %v5595, %v5595
    %v7037 = vmul.f32 %v5596, %v5596
    %v7038 = vmul.f32 %v5597, %v5597
    %v7039 = vmul.f32 %v5598, %v5598
    %v7040 = vmul.f32 %v5599, %v5599
    %v7041 = vmul.f32 %v5600, %v5600
    %v7042 = vmul.f32 %v5601, %v5601
    %v7043 = vmul.f32 %v5602, %v5602
    %v7044 = vmul.f32 %v5603, %v5603
    %v7045 = vmul.f32 %v5604, %v5604
    %v7046 = vmul.f32 %v5605, %v5605
    %v7047 = vmul.f32 %v5606, %v5606
    %v7048 = vmul.f32 %v5607, %v5607
    %v7049 = vmul.f32 %v5608, %v5608
    %v7050 = vmul.f32 %v5609, %v5609
    %v7051 = vmul.f32 %v5610, %v5610
    %v7052 = vmul.f32 %v5611, %v5611
    %v7053 = vmul.f32 %v5612, %v5612
    %v7054 = vmul.f32 %v5613, %v5613
    %v7055 = vmul.f32 %v5614, %v5614
    %v7056 = vmul.f32 %v5615, %v5615
    %v7057 = vmul.f32 %v5616, %v5616
    %v7058 = vmul.f32 %v5617, %v5617
    %v7059 = vmul.f32 %v5618, %v5618
    %v7060 = vmul.f32 %v5619, %v5619
    %v7061 = vmul.f32 %v5620, %v5620
    %v7062 = vmul.f32 %v5621, %v5621
    %v7063 = vmul.f32 %v5622, %v5622
    %v7064 = vmul.f32 %v5623, %v5623
    %v7065 = vmul.f32 %v5624, %v5624
    %v7066 = vmul.f32 %v5625, %v5625
    %v7067 = vmul.f32 %v5626, %v5626
    %v7068 = vmul.f32 %v5627, %v5627
    %v7069 = vmul.f32 %v5628, %v5628
    %v7070 = vmul.f32 %v5629, %v5629
    %v7071 = vmul.f32 %v5630, %v5630
    %v7072 = vsel %vm5823, %v7024, 0.0
    %7073 = vadd.xlane.f32.xlu0 %v7072
    %v7074 = vpop.xlane.xlu0 %7073
    %v7075 = vsel %vm5823, %v7025, 0.0
    %7076 = vadd.xlane.f32.xlu0 %v7075
    %v7077 = vpop.xlane.xlu0 %7076
    %v7078 = vsel %vm5823, %v7026, 0.0
    %7079 = vadd.xlane.f32.xlu0 %v7078
    %v7080 = vpop.xlane.xlu0 %7079
    %v7081 = vsel %vm5823, %v7027, 0.0
    %7082 = vadd.xlane.f32.xlu0 %v7081
    %v7083 = vpop.xlane.xlu0 %7082
    %v7084 = vsel %vm5823, %v7028, 0.0
    %7085 = vadd.xlane.f32.xlu0 %v7084
    %v7086 = vpop.xlane.xlu0 %7085
    %v7087 = vsel %vm5823, %v7029, 0.0
    %7088 = vadd.xlane.f32.xlu0 %v7087
    %v7089 = vpop.xlane.xlu0 %7088
    %v7090 = vsel %vm5823, %v7030, 0.0
    %7091 = vadd.xlane.f32.xlu0 %v7090
    %v7092 = vpop.xlane.xlu0 %7091
    %v7093 = vsel %vm5823, %v7031, 0.0
    %7094 = vadd.xlane.f32.xlu0 %v7093
    %v7095 = vpop.xlane.xlu0 %7094
    %v7096 = vsel %vm5823, %v7032, 0.0
    %7097 = vadd.xlane.f32.xlu0 %v7096
    %v7098 = vpop.xlane.xlu0 %7097
    %v7099 = vsel %vm5823, %v7033, 0.0
    %7100 = vadd.xlane.f32.xlu0 %v7099
    %v7101 = vpop.xlane.xlu0 %7100
    %v7102 = vsel %vm5823, %v7034, 0.0
    %7103 = vadd.xlane.f32.xlu0 %v7102
    %v7104 = vpop.xlane.xlu0 %7103
    %v7105 = vsel %vm5823, %v7035, 0.0
    %7106 = vadd.xlane.f32.xlu0 %v7105
    %v7107 = vpop.xlane.xlu0 %7106
    %v7108 = vsel %vm5823, %v7036, 0.0
    %7109 = vadd.xlane.f32.xlu0 %v7108
    %v7110 = vpop.xlane.xlu0 %7109
    %v7111 = vsel %vm5823, %v7037, 0.0
    %7112 = vadd.xlane.f32.xlu0 %v7111
    %v7113 = vpop.xlane.xlu0 %7112
    %v7114 = vsel %vm5823, %v7038, 0.0
    %7115 = vadd.xlane.f32.xlu0 %v7114
    %v7116 = vpop.xlane.xlu0 %7115
    %v7117 = vsel %vm5823, %v7039, 0.0
    %7118 = vadd.xlane.f32.xlu0 %v7117
    %v7119 = vpop.xlane.xlu0 %7118
    %v7120 = vsel %vm5823, %v7040, 0.0
    %7121 = vadd.xlane.f32.xlu0 %v7120
    %v7122 = vpop.xlane.xlu0 %7121
    %v7123 = vsel %vm5823, %v7041, 0.0
    %7124 = vadd.xlane.f32.xlu0 %v7123
    %v7125 = vpop.xlane.xlu0 %7124
    %v7126 = vsel %vm5823, %v7042, 0.0
    %7127 = vadd.xlane.f32.xlu0 %v7126
    %v7128 = vpop.xlane.xlu0 %7127
    %v7129 = vsel %vm5823, %v7043, 0.0
    %7130 = vadd.xlane.f32.xlu0 %v7129
    %v7131 = vpop.xlane.xlu0 %7130
    %v7132 = vsel %vm5823, %v7044, 0.0
    %7133 = vadd.xlane.f32.xlu0 %v7132
    %v7134 = vpop.xlane.xlu0 %7133
    %v7135 = vsel %vm5823, %v7045, 0.0
    %7136 = vadd.xlane.f32.xlu0 %v7135
    %v7137 = vpop.xlane.xlu0 %7136
    %v7138 = vsel %vm5823, %v7046, 0.0
    %7139 = vadd.xlane.f32.xlu0 %v7138
    %v7140 = vpop.xlane.xlu0 %7139
    %v7141 = vsel %vm5823, %v7047, 0.0
    %7142 = vadd.xlane.f32.xlu0 %v7141
    %v7143 = vpop.xlane.xlu0 %7142
    %v7144 = vsel %vm5823, %v7048, 0.0
    %7145 = vadd.xlane.f32.xlu0 %v7144
    %v7146 = vpop.xlane.xlu0 %7145
    %v7147 = vsel %vm5823, %v7049, 0.0
    %7148 = vadd.xlane.f32.xlu0 %v7147
    %v7149 = vpop.xlane.xlu0 %7148
    %v7150 = vsel %vm5823, %v7050, 0.0
    %7151 = vadd.xlane.f32.xlu0 %v7150
    %v7152 = vpop.xlane.xlu0 %7151
    %v7153 = vsel %vm5823, %v7051, 0.0
    %7154 = vadd.xlane.f32.xlu0 %v7153
    %v7155 = vpop.xlane.xlu0 %7154
    %v7156 = vsel %vm5823, %v7052, 0.0
    %7157 = vadd.xlane.f32.xlu0 %v7156
    %v7158 = vpop.xlane.xlu0 %7157
    %v7159 = vsel %vm5823, %v7053, 0.0
    %7160 = vadd.xlane.f32.xlu0 %v7159
    %v7161 = vpop.xlane.xlu0 %7160
    %v7162 = vsel %vm5823, %v7054, 0.0
    %7163 = vadd.xlane.f32.xlu0 %v7162
    %v7164 = vpop.xlane.xlu0 %7163
    %v7165 = vsel %vm5823, %v7055, 0.0
    %7166 = vadd.xlane.f32.xlu0 %v7165
    %v7167 = vpop.xlane.xlu0 %7166
    %v7168 = vsel %vm5823, %v7056, 0.0
    %7169 = vadd.xlane.f32.xlu0 %v7168
    %v7170 = vpop.xlane.xlu0 %7169
    %v7171 = vsel %vm5823, %v7057, 0.0
    %7172 = vadd.xlane.f32.xlu0 %v7171
    %v7173 = vpop.xlane.xlu0 %7172
    %v7174 = vsel %vm5823, %v7058, 0.0
    %7175 = vadd.xlane.f32.xlu0 %v7174
    %v7176 = vpop.xlane.xlu0 %7175
    %v7177 = vsel %vm5823, %v7059, 0.0
    %7178 = vadd.xlane.f32.xlu0 %v7177
    %v7179 = vpop.xlane.xlu0 %7178
    %v7180 = vsel %vm5823, %v7060, 0.0
    %7181 = vadd.xlane.f32.xlu0 %v7180
    %v7182 = vpop.xlane.xlu0 %7181
    %v7183 = vsel %vm5823, %v7061, 0.0
    %7184 = vadd.xlane.f32.xlu0 %v7183
    %v7185 = vpop.xlane.xlu0 %7184
    %v7186 = vsel %vm5823, %v7062, 0.0
    %7187 = vadd.xlane.f32.xlu0 %v7186
    %v7188 = vpop.xlane.xlu0 %7187
    %v7189 = vsel %vm5823, %v7063, 0.0
    %7190 = vadd.xlane.f32.xlu0 %v7189
    %v7191 = vpop.xlane.xlu0 %7190
    %v7192 = vsel %vm5823, %v7064, 0.0
    %7193 = vadd.xlane.f32.xlu0 %v7192
    %v7194 = vpop.xlane.xlu0 %7193
    %v7195 = vsel %vm5823, %v7065, 0.0
    %7196 = vadd.xlane.f32.xlu0 %v7195
    %v7197 = vpop.xlane.xlu0 %7196
    %v7198 = vsel %vm5823, %v7066, 0.0
    %7199 = vadd.xlane.f32.xlu0 %v7198
    %v7200 = vpop.xlane.xlu0 %7199
    %v7201 = vsel %vm5823, %v7067, 0.0
    %7202 = vadd.xlane.f32.xlu0 %v7201
    %v7203 = vpop.xlane.xlu0 %7202
    %v7204 = vsel %vm5823, %v7068, 0.0
    %7205 = vadd.xlane.f32.xlu0 %v7204
    %v7206 = vpop.xlane.xlu0 %7205
    %v7207 = vsel %vm5823, %v7069, 0.0
    %7208 = vadd.xlane.f32.xlu0 %v7207
    %v7209 = vpop.xlane.xlu0 %7208
    %v7210 = vsel %vm5823, %v7070, 0.0
    %7211 = vadd.xlane.f32.xlu0 %v7210
    %v7212 = vpop.xlane.xlu0 %7211
    %v7213 = vsel %vm5823, %v7071, 0.0
    %7214 = vadd.xlane.f32.xlu0 %v7213
    %v7215 = vpop.xlane.xlu0 %7214
    %v7216 = vmax.f32 %v7074, 1e-24
    %v7217 = vmax.f32 %v7077, 1e-24
    %v7218 = vmax.f32 %v7080, 1e-24
    %v7219 = vmax.f32 %v7083, 1e-24
    %v7220 = vmax.f32 %v7086, 1e-24
    %v7221 = vmax.f32 %v7089, 1e-24
    %v7222 = vmax.f32 %v7092, 1e-24
    %v7223 = vmax.f32 %v7095, 1e-24
    %v7224 = vmax.f32 %v7098, 1e-24
    %v7225 = vmax.f32 %v7101, 1e-24
    %v7226 = vmax.f32 %v7104, 1e-24
    %v7227 = vmax.f32 %v7107, 1e-24
    %v7228 = vmax.f32 %v7110, 1e-24
    %v7229 = vmax.f32 %v7113, 1e-24
    %v7230 = vmax.f32 %v7116, 1e-24
    %v7231 = vmax.f32 %v7119, 1e-24
    %v7232 = vmax.f32 %v7122, 1e-24
    %v7233 = vmax.f32 %v7125, 1e-24
    %v7234 = vmax.f32 %v7128, 1e-24
    %v7235 = vmax.f32 %v7131, 1e-24
    %v7236 = vmax.f32 %v7134, 1e-24
    %v7237 = vmax.f32 %v7137, 1e-24
    %v7238 = vmax.f32 %v7140, 1e-24
    %v7239 = vmax.f32 %v7143, 1e-24
    %v7240 = vmax.f32 %v7146, 1e-24
    %v7241 = vmax.f32 %v7149, 1e-24
    %v7242 = vmax.f32 %v7152, 1e-24
    %v7243 = vmax.f32 %v7155, 1e-24
    %v7244 = vmax.f32 %v7158, 1e-24
    %v7245 = vmax.f32 %v7161, 1e-24
    %v7246 = vmax.f32 %v7164, 1e-24
    %v7247 = vmax.f32 %v7167, 1e-24
    %v7248 = vmax.f32 %v7170, 1e-24
    %v7249 = vmax.f32 %v7173, 1e-24
    %v7250 = vmax.f32 %v7176, 1e-24
    %v7251 = vmax.f32 %v7179, 1e-24
    %v7252 = vmax.f32 %v7182, 1e-24
    %v7253 = vmax.f32 %v7185, 1e-24
    %v7254 = vmax.f32 %v7188, 1e-24
    %v7255 = vmax.f32 %v7191, 1e-24
    %v7256 = vmax.f32 %v7194, 1e-24
    %v7257 = vmax.f32 %v7197, 1e-24
    %v7258 = vmax.f32 %v7200, 1e-24
    %v7259 = vmax.f32 %v7203, 1e-24
    %v7260 = vmax.f32 %v7206, 1e-24
    %v7261 = vmax.f32 %v7209, 1e-24
    %v7262 = vmax.f32 %v7212, 1e-24
    %v7263 = vmax.f32 %v7215, 1e-24
    %v7264 = vrsqrt.pop %v7216
    %v7265 = vrsqrt.pop %v7217
    %v7266 = vrsqrt.pop %v7218
    %v7267 = vrsqrt.pop %v7219
    %v7268 = vrsqrt.pop %v7220
    %v7269 = vrsqrt.pop %v7221
    %v7270 = vrsqrt.pop %v7222
    %v7271 = vrsqrt.pop %v7223
    %v7272 = vrsqrt.pop %v7224
    %v7273 = vrsqrt.pop %v7225
    %v7274 = vrsqrt.pop %v7226
    %v7275 = vrsqrt.pop %v7227
    %v7276 = vrsqrt.pop %v7228
    %v7277 = vrsqrt.pop %v7229
    %v7278 = vrsqrt.pop %v7230
    %v7279 = vrsqrt.pop %v7231
    %v7280 = vrsqrt.pop %v7232
    %v7281 = vrsqrt.pop %v7233
    %v7282 = vrsqrt.pop %v7234
    %v7283 = vrsqrt.pop %v7235
    %v7284 = vrsqrt.pop %v7236
    %v7285 = vrsqrt.pop %v7237
    %v7286 = vrsqrt.pop %v7238
    %v7287 = vrsqrt.pop %v7239
    %v7288 = vrsqrt.pop %v7240
    %v7289 = vrsqrt.pop %v7241
    %v7290 = vrsqrt.pop %v7242
    %v7291 = vrsqrt.pop %v7243
    %v7292 = vrsqrt.pop %v7244
    %v7293 = vrsqrt.pop %v7245
    %v7294 = vrsqrt.pop %v7246
    %v7295 = vrsqrt.pop %v7247
    %v7296 = vrsqrt.pop %v7248
    %v7297 = vrsqrt.pop %v7249
    %v7298 = vrsqrt.pop %v7250
    %v7299 = vrsqrt.pop %v7251
    %v7300 = vrsqrt.pop %v7252
    %v7301 = vrsqrt.pop %v7253
    %v7302 = vrsqrt.pop %v7254
    %v7303 = vrsqrt.pop %v7255
    %v7304 = vrsqrt.pop %v7256
    %v7305 = vrsqrt.pop %v7257
    %v7306 = vrsqrt.pop %v7258
    %v7307 = vrsqrt.pop %v7259
    %v7308 = vrsqrt.pop %v7260
    %v7309 = vrsqrt.pop %v7261
    %v7310 = vrsqrt.pop %v7262
    %v7311 = vrsqrt.pop %v7263
    %v7312 = vmul.f32 %v5583, %v7264
    %v7313 = vmul.f32 %v5584, %v7265
    %v7314 = vmul.f32 %v5585, %v7266
    %v7315 = vmul.f32 %v5586, %v7267
    %v7316 = vmul.f32 %v5587, %v7268
    %v7317 = vmul.f32 %v5588, %v7269
    %v7318 = vmul.f32 %v5589, %v7270
    %v7319 = vmul.f32 %v5590, %v7271
    %v7320 = vmul.f32 %v5591, %v7272
    %v7321 = vmul.f32 %v5592, %v7273
    %v7322 = vmul.f32 %v5593, %v7274
    %v7323 = vmul.f32 %v5594, %v7275
    %v7324 = vmul.f32 %v5595, %v7276
    %v7325 = vmul.f32 %v5596, %v7277
    %v7326 = vmul.f32 %v5597, %v7278
    %v7327 = vmul.f32 %v5598, %v7279
    %v7328 = vmul.f32 %v5599, %v7280
    %v7329 = vmul.f32 %v5600, %v7281
    %v7330 = vmul.f32 %v5601, %v7282
    %v7331 = vmul.f32 %v5602, %v7283
    %v7332 = vmul.f32 %v5603, %v7284
    %v7333 = vmul.f32 %v5604, %v7285
    %v7334 = vmul.f32 %v5605, %v7286
    %v7335 = vmul.f32 %v5606, %v7287
    %v7336 = vmul.f32 %v5607, %v7288
    %v7337 = vmul.f32 %v5608, %v7289
    %v7338 = vmul.f32 %v5609, %v7290
    %v7339 = vmul.f32 %v5610, %v7291
    %v7340 = vmul.f32 %v5611, %v7292
    %v7341 = vmul.f32 %v5612, %v7293
    %v7342 = vmul.f32 %v5613, %v7294
    %v7343 = vmul.f32 %v5614, %v7295
    %v7344 = vmul.f32 %v5615, %v7296
    %v7345 = vmul.f32 %v5616, %v7297
    %v7346 = vmul.f32 %v5617, %v7298
    %v7347 = vmul.f32 %v5618, %v7299
    %v7348 = vmul.f32 %v5619, %v7300
    %v7349 = vmul.f32 %v5620, %v7301
    %v7350 = vmul.f32 %v5621, %v7302
    %v7351 = vmul.f32 %v5622, %v7303
    %v7352 = vmul.f32 %v5623, %v7304
    %v7353 = vmul.f32 %v5624, %v7305
    %v7354 = vmul.f32 %v5625, %v7306
    %v7355 = vmul.f32 %v5626, %v7307
    %v7356 = vmul.f32 %v5627, %v7308
    %v7357 = vmul.f32 %v5628, %v7309
    %v7358 = vmul.f32 %v5629, %v7310
    %v7359 = vmul.f32 %v5630, %v7311
    %v7360 = vadd.f32 %v6352, %v7312
    %v7361 = vadd.f32 %v6353, %v7313
    %v7362 = vadd.f32 %v6354, %v7314
    %v7363 = vadd.f32 %v6355, %v7315
    %v7364 = vadd.f32 %v6356, %v7316
    %v7365 = vadd.f32 %v6357, %v7317
    %v7366 = vadd.f32 %v6358, %v7318
    %v7367 = vadd.f32 %v6359, %v7319
    %v7368 = vadd.f32 %v6360, %v7320
    %v7369 = vadd.f32 %v6361, %v7321
    %v7370 = vadd.f32 %v6362, %v7322
    %v7371 = vadd.f32 %v6363, %v7323
    %v7372 = vadd.f32 %v6364, %v7324
    %v7373 = vadd.f32 %v6365, %v7325
    %v7374 = vadd.f32 %v6366, %v7326
    %v7375 = vadd.f32 %v6367, %v7327
    %v7376 = vadd.f32 %v6368, %v7328
    %v7377 = vadd.f32 %v6369, %v7329
    %v7378 = vadd.f32 %v6370, %v7330
    %v7379 = vadd.f32 %v6371, %v7331
    %v7380 = vadd.f32 %v6372, %v7332
    %v7381 = vadd.f32 %v6373, %v7333
    %v7382 = vadd.f32 %v6374, %v7334
    %v7383 = vadd.f32 %v6375, %v7335
    %v7384 = vadd.f32 %v6376, %v7336
    %v7385 = vadd.f32 %v6377, %v7337
    %v7386 = vadd.f32 %v6378, %v7338
    %v7387 = vadd.f32 %v6379, %v7339
    %v7388 = vadd.f32 %v6380, %v7340
    %v7389 = vadd.f32 %v6381, %v7341
    %v7390 = vadd.f32 %v6382, %v7342
    %v7391 = vadd.f32 %v6383, %v7343
    %v7392 = vadd.f32 %v6384, %v7344
    %v7393 = vadd.f32 %v6385, %v7345
    %v7394 = vadd.f32 %v6386, %v7346
    %v7395 = vadd.f32 %v6387, %v7347
    %v7396 = vadd.f32 %v6388, %v7348
    %v7397 = vadd.f32 %v6389, %v7349
    %v7398 = vadd.f32 %v6390, %v7350
    %v7399 = vadd.f32 %v6391, %v7351
    %v7400 = vadd.f32 %v6392, %v7352
    %v7401 = vadd.f32 %v6393, %v7353
    %v7402 = vadd.f32 %v6394, %v7354
    %v7403 = vadd.f32 %v6395, %v7355
    %v7404 = vadd.f32 %v6396, %v7356
    %v7405 = vadd.f32 %v6397, %v7357
    %v7406 = vadd.f32 %v6398, %v7358
    %v7407 = vadd.f32 %v6399, %v7359
    %v7408 = vsub.f32 %v7360, %v6976
    %v7409 = vsub.f32 %v7361, %v6977
    %v7410 = vsub.f32 %v7362, %v6978
    %v7411 = vsub.f32 %v7363, %v6979
    %v7412 = vsub.f32 %v7364, %v6980
    %v7413 = vsub.f32 %v7365, %v6981
    %v7414 = vsub.f32 %v7366, %v6982
    %v7415 = vsub.f32 %v7367, %v6983
    %v7416 = vsub.f32 %v7368, %v6984
    %v7417 = vsub.f32 %v7369, %v6985
    %v7418 = vsub.f32 %v7370, %v6986
    %v7419 = vsub.f32 %v7371, %v6987
    %v7420 = vsub.f32 %v7372, %v6988
    %v7421 = vsub.f32 %v7373, %v6989
    %v7422 = vsub.f32 %v7374, %v6990
    %v7423 = vsub.f32 %v7375, %v6991
    %v7424 = vsub.f32 %v7376, %v6992
    %v7425 = vsub.f32 %v7377, %v6993
    %v7426 = vsub.f32 %v7378, %v6994
    %v7427 = vsub.f32 %v7379, %v6995
    %v7428 = vsub.f32 %v7380, %v6996
    %v7429 = vsub.f32 %v7381, %v6997
    %v7430 = vsub.f32 %v7382, %v6998
    %v7431 = vsub.f32 %v7383, %v6999
    %v7432 = vsub.f32 %v7384, %v7000
    %v7433 = vsub.f32 %v7385, %v7001
    %v7434 = vsub.f32 %v7386, %v7002
    %v7435 = vsub.f32 %v7387, %v7003
    %v7436 = vsub.f32 %v7388, %v7004
    %v7437 = vsub.f32 %v7389, %v7005
    %v7438 = vsub.f32 %v7390, %v7006
    %v7439 = vsub.f32 %v7391, %v7007
    %v7440 = vsub.f32 %v7392, %v7008
    %v7441 = vsub.f32 %v7393, %v7009
    %v7442 = vsub.f32 %v7394, %v7010
    %v7443 = vsub.f32 %v7395, %v7011
    %v7444 = vsub.f32 %v7396, %v7012
    %v7445 = vsub.f32 %v7397, %v7013
    %v7446 = vsub.f32 %v7398, %v7014
    %v7447 = vsub.f32 %v7399, %v7015
    %v7448 = vsub.f32 %v7400, %v7016
    %v7449 = vsub.f32 %v7401, %v7017
    %v7450 = vsub.f32 %v7402, %v7018
    %v7451 = vsub.f32 %v7403, %v7019
    %v7452 = vsub.f32 %v7404, %v7020
    %v7453 = vsub.f32 %v7405, %v7021
    %v7454 = vsub.f32 %v7406, %v7022
    %v7455 = vsub.f32 %v7407, %v7023
    %v7456 = vand.u32 2147483647, %v7408
    %v7457 = vand.u32 2147483647, %v7409
    %v7458 = vand.u32 2147483647, %v7410
    %v7459 = vand.u32 2147483647, %v7411
    %v7460 = vand.u32 2147483647, %v7412
    %v7461 = vand.u32 2147483647, %v7413
    %v7462 = vand.u32 2147483647, %v7414
    %v7463 = vand.u32 2147483647, %v7415
    %v7464 = vand.u32 2147483647, %v7416
    %v7465 = vand.u32 2147483647, %v7417
    %v7466 = vand.u32 2147483647, %v7418
    %v7467 = vand.u32 2147483647, %v7419
    %v7468 = vand.u32 2147483647, %v7420
    %v7469 = vand.u32 2147483647, %v7421
    %v7470 = vand.u32 2147483647, %v7422
    %v7471 = vand.u32 2147483647, %v7423
    %v7472 = vand.u32 2147483647, %v7424
    %v7473 = vand.u32 2147483647, %v7425
    %v7474 = vand.u32 2147483647, %v7426
    %v7475 = vand.u32 2147483647, %v7427
    %v7476 = vand.u32 2147483647, %v7428
    %v7477 = vand.u32 2147483647, %v7429
    %v7478 = vand.u32 2147483647, %v7430
    %v7479 = vand.u32 2147483647, %v7431
    %v7480 = vand.u32 2147483647, %v7432
    %v7481 = vand.u32 2147483647, %v7433
    %v7482 = vand.u32 2147483647, %v7434
    %v7483 = vand.u32 2147483647, %v7435
    %v7484 = vand.u32 2147483647, %v7436
    %v7485 = vand.u32 2147483647, %v7437
    %v7486 = vand.u32 2147483647, %v7438
    %v7487 = vand.u32 2147483647, %v7439
    %v7488 = vand.u32 2147483647, %v7440
    %v7489 = vand.u32 2147483647, %v7441
    %v7490 = vand.u32 2147483647, %v7442
    %v7491 = vand.u32 2147483647, %v7443
    %v7492 = vand.u32 2147483647, %v7444
    %v7493 = vand.u32 2147483647, %v7445
    %v7494 = vand.u32 2147483647, %v7446
    %v7495 = vand.u32 2147483647, %v7447
    %v7496 = vand.u32 2147483647, %v7448
    %v7497 = vand.u32 2147483647, %v7449
    %v7498 = vand.u32 2147483647, %v7450
    %v7499 = vand.u32 2147483647, %v7451
    %v7500 = vand.u32 2147483647, %v7452
    %v7501 = vand.u32 2147483647, %v7453
    %v7502 = vand.u32 2147483647, %v7454
    %v7503 = vand.u32 2147483647, %v7455
    %v7504 = vsel %vm5823, %v7456, 0.0
    %7505 = vadd.xlane.f32.xlu0 %v7504
    %v7506 = vpop.xlane.xlu0 %7505
    %v7507 = vsel %vm5823, %v7457, 0.0
    %7508 = vadd.xlane.f32.xlu0 %v7507
    %v7509 = vpop.xlane.xlu0 %7508
    %v7510 = vsel %vm5823, %v7458, 0.0
    %7511 = vadd.xlane.f32.xlu0 %v7510
    %v7512 = vpop.xlane.xlu0 %7511
    %v7513 = vsel %vm5823, %v7459, 0.0
    %7514 = vadd.xlane.f32.xlu0 %v7513
    %v7515 = vpop.xlane.xlu0 %7514
    %v7516 = vsel %vm5823, %v7460, 0.0
    %7517 = vadd.xlane.f32.xlu0 %v7516
    %v7518 = vpop.xlane.xlu0 %7517
    %v7519 = vsel %vm5823, %v7461, 0.0
    %7520 = vadd.xlane.f32.xlu0 %v7519
    %v7521 = vpop.xlane.xlu0 %7520
    %v7522 = vsel %vm5823, %v7462, 0.0
    %7523 = vadd.xlane.f32.xlu0 %v7522
    %v7524 = vpop.xlane.xlu0 %7523
    %v7525 = vsel %vm5823, %v7463, 0.0
    %7526 = vadd.xlane.f32.xlu0 %v7525
    %v7527 = vpop.xlane.xlu0 %7526
    %v7528 = vsel %vm5823, %v7464, 0.0
    %7529 = vadd.xlane.f32.xlu0 %v7528
    %v7530 = vpop.xlane.xlu0 %7529
    %v7531 = vsel %vm5823, %v7465, 0.0
    %7532 = vadd.xlane.f32.xlu0 %v7531
    %v7533 = vpop.xlane.xlu0 %7532
    %v7534 = vsel %vm5823, %v7466, 0.0
    %7535 = vadd.xlane.f32.xlu0 %v7534
    %v7536 = vpop.xlane.xlu0 %7535
    %v7537 = vsel %vm5823, %v7467, 0.0
    %7538 = vadd.xlane.f32.xlu0 %v7537
    %v7539 = vpop.xlane.xlu0 %7538
    %v7540 = vsel %vm5823, %v7468, 0.0
    %7541 = vadd.xlane.f32.xlu0 %v7540
    %v7542 = vpop.xlane.xlu0 %7541
    %v7543 = vsel %vm5823, %v7469, 0.0
    %7544 = vadd.xlane.f32.xlu0 %v7543
    %v7545 = vpop.xlane.xlu0 %7544
    %v7546 = vsel %vm5823, %v7470, 0.0
    %7547 = vadd.xlane.f32.xlu0 %v7546
    %v7548 = vpop.xlane.xlu0 %7547
    %v7549 = vsel %vm5823, %v7471, 0.0
    %7550 = vadd.xlane.f32.xlu0 %v7549
    %v7551 = vpop.xlane.xlu0 %7550
    %v7552 = vsel %vm5823, %v7472, 0.0
    %7553 = vadd.xlane.f32.xlu0 %v7552
    %v7554 = vpop.xlane.xlu0 %7553
    %v7555 = vsel %vm5823, %v7473, 0.0
    %7556 = vadd.xlane.f32.xlu0 %v7555
    %v7557 = vpop.xlane.xlu0 %7556
    %v7558 = vsel %vm5823, %v7474, 0.0
    %7559 = vadd.xlane.f32.xlu0 %v7558
    %v7560 = vpop.xlane.xlu0 %7559
    %v7561 = vsel %vm5823, %v7475, 0.0
    %7562 = vadd.xlane.f32.xlu0 %v7561
    %v7563 = vpop.xlane.xlu0 %7562
    %v7564 = vsel %vm5823, %v7476, 0.0
    %7565 = vadd.xlane.f32.xlu0 %v7564
    %v7566 = vpop.xlane.xlu0 %7565
    %v7567 = vsel %vm5823, %v7477, 0.0
    %7568 = vadd.xlane.f32.xlu0 %v7567
    %v7569 = vpop.xlane.xlu0 %7568
    %v7570 = vsel %vm5823, %v7478, 0.0
    %7571 = vadd.xlane.f32.xlu0 %v7570
    %v7572 = vpop.xlane.xlu0 %7571
    %v7573 = vsel %vm5823, %v7479, 0.0
    %7574 = vadd.xlane.f32.xlu0 %v7573
    %v7575 = vpop.xlane.xlu0 %7574
    %v7576 = vsel %vm5823, %v7480, 0.0
    %7577 = vadd.xlane.f32.xlu0 %v7576
    %v7578 = vpop.xlane.xlu0 %7577
    %v7579 = vsel %vm5823, %v7481, 0.0
    %7580 = vadd.xlane.f32.xlu0 %v7579
    %v7581 = vpop.xlane.xlu0 %7580
    %v7582 = vsel %vm5823, %v7482, 0.0
    %7583 = vadd.xlane.f32.xlu0 %v7582
    %v7584 = vpop.xlane.xlu0 %7583
    %v7585 = vsel %vm5823, %v7483, 0.0
    %7586 = vadd.xlane.f32.xlu0 %v7585
    %v7587 = vpop.xlane.xlu0 %7586
    %v7588 = vsel %vm5823, %v7484, 0.0
    %7589 = vadd.xlane.f32.xlu0 %v7588
    %v7590 = vpop.xlane.xlu0 %7589
    %v7591 = vsel %vm5823, %v7485, 0.0
    %7592 = vadd.xlane.f32.xlu0 %v7591
    %v7593 = vpop.xlane.xlu0 %7592
    %v7594 = vsel %vm5823, %v7486, 0.0
    %7595 = vadd.xlane.f32.xlu0 %v7594
    %v7596 = vpop.xlane.xlu0 %7595
    %v7597 = vsel %vm5823, %v7487, 0.0
    %7598 = vadd.xlane.f32.xlu0 %v7597
    %v7599 = vpop.xlane.xlu0 %7598
    %v7600 = vsel %vm5823, %v7488, 0.0
    %7601 = vadd.xlane.f32.xlu0 %v7600
    %v7602 = vpop.xlane.xlu0 %7601
    %v7603 = vsel %vm5823, %v7489, 0.0
    %7604 = vadd.xlane.f32.xlu0 %v7603
    %v7605 = vpop.xlane.xlu0 %7604
    %v7606 = vsel %vm5823, %v7490, 0.0
    %7607 = vadd.xlane.f32.xlu0 %v7606
    %v7608 = vpop.xlane.xlu0 %7607
    %v7609 = vsel %vm5823, %v7491, 0.0
    %7610 = vadd.xlane.f32.xlu0 %v7609
    %v7611 = vpop.xlane.xlu0 %7610
    %v7612 = vsel %vm5823, %v7492, 0.0
    %7613 = vadd.xlane.f32.xlu0 %v7612
    %v7614 = vpop.xlane.xlu0 %7613
    %v7615 = vsel %vm5823, %v7493, 0.0
    %7616 = vadd.xlane.f32.xlu0 %v7615
    %v7617 = vpop.xlane.xlu0 %7616
    %v7618 = vsel %vm5823, %v7494, 0.0
    %7619 = vadd.xlane.f32.xlu0 %v7618
    %v7620 = vpop.xlane.xlu0 %7619
    %v7621 = vsel %vm5823, %v7495, 0.0
    %7622 = vadd.xlane.f32.xlu0 %v7621
    %v7623 = vpop.xlane.xlu0 %7622
    %v7624 = vsel %vm5823, %v7496, 0.0
    %7625 = vadd.xlane.f32.xlu0 %v7624
    %v7626 = vpop.xlane.xlu0 %7625
    %v7627 = vsel %vm5823, %v7497, 0.0
    %7628 = vadd.xlane.f32.xlu0 %v7627
    %v7629 = vpop.xlane.xlu0 %7628
    %v7630 = vsel %vm5823, %v7498, 0.0
    %7631 = vadd.xlane.f32.xlu0 %v7630
    %v7632 = vpop.xlane.xlu0 %7631
    %v7633 = vsel %vm5823, %v7499, 0.0
    %7634 = vadd.xlane.f32.xlu0 %v7633
    %v7635 = vpop.xlane.xlu0 %7634
    %v7636 = vsel %vm5823, %v7500, 0.0
    %7637 = vadd.xlane.f32.xlu0 %v7636
    %v7638 = vpop.xlane.xlu0 %7637
    %v7639 = vsel %vm5823, %v7501, 0.0
    %7640 = vadd.xlane.f32.xlu0 %v7639
    %v7641 = vpop.xlane.xlu0 %7640
    %v7642 = vsel %vm5823, %v7502, 0.0
    %7643 = vadd.xlane.f32.xlu0 %v7642
    %v7644 = vpop.xlane.xlu0 %7643
    %v7645 = vsel %vm5823, %v7503, 0.0
    %7646 = vadd.xlane.f32.xlu0 %v7645
    %v7647 = vpop.xlane.xlu0 %7646
    %v7648 = vsub.f32 1.0, %v7506
    %v7649 = vsub.f32 1.0, %v7509
    %v7650 = vsub.f32 1.0, %v7512
    %v7651 = vsub.f32 1.0, %v7515
    %v7652 = vsub.f32 1.0, %v7518
    %v7653 = vsub.f32 1.0, %v7521
    %v7654 = vsub.f32 1.0, %v7524
    %v7655 = vsub.f32 1.0, %v7527
    %v7656 = vsub.f32 1.0, %v7530
    %v7657 = vsub.f32 1.0, %v7533
    %v7658 = vsub.f32 1.0, %v7536
    %v7659 = vsub.f32 1.0, %v7539
    %v7660 = vsub.f32 1.0, %v7542
    %v7661 = vsub.f32 1.0, %v7545
    %v7662 = vsub.f32 1.0, %v7548
    %v7663 = vsub.f32 1.0, %v7551
    %v7664 = vsub.f32 1.0, %v7554
    %v7665 = vsub.f32 1.0, %v7557
    %v7666 = vsub.f32 1.0, %v7560
    %v7667 = vsub.f32 1.0, %v7563
    %v7668 = vsub.f32 1.0, %v7566
    %v7669 = vsub.f32 1.0, %v7569
    %v7670 = vsub.f32 1.0, %v7572
    %v7671 = vsub.f32 1.0, %v7575
    %v7672 = vsub.f32 1.0, %v7578
    %v7673 = vsub.f32 1.0, %v7581
    %v7674 = vsub.f32 1.0, %v7584
    %v7675 = vsub.f32 1.0, %v7587
    %v7676 = vsub.f32 1.0, %v7590
    %v7677 = vsub.f32 1.0, %v7593
    %v7678 = vsub.f32 1.0, %v7596
    %v7679 = vsub.f32 1.0, %v7599
    %v7680 = vsub.f32 1.0, %v7602
    %v7681 = vsub.f32 1.0, %v7605
    %v7682 = vsub.f32 1.0, %v7608
    %v7683 = vsub.f32 1.0, %v7611
    %v7684 = vsub.f32 1.0, %v7614
    %v7685 = vsub.f32 1.0, %v7617
    %v7686 = vsub.f32 1.0, %v7620
    %v7687 = vsub.f32 1.0, %v7623
    %v7688 = vsub.f32 1.0, %v7626
    %v7689 = vsub.f32 1.0, %v7629
    %v7690 = vsub.f32 1.0, %v7632
    %v7691 = vsub.f32 1.0, %v7635
    %v7692 = vsub.f32 1.0, %v7638
    %v7693 = vsub.f32 1.0, %v7641
    %v7694 = vsub.f32 1.0, %v7644
    %v7695 = vsub.f32 1.0, %v7647
    %v7744 = vlaneseq
    %v7745 = vshrl.u32 %v7744, 7
    %v7746 = vsub.s32 0, %v7745
    %v7747 = vrot.slane %v7648, %v7746
    %v7748 = vlaneseq
    %v7749 = vshrl.u32 %v7748, 7
    %v7750 = vsub.s32 1, %v7749
    %v7751 = vrot.slane %v7648, %v7750
    %v7752 = vlaneseq
    %v7753 = vshrl.u32 %v7752, 7
    %v7754 = vsub.s32 2, %v7753
    %v7755 = vrot.slane %v7648, %v7754
    %v7756 = vlaneseq
    %v7757 = vshrl.u32 %v7756, 7
    %v7758 = vsub.s32 3, %v7757
    %v7759 = vrot.slane %v7648, %v7758
    %v7760 = vlaneseq
    %v7761 = vshrl.u32 %v7760, 7
    %v7762 = vsub.s32 4, %v7761
    %v7763 = vrot.slane %v7648, %v7762
    %v7764 = vlaneseq
    %v7765 = vshrl.u32 %v7764, 7
    %v7766 = vsub.s32 5, %v7765
    %v7767 = vrot.slane %v7648, %v7766
    %v7768 = vlaneseq
    %v7769 = vshrl.u32 %v7768, 7
    %v7770 = vsub.s32 6, %v7769
    %v7771 = vrot.slane %v7648, %v7770
    %v7772 = vlaneseq
    %v7773 = vshrl.u32 %v7772, 7
    %v7774 = vsub.s32 7, %v7773
    %v7775 = vrot.slane %v7648, %v7774
    %v7776 = vlaneseq
    %v7777 = vshrl.u32 %v7776, 7
    %v7778 = vsub.s32 0, %v7777
    %v7779 = vrot.slane %v7649, %v7778
    %v7780 = vlaneseq
    %v7781 = vshrl.u32 %v7780, 7
    %v7782 = vsub.s32 1, %v7781
    %v7783 = vrot.slane %v7649, %v7782
    %v7784 = vlaneseq
    %v7785 = vshrl.u32 %v7784, 7
    %v7786 = vsub.s32 2, %v7785
    %v7787 = vrot.slane %v7649, %v7786
    %v7788 = vlaneseq
    %v7789 = vshrl.u32 %v7788, 7
    %v7790 = vsub.s32 3, %v7789
    %v7791 = vrot.slane %v7649, %v7790
    %v7792 = vlaneseq
    %v7793 = vshrl.u32 %v7792, 7
    %v7794 = vsub.s32 4, %v7793
    %v7795 = vrot.slane %v7649, %v7794
    %v7796 = vlaneseq
    %v7797 = vshrl.u32 %v7796, 7
    %v7798 = vsub.s32 5, %v7797
    %v7799 = vrot.slane %v7649, %v7798
    %v7800 = vlaneseq
    %v7801 = vshrl.u32 %v7800, 7
    %v7802 = vsub.s32 6, %v7801
    %v7803 = vrot.slane %v7649, %v7802
    %v7804 = vlaneseq
    %v7805 = vshrl.u32 %v7804, 7
    %v7806 = vsub.s32 7, %v7805
    %v7807 = vrot.slane %v7649, %v7806
    %v7808 = vlaneseq
    %v7809 = vshrl.u32 %v7808, 7
    %v7810 = vsub.s32 0, %v7809
    %v7811 = vrot.slane %v7650, %v7810
    %v7812 = vlaneseq
    %v7813 = vshrl.u32 %v7812, 7
    %v7814 = vsub.s32 1, %v7813
    %v7815 = vrot.slane %v7650, %v7814
    %v7816 = vlaneseq
    %v7817 = vshrl.u32 %v7816, 7
    %v7818 = vsub.s32 2, %v7817
    %v7819 = vrot.slane %v7650, %v7818
    %v7820 = vlaneseq
    %v7821 = vshrl.u32 %v7820, 7
    %v7822 = vsub.s32 3, %v7821
    %v7823 = vrot.slane %v7650, %v7822
    %v7824 = vlaneseq
    %v7825 = vshrl.u32 %v7824, 7
    %v7826 = vsub.s32 4, %v7825
    %v7827 = vrot.slane %v7650, %v7826
    %v7828 = vlaneseq
    %v7829 = vshrl.u32 %v7828, 7
    %v7830 = vsub.s32 5, %v7829
    %v7831 = vrot.slane %v7650, %v7830
    %v7832 = vlaneseq
    %v7833 = vshrl.u32 %v7832, 7
    %v7834 = vsub.s32 6, %v7833
    %v7835 = vrot.slane %v7650, %v7834
    %v7836 = vlaneseq
    %v7837 = vshrl.u32 %v7836, 7
    %v7838 = vsub.s32 7, %v7837
    %v7839 = vrot.slane %v7650, %v7838
    %v7840 = vlaneseq
    %v7841 = vshrl.u32 %v7840, 7
    %v7842 = vsub.s32 0, %v7841
    %v7843 = vrot.slane %v7651, %v7842
    %v7844 = vlaneseq
    %v7845 = vshrl.u32 %v7844, 7
    %v7846 = vsub.s32 1, %v7845
    %v7847 = vrot.slane %v7651, %v7846
    %v7848 = vlaneseq
    %v7849 = vshrl.u32 %v7848, 7
    %v7850 = vsub.s32 2, %v7849
    %v7851 = vrot.slane %v7651, %v7850
    %v7852 = vlaneseq
    %v7853 = vshrl.u32 %v7852, 7
    %v7854 = vsub.s32 3, %v7853
    %v7855 = vrot.slane %v7651, %v7854
    %v7856 = vlaneseq
    %v7857 = vshrl.u32 %v7856, 7
    %v7858 = vsub.s32 4, %v7857
    %v7859 = vrot.slane %v7651, %v7858
    %v7860 = vlaneseq
    %v7861 = vshrl.u32 %v7860, 7
    %v7862 = vsub.s32 5, %v7861
    %v7863 = vrot.slane %v7651, %v7862
    %v7864 = vlaneseq
    %v7865 = vshrl.u32 %v7864, 7
    %v7866 = vsub.s32 6, %v7865
    %v7867 = vrot.slane %v7651, %v7866
    %v7868 = vlaneseq
    %v7869 = vshrl.u32 %v7868, 7
    %v7870 = vsub.s32 7, %v7869
    %v7871 = vrot.slane %v7651, %v7870
    %v7872 = vlaneseq
    %v7873 = vshrl.u32 %v7872, 7
    %v7874 = vsub.s32 0, %v7873
    %v7875 = vrot.slane %v7652, %v7874
    %v7876 = vlaneseq
    %v7877 = vshrl.u32 %v7876, 7
    %v7878 = vsub.s32 1, %v7877
    %v7879 = vrot.slane %v7652, %v7878
    %v7880 = vlaneseq
    %v7881 = vshrl.u32 %v7880, 7
    %v7882 = vsub.s32 2, %v7881
    %v7883 = vrot.slane %v7652, %v7882
    %v7884 = vlaneseq
    %v7885 = vshrl.u32 %v7884, 7
    %v7886 = vsub.s32 3, %v7885
    %v7887 = vrot.slane %v7652, %v7886
    %v7888 = vlaneseq
    %v7889 = vshrl.u32 %v7888, 7
    %v7890 = vsub.s32 4, %v7889
    %v7891 = vrot.slane %v7652, %v7890
    %v7892 = vlaneseq
    %v7893 = vshrl.u32 %v7892, 7
    %v7894 = vsub.s32 5, %v7893
    %v7895 = vrot.slane %v7652, %v7894
    %v7896 = vlaneseq
    %v7897 = vshrl.u32 %v7896, 7
    %v7898 = vsub.s32 6, %v7897
    %v7899 = vrot.slane %v7652, %v7898
    %v7900 = vlaneseq
    %v7901 = vshrl.u32 %v7900, 7
    %v7902 = vsub.s32 7, %v7901
    %v7903 = vrot.slane %v7652, %v7902
    %v7904 = vlaneseq
    %v7905 = vshrl.u32 %v7904, 7
    %v7906 = vsub.s32 0, %v7905
    %v7907 = vrot.slane %v7653, %v7906
    %v7908 = vlaneseq
    %v7909 = vshrl.u32 %v7908, 7
    %v7910 = vsub.s32 1, %v7909
    %v7911 = vrot.slane %v7653, %v7910
    %v7912 = vlaneseq
    %v7913 = vshrl.u32 %v7912, 7
    %v7914 = vsub.s32 2, %v7913
    %v7915 = vrot.slane %v7653, %v7914
    %v7916 = vlaneseq
    %v7917 = vshrl.u32 %v7916, 7
    %v7918 = vsub.s32 3, %v7917
    %v7919 = vrot.slane %v7653, %v7918
    %v7920 = vlaneseq
    %v7921 = vshrl.u32 %v7920, 7
    %v7922 = vsub.s32 4, %v7921
    %v7923 = vrot.slane %v7653, %v7922
    %v7924 = vlaneseq
    %v7925 = vshrl.u32 %v7924, 7
    %v7926 = vsub.s32 5, %v7925
    %v7927 = vrot.slane %v7653, %v7926
    %v7928 = vlaneseq
    %v7929 = vshrl.u32 %v7928, 7
    %v7930 = vsub.s32 6, %v7929
    %v7931 = vrot.slane %v7653, %v7930
    %v7932 = vlaneseq
    %v7933 = vshrl.u32 %v7932, 7
    %v7934 = vsub.s32 7, %v7933
    %v7935 = vrot.slane %v7653, %v7934
    %v7936 = vlaneseq
    %v7937 = vshrl.u32 %v7936, 7
    %v7938 = vsub.s32 0, %v7937
    %v7939 = vrot.slane %v7654, %v7938
    %v7940 = vlaneseq
    %v7941 = vshrl.u32 %v7940, 7
    %v7942 = vsub.s32 1, %v7941
    %v7943 = vrot.slane %v7654, %v7942
    %v7944 = vlaneseq
    %v7945 = vshrl.u32 %v7944, 7
    %v7946 = vsub.s32 2, %v7945
    %v7947 = vrot.slane %v7654, %v7946
    %v7948 = vlaneseq
    %v7949 = vshrl.u32 %v7948, 7
    %v7950 = vsub.s32 3, %v7949
    %v7951 = vrot.slane %v7654, %v7950
    %v7952 = vlaneseq
    %v7953 = vshrl.u32 %v7952, 7
    %v7954 = vsub.s32 4, %v7953
    %v7955 = vrot.slane %v7654, %v7954
    %v7956 = vlaneseq
    %v7957 = vshrl.u32 %v7956, 7
    %v7958 = vsub.s32 5, %v7957
    %v7959 = vrot.slane %v7654, %v7958
    %v7960 = vlaneseq
    %v7961 = vshrl.u32 %v7960, 7
    %v7962 = vsub.s32 6, %v7961
    %v7963 = vrot.slane %v7654, %v7962
    %v7964 = vlaneseq
    %v7965 = vshrl.u32 %v7964, 7
    %v7966 = vsub.s32 7, %v7965
    %v7967 = vrot.slane %v7654, %v7966
    %v7968 = vlaneseq
    %v7969 = vshrl.u32 %v7968, 7
    %v7970 = vsub.s32 0, %v7969
    %v7971 = vrot.slane %v7655, %v7970
    %v7972 = vlaneseq
    %v7973 = vshrl.u32 %v7972, 7
    %v7974 = vsub.s32 1, %v7973
    %v7975 = vrot.slane %v7655, %v7974
    %v7976 = vlaneseq
    %v7977 = vshrl.u32 %v7976, 7
    %v7978 = vsub.s32 2, %v7977
    %v7979 = vrot.slane %v7655, %v7978
    %v7980 = vlaneseq
    %v7981 = vshrl.u32 %v7980, 7
    %v7982 = vsub.s32 3, %v7981
    %v7983 = vrot.slane %v7655, %v7982
    %v7984 = vlaneseq
    %v7985 = vshrl.u32 %v7984, 7
    %v7986 = vsub.s32 4, %v7985
    %v7987 = vrot.slane %v7655, %v7986
    %v7988 = vlaneseq
    %v7989 = vshrl.u32 %v7988, 7
    %v7990 = vsub.s32 5, %v7989
    %v7991 = vrot.slane %v7655, %v7990
    %v7992 = vlaneseq
    %v7993 = vshrl.u32 %v7992, 7
    %v7994 = vsub.s32 6, %v7993
    %v7995 = vrot.slane %v7655, %v7994
    %v7996 = vlaneseq
    %v7997 = vshrl.u32 %v7996, 7
    %v7998 = vsub.s32 7, %v7997
    %v7999 = vrot.slane %v7655, %v7998
    %v8000 = vlaneseq
    %v8001 = vshrl.u32 %v8000, 7
    %v8002 = vsub.s32 0, %v8001
    %v8003 = vrot.slane %v7656, %v8002
    %v8004 = vlaneseq
    %v8005 = vshrl.u32 %v8004, 7
    %v8006 = vsub.s32 1, %v8005
    %v8007 = vrot.slane %v7656, %v8006
    %v8008 = vlaneseq
    %v8009 = vshrl.u32 %v8008, 7
    %v8010 = vsub.s32 2, %v8009
    %v8011 = vrot.slane %v7656, %v8010
    %v8012 = vlaneseq
    %v8013 = vshrl.u32 %v8012, 7
    %v8014 = vsub.s32 3, %v8013
    %v8015 = vrot.slane %v7656, %v8014
    %v8016 = vlaneseq
    %v8017 = vshrl.u32 %v8016, 7
    %v8018 = vsub.s32 4, %v8017
    %v8019 = vrot.slane %v7656, %v8018
    %v8020 = vlaneseq
    %v8021 = vshrl.u32 %v8020, 7
    %v8022 = vsub.s32 5, %v8021
    %v8023 = vrot.slane %v7656, %v8022
    %v8024 = vlaneseq
    %v8025 = vshrl.u32 %v8024, 7
    %v8026 = vsub.s32 6, %v8025
    %v8027 = vrot.slane %v7656, %v8026
    %v8028 = vlaneseq
    %v8029 = vshrl.u32 %v8028, 7
    %v8030 = vsub.s32 7, %v8029
    %v8031 = vrot.slane %v7656, %v8030
    %v8032 = vlaneseq
    %v8033 = vshrl.u32 %v8032, 7
    %v8034 = vsub.s32 0, %v8033
    %v8035 = vrot.slane %v7657, %v8034
    %v8036 = vlaneseq
    %v8037 = vshrl.u32 %v8036, 7
    %v8038 = vsub.s32 1, %v8037
    %v8039 = vrot.slane %v7657, %v8038
    %v8040 = vlaneseq
    %v8041 = vshrl.u32 %v8040, 7
    %v8042 = vsub.s32 2, %v8041
    %v8043 = vrot.slane %v7657, %v8042
    %v8044 = vlaneseq
    %v8045 = vshrl.u32 %v8044, 7
    %v8046 = vsub.s32 3, %v8045
    %v8047 = vrot.slane %v7657, %v8046
    %v8048 = vlaneseq
    %v8049 = vshrl.u32 %v8048, 7
    %v8050 = vsub.s32 4, %v8049
    %v8051 = vrot.slane %v7657, %v8050
    %v8052 = vlaneseq
    %v8053 = vshrl.u32 %v8052, 7
    %v8054 = vsub.s32 5, %v8053
    %v8055 = vrot.slane %v7657, %v8054
    %v8056 = vlaneseq
    %v8057 = vshrl.u32 %v8056, 7
    %v8058 = vsub.s32 6, %v8057
    %v8059 = vrot.slane %v7657, %v8058
    %v8060 = vlaneseq
    %v8061 = vshrl.u32 %v8060, 7
    %v8062 = vsub.s32 7, %v8061
    %v8063 = vrot.slane %v7657, %v8062
    %v8064 = vlaneseq
    %v8065 = vshrl.u32 %v8064, 7
    %v8066 = vsub.s32 0, %v8065
    %v8067 = vrot.slane %v7658, %v8066
    %v8068 = vlaneseq
    %v8069 = vshrl.u32 %v8068, 7
    %v8070 = vsub.s32 1, %v8069
    %v8071 = vrot.slane %v7658, %v8070
    %v8072 = vlaneseq
    %v8073 = vshrl.u32 %v8072, 7
    %v8074 = vsub.s32 2, %v8073
    %v8075 = vrot.slane %v7658, %v8074
    %v8076 = vlaneseq
    %v8077 = vshrl.u32 %v8076, 7
    %v8078 = vsub.s32 3, %v8077
    %v8079 = vrot.slane %v7658, %v8078
    %v8080 = vlaneseq
    %v8081 = vshrl.u32 %v8080, 7
    %v8082 = vsub.s32 4, %v8081
    %v8083 = vrot.slane %v7658, %v8082
    %v8084 = vlaneseq
    %v8085 = vshrl.u32 %v8084, 7
    %v8086 = vsub.s32 5, %v8085
    %v8087 = vrot.slane %v7658, %v8086
    %v8088 = vlaneseq
    %v8089 = vshrl.u32 %v8088, 7
    %v8090 = vsub.s32 6, %v8089
    %v8091 = vrot.slane %v7658, %v8090
    %v8092 = vlaneseq
    %v8093 = vshrl.u32 %v8092, 7
    %v8094 = vsub.s32 7, %v8093
    %v8095 = vrot.slane %v7658, %v8094
    %v8096 = vlaneseq
    %v8097 = vshrl.u32 %v8096, 7
    %v8098 = vsub.s32 0, %v8097
    %v8099 = vrot.slane %v7659, %v8098
    %v8100 = vlaneseq
    %v8101 = vshrl.u32 %v8100, 7
    %v8102 = vsub.s32 1, %v8101
    %v8103 = vrot.slane %v7659, %v8102
    %v8104 = vlaneseq
    %v8105 = vshrl.u32 %v8104, 7
    %v8106 = vsub.s32 2, %v8105
    %v8107 = vrot.slane %v7659, %v8106
    %v8108 = vlaneseq
    %v8109 = vshrl.u32 %v8108, 7
    %v8110 = vsub.s32 3, %v8109
    %v8111 = vrot.slane %v7659, %v8110
    %v8112 = vlaneseq
    %v8113 = vshrl.u32 %v8112, 7
    %v8114 = vsub.s32 4, %v8113
    %v8115 = vrot.slane %v7659, %v8114
    %v8116 = vlaneseq
    %v8117 = vshrl.u32 %v8116, 7
    %v8118 = vsub.s32 5, %v8117
    %v8119 = vrot.slane %v7659, %v8118
    %v8120 = vlaneseq
    %v8121 = vshrl.u32 %v8120, 7
    %v8122 = vsub.s32 6, %v8121
    %v8123 = vrot.slane %v7659, %v8122
    %v8124 = vlaneseq
    %v8125 = vshrl.u32 %v8124, 7
    %v8126 = vsub.s32 7, %v8125
    %v8127 = vrot.slane %v7659, %v8126
    %v8128 = vlaneseq
    %v8129 = vshrl.u32 %v8128, 7
    %v8130 = vsub.s32 0, %v8129
    %v8131 = vrot.slane %v7660, %v8130
    %v8132 = vlaneseq
    %v8133 = vshrl.u32 %v8132, 7
    %v8134 = vsub.s32 1, %v8133
    %v8135 = vrot.slane %v7660, %v8134
    %v8136 = vlaneseq
    %v8137 = vshrl.u32 %v8136, 7
    %v8138 = vsub.s32 2, %v8137
    %v8139 = vrot.slane %v7660, %v8138
    %v8140 = vlaneseq
    %v8141 = vshrl.u32 %v8140, 7
    %v8142 = vsub.s32 3, %v8141
    %v8143 = vrot.slane %v7660, %v8142
    %v8144 = vlaneseq
    %v8145 = vshrl.u32 %v8144, 7
    %v8146 = vsub.s32 4, %v8145
    %v8147 = vrot.slane %v7660, %v8146
    %v8148 = vlaneseq
    %v8149 = vshrl.u32 %v8148, 7
    %v8150 = vsub.s32 5, %v8149
    %v8151 = vrot.slane %v7660, %v8150
    %v8152 = vlaneseq
    %v8153 = vshrl.u32 %v8152, 7
    %v8154 = vsub.s32 6, %v8153
    %v8155 = vrot.slane %v7660, %v8154
    %v8156 = vlaneseq
    %v8157 = vshrl.u32 %v8156, 7
    %v8158 = vsub.s32 7, %v8157
    %v8159 = vrot.slane %v7660, %v8158
    %v8160 = vlaneseq
    %v8161 = vshrl.u32 %v8160, 7
    %v8162 = vsub.s32 0, %v8161
    %v8163 = vrot.slane %v7661, %v8162
    %v8164 = vlaneseq
    %v8165 = vshrl.u32 %v8164, 7
    %v8166 = vsub.s32 1, %v8165
    %v8167 = vrot.slane %v7661, %v8166
    %v8168 = vlaneseq
    %v8169 = vshrl.u32 %v8168, 7
    %v8170 = vsub.s32 2, %v8169
    %v8171 = vrot.slane %v7661, %v8170
    %v8172 = vlaneseq
    %v8173 = vshrl.u32 %v8172, 7
    %v8174 = vsub.s32 3, %v8173
    %v8175 = vrot.slane %v7661, %v8174
    %v8176 = vlaneseq
    %v8177 = vshrl.u32 %v8176, 7
    %v8178 = vsub.s32 4, %v8177
    %v8179 = vrot.slane %v7661, %v8178
    %v8180 = vlaneseq
    %v8181 = vshrl.u32 %v8180, 7
    %v8182 = vsub.s32 5, %v8181
    %v8183 = vrot.slane %v7661, %v8182
    %v8184 = vlaneseq
    %v8185 = vshrl.u32 %v8184, 7
    %v8186 = vsub.s32 6, %v8185
    %v8187 = vrot.slane %v7661, %v8186
    %v8188 = vlaneseq
    %v8189 = vshrl.u32 %v8188, 7
    %v8190 = vsub.s32 7, %v8189
    %v8191 = vrot.slane %v7661, %v8190
    %v8192 = vlaneseq
    %v8193 = vshrl.u32 %v8192, 7
    %v8194 = vsub.s32 0, %v8193
    %v8195 = vrot.slane %v7662, %v8194
    %v8196 = vlaneseq
    %v8197 = vshrl.u32 %v8196, 7
    %v8198 = vsub.s32 1, %v8197
    %v8199 = vrot.slane %v7662, %v8198
    %v8200 = vlaneseq
    %v8201 = vshrl.u32 %v8200, 7
    %v8202 = vsub.s32 2, %v8201
    %v8203 = vrot.slane %v7662, %v8202
    %v8204 = vlaneseq
    %v8205 = vshrl.u32 %v8204, 7
    %v8206 = vsub.s32 3, %v8205
    %v8207 = vrot.slane %v7662, %v8206
    %v8208 = vlaneseq
    %v8209 = vshrl.u32 %v8208, 7
    %v8210 = vsub.s32 4, %v8209
    %v8211 = vrot.slane %v7662, %v8210
    %v8212 = vlaneseq
    %v8213 = vshrl.u32 %v8212, 7
    %v8214 = vsub.s32 5, %v8213
    %v8215 = vrot.slane %v7662, %v8214
    %v8216 = vlaneseq
    %v8217 = vshrl.u32 %v8216, 7
    %v8218 = vsub.s32 6, %v8217
    %v8219 = vrot.slane %v7662, %v8218
    %v8220 = vlaneseq
    %v8221 = vshrl.u32 %v8220, 7
    %v8222 = vsub.s32 7, %v8221
    %v8223 = vrot.slane %v7662, %v8222
    %v8224 = vlaneseq
    %v8225 = vshrl.u32 %v8224, 7
    %v8226 = vsub.s32 0, %v8225
    %v8227 = vrot.slane %v7663, %v8226
    %v8228 = vlaneseq
    %v8229 = vshrl.u32 %v8228, 7
    %v8230 = vsub.s32 1, %v8229
    %v8231 = vrot.slane %v7663, %v8230
    %v8232 = vlaneseq
    %v8233 = vshrl.u32 %v8232, 7
    %v8234 = vsub.s32 2, %v8233
    %v8235 = vrot.slane %v7663, %v8234
    %v8236 = vlaneseq
    %v8237 = vshrl.u32 %v8236, 7
    %v8238 = vsub.s32 3, %v8237
    %v8239 = vrot.slane %v7663, %v8238
    %v8240 = vlaneseq
    %v8241 = vshrl.u32 %v8240, 7
    %v8242 = vsub.s32 4, %v8241
    %v8243 = vrot.slane %v7663, %v8242
    %v8244 = vlaneseq
    %v8245 = vshrl.u32 %v8244, 7
    %v8246 = vsub.s32 5, %v8245
    %v8247 = vrot.slane %v7663, %v8246
    %v8248 = vlaneseq
    %v8249 = vshrl.u32 %v8248, 7
    %v8250 = vsub.s32 6, %v8249
    %v8251 = vrot.slane %v7663, %v8250
    %v8252 = vlaneseq
    %v8253 = vshrl.u32 %v8252, 7
    %v8254 = vsub.s32 7, %v8253
    %v8255 = vrot.slane %v7663, %v8254
    %v8256 = vlaneseq
    %v8257 = vshrl.u32 %v8256, 7
    %v8258 = vsub.s32 0, %v8257
    %v8259 = vrot.slane %v7664, %v8258
    %v8260 = vlaneseq
    %v8261 = vshrl.u32 %v8260, 7
    %v8262 = vsub.s32 1, %v8261
    %v8263 = vrot.slane %v7664, %v8262
    %v8264 = vlaneseq
    %v8265 = vshrl.u32 %v8264, 7
    %v8266 = vsub.s32 2, %v8265
    %v8267 = vrot.slane %v7664, %v8266
    %v8268 = vlaneseq
    %v8269 = vshrl.u32 %v8268, 7
    %v8270 = vsub.s32 3, %v8269
    %v8271 = vrot.slane %v7664, %v8270
    %v8272 = vlaneseq
    %v8273 = vshrl.u32 %v8272, 7
    %v8274 = vsub.s32 4, %v8273
    %v8275 = vrot.slane %v7664, %v8274
    %v8276 = vlaneseq
    %v8277 = vshrl.u32 %v8276, 7
    %v8278 = vsub.s32 5, %v8277
    %v8279 = vrot.slane %v7664, %v8278
    %v8280 = vlaneseq
    %v8281 = vshrl.u32 %v8280, 7
    %v8282 = vsub.s32 6, %v8281
    %v8283 = vrot.slane %v7664, %v8282
    %v8284 = vlaneseq
    %v8285 = vshrl.u32 %v8284, 7
    %v8286 = vsub.s32 7, %v8285
    %v8287 = vrot.slane %v7664, %v8286
    %v8288 = vlaneseq
    %v8289 = vshrl.u32 %v8288, 7
    %v8290 = vsub.s32 0, %v8289
    %v8291 = vrot.slane %v7665, %v8290
    %v8292 = vlaneseq
    %v8293 = vshrl.u32 %v8292, 7
    %v8294 = vsub.s32 1, %v8293
    %v8295 = vrot.slane %v7665, %v8294
    %v8296 = vlaneseq
    %v8297 = vshrl.u32 %v8296, 7
    %v8298 = vsub.s32 2, %v8297
    %v8299 = vrot.slane %v7665, %v8298
    %v8300 = vlaneseq
    %v8301 = vshrl.u32 %v8300, 7
    %v8302 = vsub.s32 3, %v8301
    %v8303 = vrot.slane %v7665, %v8302
    %v8304 = vlaneseq
    %v8305 = vshrl.u32 %v8304, 7
    %v8306 = vsub.s32 4, %v8305
    %v8307 = vrot.slane %v7665, %v8306
    %v8308 = vlaneseq
    %v8309 = vshrl.u32 %v8308, 7
    %v8310 = vsub.s32 5, %v8309
    %v8311 = vrot.slane %v7665, %v8310
    %v8312 = vlaneseq
    %v8313 = vshrl.u32 %v8312, 7
    %v8314 = vsub.s32 6, %v8313
    %v8315 = vrot.slane %v7665, %v8314
    %v8316 = vlaneseq
    %v8317 = vshrl.u32 %v8316, 7
    %v8318 = vsub.s32 7, %v8317
    %v8319 = vrot.slane %v7665, %v8318
    %v8320 = vlaneseq
    %v8321 = vshrl.u32 %v8320, 7
    %v8322 = vsub.s32 0, %v8321
    %v8323 = vrot.slane %v7666, %v8322
    %v8324 = vlaneseq
    %v8325 = vshrl.u32 %v8324, 7
    %v8326 = vsub.s32 1, %v8325
    %v8327 = vrot.slane %v7666, %v8326
    %v8328 = vlaneseq
    %v8329 = vshrl.u32 %v8328, 7
    %v8330 = vsub.s32 2, %v8329
    %v8331 = vrot.slane %v7666, %v8330
    %v8332 = vlaneseq
    %v8333 = vshrl.u32 %v8332, 7
    %v8334 = vsub.s32 3, %v8333
    %v8335 = vrot.slane %v7666, %v8334
    %v8336 = vlaneseq
    %v8337 = vshrl.u32 %v8336, 7
    %v8338 = vsub.s32 4, %v8337
    %v8339 = vrot.slane %v7666, %v8338
    %v8340 = vlaneseq
    %v8341 = vshrl.u32 %v8340, 7
    %v8342 = vsub.s32 5, %v8341
    %v8343 = vrot.slane %v7666, %v8342
    %v8344 = vlaneseq
    %v8345 = vshrl.u32 %v8344, 7
    %v8346 = vsub.s32 6, %v8345
    %v8347 = vrot.slane %v7666, %v8346
    %v8348 = vlaneseq
    %v8349 = vshrl.u32 %v8348, 7
    %v8350 = vsub.s32 7, %v8349
    %v8351 = vrot.slane %v7666, %v8350
    %v8352 = vlaneseq
    %v8353 = vshrl.u32 %v8352, 7
    %v8354 = vsub.s32 0, %v8353
    %v8355 = vrot.slane %v7667, %v8354
    %v8356 = vlaneseq
    %v8357 = vshrl.u32 %v8356, 7
    %v8358 = vsub.s32 1, %v8357
    %v8359 = vrot.slane %v7667, %v8358
    %v8360 = vlaneseq
    %v8361 = vshrl.u32 %v8360, 7
    %v8362 = vsub.s32 2, %v8361
    %v8363 = vrot.slane %v7667, %v8362
    %v8364 = vlaneseq
    %v8365 = vshrl.u32 %v8364, 7
    %v8366 = vsub.s32 3, %v8365
    %v8367 = vrot.slane %v7667, %v8366
    %v8368 = vlaneseq
    %v8369 = vshrl.u32 %v8368, 7
    %v8370 = vsub.s32 4, %v8369
    %v8371 = vrot.slane %v7667, %v8370
    %v8372 = vlaneseq
    %v8373 = vshrl.u32 %v8372, 7
    %v8374 = vsub.s32 5, %v8373
    %v8375 = vrot.slane %v7667, %v8374
    %v8376 = vlaneseq
    %v8377 = vshrl.u32 %v8376, 7
    %v8378 = vsub.s32 6, %v8377
    %v8379 = vrot.slane %v7667, %v8378
    %v8380 = vlaneseq
    %v8381 = vshrl.u32 %v8380, 7
    %v8382 = vsub.s32 7, %v8381
    %v8383 = vrot.slane %v7667, %v8382
    %v8384 = vlaneseq
    %v8385 = vshrl.u32 %v8384, 7
    %v8386 = vsub.s32 0, %v8385
    %v8387 = vrot.slane %v7668, %v8386
    %v8388 = vlaneseq
    %v8389 = vshrl.u32 %v8388, 7
    %v8390 = vsub.s32 1, %v8389
    %v8391 = vrot.slane %v7668, %v8390
    %v8392 = vlaneseq
    %v8393 = vshrl.u32 %v8392, 7
    %v8394 = vsub.s32 2, %v8393
    %v8395 = vrot.slane %v7668, %v8394
    %v8396 = vlaneseq
    %v8397 = vshrl.u32 %v8396, 7
    %v8398 = vsub.s32 3, %v8397
    %v8399 = vrot.slane %v7668, %v8398
    %v8400 = vlaneseq
    %v8401 = vshrl.u32 %v8400, 7
    %v8402 = vsub.s32 4, %v8401
    %v8403 = vrot.slane %v7668, %v8402
    %v8404 = vlaneseq
    %v8405 = vshrl.u32 %v8404, 7
    %v8406 = vsub.s32 5, %v8405
    %v8407 = vrot.slane %v7668, %v8406
    %v8408 = vlaneseq
    %v8409 = vshrl.u32 %v8408, 7
    %v8410 = vsub.s32 6, %v8409
    %v8411 = vrot.slane %v7668, %v8410
    %v8412 = vlaneseq
    %v8413 = vshrl.u32 %v8412, 7
    %v8414 = vsub.s32 7, %v8413
    %v8415 = vrot.slane %v7668, %v8414
    %v8416 = vlaneseq
    %v8417 = vshrl.u32 %v8416, 7
    %v8418 = vsub.s32 0, %v8417
    %v8419 = vrot.slane %v7669, %v8418
    %v8420 = vlaneseq
    %v8421 = vshrl.u32 %v8420, 7
    %v8422 = vsub.s32 1, %v8421
    %v8423 = vrot.slane %v7669, %v8422
    %v8424 = vlaneseq
    %v8425 = vshrl.u32 %v8424, 7
    %v8426 = vsub.s32 2, %v8425
    %v8427 = vrot.slane %v7669, %v8426
    %v8428 = vlaneseq
    %v8429 = vshrl.u32 %v8428, 7
    %v8430 = vsub.s32 3, %v8429
    %v8431 = vrot.slane %v7669, %v8430
    %v8432 = vlaneseq
    %v8433 = vshrl.u32 %v8432, 7
    %v8434 = vsub.s32 4, %v8433
    %v8435 = vrot.slane %v7669, %v8434
    %v8436 = vlaneseq
    %v8437 = vshrl.u32 %v8436, 7
    %v8438 = vsub.s32 5, %v8437
    %v8439 = vrot.slane %v7669, %v8438
    %v8440 = vlaneseq
    %v8441 = vshrl.u32 %v8440, 7
    %v8442 = vsub.s32 6, %v8441
    %v8443 = vrot.slane %v7669, %v8442
    %v8444 = vlaneseq
    %v8445 = vshrl.u32 %v8444, 7
    %v8446 = vsub.s32 7, %v8445
    %v8447 = vrot.slane %v7669, %v8446
    %v8448 = vlaneseq
    %v8449 = vshrl.u32 %v8448, 7
    %v8450 = vsub.s32 0, %v8449
    %v8451 = vrot.slane %v7670, %v8450
    %v8452 = vlaneseq
    %v8453 = vshrl.u32 %v8452, 7
    %v8454 = vsub.s32 1, %v8453
    %v8455 = vrot.slane %v7670, %v8454
    %v8456 = vlaneseq
    %v8457 = vshrl.u32 %v8456, 7
    %v8458 = vsub.s32 2, %v8457
    %v8459 = vrot.slane %v7670, %v8458
    %v8460 = vlaneseq
    %v8461 = vshrl.u32 %v8460, 7
    %v8462 = vsub.s32 3, %v8461
    %v8463 = vrot.slane %v7670, %v8462
    %v8464 = vlaneseq
    %v8465 = vshrl.u32 %v8464, 7
    %v8466 = vsub.s32 4, %v8465
    %v8467 = vrot.slane %v7670, %v8466
    %v8468 = vlaneseq
    %v8469 = vshrl.u32 %v8468, 7
    %v8470 = vsub.s32 5, %v8469
    %v8471 = vrot.slane %v7670, %v8470
    %v8472 = vlaneseq
    %v8473 = vshrl.u32 %v8472, 7
    %v8474 = vsub.s32 6, %v8473
    %v8475 = vrot.slane %v7670, %v8474
    %v8476 = vlaneseq
    %v8477 = vshrl.u32 %v8476, 7
    %v8478 = vsub.s32 7, %v8477
    %v8479 = vrot.slane %v7670, %v8478
    %v8480 = vlaneseq
    %v8481 = vshrl.u32 %v8480, 7
    %v8482 = vsub.s32 0, %v8481
    %v8483 = vrot.slane %v7671, %v8482
    %v8484 = vlaneseq
    %v8485 = vshrl.u32 %v8484, 7
    %v8486 = vsub.s32 1, %v8485
    %v8487 = vrot.slane %v7671, %v8486
    %v8488 = vlaneseq
    %v8489 = vshrl.u32 %v8488, 7
    %v8490 = vsub.s32 2, %v8489
    %v8491 = vrot.slane %v7671, %v8490
    %v8492 = vlaneseq
    %v8493 = vshrl.u32 %v8492, 7
    %v8494 = vsub.s32 3, %v8493
    %v8495 = vrot.slane %v7671, %v8494
    %v8496 = vlaneseq
    %v8497 = vshrl.u32 %v8496, 7
    %v8498 = vsub.s32 4, %v8497
    %v8499 = vrot.slane %v7671, %v8498
    %v8500 = vlaneseq
    %v8501 = vshrl.u32 %v8500, 7
    %v8502 = vsub.s32 5, %v8501
    %v8503 = vrot.slane %v7671, %v8502
    %v8504 = vlaneseq
    %v8505 = vshrl.u32 %v8504, 7
    %v8506 = vsub.s32 6, %v8505
    %v8507 = vrot.slane %v7671, %v8506
    %v8508 = vlaneseq
    %v8509 = vshrl.u32 %v8508, 7
    %v8510 = vsub.s32 7, %v8509
    %v8511 = vrot.slane %v7671, %v8510
    %v8512 = vlaneseq
    %v8513 = vshrl.u32 %v8512, 7
    %v8514 = vsub.s32 0, %v8513
    %v8515 = vrot.slane %v7672, %v8514
    %v8516 = vlaneseq
    %v8517 = vshrl.u32 %v8516, 7
    %v8518 = vsub.s32 1, %v8517
    %v8519 = vrot.slane %v7672, %v8518
    %v8520 = vlaneseq
    %v8521 = vshrl.u32 %v8520, 7
    %v8522 = vsub.s32 2, %v8521
    %v8523 = vrot.slane %v7672, %v8522
    %v8524 = vlaneseq
    %v8525 = vshrl.u32 %v8524, 7
    %v8526 = vsub.s32 3, %v8525
    %v8527 = vrot.slane %v7672, %v8526
    %v8528 = vlaneseq
    %v8529 = vshrl.u32 %v8528, 7
    %v8530 = vsub.s32 4, %v8529
    %v8531 = vrot.slane %v7672, %v8530
    %v8532 = vlaneseq
    %v8533 = vshrl.u32 %v8532, 7
    %v8534 = vsub.s32 5, %v8533
    %v8535 = vrot.slane %v7672, %v8534
    %v8536 = vlaneseq
    %v8537 = vshrl.u32 %v8536, 7
    %v8538 = vsub.s32 6, %v8537
    %v8539 = vrot.slane %v7672, %v8538
    %v8540 = vlaneseq
    %v8541 = vshrl.u32 %v8540, 7
    %v8542 = vsub.s32 7, %v8541
    %v8543 = vrot.slane %v7672, %v8542
    %v8544 = vlaneseq
    %v8545 = vshrl.u32 %v8544, 7
    %v8546 = vsub.s32 0, %v8545
    %v8547 = vrot.slane %v7673, %v8546
    %v8548 = vlaneseq
    %v8549 = vshrl.u32 %v8548, 7
    %v8550 = vsub.s32 1, %v8549
    %v8551 = vrot.slane %v7673, %v8550
    %v8552 = vlaneseq
    %v8553 = vshrl.u32 %v8552, 7
    %v8554 = vsub.s32 2, %v8553
    %v8555 = vrot.slane %v7673, %v8554
    %v8556 = vlaneseq
    %v8557 = vshrl.u32 %v8556, 7
    %v8558 = vsub.s32 3, %v8557
    %v8559 = vrot.slane %v7673, %v8558
    %v8560 = vlaneseq
    %v8561 = vshrl.u32 %v8560, 7
    %v8562 = vsub.s32 4, %v8561
    %v8563 = vrot.slane %v7673, %v8562
    %v8564 = vlaneseq
    %v8565 = vshrl.u32 %v8564, 7
    %v8566 = vsub.s32 5, %v8565
    %v8567 = vrot.slane %v7673, %v8566
    %v8568 = vlaneseq
    %v8569 = vshrl.u32 %v8568, 7
    %v8570 = vsub.s32 6, %v8569
    %v8571 = vrot.slane %v7673, %v8570
    %v8572 = vlaneseq
    %v8573 = vshrl.u32 %v8572, 7
    %v8574 = vsub.s32 7, %v8573
    %v8575 = vrot.slane %v7673, %v8574
    %v8576 = vlaneseq
    %v8577 = vshrl.u32 %v8576, 7
    %v8578 = vsub.s32 0, %v8577
    %v8579 = vrot.slane %v7674, %v8578
    %v8580 = vlaneseq
    %v8581 = vshrl.u32 %v8580, 7
    %v8582 = vsub.s32 1, %v8581
    %v8583 = vrot.slane %v7674, %v8582
    %v8584 = vlaneseq
    %v8585 = vshrl.u32 %v8584, 7
    %v8586 = vsub.s32 2, %v8585
    %v8587 = vrot.slane %v7674, %v8586
    %v8588 = vlaneseq
    %v8589 = vshrl.u32 %v8588, 7
    %v8590 = vsub.s32 3, %v8589
    %v8591 = vrot.slane %v7674, %v8590
    %v8592 = vlaneseq
    %v8593 = vshrl.u32 %v8592, 7
    %v8594 = vsub.s32 4, %v8593
    %v8595 = vrot.slane %v7674, %v8594
    %v8596 = vlaneseq
    %v8597 = vshrl.u32 %v8596, 7
    %v8598 = vsub.s32 5, %v8597
    %v8599 = vrot.slane %v7674, %v8598
    %v8600 = vlaneseq
    %v8601 = vshrl.u32 %v8600, 7
    %v8602 = vsub.s32 6, %v8601
    %v8603 = vrot.slane %v7674, %v8602
    %v8604 = vlaneseq
    %v8605 = vshrl.u32 %v8604, 7
    %v8606 = vsub.s32 7, %v8605
    %v8607 = vrot.slane %v7674, %v8606
    %v8608 = vlaneseq
    %v8609 = vshrl.u32 %v8608, 7
    %v8610 = vsub.s32 0, %v8609
    %v8611 = vrot.slane %v7675, %v8610
    %v8612 = vlaneseq
    %v8613 = vshrl.u32 %v8612, 7
    %v8614 = vsub.s32 1, %v8613
    %v8615 = vrot.slane %v7675, %v8614
    %v8616 = vlaneseq
    %v8617 = vshrl.u32 %v8616, 7
    %v8618 = vsub.s32 2, %v8617
    %v8619 = vrot.slane %v7675, %v8618
    %v8620 = vlaneseq
    %v8621 = vshrl.u32 %v8620, 7
    %v8622 = vsub.s32 3, %v8621
    %v8623 = vrot.slane %v7675, %v8622
    %v8624 = vlaneseq
    %v8625 = vshrl.u32 %v8624, 7
    %v8626 = vsub.s32 4, %v8625
    %v8627 = vrot.slane %v7675, %v8626
    %v8628 = vlaneseq
    %v8629 = vshrl.u32 %v8628, 7
    %v8630 = vsub.s32 5, %v8629
    %v8631 = vrot.slane %v7675, %v8630
    %v8632 = vlaneseq
    %v8633 = vshrl.u32 %v8632, 7
    %v8634 = vsub.s32 6, %v8633
    %v8635 = vrot.slane %v7675, %v8634
    %v8636 = vlaneseq
    %v8637 = vshrl.u32 %v8636, 7
    %v8638 = vsub.s32 7, %v8637
    %v8639 = vrot.slane %v7675, %v8638
    %v8640 = vlaneseq
    %v8641 = vshrl.u32 %v8640, 7
    %v8642 = vsub.s32 0, %v8641
    %v8643 = vrot.slane %v7676, %v8642
    %v8644 = vlaneseq
    %v8645 = vshrl.u32 %v8644, 7
    %v8646 = vsub.s32 1, %v8645
    %v8647 = vrot.slane %v7676, %v8646
    %v8648 = vlaneseq
    %v8649 = vshrl.u32 %v8648, 7
    %v8650 = vsub.s32 2, %v8649
    %v8651 = vrot.slane %v7676, %v8650
    %v8652 = vlaneseq
    %v8653 = vshrl.u32 %v8652, 7
    %v8654 = vsub.s32 3, %v8653
    %v8655 = vrot.slane %v7676, %v8654
    %v8656 = vlaneseq
    %v8657 = vshrl.u32 %v8656, 7
    %v8658 = vsub.s32 4, %v8657
    %v8659 = vrot.slane %v7676, %v8658
    %v8660 = vlaneseq
    %v8661 = vshrl.u32 %v8660, 7
    %v8662 = vsub.s32 5, %v8661
    %v8663 = vrot.slane %v7676, %v8662
    %v8664 = vlaneseq
    %v8665 = vshrl.u32 %v8664, 7
    %v8666 = vsub.s32 6, %v8665
    %v8667 = vrot.slane %v7676, %v8666
    %v8668 = vlaneseq
    %v8669 = vshrl.u32 %v8668, 7
    %v8670 = vsub.s32 7, %v8669
    %v8671 = vrot.slane %v7676, %v8670
    %v8672 = vlaneseq
    %v8673 = vshrl.u32 %v8672, 7
    %v8674 = vsub.s32 0, %v8673
    %v8675 = vrot.slane %v7677, %v8674
    %v8676 = vlaneseq
    %v8677 = vshrl.u32 %v8676, 7
    %v8678 = vsub.s32 1, %v8677
    %v8679 = vrot.slane %v7677, %v8678
    %v8680 = vlaneseq
    %v8681 = vshrl.u32 %v8680, 7
    %v8682 = vsub.s32 2, %v8681
    %v8683 = vrot.slane %v7677, %v8682
    %v8684 = vlaneseq
    %v8685 = vshrl.u32 %v8684, 7
    %v8686 = vsub.s32 3, %v8685
    %v8687 = vrot.slane %v7677, %v8686
    %v8688 = vlaneseq
    %v8689 = vshrl.u32 %v8688, 7
    %v8690 = vsub.s32 4, %v8689
    %v8691 = vrot.slane %v7677, %v8690
    %v8692 = vlaneseq
    %v8693 = vshrl.u32 %v8692, 7
    %v8694 = vsub.s32 5, %v8693
    %v8695 = vrot.slane %v7677, %v8694
    %v8696 = vlaneseq
    %v8697 = vshrl.u32 %v8696, 7
    %v8698 = vsub.s32 6, %v8697
    %v8699 = vrot.slane %v7677, %v8698
    %v8700 = vlaneseq
    %v8701 = vshrl.u32 %v8700, 7
    %v8702 = vsub.s32 7, %v8701
    %v8703 = vrot.slane %v7677, %v8702
    %v8704 = vlaneseq
    %v8705 = vshrl.u32 %v8704, 7
    %v8706 = vsub.s32 0, %v8705
    %v8707 = vrot.slane %v7678, %v8706
    %v8708 = vlaneseq
    %v8709 = vshrl.u32 %v8708, 7
    %v8710 = vsub.s32 1, %v8709
    %v8711 = vrot.slane %v7678, %v8710
    %v8712 = vlaneseq
    %v8713 = vshrl.u32 %v8712, 7
    %v8714 = vsub.s32 2, %v8713
    %v8715 = vrot.slane %v7678, %v8714
    %v8716 = vlaneseq
    %v8717 = vshrl.u32 %v8716, 7
    %v8718 = vsub.s32 3, %v8717
    %v8719 = vrot.slane %v7678, %v8718
    %v8720 = vlaneseq
    %v8721 = vshrl.u32 %v8720, 7
    %v8722 = vsub.s32 4, %v8721
    %v8723 = vrot.slane %v7678, %v8722
    %v8724 = vlaneseq
    %v8725 = vshrl.u32 %v8724, 7
    %v8726 = vsub.s32 5, %v8725
    %v8727 = vrot.slane %v7678, %v8726
    %v8728 = vlaneseq
    %v8729 = vshrl.u32 %v8728, 7
    %v8730 = vsub.s32 6, %v8729
    %v8731 = vrot.slane %v7678, %v8730
    %v8732 = vlaneseq
    %v8733 = vshrl.u32 %v8732, 7
    %v8734 = vsub.s32 7, %v8733
    %v8735 = vrot.slane %v7678, %v8734
    %v8736 = vlaneseq
    %v8737 = vshrl.u32 %v8736, 7
    %v8738 = vsub.s32 0, %v8737
    %v8739 = vrot.slane %v7679, %v8738
    %v8740 = vlaneseq
    %v8741 = vshrl.u32 %v8740, 7
    %v8742 = vsub.s32 1, %v8741
    %v8743 = vrot.slane %v7679, %v8742
    %v8744 = vlaneseq
    %v8745 = vshrl.u32 %v8744, 7
    %v8746 = vsub.s32 2, %v8745
    %v8747 = vrot.slane %v7679, %v8746
    %v8748 = vlaneseq
    %v8749 = vshrl.u32 %v8748, 7
    %v8750 = vsub.s32 3, %v8749
    %v8751 = vrot.slane %v7679, %v8750
    %v8752 = vlaneseq
    %v8753 = vshrl.u32 %v8752, 7
    %v8754 = vsub.s32 4, %v8753
    %v8755 = vrot.slane %v7679, %v8754
    %v8756 = vlaneseq
    %v8757 = vshrl.u32 %v8756, 7
    %v8758 = vsub.s32 5, %v8757
    %v8759 = vrot.slane %v7679, %v8758
    %v8760 = vlaneseq
    %v8761 = vshrl.u32 %v8760, 7
    %v8762 = vsub.s32 6, %v8761
    %v8763 = vrot.slane %v7679, %v8762
    %v8764 = vlaneseq
    %v8765 = vshrl.u32 %v8764, 7
    %v8766 = vsub.s32 7, %v8765
    %v8767 = vrot.slane %v7679, %v8766
    %v8768 = vlaneseq
    %v8769 = vshrl.u32 %v8768, 7
    %v8770 = vsub.s32 0, %v8769
    %v8771 = vrot.slane %v7680, %v8770
    %v8772 = vlaneseq
    %v8773 = vshrl.u32 %v8772, 7
    %v8774 = vsub.s32 1, %v8773
    %v8775 = vrot.slane %v7680, %v8774
    %v8776 = vlaneseq
    %v8777 = vshrl.u32 %v8776, 7
    %v8778 = vsub.s32 2, %v8777
    %v8779 = vrot.slane %v7680, %v8778
    %v8780 = vlaneseq
    %v8781 = vshrl.u32 %v8780, 7
    %v8782 = vsub.s32 3, %v8781
    %v8783 = vrot.slane %v7680, %v8782
    %v8784 = vlaneseq
    %v8785 = vshrl.u32 %v8784, 7
    %v8786 = vsub.s32 4, %v8785
    %v8787 = vrot.slane %v7680, %v8786
    %v8788 = vlaneseq
    %v8789 = vshrl.u32 %v8788, 7
    %v8790 = vsub.s32 5, %v8789
    %v8791 = vrot.slane %v7680, %v8790
    %v8792 = vlaneseq
    %v8793 = vshrl.u32 %v8792, 7
    %v8794 = vsub.s32 6, %v8793
    %v8795 = vrot.slane %v7680, %v8794
    %v8796 = vlaneseq
    %v8797 = vshrl.u32 %v8796, 7
    %v8798 = vsub.s32 7, %v8797
    %v8799 = vrot.slane %v7680, %v8798
    %v8800 = vlaneseq
    %v8801 = vshrl.u32 %v8800, 7
    %v8802 = vsub.s32 0, %v8801
    %v8803 = vrot.slane %v7681, %v8802
    %v8804 = vlaneseq
    %v8805 = vshrl.u32 %v8804, 7
    %v8806 = vsub.s32 1, %v8805
    %v8807 = vrot.slane %v7681, %v8806
    %v8808 = vlaneseq
    %v8809 = vshrl.u32 %v8808, 7
    %v8810 = vsub.s32 2, %v8809
    %v8811 = vrot.slane %v7681, %v8810
    %v8812 = vlaneseq
    %v8813 = vshrl.u32 %v8812, 7
    %v8814 = vsub.s32 3, %v8813
    %v8815 = vrot.slane %v7681, %v8814
    %v8816 = vlaneseq
    %v8817 = vshrl.u32 %v8816, 7
    %v8818 = vsub.s32 4, %v8817
    %v8819 = vrot.slane %v7681, %v8818
    %v8820 = vlaneseq
    %v8821 = vshrl.u32 %v8820, 7
    %v8822 = vsub.s32 5, %v8821
    %v8823 = vrot.slane %v7681, %v8822
    %v8824 = vlaneseq
    %v8825 = vshrl.u32 %v8824, 7
    %v8826 = vsub.s32 6, %v8825
    %v8827 = vrot.slane %v7681, %v8826
    %v8828 = vlaneseq
    %v8829 = vshrl.u32 %v8828, 7
    %v8830 = vsub.s32 7, %v8829
    %v8831 = vrot.slane %v7681, %v8830
    %v8832 = vlaneseq
    %v8833 = vshrl.u32 %v8832, 7
    %v8834 = vsub.s32 0, %v8833
    %v8835 = vrot.slane %v7682, %v8834
    %v8836 = vlaneseq
    %v8837 = vshrl.u32 %v8836, 7
    %v8838 = vsub.s32 1, %v8837
    %v8839 = vrot.slane %v7682, %v8838
    %v8840 = vlaneseq
    %v8841 = vshrl.u32 %v8840, 7
    %v8842 = vsub.s32 2, %v8841
    %v8843 = vrot.slane %v7682, %v8842
    %v8844 = vlaneseq
    %v8845 = vshrl.u32 %v8844, 7
    %v8846 = vsub.s32 3, %v8845
    %v8847 = vrot.slane %v7682, %v8846
    %v8848 = vlaneseq
    %v8849 = vshrl.u32 %v8848, 7
    %v8850 = vsub.s32 4, %v8849
    %v8851 = vrot.slane %v7682, %v8850
    %v8852 = vlaneseq
    %v8853 = vshrl.u32 %v8852, 7
    %v8854 = vsub.s32 5, %v8853
    %v8855 = vrot.slane %v7682, %v8854
    %v8856 = vlaneseq
    %v8857 = vshrl.u32 %v8856, 7
    %v8858 = vsub.s32 6, %v8857
    %v8859 = vrot.slane %v7682, %v8858
    %v8860 = vlaneseq
    %v8861 = vshrl.u32 %v8860, 7
    %v8862 = vsub.s32 7, %v8861
    %v8863 = vrot.slane %v7682, %v8862
    %v8864 = vlaneseq
    %v8865 = vshrl.u32 %v8864, 7
    %v8866 = vsub.s32 0, %v8865
    %v8867 = vrot.slane %v7683, %v8866
    %v8868 = vlaneseq
    %v8869 = vshrl.u32 %v8868, 7
    %v8870 = vsub.s32 1, %v8869
    %v8871 = vrot.slane %v7683, %v8870
    %v8872 = vlaneseq
    %v8873 = vshrl.u32 %v8872, 7
    %v8874 = vsub.s32 2, %v8873
    %v8875 = vrot.slane %v7683, %v8874
    %v8876 = vlaneseq
    %v8877 = vshrl.u32 %v8876, 7
    %v8878 = vsub.s32 3, %v8877
    %v8879 = vrot.slane %v7683, %v8878
    %v8880 = vlaneseq
    %v8881 = vshrl.u32 %v8880, 7
    %v8882 = vsub.s32 4, %v8881
    %v8883 = vrot.slane %v7683, %v8882
    %v8884 = vlaneseq
    %v8885 = vshrl.u32 %v8884, 7
    %v8886 = vsub.s32 5, %v8885
    %v8887 = vrot.slane %v7683, %v8886
    %v8888 = vlaneseq
    %v8889 = vshrl.u32 %v8888, 7
    %v8890 = vsub.s32 6, %v8889
    %v8891 = vrot.slane %v7683, %v8890
    %v8892 = vlaneseq
    %v8893 = vshrl.u32 %v8892, 7
    %v8894 = vsub.s32 7, %v8893
    %v8895 = vrot.slane %v7683, %v8894
    %v8896 = vlaneseq
    %v8897 = vshrl.u32 %v8896, 7
    %v8898 = vsub.s32 0, %v8897
    %v8899 = vrot.slane %v7684, %v8898
    %v8900 = vlaneseq
    %v8901 = vshrl.u32 %v8900, 7
    %v8902 = vsub.s32 1, %v8901
    %v8903 = vrot.slane %v7684, %v8902
    %v8904 = vlaneseq
    %v8905 = vshrl.u32 %v8904, 7
    %v8906 = vsub.s32 2, %v8905
    %v8907 = vrot.slane %v7684, %v8906
    %v8908 = vlaneseq
    %v8909 = vshrl.u32 %v8908, 7
    %v8910 = vsub.s32 3, %v8909
    %v8911 = vrot.slane %v7684, %v8910
    %v8912 = vlaneseq
    %v8913 = vshrl.u32 %v8912, 7
    %v8914 = vsub.s32 4, %v8913
    %v8915 = vrot.slane %v7684, %v8914
    %v8916 = vlaneseq
    %v8917 = vshrl.u32 %v8916, 7
    %v8918 = vsub.s32 5, %v8917
    %v8919 = vrot.slane %v7684, %v8918
    %v8920 = vlaneseq
    %v8921 = vshrl.u32 %v8920, 7
    %v8922 = vsub.s32 6, %v8921
    %v8923 = vrot.slane %v7684, %v8922
    %v8924 = vlaneseq
    %v8925 = vshrl.u32 %v8924, 7
    %v8926 = vsub.s32 7, %v8925
    %v8927 = vrot.slane %v7684, %v8926
    %v8928 = vlaneseq
    %v8929 = vshrl.u32 %v8928, 7
    %v8930 = vsub.s32 0, %v8929
    %v8931 = vrot.slane %v7685, %v8930
    %v8932 = vlaneseq
    %v8933 = vshrl.u32 %v8932, 7
    %v8934 = vsub.s32 1, %v8933
    %v8935 = vrot.slane %v7685, %v8934
    %v8936 = vlaneseq
    %v8937 = vshrl.u32 %v8936, 7
    %v8938 = vsub.s32 2, %v8937
    %v8939 = vrot.slane %v7685, %v8938
    %v8940 = vlaneseq
    %v8941 = vshrl.u32 %v8940, 7
    %v8942 = vsub.s32 3, %v8941
    %v8943 = vrot.slane %v7685, %v8942
    %v8944 = vlaneseq
    %v8945 = vshrl.u32 %v8944, 7
    %v8946 = vsub.s32 4, %v8945
    %v8947 = vrot.slane %v7685, %v8946
    %v8948 = vlaneseq
    %v8949 = vshrl.u32 %v8948, 7
    %v8950 = vsub.s32 5, %v8949
    %v8951 = vrot.slane %v7685, %v8950
    %v8952 = vlaneseq
    %v8953 = vshrl.u32 %v8952, 7
    %v8954 = vsub.s32 6, %v8953
    %v8955 = vrot.slane %v7685, %v8954
    %v8956 = vlaneseq
    %v8957 = vshrl.u32 %v8956, 7
    %v8958 = vsub.s32 7, %v8957
    %v8959 = vrot.slane %v7685, %v8958
    %v8960 = vlaneseq
    %v8961 = vshrl.u32 %v8960, 7
    %v8962 = vsub.s32 0, %v8961
    %v8963 = vrot.slane %v7686, %v8962
    %v8964 = vlaneseq
    %v8965 = vshrl.u32 %v8964, 7
    %v8966 = vsub.s32 1, %v8965
    %v8967 = vrot.slane %v7686, %v8966
    %v8968 = vlaneseq
    %v8969 = vshrl.u32 %v8968, 7
    %v8970 = vsub.s32 2, %v8969
    %v8971 = vrot.slane %v7686, %v8970
    %v8972 = vlaneseq
    %v8973 = vshrl.u32 %v8972, 7
    %v8974 = vsub.s32 3, %v8973
    %v8975 = vrot.slane %v7686, %v8974
    %v8976 = vlaneseq
    %v8977 = vshrl.u32 %v8976, 7
    %v8978 = vsub.s32 4, %v8977
    %v8979 = vrot.slane %v7686, %v8978
    %v8980 = vlaneseq
    %v8981 = vshrl.u32 %v8980, 7
    %v8982 = vsub.s32 5, %v8981
    %v8983 = vrot.slane %v7686, %v8982
    %v8984 = vlaneseq
    %v8985 = vshrl.u32 %v8984, 7
    %v8986 = vsub.s32 6, %v8985
    %v8987 = vrot.slane %v7686, %v8986
    %v8988 = vlaneseq
    %v8989 = vshrl.u32 %v8988, 7
    %v8990 = vsub.s32 7, %v8989
    %v8991 = vrot.slane %v7686, %v8990
    %v8992 = vlaneseq
    %v8993 = vshrl.u32 %v8992, 7
    %v8994 = vsub.s32 0, %v8993
    %v8995 = vrot.slane %v7687, %v8994
    %v8996 = vlaneseq
    %v8997 = vshrl.u32 %v8996, 7
    %v8998 = vsub.s32 1, %v8997
    %v8999 = vrot.slane %v7687, %v8998
    %v9000 = vlaneseq
    %v9001 = vshrl.u32 %v9000, 7
    %v9002 = vsub.s32 2, %v9001
    %v9003 = vrot.slane %v7687, %v9002
    %v9004 = vlaneseq
    %v9005 = vshrl.u32 %v9004, 7
    %v9006 = vsub.s32 3, %v9005
    %v9007 = vrot.slane %v7687, %v9006
    %v9008 = vlaneseq
    %v9009 = vshrl.u32 %v9008, 7
    %v9010 = vsub.s32 4, %v9009
    %v9011 = vrot.slane %v7687, %v9010
    %v9012 = vlaneseq
    %v9013 = vshrl.u32 %v9012, 7
    %v9014 = vsub.s32 5, %v9013
    %v9015 = vrot.slane %v7687, %v9014
    %v9016 = vlaneseq
    %v9017 = vshrl.u32 %v9016, 7
    %v9018 = vsub.s32 6, %v9017
    %v9019 = vrot.slane %v7687, %v9018
    %v9020 = vlaneseq
    %v9021 = vshrl.u32 %v9020, 7
    %v9022 = vsub.s32 7, %v9021
    %v9023 = vrot.slane %v7687, %v9022
    %v9024 = vlaneseq
    %v9025 = vshrl.u32 %v9024, 7
    %v9026 = vsub.s32 0, %v9025
    %v9027 = vrot.slane %v7688, %v9026
    %v9028 = vlaneseq
    %v9029 = vshrl.u32 %v9028, 7
    %v9030 = vsub.s32 1, %v9029
    %v9031 = vrot.slane %v7688, %v9030
    %v9032 = vlaneseq
    %v9033 = vshrl.u32 %v9032, 7
    %v9034 = vsub.s32 2, %v9033
    %v9035 = vrot.slane %v7688, %v9034
    %v9036 = vlaneseq
    %v9037 = vshrl.u32 %v9036, 7
    %v9038 = vsub.s32 3, %v9037
    %v9039 = vrot.slane %v7688, %v9038
    %v9040 = vlaneseq
    %v9041 = vshrl.u32 %v9040, 7
    %v9042 = vsub.s32 4, %v9041
    %v9043 = vrot.slane %v7688, %v9042
    %v9044 = vlaneseq
    %v9045 = vshrl.u32 %v9044, 7
    %v9046 = vsub.s32 5, %v9045
    %v9047 = vrot.slane %v7688, %v9046
    %v9048 = vlaneseq
    %v9049 = vshrl.u32 %v9048, 7
    %v9050 = vsub.s32 6, %v9049
    %v9051 = vrot.slane %v7688, %v9050
    %v9052 = vlaneseq
    %v9053 = vshrl.u32 %v9052, 7
    %v9054 = vsub.s32 7, %v9053
    %v9055 = vrot.slane %v7688, %v9054
    %v9056 = vlaneseq
    %v9057 = vshrl.u32 %v9056, 7
    %v9058 = vsub.s32 0, %v9057
    %v9059 = vrot.slane %v7689, %v9058
    %v9060 = vlaneseq
    %v9061 = vshrl.u32 %v9060, 7
    %v9062 = vsub.s32 1, %v9061
    %v9063 = vrot.slane %v7689, %v9062
    %v9064 = vlaneseq
    %v9065 = vshrl.u32 %v9064, 7
    %v9066 = vsub.s32 2, %v9065
    %v9067 = vrot.slane %v7689, %v9066
    %v9068 = vlaneseq
    %v9069 = vshrl.u32 %v9068, 7
    %v9070 = vsub.s32 3, %v9069
    %v9071 = vrot.slane %v7689, %v9070
    %v9072 = vlaneseq
    %v9073 = vshrl.u32 %v9072, 7
    %v9074 = vsub.s32 4, %v9073
    %v9075 = vrot.slane %v7689, %v9074
    %v9076 = vlaneseq
    %v9077 = vshrl.u32 %v9076, 7
    %v9078 = vsub.s32 5, %v9077
    %v9079 = vrot.slane %v7689, %v9078
    %v9080 = vlaneseq
    %v9081 = vshrl.u32 %v9080, 7
    %v9082 = vsub.s32 6, %v9081
    %v9083 = vrot.slane %v7689, %v9082
    %v9084 = vlaneseq
    %v9085 = vshrl.u32 %v9084, 7
    %v9086 = vsub.s32 7, %v9085
    %v9087 = vrot.slane %v7689, %v9086
    %v9088 = vlaneseq
    %v9089 = vshrl.u32 %v9088, 7
    %v9090 = vsub.s32 0, %v9089
    %v9091 = vrot.slane %v7690, %v9090
    %v9092 = vlaneseq
    %v9093 = vshrl.u32 %v9092, 7
    %v9094 = vsub.s32 1, %v9093
    %v9095 = vrot.slane %v7690, %v9094
    %v9096 = vlaneseq
    %v9097 = vshrl.u32 %v9096, 7
    %v9098 = vsub.s32 2, %v9097
    %v9099 = vrot.slane %v7690, %v9098
    %v9100 = vlaneseq
    %v9101 = vshrl.u32 %v9100, 7
    %v9102 = vsub.s32 3, %v9101
    %v9103 = vrot.slane %v7690, %v9102
    %v9104 = vlaneseq
    %v9105 = vshrl.u32 %v9104, 7
    %v9106 = vsub.s32 4, %v9105
    %v9107 = vrot.slane %v7690, %v9106
    %v9108 = vlaneseq
    %v9109 = vshrl.u32 %v9108, 7
    %v9110 = vsub.s32 5, %v9109
    %v9111 = vrot.slane %v7690, %v9110
    %v9112 = vlaneseq
    %v9113 = vshrl.u32 %v9112, 7
    %v9114 = vsub.s32 6, %v9113
    %v9115 = vrot.slane %v7690, %v9114
    %v9116 = vlaneseq
    %v9117 = vshrl.u32 %v9116, 7
    %v9118 = vsub.s32 7, %v9117
    %v9119 = vrot.slane %v7690, %v9118
    %v9120 = vlaneseq
    %v9121 = vshrl.u32 %v9120, 7
    %v9122 = vsub.s32 0, %v9121
    %v9123 = vrot.slane %v7691, %v9122
    %v9124 = vlaneseq
    %v9125 = vshrl.u32 %v9124, 7
    %v9126 = vsub.s32 1, %v9125
    %v9127 = vrot.slane %v7691, %v9126
    %v9128 = vlaneseq
    %v9129 = vshrl.u32 %v9128, 7
    %v9130 = vsub.s32 2, %v9129
    %v9131 = vrot.slane %v7691, %v9130
    %v9132 = vlaneseq
    %v9133 = vshrl.u32 %v9132, 7
    %v9134 = vsub.s32 3, %v9133
    %v9135 = vrot.slane %v7691, %v9134
    %v9136 = vlaneseq
    %v9137 = vshrl.u32 %v9136, 7
    %v9138 = vsub.s32 4, %v9137
    %v9139 = vrot.slane %v7691, %v9138
    %v9140 = vlaneseq
    %v9141 = vshrl.u32 %v9140, 7
    %v9142 = vsub.s32 5, %v9141
    %v9143 = vrot.slane %v7691, %v9142
    %v9144 = vlaneseq
    %v9145 = vshrl.u32 %v9144, 7
    %v9146 = vsub.s32 6, %v9145
    %v9147 = vrot.slane %v7691, %v9146
    %v9148 = vlaneseq
    %v9149 = vshrl.u32 %v9148, 7
    %v9150 = vsub.s32 7, %v9149
    %v9151 = vrot.slane %v7691, %v9150
    %v9152 = vlaneseq
    %v9153 = vshrl.u32 %v9152, 7
    %v9154 = vsub.s32 0, %v9153
    %v9155 = vrot.slane %v7692, %v9154
    %v9156 = vlaneseq
    %v9157 = vshrl.u32 %v9156, 7
    %v9158 = vsub.s32 1, %v9157
    %v9159 = vrot.slane %v7692, %v9158
    %v9160 = vlaneseq
    %v9161 = vshrl.u32 %v9160, 7
    %v9162 = vsub.s32 2, %v9161
    %v9163 = vrot.slane %v7692, %v9162
    %v9164 = vlaneseq
    %v9165 = vshrl.u32 %v9164, 7
    %v9166 = vsub.s32 3, %v9165
    %v9167 = vrot.slane %v7692, %v9166
    %v9168 = vlaneseq
    %v9169 = vshrl.u32 %v9168, 7
    %v9170 = vsub.s32 4, %v9169
    %v9171 = vrot.slane %v7692, %v9170
    %v9172 = vlaneseq
    %v9173 = vshrl.u32 %v9172, 7
    %v9174 = vsub.s32 5, %v9173
    %v9175 = vrot.slane %v7692, %v9174
    %v9176 = vlaneseq
    %v9177 = vshrl.u32 %v9176, 7
    %v9178 = vsub.s32 6, %v9177
    %v9179 = vrot.slane %v7692, %v9178
    %v9180 = vlaneseq
    %v9181 = vshrl.u32 %v9180, 7
    %v9182 = vsub.s32 7, %v9181
    %v9183 = vrot.slane %v7692, %v9182
    %v9184 = vlaneseq
    %v9185 = vshrl.u32 %v9184, 7
    %v9186 = vsub.s32 0, %v9185
    %v9187 = vrot.slane %v7693, %v9186
    %v9188 = vlaneseq
    %v9189 = vshrl.u32 %v9188, 7
    %v9190 = vsub.s32 1, %v9189
    %v9191 = vrot.slane %v7693, %v9190
    %v9192 = vlaneseq
    %v9193 = vshrl.u32 %v9192, 7
    %v9194 = vsub.s32 2, %v9193
    %v9195 = vrot.slane %v7693, %v9194
    %v9196 = vlaneseq
    %v9197 = vshrl.u32 %v9196, 7
    %v9198 = vsub.s32 3, %v9197
    %v9199 = vrot.slane %v7693, %v9198
    %v9200 = vlaneseq
    %v9201 = vshrl.u32 %v9200, 7
    %v9202 = vsub.s32 4, %v9201
    %v9203 = vrot.slane %v7693, %v9202
    %v9204 = vlaneseq
    %v9205 = vshrl.u32 %v9204, 7
    %v9206 = vsub.s32 5, %v9205
    %v9207 = vrot.slane %v7693, %v9206
    %v9208 = vlaneseq
    %v9209 = vshrl.u32 %v9208, 7
    %v9210 = vsub.s32 6, %v9209
    %v9211 = vrot.slane %v7693, %v9210
    %v9212 = vlaneseq
    %v9213 = vshrl.u32 %v9212, 7
    %v9214 = vsub.s32 7, %v9213
    %v9215 = vrot.slane %v7693, %v9214
    %v9216 = vlaneseq
    %v9217 = vshrl.u32 %v9216, 7
    %v9218 = vsub.s32 0, %v9217
    %v9219 = vrot.slane %v7694, %v9218
    %v9220 = vlaneseq
    %v9221 = vshrl.u32 %v9220, 7
    %v9222 = vsub.s32 1, %v9221
    %v9223 = vrot.slane %v7694, %v9222
    %v9224 = vlaneseq
    %v9225 = vshrl.u32 %v9224, 7
    %v9226 = vsub.s32 2, %v9225
    %v9227 = vrot.slane %v7694, %v9226
    %v9228 = vlaneseq
    %v9229 = vshrl.u32 %v9228, 7
    %v9230 = vsub.s32 3, %v9229
    %v9231 = vrot.slane %v7694, %v9230
    %v9232 = vlaneseq
    %v9233 = vshrl.u32 %v9232, 7
    %v9234 = vsub.s32 4, %v9233
    %v9235 = vrot.slane %v7694, %v9234
    %v9236 = vlaneseq
    %v9237 = vshrl.u32 %v9236, 7
    %v9238 = vsub.s32 5, %v9237
    %v9239 = vrot.slane %v7694, %v9238
    %v9240 = vlaneseq
    %v9241 = vshrl.u32 %v9240, 7
    %v9242 = vsub.s32 6, %v9241
    %v9243 = vrot.slane %v7694, %v9242
    %v9244 = vlaneseq
    %v9245 = vshrl.u32 %v9244, 7
    %v9246 = vsub.s32 7, %v9245
    %v9247 = vrot.slane %v7694, %v9246
    %v9248 = vlaneseq
    %v9249 = vshrl.u32 %v9248, 7
    %v9250 = vsub.s32 0, %v9249
    %v9251 = vrot.slane %v7695, %v9250
    %v9252 = vlaneseq
    %v9253 = vshrl.u32 %v9252, 7
    %v9254 = vsub.s32 1, %v9253
    %v9255 = vrot.slane %v7695, %v9254
    %v9256 = vlaneseq
    %v9257 = vshrl.u32 %v9256, 7
    %v9258 = vsub.s32 2, %v9257
    %v9259 = vrot.slane %v7695, %v9258
    %v9260 = vlaneseq
    %v9261 = vshrl.u32 %v9260, 7
    %v9262 = vsub.s32 3, %v9261
    %v9263 = vrot.slane %v7695, %v9262
    %v9264 = vlaneseq
    %v9265 = vshrl.u32 %v9264, 7
    %v9266 = vsub.s32 4, %v9265
    %v9267 = vrot.slane %v7695, %v9266
    %v9268 = vlaneseq
    %v9269 = vshrl.u32 %v9268, 7
    %v9270 = vsub.s32 5, %v9269
    %v9271 = vrot.slane %v7695, %v9270
    %v9272 = vlaneseq
    %v9273 = vshrl.u32 %v9272, 7
    %v9274 = vsub.s32 6, %v9273
    %v9275 = vrot.slane %v7695, %v9274
    %v9276 = vlaneseq
    %v9277 = vshrl.u32 %v9276, 7
    %v9278 = vsub.s32 7, %v9277
    %v9279 = vrot.slane %v7695, %v9278
    %v9280 = vcombine.low %v7747, %v7751
    %v9281 = vcombine.low %v7755, %v7759
    %v9282 = vcombine.low %v7763, %v7767
    %v9283 = vcombine.low %v7771, %v7775
    %v9285 = vunpack.c.l.s4 1966171168
    %v9286 = vunpack.c.0.s8 %v9285
    %v9287 = vlaneseq
    %v9288 = vshrl.u32 %v9287, 7
    %v9289 = vsub.s32 %v9286, %v9288
    %v9290 = vrot.slane %v9280, %v9289
    %v9292 = vunpack.c.l.s4 1966171168
    %v9293 = vunpack.c.0.s8 %v9292
    %v9294 = vlaneseq
    %v9295 = vshrl.u32 %v9294, 7
    %v9296 = vsub.s32 %v9293, %v9295
    %v9297 = vrot.slane %v9281, %v9296
    %v9299 = vunpack.c.l.s4 1966171168
    %v9300 = vunpack.c.0.s8 %v9299
    %v9301 = vlaneseq
    %v9302 = vshrl.u32 %v9301, 7
    %v9303 = vsub.s32 %v9300, %v9302
    %v9304 = vrot.slane %v9282, %v9303
    %v9306 = vunpack.c.l.s4 1966171168
    %v9307 = vunpack.c.0.s8 %v9306
    %v9308 = vlaneseq
    %v9309 = vshrl.u32 %v9308, 7
    %v9310 = vsub.s32 %v9307, %v9309
    %v9311 = vrot.slane %v9283, %v9310
    %v9312 = vcombine.low %v9290, %v9297
    %v9313 = vcombine.low %v9304, %v9311
    %v9315 = vunpack.c.l.s4 1966171168
    %v9316 = vunpack.c.0.s8 %v9315
    %v9317 = vlaneseq
    %v9318 = vshrl.u32 %v9317, 7
    %v9319 = vsub.s32 %v9316, %v9318
    %v9320 = vrot.slane %v9312, %v9319
    %v9322 = vunpack.c.l.s4 1966171168
    %v9323 = vunpack.c.0.s8 %v9322
    %v9324 = vlaneseq
    %v9325 = vshrl.u32 %v9324, 7
    %v9326 = vsub.s32 %v9323, %v9325
    %v9327 = vrot.slane %v9313, %v9326
    %v9328 = vcombine.low %v9320, %v9327
    %v9329 = vcombine.low %v7779, %v7783
    %v9330 = vcombine.low %v7787, %v7791
    %v9331 = vcombine.low %v7795, %v7799
    %v9332 = vcombine.low %v7803, %v7807
    %v9334 = vunpack.c.l.s4 1966171168
    %v9335 = vunpack.c.0.s8 %v9334
    %v9336 = vlaneseq
    %v9337 = vshrl.u32 %v9336, 7
    %v9338 = vsub.s32 %v9335, %v9337
    %v9339 = vrot.slane %v9329, %v9338
    %v9341 = vunpack.c.l.s4 1966171168
    %v9342 = vunpack.c.0.s8 %v9341
    %v9343 = vlaneseq
    %v9344 = vshrl.u32 %v9343, 7
    %v9345 = vsub.s32 %v9342, %v9344
    %v9346 = vrot.slane %v9330, %v9345
    %v9348 = vunpack.c.l.s4 1966171168
    %v9349 = vunpack.c.0.s8 %v9348
    %v9350 = vlaneseq
    %v9351 = vshrl.u32 %v9350, 7
    %v9352 = vsub.s32 %v9349, %v9351
    %v9353 = vrot.slane %v9331, %v9352
    %v9355 = vunpack.c.l.s4 1966171168
    %v9356 = vunpack.c.0.s8 %v9355
    %v9357 = vlaneseq
    %v9358 = vshrl.u32 %v9357, 7
    %v9359 = vsub.s32 %v9356, %v9358
    %v9360 = vrot.slane %v9332, %v9359
    %v9361 = vcombine.low %v9339, %v9346
    %v9362 = vcombine.low %v9353, %v9360
    %v9364 = vunpack.c.l.s4 1966171168
    %v9365 = vunpack.c.0.s8 %v9364
    %v9366 = vlaneseq
    %v9367 = vshrl.u32 %v9366, 7
    %v9368 = vsub.s32 %v9365, %v9367
    %v9369 = vrot.slane %v9361, %v9368
    %v9371 = vunpack.c.l.s4 1966171168
    %v9372 = vunpack.c.0.s8 %v9371
    %v9373 = vlaneseq
    %v9374 = vshrl.u32 %v9373, 7
    %v9375 = vsub.s32 %v9372, %v9374
    %v9376 = vrot.slane %v9362, %v9375
    %v9377 = vcombine.low %v9369, %v9376
    %v9378 = vcombine.low %v7811, %v7815
    %v9379 = vcombine.low %v7819, %v7823
    %v9380 = vcombine.low %v7827, %v7831
    %v9381 = vcombine.low %v7835, %v7839
    %v9383 = vunpack.c.l.s4 1966171168
    %v9384 = vunpack.c.0.s8 %v9383
    %v9385 = vlaneseq
    %v9386 = vshrl.u32 %v9385, 7
    %v9387 = vsub.s32 %v9384, %v9386
    %v9388 = vrot.slane %v9378, %v9387
    %v9390 = vunpack.c.l.s4 1966171168
    %v9391 = vunpack.c.0.s8 %v9390
    %v9392 = vlaneseq
    %v9393 = vshrl.u32 %v9392, 7
    %v9394 = vsub.s32 %v9391, %v9393
    %v9395 = vrot.slane %v9379, %v9394
    %v9397 = vunpack.c.l.s4 1966171168
    %v9398 = vunpack.c.0.s8 %v9397
    %v9399 = vlaneseq
    %v9400 = vshrl.u32 %v9399, 7
    %v9401 = vsub.s32 %v9398, %v9400
    %v9402 = vrot.slane %v9380, %v9401
    %v9404 = vunpack.c.l.s4 1966171168
    %v9405 = vunpack.c.0.s8 %v9404
    %v9406 = vlaneseq
    %v9407 = vshrl.u32 %v9406, 7
    %v9408 = vsub.s32 %v9405, %v9407
    %v9409 = vrot.slane %v9381, %v9408
    %v9410 = vcombine.low %v9388, %v9395
    %v9411 = vcombine.low %v9402, %v9409
    %v9413 = vunpack.c.l.s4 1966171168
    %v9414 = vunpack.c.0.s8 %v9413
    %v9415 = vlaneseq
    %v9416 = vshrl.u32 %v9415, 7
    %v9417 = vsub.s32 %v9414, %v9416
    %v9418 = vrot.slane %v9410, %v9417
    %v9420 = vunpack.c.l.s4 1966171168
    %v9421 = vunpack.c.0.s8 %v9420
    %v9422 = vlaneseq
    %v9423 = vshrl.u32 %v9422, 7
    %v9424 = vsub.s32 %v9421, %v9423
    %v9425 = vrot.slane %v9411, %v9424
    %v9426 = vcombine.low %v9418, %v9425
    %v9427 = vcombine.low %v7843, %v7847
    %v9428 = vcombine.low %v7851, %v7855
    %v9429 = vcombine.low %v7859, %v7863
    %v9430 = vcombine.low %v7867, %v7871
    %v9432 = vunpack.c.l.s4 1966171168
    %v9433 = vunpack.c.0.s8 %v9432
    %v9434 = vlaneseq
    %v9435 = vshrl.u32 %v9434, 7
    %v9436 = vsub.s32 %v9433, %v9435
    %v9437 = vrot.slane %v9427, %v9436
    %v9439 = vunpack.c.l.s4 1966171168
    %v9440 = vunpack.c.0.s8 %v9439
    %v9441 = vlaneseq
    %v9442 = vshrl.u32 %v9441, 7
    %v9443 = vsub.s32 %v9440, %v9442
    %v9444 = vrot.slane %v9428, %v9443
    %v9446 = vunpack.c.l.s4 1966171168
    %v9447 = vunpack.c.0.s8 %v9446
    %v9448 = vlaneseq
    %v9449 = vshrl.u32 %v9448, 7
    %v9450 = vsub.s32 %v9447, %v9449
    %v9451 = vrot.slane %v9429, %v9450
    %v9453 = vunpack.c.l.s4 1966171168
    %v9454 = vunpack.c.0.s8 %v9453
    %v9455 = vlaneseq
    %v9456 = vshrl.u32 %v9455, 7
    %v9457 = vsub.s32 %v9454, %v9456
    %v9458 = vrot.slane %v9430, %v9457
    %v9459 = vcombine.low %v9437, %v9444
    %v9460 = vcombine.low %v9451, %v9458
    %v9462 = vunpack.c.l.s4 1966171168
    %v9463 = vunpack.c.0.s8 %v9462
    %v9464 = vlaneseq
    %v9465 = vshrl.u32 %v9464, 7
    %v9466 = vsub.s32 %v9463, %v9465
    %v9467 = vrot.slane %v9459, %v9466
    %v9469 = vunpack.c.l.s4 1966171168
    %v9470 = vunpack.c.0.s8 %v9469
    %v9471 = vlaneseq
    %v9472 = vshrl.u32 %v9471, 7
    %v9473 = vsub.s32 %v9470, %v9472
    %v9474 = vrot.slane %v9460, %v9473
    %v9475 = vcombine.low %v9467, %v9474
    %v9476 = vcombine.low %v7875, %v7879
    %v9477 = vcombine.low %v7883, %v7887
    %v9478 = vcombine.low %v7891, %v7895
    %v9479 = vcombine.low %v7899, %v7903
    %v9481 = vunpack.c.l.s4 1966171168
    %v9482 = vunpack.c.0.s8 %v9481
    %v9483 = vlaneseq
    %v9484 = vshrl.u32 %v9483, 7
    %v9485 = vsub.s32 %v9482, %v9484
    %v9486 = vrot.slane %v9476, %v9485
    %v9488 = vunpack.c.l.s4 1966171168
    %v9489 = vunpack.c.0.s8 %v9488
    %v9490 = vlaneseq
    %v9491 = vshrl.u32 %v9490, 7
    %v9492 = vsub.s32 %v9489, %v9491
    %v9493 = vrot.slane %v9477, %v9492
    %v9495 = vunpack.c.l.s4 1966171168
    %v9496 = vunpack.c.0.s8 %v9495
    %v9497 = vlaneseq
    %v9498 = vshrl.u32 %v9497, 7
    %v9499 = vsub.s32 %v9496, %v9498
    %v9500 = vrot.slane %v9478, %v9499
    %v9502 = vunpack.c.l.s4 1966171168
    %v9503 = vunpack.c.0.s8 %v9502
    %v9504 = vlaneseq
    %v9505 = vshrl.u32 %v9504, 7
    %v9506 = vsub.s32 %v9503, %v9505
    %v9507 = vrot.slane %v9479, %v9506
    %v9508 = vcombine.low %v9486, %v9493
    %v9509 = vcombine.low %v9500, %v9507
    %v9511 = vunpack.c.l.s4 1966171168
    %v9512 = vunpack.c.0.s8 %v9511
    %v9513 = vlaneseq
    %v9514 = vshrl.u32 %v9513, 7
    %v9515 = vsub.s32 %v9512, %v9514
    %v9516 = vrot.slane %v9508, %v9515
    %v9518 = vunpack.c.l.s4 1966171168
    %v9519 = vunpack.c.0.s8 %v9518
    %v9520 = vlaneseq
    %v9521 = vshrl.u32 %v9520, 7
    %v9522 = vsub.s32 %v9519, %v9521
    %v9523 = vrot.slane %v9509, %v9522
    %v9524 = vcombine.low %v9516, %v9523
    %v9525 = vcombine.low %v7907, %v7911
    %v9526 = vcombine.low %v7915, %v7919
    %v9527 = vcombine.low %v7923, %v7927
    %v9528 = vcombine.low %v7931, %v7935
    %v9530 = vunpack.c.l.s4 1966171168
    %v9531 = vunpack.c.0.s8 %v9530
    %v9532 = vlaneseq
    %v9533 = vshrl.u32 %v9532, 7
    %v9534 = vsub.s32 %v9531, %v9533
    %v9535 = vrot.slane %v9525, %v9534
    %v9537 = vunpack.c.l.s4 1966171168
    %v9538 = vunpack.c.0.s8 %v9537
    %v9539 = vlaneseq
    %v9540 = vshrl.u32 %v9539, 7
    %v9541 = vsub.s32 %v9538, %v9540
    %v9542 = vrot.slane %v9526, %v9541
    %v9544 = vunpack.c.l.s4 1966171168
    %v9545 = vunpack.c.0.s8 %v9544
    %v9546 = vlaneseq
    %v9547 = vshrl.u32 %v9546, 7
    %v9548 = vsub.s32 %v9545, %v9547
    %v9549 = vrot.slane %v9527, %v9548
    %v9551 = vunpack.c.l.s4 1966171168
    %v9552 = vunpack.c.0.s8 %v9551
    %v9553 = vlaneseq
    %v9554 = vshrl.u32 %v9553, 7
    %v9555 = vsub.s32 %v9552, %v9554
    %v9556 = vrot.slane %v9528, %v9555
    %v9557 = vcombine.low %v9535, %v9542
    %v9558 = vcombine.low %v9549, %v9556
    %v9560 = vunpack.c.l.s4 1966171168
    %v9561 = vunpack.c.0.s8 %v9560
    %v9562 = vlaneseq
    %v9563 = vshrl.u32 %v9562, 7
    %v9564 = vsub.s32 %v9561, %v9563
    %v9565 = vrot.slane %v9557, %v9564
    %v9567 = vunpack.c.l.s4 1966171168
    %v9568 = vunpack.c.0.s8 %v9567
    %v9569 = vlaneseq
    %v9570 = vshrl.u32 %v9569, 7
    %v9571 = vsub.s32 %v9568, %v9570
    %v9572 = vrot.slane %v9558, %v9571
    %v9573 = vcombine.low %v9565, %v9572
    %v9574 = vcombine.low %v7939, %v7943
    %v9575 = vcombine.low %v7947, %v7951
    %v9576 = vcombine.low %v7955, %v7959
    %v9577 = vcombine.low %v7963, %v7967
    %v9579 = vunpack.c.l.s4 1966171168
    %v9580 = vunpack.c.0.s8 %v9579
    %v9581 = vlaneseq
    %v9582 = vshrl.u32 %v9581, 7
    %v9583 = vsub.s32 %v9580, %v9582
    %v9584 = vrot.slane %v9574, %v9583
    %v9586 = vunpack.c.l.s4 1966171168
    %v9587 = vunpack.c.0.s8 %v9586
    %v9588 = vlaneseq
    %v9589 = vshrl.u32 %v9588, 7
    %v9590 = vsub.s32 %v9587, %v9589
    %v9591 = vrot.slane %v9575, %v9590
    %v9593 = vunpack.c.l.s4 1966171168
    %v9594 = vunpack.c.0.s8 %v9593
    %v9595 = vlaneseq
    %v9596 = vshrl.u32 %v9595, 7
    %v9597 = vsub.s32 %v9594, %v9596
    %v9598 = vrot.slane %v9576, %v9597
    %v9600 = vunpack.c.l.s4 1966171168
    %v9601 = vunpack.c.0.s8 %v9600
    %v9602 = vlaneseq
    %v9603 = vshrl.u32 %v9602, 7
    %v9604 = vsub.s32 %v9601, %v9603
    %v9605 = vrot.slane %v9577, %v9604
    %v9606 = vcombine.low %v9584, %v9591
    %v9607 = vcombine.low %v9598, %v9605
    %v9609 = vunpack.c.l.s4 1966171168
    %v9610 = vunpack.c.0.s8 %v9609
    %v9611 = vlaneseq
    %v9612 = vshrl.u32 %v9611, 7
    %v9613 = vsub.s32 %v9610, %v9612
    %v9614 = vrot.slane %v9606, %v9613
    %v9616 = vunpack.c.l.s4 1966171168
    %v9617 = vunpack.c.0.s8 %v9616
    %v9618 = vlaneseq
    %v9619 = vshrl.u32 %v9618, 7
    %v9620 = vsub.s32 %v9617, %v9619
    %v9621 = vrot.slane %v9607, %v9620
    %v9622 = vcombine.low %v9614, %v9621
    %v9623 = vcombine.low %v7971, %v7975
    %v9624 = vcombine.low %v7979, %v7983
    %v9625 = vcombine.low %v7987, %v7991
    %v9626 = vcombine.low %v7995, %v7999
    %v9628 = vunpack.c.l.s4 1966171168
    %v9629 = vunpack.c.0.s8 %v9628
    %v9630 = vlaneseq
    %v9631 = vshrl.u32 %v9630, 7
    %v9632 = vsub.s32 %v9629, %v9631
    %v9633 = vrot.slane %v9623, %v9632
    %v9635 = vunpack.c.l.s4 1966171168
    %v9636 = vunpack.c.0.s8 %v9635
    %v9637 = vlaneseq
    %v9638 = vshrl.u32 %v9637, 7
    %v9639 = vsub.s32 %v9636, %v9638
    %v9640 = vrot.slane %v9624, %v9639
    %v9642 = vunpack.c.l.s4 1966171168
    %v9643 = vunpack.c.0.s8 %v9642
    %v9644 = vlaneseq
    %v9645 = vshrl.u32 %v9644, 7
    %v9646 = vsub.s32 %v9643, %v9645
    %v9647 = vrot.slane %v9625, %v9646
    %v9649 = vunpack.c.l.s4 1966171168
    %v9650 = vunpack.c.0.s8 %v9649
    %v9651 = vlaneseq
    %v9652 = vshrl.u32 %v9651, 7
    %v9653 = vsub.s32 %v9650, %v9652
    %v9654 = vrot.slane %v9626, %v9653
    %v9655 = vcombine.low %v9633, %v9640
    %v9656 = vcombine.low %v9647, %v9654
    %v9658 = vunpack.c.l.s4 1966171168
    %v9659 = vunpack.c.0.s8 %v9658
    %v9660 = vlaneseq
    %v9661 = vshrl.u32 %v9660, 7
    %v9662 = vsub.s32 %v9659, %v9661
    %v9663 = vrot.slane %v9655, %v9662
    %v9665 = vunpack.c.l.s4 1966171168
    %v9666 = vunpack.c.0.s8 %v9665
    %v9667 = vlaneseq
    %v9668 = vshrl.u32 %v9667, 7
    %v9669 = vsub.s32 %v9666, %v9668
    %v9670 = vrot.slane %v9656, %v9669
    %v9671 = vcombine.low %v9663, %v9670
    %v9672 = vcombine.low %v8003, %v8007
    %v9673 = vcombine.low %v8011, %v8015
    %v9674 = vcombine.low %v8019, %v8023
    %v9675 = vcombine.low %v8027, %v8031
    %v9677 = vunpack.c.l.s4 1966171168
    %v9678 = vunpack.c.0.s8 %v9677
    %v9679 = vlaneseq
    %v9680 = vshrl.u32 %v9679, 7
    %v9681 = vsub.s32 %v9678, %v9680
    %v9682 = vrot.slane %v9672, %v9681
    %v9684 = vunpack.c.l.s4 1966171168
    %v9685 = vunpack.c.0.s8 %v9684
    %v9686 = vlaneseq
    %v9687 = vshrl.u32 %v9686, 7
    %v9688 = vsub.s32 %v9685, %v9687
    %v9689 = vrot.slane %v9673, %v9688
    %v9691 = vunpack.c.l.s4 1966171168
    %v9692 = vunpack.c.0.s8 %v9691
    %v9693 = vlaneseq
    %v9694 = vshrl.u32 %v9693, 7
    %v9695 = vsub.s32 %v9692, %v9694
    %v9696 = vrot.slane %v9674, %v9695
    %v9698 = vunpack.c.l.s4 1966171168
    %v9699 = vunpack.c.0.s8 %v9698
    %v9700 = vlaneseq
    %v9701 = vshrl.u32 %v9700, 7
    %v9702 = vsub.s32 %v9699, %v9701
    %v9703 = vrot.slane %v9675, %v9702
    %v9704 = vcombine.low %v9682, %v9689
    %v9705 = vcombine.low %v9696, %v9703
    %v9707 = vunpack.c.l.s4 1966171168
    %v9708 = vunpack.c.0.s8 %v9707
    %v9709 = vlaneseq
    %v9710 = vshrl.u32 %v9709, 7
    %v9711 = vsub.s32 %v9708, %v9710
    %v9712 = vrot.slane %v9704, %v9711
    %v9714 = vunpack.c.l.s4 1966171168
    %v9715 = vunpack.c.0.s8 %v9714
    %v9716 = vlaneseq
    %v9717 = vshrl.u32 %v9716, 7
    %v9718 = vsub.s32 %v9715, %v9717
    %v9719 = vrot.slane %v9705, %v9718
    %v9720 = vcombine.low %v9712, %v9719
    %v9721 = vcombine.low %v8035, %v8039
    %v9722 = vcombine.low %v8043, %v8047
    %v9723 = vcombine.low %v8051, %v8055
    %v9724 = vcombine.low %v8059, %v8063
    %v9726 = vunpack.c.l.s4 1966171168
    %v9727 = vunpack.c.0.s8 %v9726
    %v9728 = vlaneseq
    %v9729 = vshrl.u32 %v9728, 7
    %v9730 = vsub.s32 %v9727, %v9729
    %v9731 = vrot.slane %v9721, %v9730
    %v9733 = vunpack.c.l.s4 1966171168
    %v9734 = vunpack.c.0.s8 %v9733
    %v9735 = vlaneseq
    %v9736 = vshrl.u32 %v9735, 7
    %v9737 = vsub.s32 %v9734, %v9736
    %v9738 = vrot.slane %v9722, %v9737
    %v9740 = vunpack.c.l.s4 1966171168
    %v9741 = vunpack.c.0.s8 %v9740
    %v9742 = vlaneseq
    %v9743 = vshrl.u32 %v9742, 7
    %v9744 = vsub.s32 %v9741, %v9743
    %v9745 = vrot.slane %v9723, %v9744
    %v9747 = vunpack.c.l.s4 1966171168
    %v9748 = vunpack.c.0.s8 %v9747
    %v9749 = vlaneseq
    %v9750 = vshrl.u32 %v9749, 7
    %v9751 = vsub.s32 %v9748, %v9750
    %v9752 = vrot.slane %v9724, %v9751
    %v9753 = vcombine.low %v9731, %v9738
    %v9754 = vcombine.low %v9745, %v9752
    %v9756 = vunpack.c.l.s4 1966171168
    %v9757 = vunpack.c.0.s8 %v9756
    %v9758 = vlaneseq
    %v9759 = vshrl.u32 %v9758, 7
    %v9760 = vsub.s32 %v9757, %v9759
    %v9761 = vrot.slane %v9753, %v9760
    %v9763 = vunpack.c.l.s4 1966171168
    %v9764 = vunpack.c.0.s8 %v9763
    %v9765 = vlaneseq
    %v9766 = vshrl.u32 %v9765, 7
    %v9767 = vsub.s32 %v9764, %v9766
    %v9768 = vrot.slane %v9754, %v9767
    %v9769 = vcombine.low %v9761, %v9768
    %v9770 = vcombine.low %v8067, %v8071
    %v9771 = vcombine.low %v8075, %v8079
    %v9772 = vcombine.low %v8083, %v8087
    %v9773 = vcombine.low %v8091, %v8095
    %v9775 = vunpack.c.l.s4 1966171168
    %v9776 = vunpack.c.0.s8 %v9775
    %v9777 = vlaneseq
    %v9778 = vshrl.u32 %v9777, 7
    %v9779 = vsub.s32 %v9776, %v9778
    %v9780 = vrot.slane %v9770, %v9779
    %v9782 = vunpack.c.l.s4 1966171168
    %v9783 = vunpack.c.0.s8 %v9782
    %v9784 = vlaneseq
    %v9785 = vshrl.u32 %v9784, 7
    %v9786 = vsub.s32 %v9783, %v9785
    %v9787 = vrot.slane %v9771, %v9786
    %v9789 = vunpack.c.l.s4 1966171168
    %v9790 = vunpack.c.0.s8 %v9789
    %v9791 = vlaneseq
    %v9792 = vshrl.u32 %v9791, 7
    %v9793 = vsub.s32 %v9790, %v9792
    %v9794 = vrot.slane %v9772, %v9793
    %v9796 = vunpack.c.l.s4 1966171168
    %v9797 = vunpack.c.0.s8 %v9796
    %v9798 = vlaneseq
    %v9799 = vshrl.u32 %v9798, 7
    %v9800 = vsub.s32 %v9797, %v9799
    %v9801 = vrot.slane %v9773, %v9800
    %v9802 = vcombine.low %v9780, %v9787
    %v9803 = vcombine.low %v9794, %v9801
    %v9805 = vunpack.c.l.s4 1966171168
    %v9806 = vunpack.c.0.s8 %v9805
    %v9807 = vlaneseq
    %v9808 = vshrl.u32 %v9807, 7
    %v9809 = vsub.s32 %v9806, %v9808
    %v9810 = vrot.slane %v9802, %v9809
    %v9812 = vunpack.c.l.s4 1966171168
    %v9813 = vunpack.c.0.s8 %v9812
    %v9814 = vlaneseq
    %v9815 = vshrl.u32 %v9814, 7
    %v9816 = vsub.s32 %v9813, %v9815
    %v9817 = vrot.slane %v9803, %v9816
    %v9818 = vcombine.low %v9810, %v9817
    %v9819 = vcombine.low %v8099, %v8103
    %v9820 = vcombine.low %v8107, %v8111
    %v9821 = vcombine.low %v8115, %v8119
    %v9822 = vcombine.low %v8123, %v8127
    %v9824 = vunpack.c.l.s4 1966171168
    %v9825 = vunpack.c.0.s8 %v9824
    %v9826 = vlaneseq
    %v9827 = vshrl.u32 %v9826, 7
    %v9828 = vsub.s32 %v9825, %v9827
    %v9829 = vrot.slane %v9819, %v9828
    %v9831 = vunpack.c.l.s4 1966171168
    %v9832 = vunpack.c.0.s8 %v9831
    %v9833 = vlaneseq
    %v9834 = vshrl.u32 %v9833, 7
    %v9835 = vsub.s32 %v9832, %v9834
    %v9836 = vrot.slane %v9820, %v9835
    %v9838 = vunpack.c.l.s4 1966171168
    %v9839 = vunpack.c.0.s8 %v9838
    %v9840 = vlaneseq
    %v9841 = vshrl.u32 %v9840, 7
    %v9842 = vsub.s32 %v9839, %v9841
    %v9843 = vrot.slane %v9821, %v9842
    %v9845 = vunpack.c.l.s4 1966171168
    %v9846 = vunpack.c.0.s8 %v9845
    %v9847 = vlaneseq
    %v9848 = vshrl.u32 %v9847, 7
    %v9849 = vsub.s32 %v9846, %v9848
    %v9850 = vrot.slane %v9822, %v9849
    %v9851 = vcombine.low %v9829, %v9836
    %v9852 = vcombine.low %v9843, %v9850
    %v9854 = vunpack.c.l.s4 1966171168
    %v9855 = vunpack.c.0.s8 %v9854
    %v9856 = vlaneseq
    %v9857 = vshrl.u32 %v9856, 7
    %v9858 = vsub.s32 %v9855, %v9857
    %v9859 = vrot.slane %v9851, %v9858
    %v9861 = vunpack.c.l.s4 1966171168
    %v9862 = vunpack.c.0.s8 %v9861
    %v9863 = vlaneseq
    %v9864 = vshrl.u32 %v9863, 7
    %v9865 = vsub.s32 %v9862, %v9864
    %v9866 = vrot.slane %v9852, %v9865
    %v9867 = vcombine.low %v9859, %v9866
    %v9868 = vcombine.low %v8131, %v8135
    %v9869 = vcombine.low %v8139, %v8143
    %v9870 = vcombine.low %v8147, %v8151
    %v9871 = vcombine.low %v8155, %v8159
    %v9873 = vunpack.c.l.s4 1966171168
    %v9874 = vunpack.c.0.s8 %v9873
    %v9875 = vlaneseq
    %v9876 = vshrl.u32 %v9875, 7
    %v9877 = vsub.s32 %v9874, %v9876
    %v9878 = vrot.slane %v9868, %v9877
    %v9880 = vunpack.c.l.s4 1966171168
    %v9881 = vunpack.c.0.s8 %v9880
    %v9882 = vlaneseq
    %v9883 = vshrl.u32 %v9882, 7
    %v9884 = vsub.s32 %v9881, %v9883
    %v9885 = vrot.slane %v9869, %v9884
    %v9887 = vunpack.c.l.s4 1966171168
    %v9888 = vunpack.c.0.s8 %v9887
    %v9889 = vlaneseq
    %v9890 = vshrl.u32 %v9889, 7
    %v9891 = vsub.s32 %v9888, %v9890
    %v9892 = vrot.slane %v9870, %v9891
    %v9894 = vunpack.c.l.s4 1966171168
    %v9895 = vunpack.c.0.s8 %v9894
    %v9896 = vlaneseq
    %v9897 = vshrl.u32 %v9896, 7
    %v9898 = vsub.s32 %v9895, %v9897
    %v9899 = vrot.slane %v9871, %v9898
    %v9900 = vcombine.low %v9878, %v9885
    %v9901 = vcombine.low %v9892, %v9899
    %v9903 = vunpack.c.l.s4 1966171168
    %v9904 = vunpack.c.0.s8 %v9903
    %v9905 = vlaneseq
    %v9906 = vshrl.u32 %v9905, 7
    %v9907 = vsub.s32 %v9904, %v9906
    %v9908 = vrot.slane %v9900, %v9907
    %v9910 = vunpack.c.l.s4 1966171168
    %v9911 = vunpack.c.0.s8 %v9910
    %v9912 = vlaneseq
    %v9913 = vshrl.u32 %v9912, 7
    %v9914 = vsub.s32 %v9911, %v9913
    %v9915 = vrot.slane %v9901, %v9914
    %v9916 = vcombine.low %v9908, %v9915
    %v9917 = vcombine.low %v8163, %v8167
    %v9918 = vcombine.low %v8171, %v8175
    %v9919 = vcombine.low %v8179, %v8183
    %v9920 = vcombine.low %v8187, %v8191
    %v9922 = vunpack.c.l.s4 1966171168
    %v9923 = vunpack.c.0.s8 %v9922
    %v9924 = vlaneseq
    %v9925 = vshrl.u32 %v9924, 7
    %v9926 = vsub.s32 %v9923, %v9925
    %v9927 = vrot.slane %v9917, %v9926
    %v9929 = vunpack.c.l.s4 1966171168
    %v9930 = vunpack.c.0.s8 %v9929
    %v9931 = vlaneseq
    %v9932 = vshrl.u32 %v9931, 7
    %v9933 = vsub.s32 %v9930, %v9932
    %v9934 = vrot.slane %v9918, %v9933
    %v9936 = vunpack.c.l.s4 1966171168
    %v9937 = vunpack.c.0.s8 %v9936
    %v9938 = vlaneseq
    %v9939 = vshrl.u32 %v9938, 7
    %v9940 = vsub.s32 %v9937, %v9939
    %v9941 = vrot.slane %v9919, %v9940
    %v9943 = vunpack.c.l.s4 1966171168
    %v9944 = vunpack.c.0.s8 %v9943
    %v9945 = vlaneseq
    %v9946 = vshrl.u32 %v9945, 7
    %v9947 = vsub.s32 %v9944, %v9946
    %v9948 = vrot.slane %v9920, %v9947
    %v9949 = vcombine.low %v9927, %v9934
    %v9950 = vcombine.low %v9941, %v9948
    %v9952 = vunpack.c.l.s4 1966171168
    %v9953 = vunpack.c.0.s8 %v9952
    %v9954 = vlaneseq
    %v9955 = vshrl.u32 %v9954, 7
    %v9956 = vsub.s32 %v9953, %v9955
    %v9957 = vrot.slane %v9949, %v9956
    %v9959 = vunpack.c.l.s4 1966171168
    %v9960 = vunpack.c.0.s8 %v9959
    %v9961 = vlaneseq
    %v9962 = vshrl.u32 %v9961, 7
    %v9963 = vsub.s32 %v9960, %v9962
    %v9964 = vrot.slane %v9950, %v9963
    %v9965 = vcombine.low %v9957, %v9964
    %v9966 = vcombine.low %v8195, %v8199
    %v9967 = vcombine.low %v8203, %v8207
    %v9968 = vcombine.low %v8211, %v8215
    %v9969 = vcombine.low %v8219, %v8223
    %v9971 = vunpack.c.l.s4 1966171168
    %v9972 = vunpack.c.0.s8 %v9971
    %v9973 = vlaneseq
    %v9974 = vshrl.u32 %v9973, 7
    %v9975 = vsub.s32 %v9972, %v9974
    %v9976 = vrot.slane %v9966, %v9975
    %v9978 = vunpack.c.l.s4 1966171168
    %v9979 = vunpack.c.0.s8 %v9978
    %v9980 = vlaneseq
    %v9981 = vshrl.u32 %v9980, 7
    %v9982 = vsub.s32 %v9979, %v9981
    %v9983 = vrot.slane %v9967, %v9982
    %v9985 = vunpack.c.l.s4 1966171168
    %v9986 = vunpack.c.0.s8 %v9985
    %v9987 = vlaneseq
    %v9988 = vshrl.u32 %v9987, 7
    %v9989 = vsub.s32 %v9986, %v9988
    %v9990 = vrot.slane %v9968, %v9989
    %v9992 = vunpack.c.l.s4 1966171168
    %v9993 = vunpack.c.0.s8 %v9992
    %v9994 = vlaneseq
    %v9995 = vshrl.u32 %v9994, 7
    %v9996 = vsub.s32 %v9993, %v9995
    %v9997 = vrot.slane %v9969, %v9996
    %v9998 = vcombine.low %v9976, %v9983
    %v9999 = vcombine.low %v9990, %v9997
    %v10001 = vunpack.c.l.s4 1966171168
    %v10002 = vunpack.c.0.s8 %v10001
    %v10003 = vlaneseq
    %v10004 = vshrl.u32 %v10003, 7
    %v10005 = vsub.s32 %v10002, %v10004
    %v10006 = vrot.slane %v9998, %v10005
    %v10008 = vunpack.c.l.s4 1966171168
    %v10009 = vunpack.c.0.s8 %v10008
    %v10010 = vlaneseq
    %v10011 = vshrl.u32 %v10010, 7
    %v10012 = vsub.s32 %v10009, %v10011
    %v10013 = vrot.slane %v9999, %v10012
    %v10014 = vcombine.low %v10006, %v10013
    %v10015 = vcombine.low %v8227, %v8231
    %v10016 = vcombine.low %v8235, %v8239
    %v10017 = vcombine.low %v8243, %v8247
    %v10018 = vcombine.low %v8251, %v8255
    %v10020 = vunpack.c.l.s4 1966171168
    %v10021 = vunpack.c.0.s8 %v10020
    %v10022 = vlaneseq
    %v10023 = vshrl.u32 %v10022, 7
    %v10024 = vsub.s32 %v10021, %v10023
    %v10025 = vrot.slane %v10015, %v10024
    %v10027 = vunpack.c.l.s4 1966171168
    %v10028 = vunpack.c.0.s8 %v10027
    %v10029 = vlaneseq
    %v10030 = vshrl.u32 %v10029, 7
    %v10031 = vsub.s32 %v10028, %v10030
    %v10032 = vrot.slane %v10016, %v10031
    %v10034 = vunpack.c.l.s4 1966171168
    %v10035 = vunpack.c.0.s8 %v10034
    %v10036 = vlaneseq
    %v10037 = vshrl.u32 %v10036, 7
    %v10038 = vsub.s32 %v10035, %v10037
    %v10039 = vrot.slane %v10017, %v10038
    %v10041 = vunpack.c.l.s4 1966171168
    %v10042 = vunpack.c.0.s8 %v10041
    %v10043 = vlaneseq
    %v10044 = vshrl.u32 %v10043, 7
    %v10045 = vsub.s32 %v10042, %v10044
    %v10046 = vrot.slane %v10018, %v10045
    %v10047 = vcombine.low %v10025, %v10032
    %v10048 = vcombine.low %v10039, %v10046
    %v10050 = vunpack.c.l.s4 1966171168
    %v10051 = vunpack.c.0.s8 %v10050
    %v10052 = vlaneseq
    %v10053 = vshrl.u32 %v10052, 7
    %v10054 = vsub.s32 %v10051, %v10053
    %v10055 = vrot.slane %v10047, %v10054
    %v10057 = vunpack.c.l.s4 1966171168
    %v10058 = vunpack.c.0.s8 %v10057
    %v10059 = vlaneseq
    %v10060 = vshrl.u32 %v10059, 7
    %v10061 = vsub.s32 %v10058, %v10060
    %v10062 = vrot.slane %v10048, %v10061
    %v10063 = vcombine.low %v10055, %v10062
    %v10064 = vcombine.low %v8259, %v8263
    %v10065 = vcombine.low %v8267, %v8271
    %v10066 = vcombine.low %v8275, %v8279
    %v10067 = vcombine.low %v8283, %v8287
    %v10069 = vunpack.c.l.s4 1966171168
    %v10070 = vunpack.c.0.s8 %v10069
    %v10071 = vlaneseq
    %v10072 = vshrl.u32 %v10071, 7
    %v10073 = vsub.s32 %v10070, %v10072
    %v10074 = vrot.slane %v10064, %v10073
    %v10076 = vunpack.c.l.s4 1966171168
    %v10077 = vunpack.c.0.s8 %v10076
    %v10078 = vlaneseq
    %v10079 = vshrl.u32 %v10078, 7
    %v10080 = vsub.s32 %v10077, %v10079
    %v10081 = vrot.slane %v10065, %v10080
    %v10083 = vunpack.c.l.s4 1966171168
    %v10084 = vunpack.c.0.s8 %v10083
    %v10085 = vlaneseq
    %v10086 = vshrl.u32 %v10085, 7
    %v10087 = vsub.s32 %v10084, %v10086
    %v10088 = vrot.slane %v10066, %v10087
    %v10090 = vunpack.c.l.s4 1966171168
    %v10091 = vunpack.c.0.s8 %v10090
    %v10092 = vlaneseq
    %v10093 = vshrl.u32 %v10092, 7
    %v10094 = vsub.s32 %v10091, %v10093
    %v10095 = vrot.slane %v10067, %v10094
    %v10096 = vcombine.low %v10074, %v10081
    %v10097 = vcombine.low %v10088, %v10095
    %v10099 = vunpack.c.l.s4 1966171168
    %v10100 = vunpack.c.0.s8 %v10099
    %v10101 = vlaneseq
    %v10102 = vshrl.u32 %v10101, 7
    %v10103 = vsub.s32 %v10100, %v10102
    %v10104 = vrot.slane %v10096, %v10103
    %v10106 = vunpack.c.l.s4 1966171168
    %v10107 = vunpack.c.0.s8 %v10106
    %v10108 = vlaneseq
    %v10109 = vshrl.u32 %v10108, 7
    %v10110 = vsub.s32 %v10107, %v10109
    %v10111 = vrot.slane %v10097, %v10110
    %v10112 = vcombine.low %v10104, %v10111
    %v10113 = vcombine.low %v8291, %v8295
    %v10114 = vcombine.low %v8299, %v8303
    %v10115 = vcombine.low %v8307, %v8311
    %v10116 = vcombine.low %v8315, %v8319
    %v10118 = vunpack.c.l.s4 1966171168
    %v10119 = vunpack.c.0.s8 %v10118
    %v10120 = vlaneseq
    %v10121 = vshrl.u32 %v10120, 7
    %v10122 = vsub.s32 %v10119, %v10121
    %v10123 = vrot.slane %v10113, %v10122
    %v10125 = vunpack.c.l.s4 1966171168
    %v10126 = vunpack.c.0.s8 %v10125
    %v10127 = vlaneseq
    %v10128 = vshrl.u32 %v10127, 7
    %v10129 = vsub.s32 %v10126, %v10128
    %v10130 = vrot.slane %v10114, %v10129
    %v10132 = vunpack.c.l.s4 1966171168
    %v10133 = vunpack.c.0.s8 %v10132
    %v10134 = vlaneseq
    %v10135 = vshrl.u32 %v10134, 7
    %v10136 = vsub.s32 %v10133, %v10135
    %v10137 = vrot.slane %v10115, %v10136
    %v10139 = vunpack.c.l.s4 1966171168
    %v10140 = vunpack.c.0.s8 %v10139
    %v10141 = vlaneseq
    %v10142 = vshrl.u32 %v10141, 7
    %v10143 = vsub.s32 %v10140, %v10142
    %v10144 = vrot.slane %v10116, %v10143
    %v10145 = vcombine.low %v10123, %v10130
    %v10146 = vcombine.low %v10137, %v10144
    %v10148 = vunpack.c.l.s4 1966171168
    %v10149 = vunpack.c.0.s8 %v10148
    %v10150 = vlaneseq
    %v10151 = vshrl.u32 %v10150, 7
    %v10152 = vsub.s32 %v10149, %v10151
    %v10153 = vrot.slane %v10145, %v10152
    %v10155 = vunpack.c.l.s4 1966171168
    %v10156 = vunpack.c.0.s8 %v10155
    %v10157 = vlaneseq
    %v10158 = vshrl.u32 %v10157, 7
    %v10159 = vsub.s32 %v10156, %v10158
    %v10160 = vrot.slane %v10146, %v10159
    %v10161 = vcombine.low %v10153, %v10160
    %v10162 = vcombine.low %v8323, %v8327
    %v10163 = vcombine.low %v8331, %v8335
    %v10164 = vcombine.low %v8339, %v8343
    %v10165 = vcombine.low %v8347, %v8351
    %v10167 = vunpack.c.l.s4 1966171168
    %v10168 = vunpack.c.0.s8 %v10167
    %v10169 = vlaneseq
    %v10170 = vshrl.u32 %v10169, 7
    %v10171 = vsub.s32 %v10168, %v10170
    %v10172 = vrot.slane %v10162, %v10171
    %v10174 = vunpack.c.l.s4 1966171168
    %v10175 = vunpack.c.0.s8 %v10174
    %v10176 = vlaneseq
    %v10177 = vshrl.u32 %v10176, 7
    %v10178 = vsub.s32 %v10175, %v10177
    %v10179 = vrot.slane %v10163, %v10178
    %v10181 = vunpack.c.l.s4 1966171168
    %v10182 = vunpack.c.0.s8 %v10181
    %v10183 = vlaneseq
    %v10184 = vshrl.u32 %v10183, 7
    %v10185 = vsub.s32 %v10182, %v10184
    %v10186 = vrot.slane %v10164, %v10185
    %v10188 = vunpack.c.l.s4 1966171168
    %v10189 = vunpack.c.0.s8 %v10188
    %v10190 = vlaneseq
    %v10191 = vshrl.u32 %v10190, 7
    %v10192 = vsub.s32 %v10189, %v10191
    %v10193 = vrot.slane %v10165, %v10192
    %v10194 = vcombine.low %v10172, %v10179
    %v10195 = vcombine.low %v10186, %v10193
    %v10197 = vunpack.c.l.s4 1966171168
    %v10198 = vunpack.c.0.s8 %v10197
    %v10199 = vlaneseq
    %v10200 = vshrl.u32 %v10199, 7
    %v10201 = vsub.s32 %v10198, %v10200
    %v10202 = vrot.slane %v10194, %v10201
    %v10204 = vunpack.c.l.s4 1966171168
    %v10205 = vunpack.c.0.s8 %v10204
    %v10206 = vlaneseq
    %v10207 = vshrl.u32 %v10206, 7
    %v10208 = vsub.s32 %v10205, %v10207
    %v10209 = vrot.slane %v10195, %v10208
    %v10210 = vcombine.low %v10202, %v10209
    %v10211 = vcombine.low %v8355, %v8359
    %v10212 = vcombine.low %v8363, %v8367
    %v10213 = vcombine.low %v8371, %v8375
    %v10214 = vcombine.low %v8379, %v8383
    %v10216 = vunpack.c.l.s4 1966171168
    %v10217 = vunpack.c.0.s8 %v10216
    %v10218 = vlaneseq
    %v10219 = vshrl.u32 %v10218, 7
    %v10220 = vsub.s32 %v10217, %v10219
    %v10221 = vrot.slane %v10211, %v10220
    %v10223 = vunpack.c.l.s4 1966171168
    %v10224 = vunpack.c.0.s8 %v10223
    %v10225 = vlaneseq
    %v10226 = vshrl.u32 %v10225, 7
    %v10227 = vsub.s32 %v10224, %v10226
    %v10228 = vrot.slane %v10212, %v10227
    %v10230 = vunpack.c.l.s4 1966171168
    %v10231 = vunpack.c.0.s8 %v10230
    %v10232 = vlaneseq
    %v10233 = vshrl.u32 %v10232, 7
    %v10234 = vsub.s32 %v10231, %v10233
    %v10235 = vrot.slane %v10213, %v10234
    %v10237 = vunpack.c.l.s4 1966171168
    %v10238 = vunpack.c.0.s8 %v10237
    %v10239 = vlaneseq
    %v10240 = vshrl.u32 %v10239, 7
    %v10241 = vsub.s32 %v10238, %v10240
    %v10242 = vrot.slane %v10214, %v10241
    %v10243 = vcombine.low %v10221, %v10228
    %v10244 = vcombine.low %v10235, %v10242
    %v10246 = vunpack.c.l.s4 1966171168
    %v10247 = vunpack.c.0.s8 %v10246
    %v10248 = vlaneseq
    %v10249 = vshrl.u32 %v10248, 7
    %v10250 = vsub.s32 %v10247, %v10249
    %v10251 = vrot.slane %v10243, %v10250
    %v10253 = vunpack.c.l.s4 1966171168
    %v10254 = vunpack.c.0.s8 %v10253
    %v10255 = vlaneseq
    %v10256 = vshrl.u32 %v10255, 7
    %v10257 = vsub.s32 %v10254, %v10256
    %v10258 = vrot.slane %v10244, %v10257
    %v10259 = vcombine.low %v10251, %v10258
    %v10260 = vcombine.low %v8387, %v8391
    %v10261 = vcombine.low %v8395, %v8399
    %v10262 = vcombine.low %v8403, %v8407
    %v10263 = vcombine.low %v8411, %v8415
    %v10265 = vunpack.c.l.s4 1966171168
    %v10266 = vunpack.c.0.s8 %v10265
    %v10267 = vlaneseq
    %v10268 = vshrl.u32 %v10267, 7
    %v10269 = vsub.s32 %v10266, %v10268
    %v10270 = vrot.slane %v10260, %v10269
    %v10272 = vunpack.c.l.s4 1966171168
    %v10273 = vunpack.c.0.s8 %v10272
    %v10274 = vlaneseq
    %v10275 = vshrl.u32 %v10274, 7
    %v10276 = vsub.s32 %v10273, %v10275
    %v10277 = vrot.slane %v10261, %v10276
    %v10279 = vunpack.c.l.s4 1966171168
    %v10280 = vunpack.c.0.s8 %v10279
    %v10281 = vlaneseq
    %v10282 = vshrl.u32 %v10281, 7
    %v10283 = vsub.s32 %v10280, %v10282
    %v10284 = vrot.slane %v10262, %v10283
    %v10286 = vunpack.c.l.s4 1966171168
    %v10287 = vunpack.c.0.s8 %v10286
    %v10288 = vlaneseq
    %v10289 = vshrl.u32 %v10288, 7
    %v10290 = vsub.s32 %v10287, %v10289
    %v10291 = vrot.slane %v10263, %v10290
    %v10292 = vcombine.low %v10270, %v10277
    %v10293 = vcombine.low %v10284, %v10291
    %v10295 = vunpack.c.l.s4 1966171168
    %v10296 = vunpack.c.0.s8 %v10295
    %v10297 = vlaneseq
    %v10298 = vshrl.u32 %v10297, 7
    %v10299 = vsub.s32 %v10296, %v10298
    %v10300 = vrot.slane %v10292, %v10299
    %v10302 = vunpack.c.l.s4 1966171168
    %v10303 = vunpack.c.0.s8 %v10302
    %v10304 = vlaneseq
    %v10305 = vshrl.u32 %v10304, 7
    %v10306 = vsub.s32 %v10303, %v10305
    %v10307 = vrot.slane %v10293, %v10306
    %v10308 = vcombine.low %v10300, %v10307
    %v10309 = vcombine.low %v8419, %v8423
    %v10310 = vcombine.low %v8427, %v8431
    %v10311 = vcombine.low %v8435, %v8439
    %v10312 = vcombine.low %v8443, %v8447
    %v10314 = vunpack.c.l.s4 1966171168
    %v10315 = vunpack.c.0.s8 %v10314
    %v10316 = vlaneseq
    %v10317 = vshrl.u32 %v10316, 7
    %v10318 = vsub.s32 %v10315, %v10317
    %v10319 = vrot.slane %v10309, %v10318
    %v10321 = vunpack.c.l.s4 1966171168
    %v10322 = vunpack.c.0.s8 %v10321
    %v10323 = vlaneseq
    %v10324 = vshrl.u32 %v10323, 7
    %v10325 = vsub.s32 %v10322, %v10324
    %v10326 = vrot.slane %v10310, %v10325
    %v10328 = vunpack.c.l.s4 1966171168
    %v10329 = vunpack.c.0.s8 %v10328
    %v10330 = vlaneseq
    %v10331 = vshrl.u32 %v10330, 7
    %v10332 = vsub.s32 %v10329, %v10331
    %v10333 = vrot.slane %v10311, %v10332
    %v10335 = vunpack.c.l.s4 1966171168
    %v10336 = vunpack.c.0.s8 %v10335
    %v10337 = vlaneseq
    %v10338 = vshrl.u32 %v10337, 7
    %v10339 = vsub.s32 %v10336, %v10338
    %v10340 = vrot.slane %v10312, %v10339
    %v10341 = vcombine.low %v10319, %v10326
    %v10342 = vcombine.low %v10333, %v10340
    %v10344 = vunpack.c.l.s4 1966171168
    %v10345 = vunpack.c.0.s8 %v10344
    %v10346 = vlaneseq
    %v10347 = vshrl.u32 %v10346, 7
    %v10348 = vsub.s32 %v10345, %v10347
    %v10349 = vrot.slane %v10341, %v10348
    %v10351 = vunpack.c.l.s4 1966171168
    %v10352 = vunpack.c.0.s8 %v10351
    %v10353 = vlaneseq
    %v10354 = vshrl.u32 %v10353, 7
    %v10355 = vsub.s32 %v10352, %v10354
    %v10356 = vrot.slane %v10342, %v10355
    %v10357 = vcombine.low %v10349, %v10356
    %v10358 = vcombine.low %v8451, %v8455
    %v10359 = vcombine.low %v8459, %v8463
    %v10360 = vcombine.low %v8467, %v8471
    %v10361 = vcombine.low %v8475, %v8479
    %v10363 = vunpack.c.l.s4 1966171168
    %v10364 = vunpack.c.0.s8 %v10363
    %v10365 = vlaneseq
    %v10366 = vshrl.u32 %v10365, 7
    %v10367 = vsub.s32 %v10364, %v10366
    %v10368 = vrot.slane %v10358, %v10367
    %v10370 = vunpack.c.l.s4 1966171168
    %v10371 = vunpack.c.0.s8 %v10370
    %v10372 = vlaneseq
    %v10373 = vshrl.u32 %v10372, 7
    %v10374 = vsub.s32 %v10371, %v10373
    %v10375 = vrot.slane %v10359, %v10374
    %v10377 = vunpack.c.l.s4 1966171168
    %v10378 = vunpack.c.0.s8 %v10377
    %v10379 = vlaneseq
    %v10380 = vshrl.u32 %v10379, 7
    %v10381 = vsub.s32 %v10378, %v10380
    %v10382 = vrot.slane %v10360, %v10381
    %v10384 = vunpack.c.l.s4 1966171168
    %v10385 = vunpack.c.0.s8 %v10384
    %v10386 = vlaneseq
    %v10387 = vshrl.u32 %v10386, 7
    %v10388 = vsub.s32 %v10385, %v10387
    %v10389 = vrot.slane %v10361, %v10388
    %v10390 = vcombine.low %v10368, %v10375
    %v10391 = vcombine.low %v10382, %v10389
    %v10393 = vunpack.c.l.s4 1966171168
    %v10394 = vunpack.c.0.s8 %v10393
    %v10395 = vlaneseq
    %v10396 = vshrl.u32 %v10395, 7
    %v10397 = vsub.s32 %v10394, %v10396
    %v10398 = vrot.slane %v10390, %v10397
    %v10400 = vunpack.c.l.s4 1966171168
    %v10401 = vunpack.c.0.s8 %v10400
    %v10402 = vlaneseq
    %v10403 = vshrl.u32 %v10402, 7
    %v10404 = vsub.s32 %v10401, %v10403
    %v10405 = vrot.slane %v10391, %v10404
    %v10406 = vcombine.low %v10398, %v10405
    %v10407 = vcombine.low %v8483, %v8487
    %v10408 = vcombine.low %v8491, %v8495
    %v10409 = vcombine.low %v8499, %v8503
    %v10410 = vcombine.low %v8507, %v8511
    %v10412 = vunpack.c.l.s4 1966171168
    %v10413 = vunpack.c.0.s8 %v10412
    %v10414 = vlaneseq
    %v10415 = vshrl.u32 %v10414, 7
    %v10416 = vsub.s32 %v10413, %v10415
    %v10417 = vrot.slane %v10407, %v10416
    %v10419 = vunpack.c.l.s4 1966171168
    %v10420 = vunpack.c.0.s8 %v10419
    %v10421 = vlaneseq
    %v10422 = vshrl.u32 %v10421, 7
    %v10423 = vsub.s32 %v10420, %v10422
    %v10424 = vrot.slane %v10408, %v10423
    %v10426 = vunpack.c.l.s4 1966171168
    %v10427 = vunpack.c.0.s8 %v10426
    %v10428 = vlaneseq
    %v10429 = vshrl.u32 %v10428, 7
    %v10430 = vsub.s32 %v10427, %v10429
    %v10431 = vrot.slane %v10409, %v10430
    %v10433 = vunpack.c.l.s4 1966171168
    %v10434 = vunpack.c.0.s8 %v10433
    %v10435 = vlaneseq
    %v10436 = vshrl.u32 %v10435, 7
    %v10437 = vsub.s32 %v10434, %v10436
    %v10438 = vrot.slane %v10410, %v10437
    %v10439 = vcombine.low %v10417, %v10424
    %v10440 = vcombine.low %v10431, %v10438
    %v10442 = vunpack.c.l.s4 1966171168
    %v10443 = vunpack.c.0.s8 %v10442
    %v10444 = vlaneseq
    %v10445 = vshrl.u32 %v10444, 7
    %v10446 = vsub.s32 %v10443, %v10445
    %v10447 = vrot.slane %v10439, %v10446
    %v10449 = vunpack.c.l.s4 1966171168
    %v10450 = vunpack.c.0.s8 %v10449
    %v10451 = vlaneseq
    %v10452 = vshrl.u32 %v10451, 7
    %v10453 = vsub.s32 %v10450, %v10452
    %v10454 = vrot.slane %v10440, %v10453
    %v10455 = vcombine.low %v10447, %v10454
    %v10456 = vcombine.low %v8515, %v8519
    %v10457 = vcombine.low %v8523, %v8527
    %v10458 = vcombine.low %v8531, %v8535
    %v10459 = vcombine.low %v8539, %v8543
    %v10461 = vunpack.c.l.s4 1966171168
    %v10462 = vunpack.c.0.s8 %v10461
    %v10463 = vlaneseq
    %v10464 = vshrl.u32 %v10463, 7
    %v10465 = vsub.s32 %v10462, %v10464
    %v10466 = vrot.slane %v10456, %v10465
    %v10468 = vunpack.c.l.s4 1966171168
    %v10469 = vunpack.c.0.s8 %v10468
    %v10470 = vlaneseq
    %v10471 = vshrl.u32 %v10470, 7
    %v10472 = vsub.s32 %v10469, %v10471
    %v10473 = vrot.slane %v10457, %v10472
    %v10475 = vunpack.c.l.s4 1966171168
    %v10476 = vunpack.c.0.s8 %v10475
    %v10477 = vlaneseq
    %v10478 = vshrl.u32 %v10477, 7
    %v10479 = vsub.s32 %v10476, %v10478
    %v10480 = vrot.slane %v10458, %v10479
    %v10482 = vunpack.c.l.s4 1966171168
    %v10483 = vunpack.c.0.s8 %v10482
    %v10484 = vlaneseq
    %v10485 = vshrl.u32 %v10484, 7
    %v10486 = vsub.s32 %v10483, %v10485
    %v10487 = vrot.slane %v10459, %v10486
    %v10488 = vcombine.low %v10466, %v10473
    %v10489 = vcombine.low %v10480, %v10487
    %v10491 = vunpack.c.l.s4 1966171168
    %v10492 = vunpack.c.0.s8 %v10491
    %v10493 = vlaneseq
    %v10494 = vshrl.u32 %v10493, 7
    %v10495 = vsub.s32 %v10492, %v10494
    %v10496 = vrot.slane %v10488, %v10495
    %v10498 = vunpack.c.l.s4 1966171168
    %v10499 = vunpack.c.0.s8 %v10498
    %v10500 = vlaneseq
    %v10501 = vshrl.u32 %v10500, 7
    %v10502 = vsub.s32 %v10499, %v10501
    %v10503 = vrot.slane %v10489, %v10502
    %v10504 = vcombine.low %v10496, %v10503
    %v10505 = vcombine.low %v8547, %v8551
    %v10506 = vcombine.low %v8555, %v8559
    %v10507 = vcombine.low %v8563, %v8567
    %v10508 = vcombine.low %v8571, %v8575
    %v10510 = vunpack.c.l.s4 1966171168
    %v10511 = vunpack.c.0.s8 %v10510
    %v10512 = vlaneseq
    %v10513 = vshrl.u32 %v10512, 7
    %v10514 = vsub.s32 %v10511, %v10513
    %v10515 = vrot.slane %v10505, %v10514
    %v10517 = vunpack.c.l.s4 1966171168
    %v10518 = vunpack.c.0.s8 %v10517
    %v10519 = vlaneseq
    %v10520 = vshrl.u32 %v10519, 7
    %v10521 = vsub.s32 %v10518, %v10520
    %v10522 = vrot.slane %v10506, %v10521
    %v10524 = vunpack.c.l.s4 1966171168
    %v10525 = vunpack.c.0.s8 %v10524
    %v10526 = vlaneseq
    %v10527 = vshrl.u32 %v10526, 7
    %v10528 = vsub.s32 %v10525, %v10527
    %v10529 = vrot.slane %v10507, %v10528
    %v10531 = vunpack.c.l.s4 1966171168
    %v10532 = vunpack.c.0.s8 %v10531
    %v10533 = vlaneseq
    %v10534 = vshrl.u32 %v10533, 7
    %v10535 = vsub.s32 %v10532, %v10534
    %v10536 = vrot.slane %v10508, %v10535
    %v10537 = vcombine.low %v10515, %v10522
    %v10538 = vcombine.low %v10529, %v10536
    %v10540 = vunpack.c.l.s4 1966171168
    %v10541 = vunpack.c.0.s8 %v10540
    %v10542 = vlaneseq
    %v10543 = vshrl.u32 %v10542, 7
    %v10544 = vsub.s32 %v10541, %v10543
    %v10545 = vrot.slane %v10537, %v10544
    %v10547 = vunpack.c.l.s4 1966171168
    %v10548 = vunpack.c.0.s8 %v10547
    %v10549 = vlaneseq
    %v10550 = vshrl.u32 %v10549, 7
    %v10551 = vsub.s32 %v10548, %v10550
    %v10552 = vrot.slane %v10538, %v10551
    %v10553 = vcombine.low %v10545, %v10552
    %v10554 = vcombine.low %v8579, %v8583
    %v10555 = vcombine.low %v8587, %v8591
    %v10556 = vcombine.low %v8595, %v8599
    %v10557 = vcombine.low %v8603, %v8607
    %v10559 = vunpack.c.l.s4 1966171168
    %v10560 = vunpack.c.0.s8 %v10559
    %v10561 = vlaneseq
    %v10562 = vshrl.u32 %v10561, 7
    %v10563 = vsub.s32 %v10560, %v10562
    %v10564 = vrot.slane %v10554, %v10563
    %v10566 = vunpack.c.l.s4 1966171168
    %v10567 = vunpack.c.0.s8 %v10566
    %v10568 = vlaneseq
    %v10569 = vshrl.u32 %v10568, 7
    %v10570 = vsub.s32 %v10567, %v10569
    %v10571 = vrot.slane %v10555, %v10570
    %v10573 = vunpack.c.l.s4 1966171168
    %v10574 = vunpack.c.0.s8 %v10573
    %v10575 = vlaneseq
    %v10576 = vshrl.u32 %v10575, 7
    %v10577 = vsub.s32 %v10574, %v10576
    %v10578 = vrot.slane %v10556, %v10577
    %v10580 = vunpack.c.l.s4 1966171168
    %v10581 = vunpack.c.0.s8 %v10580
    %v10582 = vlaneseq
    %v10583 = vshrl.u32 %v10582, 7
    %v10584 = vsub.s32 %v10581, %v10583
    %v10585 = vrot.slane %v10557, %v10584
    %v10586 = vcombine.low %v10564, %v10571
    %v10587 = vcombine.low %v10578, %v10585
    %v10589 = vunpack.c.l.s4 1966171168
    %v10590 = vunpack.c.0.s8 %v10589
    %v10591 = vlaneseq
    %v10592 = vshrl.u32 %v10591, 7
    %v10593 = vsub.s32 %v10590, %v10592
    %v10594 = vrot.slane %v10586, %v10593
    %v10596 = vunpack.c.l.s4 1966171168
    %v10597 = vunpack.c.0.s8 %v10596
    %v10598 = vlaneseq
    %v10599 = vshrl.u32 %v10598, 7
    %v10600 = vsub.s32 %v10597, %v10599
    %v10601 = vrot.slane %v10587, %v10600
    %v10602 = vcombine.low %v10594, %v10601
    %v10603 = vcombine.low %v8611, %v8615
    %v10604 = vcombine.low %v8619, %v8623
    %v10605 = vcombine.low %v8627, %v8631
    %v10606 = vcombine.low %v8635, %v8639
    %v10608 = vunpack.c.l.s4 1966171168
    %v10609 = vunpack.c.0.s8 %v10608
    %v10610 = vlaneseq
    %v10611 = vshrl.u32 %v10610, 7
    %v10612 = vsub.s32 %v10609, %v10611
    %v10613 = vrot.slane %v10603, %v10612
    %v10615 = vunpack.c.l.s4 1966171168
    %v10616 = vunpack.c.0.s8 %v10615
    %v10617 = vlaneseq
    %v10618 = vshrl.u32 %v10617, 7
    %v10619 = vsub.s32 %v10616, %v10618
    %v10620 = vrot.slane %v10604, %v10619
    %v10622 = vunpack.c.l.s4 1966171168
    %v10623 = vunpack.c.0.s8 %v10622
    %v10624 = vlaneseq
    %v10625 = vshrl.u32 %v10624, 7
    %v10626 = vsub.s32 %v10623, %v10625
    %v10627 = vrot.slane %v10605, %v10626
    %v10629 = vunpack.c.l.s4 1966171168
    %v10630 = vunpack.c.0.s8 %v10629
    %v10631 = vlaneseq
    %v10632 = vshrl.u32 %v10631, 7
    %v10633 = vsub.s32 %v10630, %v10632
    %v10634 = vrot.slane %v10606, %v10633
    %v10635 = vcombine.low %v10613, %v10620
    %v10636 = vcombine.low %v10627, %v10634
    %v10638 = vunpack.c.l.s4 1966171168
    %v10639 = vunpack.c.0.s8 %v10638
    %v10640 = vlaneseq
    %v10641 = vshrl.u32 %v10640, 7
    %v10642 = vsub.s32 %v10639, %v10641
    %v10643 = vrot.slane %v10635, %v10642
    %v10645 = vunpack.c.l.s4 1966171168
    %v10646 = vunpack.c.0.s8 %v10645
    %v10647 = vlaneseq
    %v10648 = vshrl.u32 %v10647, 7
    %v10649 = vsub.s32 %v10646, %v10648
    %v10650 = vrot.slane %v10636, %v10649
    %v10651 = vcombine.low %v10643, %v10650
    %v10652 = vcombine.low %v8643, %v8647
    %v10653 = vcombine.low %v8651, %v8655
    %v10654 = vcombine.low %v8659, %v8663
    %v10655 = vcombine.low %v8667, %v8671
    %v10657 = vunpack.c.l.s4 1966171168
    %v10658 = vunpack.c.0.s8 %v10657
    %v10659 = vlaneseq
    %v10660 = vshrl.u32 %v10659, 7
    %v10661 = vsub.s32 %v10658, %v10660
    %v10662 = vrot.slane %v10652, %v10661
    %v10664 = vunpack.c.l.s4 1966171168
    %v10665 = vunpack.c.0.s8 %v10664
    %v10666 = vlaneseq
    %v10667 = vshrl.u32 %v10666, 7
    %v10668 = vsub.s32 %v10665, %v10667
    %v10669 = vrot.slane %v10653, %v10668
    %v10671 = vunpack.c.l.s4 1966171168
    %v10672 = vunpack.c.0.s8 %v10671
    %v10673 = vlaneseq
    %v10674 = vshrl.u32 %v10673, 7
    %v10675 = vsub.s32 %v10672, %v10674
    %v10676 = vrot.slane %v10654, %v10675
    %v10678 = vunpack.c.l.s4 1966171168
    %v10679 = vunpack.c.0.s8 %v10678
    %v10680 = vlaneseq
    %v10681 = vshrl.u32 %v10680, 7
    %v10682 = vsub.s32 %v10679, %v10681
    %v10683 = vrot.slane %v10655, %v10682
    %v10684 = vcombine.low %v10662, %v10669
    %v10685 = vcombine.low %v10676, %v10683
    %v10687 = vunpack.c.l.s4 1966171168
    %v10688 = vunpack.c.0.s8 %v10687
    %v10689 = vlaneseq
    %v10690 = vshrl.u32 %v10689, 7
    %v10691 = vsub.s32 %v10688, %v10690
    %v10692 = vrot.slane %v10684, %v10691
    %v10694 = vunpack.c.l.s4 1966171168
    %v10695 = vunpack.c.0.s8 %v10694
    %v10696 = vlaneseq
    %v10697 = vshrl.u32 %v10696, 7
    %v10698 = vsub.s32 %v10695, %v10697
    %v10699 = vrot.slane %v10685, %v10698
    %v10700 = vcombine.low %v10692, %v10699
    %v10701 = vcombine.low %v8675, %v8679
    %v10702 = vcombine.low %v8683, %v8687
    %v10703 = vcombine.low %v8691, %v8695
    %v10704 = vcombine.low %v8699, %v8703
    %v10706 = vunpack.c.l.s4 1966171168
    %v10707 = vunpack.c.0.s8 %v10706
    %v10708 = vlaneseq
    %v10709 = vshrl.u32 %v10708, 7
    %v10710 = vsub.s32 %v10707, %v10709
    %v10711 = vrot.slane %v10701, %v10710
    %v10713 = vunpack.c.l.s4 1966171168
    %v10714 = vunpack.c.0.s8 %v10713
    %v10715 = vlaneseq
    %v10716 = vshrl.u32 %v10715, 7
    %v10717 = vsub.s32 %v10714, %v10716
    %v10718 = vrot.slane %v10702, %v10717
    %v10720 = vunpack.c.l.s4 1966171168
    %v10721 = vunpack.c.0.s8 %v10720
    %v10722 = vlaneseq
    %v10723 = vshrl.u32 %v10722, 7
    %v10724 = vsub.s32 %v10721, %v10723
    %v10725 = vrot.slane %v10703, %v10724
    %v10727 = vunpack.c.l.s4 1966171168
    %v10728 = vunpack.c.0.s8 %v10727
    %v10729 = vlaneseq
    %v10730 = vshrl.u32 %v10729, 7
    %v10731 = vsub.s32 %v10728, %v10730
    %v10732 = vrot.slane %v10704, %v10731
    %v10733 = vcombine.low %v10711, %v10718
    %v10734 = vcombine.low %v10725, %v10732
    %v10736 = vunpack.c.l.s4 1966171168
    %v10737 = vunpack.c.0.s8 %v10736
    %v10738 = vlaneseq
    %v10739 = vshrl.u32 %v10738, 7
    %v10740 = vsub.s32 %v10737, %v10739
    %v10741 = vrot.slane %v10733, %v10740
    %v10743 = vunpack.c.l.s4 1966171168
    %v10744 = vunpack.c.0.s8 %v10743
    %v10745 = vlaneseq
    %v10746 = vshrl.u32 %v10745, 7
    %v10747 = vsub.s32 %v10744, %v10746
    %v10748 = vrot.slane %v10734, %v10747
    %v10749 = vcombine.low %v10741, %v10748
    %v10750 = vcombine.low %v8707, %v8711
    %v10751 = vcombine.low %v8715, %v8719
    %v10752 = vcombine.low %v8723, %v8727
    %v10753 = vcombine.low %v8731, %v8735
    %v10755 = vunpack.c.l.s4 1966171168
    %v10756 = vunpack.c.0.s8 %v10755
    %v10757 = vlaneseq
    %v10758 = vshrl.u32 %v10757, 7
    %v10759 = vsub.s32 %v10756, %v10758
    %v10760 = vrot.slane %v10750, %v10759
    %v10762 = vunpack.c.l.s4 1966171168
    %v10763 = vunpack.c.0.s8 %v10762
    %v10764 = vlaneseq
    %v10765 = vshrl.u32 %v10764, 7
    %v10766 = vsub.s32 %v10763, %v10765
    %v10767 = vrot.slane %v10751, %v10766
    %v10769 = vunpack.c.l.s4 1966171168
    %v10770 = vunpack.c.0.s8 %v10769
    %v10771 = vlaneseq
    %v10772 = vshrl.u32 %v10771, 7
    %v10773 = vsub.s32 %v10770, %v10772
    %v10774 = vrot.slane %v10752, %v10773
    %v10776 = vunpack.c.l.s4 1966171168
    %v10777 = vunpack.c.0.s8 %v10776
    %v10778 = vlaneseq
    %v10779 = vshrl.u32 %v10778, 7
    %v10780 = vsub.s32 %v10777, %v10779
    %v10781 = vrot.slane %v10753, %v10780
    %v10782 = vcombine.low %v10760, %v10767
    %v10783 = vcombine.low %v10774, %v10781
    %v10785 = vunpack.c.l.s4 1966171168
    %v10786 = vunpack.c.0.s8 %v10785
    %v10787 = vlaneseq
    %v10788 = vshrl.u32 %v10787, 7
    %v10789 = vsub.s32 %v10786, %v10788
    %v10790 = vrot.slane %v10782, %v10789
    %v10792 = vunpack.c.l.s4 1966171168
    %v10793 = vunpack.c.0.s8 %v10792
    %v10794 = vlaneseq
    %v10795 = vshrl.u32 %v10794, 7
    %v10796 = vsub.s32 %v10793, %v10795
    %v10797 = vrot.slane %v10783, %v10796
    %v10798 = vcombine.low %v10790, %v10797
    %v10799 = vcombine.low %v8739, %v8743
    %v10800 = vcombine.low %v8747, %v8751
    %v10801 = vcombine.low %v8755, %v8759
    %v10802 = vcombine.low %v8763, %v8767
    %v10804 = vunpack.c.l.s4 1966171168
    %v10805 = vunpack.c.0.s8 %v10804
    %v10806 = vlaneseq
    %v10807 = vshrl.u32 %v10806, 7
    %v10808 = vsub.s32 %v10805, %v10807
    %v10809 = vrot.slane %v10799, %v10808
    %v10811 = vunpack.c.l.s4 1966171168
    %v10812 = vunpack.c.0.s8 %v10811
    %v10813 = vlaneseq
    %v10814 = vshrl.u32 %v10813, 7
    %v10815 = vsub.s32 %v10812, %v10814
    %v10816 = vrot.slane %v10800, %v10815
    %v10818 = vunpack.c.l.s4 1966171168
    %v10819 = vunpack.c.0.s8 %v10818
    %v10820 = vlaneseq
    %v10821 = vshrl.u32 %v10820, 7
    %v10822 = vsub.s32 %v10819, %v10821
    %v10823 = vrot.slane %v10801, %v10822
    %v10825 = vunpack.c.l.s4 1966171168
    %v10826 = vunpack.c.0.s8 %v10825
    %v10827 = vlaneseq
    %v10828 = vshrl.u32 %v10827, 7
    %v10829 = vsub.s32 %v10826, %v10828
    %v10830 = vrot.slane %v10802, %v10829
    %v10831 = vcombine.low %v10809, %v10816
    %v10832 = vcombine.low %v10823, %v10830
    %v10834 = vunpack.c.l.s4 1966171168
    %v10835 = vunpack.c.0.s8 %v10834
    %v10836 = vlaneseq
    %v10837 = vshrl.u32 %v10836, 7
    %v10838 = vsub.s32 %v10835, %v10837
    %v10839 = vrot.slane %v10831, %v10838
    %v10841 = vunpack.c.l.s4 1966171168
    %v10842 = vunpack.c.0.s8 %v10841
    %v10843 = vlaneseq
    %v10844 = vshrl.u32 %v10843, 7
    %v10845 = vsub.s32 %v10842, %v10844
    %v10846 = vrot.slane %v10832, %v10845
    %v10847 = vcombine.low %v10839, %v10846
    %v10848 = vcombine.low %v8771, %v8775
    %v10849 = vcombine.low %v8779, %v8783
    %v10850 = vcombine.low %v8787, %v8791
    %v10851 = vcombine.low %v8795, %v8799
    %v10853 = vunpack.c.l.s4 1966171168
    %v10854 = vunpack.c.0.s8 %v10853
    %v10855 = vlaneseq
    %v10856 = vshrl.u32 %v10855, 7
    %v10857 = vsub.s32 %v10854, %v10856
    %v10858 = vrot.slane %v10848, %v10857
    %v10860 = vunpack.c.l.s4 1966171168
    %v10861 = vunpack.c.0.s8 %v10860
    %v10862 = vlaneseq
    %v10863 = vshrl.u32 %v10862, 7
    %v10864 = vsub.s32 %v10861, %v10863
    %v10865 = vrot.slane %v10849, %v10864
    %v10867 = vunpack.c.l.s4 1966171168
    %v10868 = vunpack.c.0.s8 %v10867
    %v10869 = vlaneseq
    %v10870 = vshrl.u32 %v10869, 7
    %v10871 = vsub.s32 %v10868, %v10870
    %v10872 = vrot.slane %v10850, %v10871
    %v10874 = vunpack.c.l.s4 1966171168
    %v10875 = vunpack.c.0.s8 %v10874
    %v10876 = vlaneseq
    %v10877 = vshrl.u32 %v10876, 7
    %v10878 = vsub.s32 %v10875, %v10877
    %v10879 = vrot.slane %v10851, %v10878
    %v10880 = vcombine.low %v10858, %v10865
    %v10881 = vcombine.low %v10872, %v10879
    %v10883 = vunpack.c.l.s4 1966171168
    %v10884 = vunpack.c.0.s8 %v10883
    %v10885 = vlaneseq
    %v10886 = vshrl.u32 %v10885, 7
    %v10887 = vsub.s32 %v10884, %v10886
    %v10888 = vrot.slane %v10880, %v10887
    %v10890 = vunpack.c.l.s4 1966171168
    %v10891 = vunpack.c.0.s8 %v10890
    %v10892 = vlaneseq
    %v10893 = vshrl.u32 %v10892, 7
    %v10894 = vsub.s32 %v10891, %v10893
    %v10895 = vrot.slane %v10881, %v10894
    %v10896 = vcombine.low %v10888, %v10895
    %v10897 = vcombine.low %v8803, %v8807
    %v10898 = vcombine.low %v8811, %v8815
    %v10899 = vcombine.low %v8819, %v8823
    %v10900 = vcombine.low %v8827, %v8831
    %v10902 = vunpack.c.l.s4 1966171168
    %v10903 = vunpack.c.0.s8 %v10902
    %v10904 = vlaneseq
    %v10905 = vshrl.u32 %v10904, 7
    %v10906 = vsub.s32 %v10903, %v10905
    %v10907 = vrot.slane %v10897, %v10906
    %v10909 = vunpack.c.l.s4 1966171168
    %v10910 = vunpack.c.0.s8 %v10909
    %v10911 = vlaneseq
    %v10912 = vshrl.u32 %v10911, 7
    %v10913 = vsub.s32 %v10910, %v10912
    %v10914 = vrot.slane %v10898, %v10913
    %v10916 = vunpack.c.l.s4 1966171168
    %v10917 = vunpack.c.0.s8 %v10916
    %v10918 = vlaneseq
    %v10919 = vshrl.u32 %v10918, 7
    %v10920 = vsub.s32 %v10917, %v10919
    %v10921 = vrot.slane %v10899, %v10920
    %v10923 = vunpack.c.l.s4 1966171168
    %v10924 = vunpack.c.0.s8 %v10923
    %v10925 = vlaneseq
    %v10926 = vshrl.u32 %v10925, 7
    %v10927 = vsub.s32 %v10924, %v10926
    %v10928 = vrot.slane %v10900, %v10927
    %v10929 = vcombine.low %v10907, %v10914
    %v10930 = vcombine.low %v10921, %v10928
    %v10932 = vunpack.c.l.s4 1966171168
    %v10933 = vunpack.c.0.s8 %v10932
    %v10934 = vlaneseq
    %v10935 = vshrl.u32 %v10934, 7
    %v10936 = vsub.s32 %v10933, %v10935
    %v10937 = vrot.slane %v10929, %v10936
    %v10939 = vunpack.c.l.s4 1966171168
    %v10940 = vunpack.c.0.s8 %v10939
    %v10941 = vlaneseq
    %v10942 = vshrl.u32 %v10941, 7
    %v10943 = vsub.s32 %v10940, %v10942
    %v10944 = vrot.slane %v10930, %v10943
    %v10945 = vcombine.low %v10937, %v10944
    %v10946 = vcombine.low %v8835, %v8839
    %v10947 = vcombine.low %v8843, %v8847
    %v10948 = vcombine.low %v8851, %v8855
    %v10949 = vcombine.low %v8859, %v8863
    %v10951 = vunpack.c.l.s4 1966171168
    %v10952 = vunpack.c.0.s8 %v10951
    %v10953 = vlaneseq
    %v10954 = vshrl.u32 %v10953, 7
    %v10955 = vsub.s32 %v10952, %v10954
    %v10956 = vrot.slane %v10946, %v10955
    %v10958 = vunpack.c.l.s4 1966171168
    %v10959 = vunpack.c.0.s8 %v10958
    %v10960 = vlaneseq
    %v10961 = vshrl.u32 %v10960, 7
    %v10962 = vsub.s32 %v10959, %v10961
    %v10963 = vrot.slane %v10947, %v10962
    %v10965 = vunpack.c.l.s4 1966171168
    %v10966 = vunpack.c.0.s8 %v10965
    %v10967 = vlaneseq
    %v10968 = vshrl.u32 %v10967, 7
    %v10969 = vsub.s32 %v10966, %v10968
    %v10970 = vrot.slane %v10948, %v10969
    %v10972 = vunpack.c.l.s4 1966171168
    %v10973 = vunpack.c.0.s8 %v10972
    %v10974 = vlaneseq
    %v10975 = vshrl.u32 %v10974, 7
    %v10976 = vsub.s32 %v10973, %v10975
    %v10977 = vrot.slane %v10949, %v10976
    %v10978 = vcombine.low %v10956, %v10963
    %v10979 = vcombine.low %v10970, %v10977
    %v10981 = vunpack.c.l.s4 1966171168
    %v10982 = vunpack.c.0.s8 %v10981
    %v10983 = vlaneseq
    %v10984 = vshrl.u32 %v10983, 7
    %v10985 = vsub.s32 %v10982, %v10984
    %v10986 = vrot.slane %v10978, %v10985
    %v10988 = vunpack.c.l.s4 1966171168
    %v10989 = vunpack.c.0.s8 %v10988
    %v10990 = vlaneseq
    %v10991 = vshrl.u32 %v10990, 7
    %v10992 = vsub.s32 %v10989, %v10991
    %v10993 = vrot.slane %v10979, %v10992
    %v10994 = vcombine.low %v10986, %v10993
    %v10995 = vcombine.low %v8867, %v8871
    %v10996 = vcombine.low %v8875, %v8879
    %v10997 = vcombine.low %v8883, %v8887
    %v10998 = vcombine.low %v8891, %v8895
    %v11000 = vunpack.c.l.s4 1966171168
    %v11001 = vunpack.c.0.s8 %v11000
    %v11002 = vlaneseq
    %v11003 = vshrl.u32 %v11002, 7
    %v11004 = vsub.s32 %v11001, %v11003
    %v11005 = vrot.slane %v10995, %v11004
    %v11007 = vunpack.c.l.s4 1966171168
    %v11008 = vunpack.c.0.s8 %v11007
    %v11009 = vlaneseq
    %v11010 = vshrl.u32 %v11009, 7
    %v11011 = vsub.s32 %v11008, %v11010
    %v11012 = vrot.slane %v10996, %v11011
    %v11014 = vunpack.c.l.s4 1966171168
    %v11015 = vunpack.c.0.s8 %v11014
    %v11016 = vlaneseq
    %v11017 = vshrl.u32 %v11016, 7
    %v11018 = vsub.s32 %v11015, %v11017
    %v11019 = vrot.slane %v10997, %v11018
    %v11021 = vunpack.c.l.s4 1966171168
    %v11022 = vunpack.c.0.s8 %v11021
    %v11023 = vlaneseq
    %v11024 = vshrl.u32 %v11023, 7
    %v11025 = vsub.s32 %v11022, %v11024
    %v11026 = vrot.slane %v10998, %v11025
    %v11027 = vcombine.low %v11005, %v11012
    %v11028 = vcombine.low %v11019, %v11026
    %v11030 = vunpack.c.l.s4 1966171168
    %v11031 = vunpack.c.0.s8 %v11030
    %v11032 = vlaneseq
    %v11033 = vshrl.u32 %v11032, 7
    %v11034 = vsub.s32 %v11031, %v11033
    %v11035 = vrot.slane %v11027, %v11034
    %v11037 = vunpack.c.l.s4 1966171168
    %v11038 = vunpack.c.0.s8 %v11037
    %v11039 = vlaneseq
    %v11040 = vshrl.u32 %v11039, 7
    %v11041 = vsub.s32 %v11038, %v11040
    %v11042 = vrot.slane %v11028, %v11041
    %v11043 = vcombine.low %v11035, %v11042
    %v11044 = vcombine.low %v8899, %v8903
    %v11045 = vcombine.low %v8907, %v8911
    %v11046 = vcombine.low %v8915, %v8919
    %v11047 = vcombine.low %v8923, %v8927
    %v11049 = vunpack.c.l.s4 1966171168
    %v11050 = vunpack.c.0.s8 %v11049
    %v11051 = vlaneseq
    %v11052 = vshrl.u32 %v11051, 7
    %v11053 = vsub.s32 %v11050, %v11052
    %v11054 = vrot.slane %v11044, %v11053
    %v11056 = vunpack.c.l.s4 1966171168
    %v11057 = vunpack.c.0.s8 %v11056
    %v11058 = vlaneseq
    %v11059 = vshrl.u32 %v11058, 7
    %v11060 = vsub.s32 %v11057, %v11059
    %v11061 = vrot.slane %v11045, %v11060
    %v11063 = vunpack.c.l.s4 1966171168
    %v11064 = vunpack.c.0.s8 %v11063
    %v11065 = vlaneseq
    %v11066 = vshrl.u32 %v11065, 7
    %v11067 = vsub.s32 %v11064, %v11066
    %v11068 = vrot.slane %v11046, %v11067
    %v11070 = vunpack.c.l.s4 1966171168
    %v11071 = vunpack.c.0.s8 %v11070
    %v11072 = vlaneseq
    %v11073 = vshrl.u32 %v11072, 7
    %v11074 = vsub.s32 %v11071, %v11073
    %v11075 = vrot.slane %v11047, %v11074
    %v11076 = vcombine.low %v11054, %v11061
    %v11077 = vcombine.low %v11068, %v11075
    %v11079 = vunpack.c.l.s4 1966171168
    %v11080 = vunpack.c.0.s8 %v11079
    %v11081 = vlaneseq
    %v11082 = vshrl.u32 %v11081, 7
    %v11083 = vsub.s32 %v11080, %v11082
    %v11084 = vrot.slane %v11076, %v11083
    %v11086 = vunpack.c.l.s4 1966171168
    %v11087 = vunpack.c.0.s8 %v11086
    %v11088 = vlaneseq
    %v11089 = vshrl.u32 %v11088, 7
    %v11090 = vsub.s32 %v11087, %v11089
    %v11091 = vrot.slane %v11077, %v11090
    %v11092 = vcombine.low %v11084, %v11091
    %v11093 = vcombine.low %v8931, %v8935
    %v11094 = vcombine.low %v8939, %v8943
    %v11095 = vcombine.low %v8947, %v8951
    %v11096 = vcombine.low %v8955, %v8959
    %v11098 = vunpack.c.l.s4 1966171168
    %v11099 = vunpack.c.0.s8 %v11098
    %v11100 = vlaneseq
    %v11101 = vshrl.u32 %v11100, 7
    %v11102 = vsub.s32 %v11099, %v11101
    %v11103 = vrot.slane %v11093, %v11102
    %v11105 = vunpack.c.l.s4 1966171168
    %v11106 = vunpack.c.0.s8 %v11105
    %v11107 = vlaneseq
    %v11108 = vshrl.u32 %v11107, 7
    %v11109 = vsub.s32 %v11106, %v11108
    %v11110 = vrot.slane %v11094, %v11109
    %v11112 = vunpack.c.l.s4 1966171168
    %v11113 = vunpack.c.0.s8 %v11112
    %v11114 = vlaneseq
    %v11115 = vshrl.u32 %v11114, 7
    %v11116 = vsub.s32 %v11113, %v11115
    %v11117 = vrot.slane %v11095, %v11116
    %v11119 = vunpack.c.l.s4 1966171168
    %v11120 = vunpack.c.0.s8 %v11119
    %v11121 = vlaneseq
    %v11122 = vshrl.u32 %v11121, 7
    %v11123 = vsub.s32 %v11120, %v11122
    %v11124 = vrot.slane %v11096, %v11123
    %v11125 = vcombine.low %v11103, %v11110
    %v11126 = vcombine.low %v11117, %v11124
    %v11128 = vunpack.c.l.s4 1966171168
    %v11129 = vunpack.c.0.s8 %v11128
    %v11130 = vlaneseq
    %v11131 = vshrl.u32 %v11130, 7
    %v11132 = vsub.s32 %v11129, %v11131
    %v11133 = vrot.slane %v11125, %v11132
    %v11135 = vunpack.c.l.s4 1966171168
    %v11136 = vunpack.c.0.s8 %v11135
    %v11137 = vlaneseq
    %v11138 = vshrl.u32 %v11137, 7
    %v11139 = vsub.s32 %v11136, %v11138
    %v11140 = vrot.slane %v11126, %v11139
    %v11141 = vcombine.low %v11133, %v11140
    %v11142 = vcombine.low %v8963, %v8967
    %v11143 = vcombine.low %v8971, %v8975
    %v11144 = vcombine.low %v8979, %v8983
    %v11145 = vcombine.low %v8987, %v8991
    %v11147 = vunpack.c.l.s4 1966171168
    %v11148 = vunpack.c.0.s8 %v11147
    %v11149 = vlaneseq
    %v11150 = vshrl.u32 %v11149, 7
    %v11151 = vsub.s32 %v11148, %v11150
    %v11152 = vrot.slane %v11142, %v11151
    %v11154 = vunpack.c.l.s4 1966171168
    %v11155 = vunpack.c.0.s8 %v11154
    %v11156 = vlaneseq
    %v11157 = vshrl.u32 %v11156, 7
    %v11158 = vsub.s32 %v11155, %v11157
    %v11159 = vrot.slane %v11143, %v11158
    %v11161 = vunpack.c.l.s4 1966171168
    %v11162 = vunpack.c.0.s8 %v11161
    %v11163 = vlaneseq
    %v11164 = vshrl.u32 %v11163, 7
    %v11165 = vsub.s32 %v11162, %v11164
    %v11166 = vrot.slane %v11144, %v11165
    %v11168 = vunpack.c.l.s4 1966171168
    %v11169 = vunpack.c.0.s8 %v11168
    %v11170 = vlaneseq
    %v11171 = vshrl.u32 %v11170, 7
    %v11172 = vsub.s32 %v11169, %v11171
    %v11173 = vrot.slane %v11145, %v11172
    %v11174 = vcombine.low %v11152, %v11159
    %v11175 = vcombine.low %v11166, %v11173
    %v11177 = vunpack.c.l.s4 1966171168
    %v11178 = vunpack.c.0.s8 %v11177
    %v11179 = vlaneseq
    %v11180 = vshrl.u32 %v11179, 7
    %v11181 = vsub.s32 %v11178, %v11180
    %v11182 = vrot.slane %v11174, %v11181
    %v11184 = vunpack.c.l.s4 1966171168
    %v11185 = vunpack.c.0.s8 %v11184
    %v11186 = vlaneseq
    %v11187 = vshrl.u32 %v11186, 7
    %v11188 = vsub.s32 %v11185, %v11187
    %v11189 = vrot.slane %v11175, %v11188
    %v11190 = vcombine.low %v11182, %v11189
    %v11191 = vcombine.low %v8995, %v8999
    %v11192 = vcombine.low %v9003, %v9007
    %v11193 = vcombine.low %v9011, %v9015
    %v11194 = vcombine.low %v9019, %v9023
    %v11196 = vunpack.c.l.s4 1966171168
    %v11197 = vunpack.c.0.s8 %v11196
    %v11198 = vlaneseq
    %v11199 = vshrl.u32 %v11198, 7
    %v11200 = vsub.s32 %v11197, %v11199
    %v11201 = vrot.slane %v11191, %v11200
    %v11203 = vunpack.c.l.s4 1966171168
    %v11204 = vunpack.c.0.s8 %v11203
    %v11205 = vlaneseq
    %v11206 = vshrl.u32 %v11205, 7
    %v11207 = vsub.s32 %v11204, %v11206
    %v11208 = vrot.slane %v11192, %v11207
    %v11210 = vunpack.c.l.s4 1966171168
    %v11211 = vunpack.c.0.s8 %v11210
    %v11212 = vlaneseq
    %v11213 = vshrl.u32 %v11212, 7
    %v11214 = vsub.s32 %v11211, %v11213
    %v11215 = vrot.slane %v11193, %v11214
    %v11217 = vunpack.c.l.s4 1966171168
    %v11218 = vunpack.c.0.s8 %v11217
    %v11219 = vlaneseq
    %v11220 = vshrl.u32 %v11219, 7
    %v11221 = vsub.s32 %v11218, %v11220
    %v11222 = vrot.slane %v11194, %v11221
    %v11223 = vcombine.low %v11201, %v11208
    %v11224 = vcombine.low %v11215, %v11222
    %v11226 = vunpack.c.l.s4 1966171168
    %v11227 = vunpack.c.0.s8 %v11226
    %v11228 = vlaneseq
    %v11229 = vshrl.u32 %v11228, 7
    %v11230 = vsub.s32 %v11227, %v11229
    %v11231 = vrot.slane %v11223, %v11230
    %v11233 = vunpack.c.l.s4 1966171168
    %v11234 = vunpack.c.0.s8 %v11233
    %v11235 = vlaneseq
    %v11236 = vshrl.u32 %v11235, 7
    %v11237 = vsub.s32 %v11234, %v11236
    %v11238 = vrot.slane %v11224, %v11237
    %v11239 = vcombine.low %v11231, %v11238
    %v11240 = vcombine.low %v9027, %v9031
    %v11241 = vcombine.low %v9035, %v9039
    %v11242 = vcombine.low %v9043, %v9047
    %v11243 = vcombine.low %v9051, %v9055
    %v11245 = vunpack.c.l.s4 1966171168
    %v11246 = vunpack.c.0.s8 %v11245
    %v11247 = vlaneseq
    %v11248 = vshrl.u32 %v11247, 7
    %v11249 = vsub.s32 %v11246, %v11248
    %v11250 = vrot.slane %v11240, %v11249
    %v11252 = vunpack.c.l.s4 1966171168
    %v11253 = vunpack.c.0.s8 %v11252
    %v11254 = vlaneseq
    %v11255 = vshrl.u32 %v11254, 7
    %v11256 = vsub.s32 %v11253, %v11255
    %v11257 = vrot.slane %v11241, %v11256
    %v11259 = vunpack.c.l.s4 1966171168
    %v11260 = vunpack.c.0.s8 %v11259
    %v11261 = vlaneseq
    %v11262 = vshrl.u32 %v11261, 7
    %v11263 = vsub.s32 %v11260, %v11262
    %v11264 = vrot.slane %v11242, %v11263
    %v11266 = vunpack.c.l.s4 1966171168
    %v11267 = vunpack.c.0.s8 %v11266
    %v11268 = vlaneseq
    %v11269 = vshrl.u32 %v11268, 7
    %v11270 = vsub.s32 %v11267, %v11269
    %v11271 = vrot.slane %v11243, %v11270
    %v11272 = vcombine.low %v11250, %v11257
    %v11273 = vcombine.low %v11264, %v11271
    %v11275 = vunpack.c.l.s4 1966171168
    %v11276 = vunpack.c.0.s8 %v11275
    %v11277 = vlaneseq
    %v11278 = vshrl.u32 %v11277, 7
    %v11279 = vsub.s32 %v11276, %v11278
    %v11280 = vrot.slane %v11272, %v11279
    %v11282 = vunpack.c.l.s4 1966171168
    %v11283 = vunpack.c.0.s8 %v11282
    %v11284 = vlaneseq
    %v11285 = vshrl.u32 %v11284, 7
    %v11286 = vsub.s32 %v11283, %v11285
    %v11287 = vrot.slane %v11273, %v11286
    %v11288 = vcombine.low %v11280, %v11287
    %v11289 = vcombine.low %v9059, %v9063
    %v11290 = vcombine.low %v9067, %v9071
    %v11291 = vcombine.low %v9075, %v9079
    %v11292 = vcombine.low %v9083, %v9087
    %v11294 = vunpack.c.l.s4 1966171168
    %v11295 = vunpack.c.0.s8 %v11294
    %v11296 = vlaneseq
    %v11297 = vshrl.u32 %v11296, 7
    %v11298 = vsub.s32 %v11295, %v11297
    %v11299 = vrot.slane %v11289, %v11298
    %v11301 = vunpack.c.l.s4 1966171168
    %v11302 = vunpack.c.0.s8 %v11301
    %v11303 = vlaneseq
    %v11304 = vshrl.u32 %v11303, 7
    %v11305 = vsub.s32 %v11302, %v11304
    %v11306 = vrot.slane %v11290, %v11305
    %v11308 = vunpack.c.l.s4 1966171168
    %v11309 = vunpack.c.0.s8 %v11308
    %v11310 = vlaneseq
    %v11311 = vshrl.u32 %v11310, 7
    %v11312 = vsub.s32 %v11309, %v11311
    %v11313 = vrot.slane %v11291, %v11312
    %v11315 = vunpack.c.l.s4 1966171168
    %v11316 = vunpack.c.0.s8 %v11315
    %v11317 = vlaneseq
    %v11318 = vshrl.u32 %v11317, 7
    %v11319 = vsub.s32 %v11316, %v11318
    %v11320 = vrot.slane %v11292, %v11319
    %v11321 = vcombine.low %v11299, %v11306
    %v11322 = vcombine.low %v11313, %v11320
    %v11324 = vunpack.c.l.s4 1966171168
    %v11325 = vunpack.c.0.s8 %v11324
    %v11326 = vlaneseq
    %v11327 = vshrl.u32 %v11326, 7
    %v11328 = vsub.s32 %v11325, %v11327
    %v11329 = vrot.slane %v11321, %v11328
    %v11331 = vunpack.c.l.s4 1966171168
    %v11332 = vunpack.c.0.s8 %v11331
    %v11333 = vlaneseq
    %v11334 = vshrl.u32 %v11333, 7
    %v11335 = vsub.s32 %v11332, %v11334
    %v11336 = vrot.slane %v11322, %v11335
    %v11337 = vcombine.low %v11329, %v11336
    %v11338 = vcombine.low %v9091, %v9095
    %v11339 = vcombine.low %v9099, %v9103
    %v11340 = vcombine.low %v9107, %v9111
    %v11341 = vcombine.low %v9115, %v9119
    %v11343 = vunpack.c.l.s4 1966171168
    %v11344 = vunpack.c.0.s8 %v11343
    %v11345 = vlaneseq
    %v11346 = vshrl.u32 %v11345, 7
    %v11347 = vsub.s32 %v11344, %v11346
    %v11348 = vrot.slane %v11338, %v11347
    %v11350 = vunpack.c.l.s4 1966171168
    %v11351 = vunpack.c.0.s8 %v11350
    %v11352 = vlaneseq
    %v11353 = vshrl.u32 %v11352, 7
    %v11354 = vsub.s32 %v11351, %v11353
    %v11355 = vrot.slane %v11339, %v11354
    %v11357 = vunpack.c.l.s4 1966171168
    %v11358 = vunpack.c.0.s8 %v11357
    %v11359 = vlaneseq
    %v11360 = vshrl.u32 %v11359, 7
    %v11361 = vsub.s32 %v11358, %v11360
    %v11362 = vrot.slane %v11340, %v11361
    %v11364 = vunpack.c.l.s4 1966171168
    %v11365 = vunpack.c.0.s8 %v11364
    %v11366 = vlaneseq
    %v11367 = vshrl.u32 %v11366, 7
    %v11368 = vsub.s32 %v11365, %v11367
    %v11369 = vrot.slane %v11341, %v11368
    %v11370 = vcombine.low %v11348, %v11355
    %v11371 = vcombine.low %v11362, %v11369
    %v11373 = vunpack.c.l.s4 1966171168
    %v11374 = vunpack.c.0.s8 %v11373
    %v11375 = vlaneseq
    %v11376 = vshrl.u32 %v11375, 7
    %v11377 = vsub.s32 %v11374, %v11376
    %v11378 = vrot.slane %v11370, %v11377
    %v11380 = vunpack.c.l.s4 1966171168
    %v11381 = vunpack.c.0.s8 %v11380
    %v11382 = vlaneseq
    %v11383 = vshrl.u32 %v11382, 7
    %v11384 = vsub.s32 %v11381, %v11383
    %v11385 = vrot.slane %v11371, %v11384
    %v11386 = vcombine.low %v11378, %v11385
    %v11387 = vcombine.low %v9123, %v9127
    %v11388 = vcombine.low %v9131, %v9135
    %v11389 = vcombine.low %v9139, %v9143
    %v11390 = vcombine.low %v9147, %v9151
    %v11392 = vunpack.c.l.s4 1966171168
    %v11393 = vunpack.c.0.s8 %v11392
    %v11394 = vlaneseq
    %v11395 = vshrl.u32 %v11394, 7
    %v11396 = vsub.s32 %v11393, %v11395
    %v11397 = vrot.slane %v11387, %v11396
    %v11399 = vunpack.c.l.s4 1966171168
    %v11400 = vunpack.c.0.s8 %v11399
    %v11401 = vlaneseq
    %v11402 = vshrl.u32 %v11401, 7
    %v11403 = vsub.s32 %v11400, %v11402
    %v11404 = vrot.slane %v11388, %v11403
    %v11406 = vunpack.c.l.s4 1966171168
    %v11407 = vunpack.c.0.s8 %v11406
    %v11408 = vlaneseq
    %v11409 = vshrl.u32 %v11408, 7
    %v11410 = vsub.s32 %v11407, %v11409
    %v11411 = vrot.slane %v11389, %v11410
    %v11413 = vunpack.c.l.s4 1966171168
    %v11414 = vunpack.c.0.s8 %v11413
    %v11415 = vlaneseq
    %v11416 = vshrl.u32 %v11415, 7
    %v11417 = vsub.s32 %v11414, %v11416
    %v11418 = vrot.slane %v11390, %v11417
    %v11419 = vcombine.low %v11397, %v11404
    %v11420 = vcombine.low %v11411, %v11418
    %v11422 = vunpack.c.l.s4 1966171168
    %v11423 = vunpack.c.0.s8 %v11422
    %v11424 = vlaneseq
    %v11425 = vshrl.u32 %v11424, 7
    %v11426 = vsub.s32 %v11423, %v11425
    %v11427 = vrot.slane %v11419, %v11426
    %v11429 = vunpack.c.l.s4 1966171168
    %v11430 = vunpack.c.0.s8 %v11429
    %v11431 = vlaneseq
    %v11432 = vshrl.u32 %v11431, 7
    %v11433 = vsub.s32 %v11430, %v11432
    %v11434 = vrot.slane %v11420, %v11433
    %v11435 = vcombine.low %v11427, %v11434
    %v11436 = vcombine.low %v9155, %v9159
    %v11437 = vcombine.low %v9163, %v9167
    %v11438 = vcombine.low %v9171, %v9175
    %v11439 = vcombine.low %v9179, %v9183
    %v11441 = vunpack.c.l.s4 1966171168
    %v11442 = vunpack.c.0.s8 %v11441
    %v11443 = vlaneseq
    %v11444 = vshrl.u32 %v11443, 7
    %v11445 = vsub.s32 %v11442, %v11444
    %v11446 = vrot.slane %v11436, %v11445
    %v11448 = vunpack.c.l.s4 1966171168
    %v11449 = vunpack.c.0.s8 %v11448
    %v11450 = vlaneseq
    %v11451 = vshrl.u32 %v11450, 7
    %v11452 = vsub.s32 %v11449, %v11451
    %v11453 = vrot.slane %v11437, %v11452
    %v11455 = vunpack.c.l.s4 1966171168
    %v11456 = vunpack.c.0.s8 %v11455
    %v11457 = vlaneseq
    %v11458 = vshrl.u32 %v11457, 7
    %v11459 = vsub.s32 %v11456, %v11458
    %v11460 = vrot.slane %v11438, %v11459
    %v11462 = vunpack.c.l.s4 1966171168
    %v11463 = vunpack.c.0.s8 %v11462
    %v11464 = vlaneseq
    %v11465 = vshrl.u32 %v11464, 7
    %v11466 = vsub.s32 %v11463, %v11465
    %v11467 = vrot.slane %v11439, %v11466
    %v11468 = vcombine.low %v11446, %v11453
    %v11469 = vcombine.low %v11460, %v11467
    %v11471 = vunpack.c.l.s4 1966171168
    %v11472 = vunpack.c.0.s8 %v11471
    %v11473 = vlaneseq
    %v11474 = vshrl.u32 %v11473, 7
    %v11475 = vsub.s32 %v11472, %v11474
    %v11476 = vrot.slane %v11468, %v11475
    %v11478 = vunpack.c.l.s4 1966171168
    %v11479 = vunpack.c.0.s8 %v11478
    %v11480 = vlaneseq
    %v11481 = vshrl.u32 %v11480, 7
    %v11482 = vsub.s32 %v11479, %v11481
    %v11483 = vrot.slane %v11469, %v11482
    %v11484 = vcombine.low %v11476, %v11483
    %v11485 = vcombine.low %v9187, %v9191
    %v11486 = vcombine.low %v9195, %v9199
    %v11487 = vcombine.low %v9203, %v9207
    %v11488 = vcombine.low %v9211, %v9215
    %v11490 = vunpack.c.l.s4 1966171168
    %v11491 = vunpack.c.0.s8 %v11490
    %v11492 = vlaneseq
    %v11493 = vshrl.u32 %v11492, 7
    %v11494 = vsub.s32 %v11491, %v11493
    %v11495 = vrot.slane %v11485, %v11494
    %v11497 = vunpack.c.l.s4 1966171168
    %v11498 = vunpack.c.0.s8 %v11497
    %v11499 = vlaneseq
    %v11500 = vshrl.u32 %v11499, 7
    %v11501 = vsub.s32 %v11498, %v11500
    %v11502 = vrot.slane %v11486, %v11501
    %v11504 = vunpack.c.l.s4 1966171168
    %v11505 = vunpack.c.0.s8 %v11504
    %v11506 = vlaneseq
    %v11507 = vshrl.u32 %v11506, 7
    %v11508 = vsub.s32 %v11505, %v11507
    %v11509 = vrot.slane %v11487, %v11508
    %v11511 = vunpack.c.l.s4 1966171168
    %v11512 = vunpack.c.0.s8 %v11511
    %v11513 = vlaneseq
    %v11514 = vshrl.u32 %v11513, 7
    %v11515 = vsub.s32 %v11512, %v11514
    %v11516 = vrot.slane %v11488, %v11515
    %v11517 = vcombine.low %v11495, %v11502
    %v11518 = vcombine.low %v11509, %v11516
    %v11520 = vunpack.c.l.s4 1966171168
    %v11521 = vunpack.c.0.s8 %v11520
    %v11522 = vlaneseq
    %v11523 = vshrl.u32 %v11522, 7
    %v11524 = vsub.s32 %v11521, %v11523
    %v11525 = vrot.slane %v11517, %v11524
    %v11527 = vunpack.c.l.s4 1966171168
    %v11528 = vunpack.c.0.s8 %v11527
    %v11529 = vlaneseq
    %v11530 = vshrl.u32 %v11529, 7
    %v11531 = vsub.s32 %v11528, %v11530
    %v11532 = vrot.slane %v11518, %v11531
    %v11533 = vcombine.low %v11525, %v11532
    %v11534 = vcombine.low %v9219, %v9223
    %v11535 = vcombine.low %v9227, %v9231
    %v11536 = vcombine.low %v9235, %v9239
    %v11537 = vcombine.low %v9243, %v9247
    %v11539 = vunpack.c.l.s4 1966171168
    %v11540 = vunpack.c.0.s8 %v11539
    %v11541 = vlaneseq
    %v11542 = vshrl.u32 %v11541, 7
    %v11543 = vsub.s32 %v11540, %v11542
    %v11544 = vrot.slane %v11534, %v11543
    %v11546 = vunpack.c.l.s4 1966171168
    %v11547 = vunpack.c.0.s8 %v11546
    %v11548 = vlaneseq
    %v11549 = vshrl.u32 %v11548, 7
    %v11550 = vsub.s32 %v11547, %v11549
    %v11551 = vrot.slane %v11535, %v11550
    %v11553 = vunpack.c.l.s4 1966171168
    %v11554 = vunpack.c.0.s8 %v11553
    %v11555 = vlaneseq
    %v11556 = vshrl.u32 %v11555, 7
    %v11557 = vsub.s32 %v11554, %v11556
    %v11558 = vrot.slane %v11536, %v11557
    %v11560 = vunpack.c.l.s4 1966171168
    %v11561 = vunpack.c.0.s8 %v11560
    %v11562 = vlaneseq
    %v11563 = vshrl.u32 %v11562, 7
    %v11564 = vsub.s32 %v11561, %v11563
    %v11565 = vrot.slane %v11537, %v11564
    %v11566 = vcombine.low %v11544, %v11551
    %v11567 = vcombine.low %v11558, %v11565
    %v11569 = vunpack.c.l.s4 1966171168
    %v11570 = vunpack.c.0.s8 %v11569
    %v11571 = vlaneseq
    %v11572 = vshrl.u32 %v11571, 7
    %v11573 = vsub.s32 %v11570, %v11572
    %v11574 = vrot.slane %v11566, %v11573
    %v11576 = vunpack.c.l.s4 1966171168
    %v11577 = vunpack.c.0.s8 %v11576
    %v11578 = vlaneseq
    %v11579 = vshrl.u32 %v11578, 7
    %v11580 = vsub.s32 %v11577, %v11579
    %v11581 = vrot.slane %v11567, %v11580
    %v11582 = vcombine.low %v11574, %v11581
    %v11583 = vcombine.low %v9251, %v9255
    %v11584 = vcombine.low %v9259, %v9263
    %v11585 = vcombine.low %v9267, %v9271
    %v11586 = vcombine.low %v9275, %v9279
    %v11588 = vunpack.c.l.s4 1966171168
    %v11589 = vunpack.c.0.s8 %v11588
    %v11590 = vlaneseq
    %v11591 = vshrl.u32 %v11590, 7
    %v11592 = vsub.s32 %v11589, %v11591
    %v11593 = vrot.slane %v11583, %v11592
    %v11595 = vunpack.c.l.s4 1966171168
    %v11596 = vunpack.c.0.s8 %v11595
    %v11597 = vlaneseq
    %v11598 = vshrl.u32 %v11597, 7
    %v11599 = vsub.s32 %v11596, %v11598
    %v11600 = vrot.slane %v11584, %v11599
    %v11602 = vunpack.c.l.s4 1966171168
    %v11603 = vunpack.c.0.s8 %v11602
    %v11604 = vlaneseq
    %v11605 = vshrl.u32 %v11604, 7
    %v11606 = vsub.s32 %v11603, %v11605
    %v11607 = vrot.slane %v11585, %v11606
    %v11609 = vunpack.c.l.s4 1966171168
    %v11610 = vunpack.c.0.s8 %v11609
    %v11611 = vlaneseq
    %v11612 = vshrl.u32 %v11611, 7
    %v11613 = vsub.s32 %v11610, %v11612
    %v11614 = vrot.slane %v11586, %v11613
    %v11615 = vcombine.low %v11593, %v11600
    %v11616 = vcombine.low %v11607, %v11614
    %v11618 = vunpack.c.l.s4 1966171168
    %v11619 = vunpack.c.0.s8 %v11618
    %v11620 = vlaneseq
    %v11621 = vshrl.u32 %v11620, 7
    %v11622 = vsub.s32 %v11619, %v11621
    %v11623 = vrot.slane %v11615, %v11622
    %v11625 = vunpack.c.l.s4 1966171168
    %v11626 = vunpack.c.0.s8 %v11625
    %v11627 = vlaneseq
    %v11628 = vshrl.u32 %v11627, 7
    %v11629 = vsub.s32 %v11626, %v11628
    %v11630 = vrot.slane %v11616, %v11629
    %v11631 = vcombine.low %v11623, %v11630
    %11632 = vset.pattern.permute.xlu0 0
    %11633 = vperm.xlu0 %11632, %v9328
    %v11634 = vpop.permute.xlu0 %11633
    %11635 = vset.pattern.permute.xlu0 0
    %11636 = vperm.xlu0 %11635, %v9377
    %v11637 = vpop.permute.xlu0 %11636
    %11638 = vset.pattern.permute.xlu0 0
    %11639 = vperm.xlu0 %11638, %v9426
    %v11640 = vpop.permute.xlu0 %11639
    %11641 = vset.pattern.permute.xlu0 0
    %11642 = vperm.xlu0 %11641, %v9475
    %v11643 = vpop.permute.xlu0 %11642
    %11644 = vset.pattern.permute.xlu0 0
    %11645 = vperm.xlu0 %11644, %v9524
    %v11646 = vpop.permute.xlu0 %11645
    %11647 = vset.pattern.permute.xlu0 0
    %11648 = vperm.xlu0 %11647, %v9573
    %v11649 = vpop.permute.xlu0 %11648
    %11650 = vset.pattern.permute.xlu0 0
    %11651 = vperm.xlu0 %11650, %v9622
    %v11652 = vpop.permute.xlu0 %11651
    %11653 = vset.pattern.permute.xlu0 0
    %11654 = vperm.xlu0 %11653, %v9671
    %v11655 = vpop.permute.xlu0 %11654
    %11656 = vset.pattern.permute.xlu0 0
    %11657 = vperm.xlu0 %11656, %v9720
    %v11658 = vpop.permute.xlu0 %11657
    %11659 = vset.pattern.permute.xlu0 0
    %11660 = vperm.xlu0 %11659, %v9769
    %v11661 = vpop.permute.xlu0 %11660
    %11662 = vset.pattern.permute.xlu0 0
    %11663 = vperm.xlu0 %11662, %v9818
    %v11664 = vpop.permute.xlu0 %11663
    %11665 = vset.pattern.permute.xlu0 0
    %11666 = vperm.xlu0 %11665, %v9867
    %v11667 = vpop.permute.xlu0 %11666
    %11668 = vset.pattern.permute.xlu0 0
    %11669 = vperm.xlu0 %11668, %v9916
    %v11670 = vpop.permute.xlu0 %11669
    %11671 = vset.pattern.permute.xlu0 0
    %11672 = vperm.xlu0 %11671, %v9965
    %v11673 = vpop.permute.xlu0 %11672
    %11674 = vset.pattern.permute.xlu0 0
    %11675 = vperm.xlu0 %11674, %v10014
    %v11676 = vpop.permute.xlu0 %11675
    %11677 = vset.pattern.permute.xlu0 0
    %11678 = vperm.xlu0 %11677, %v10063
    %v11679 = vpop.permute.xlu0 %11678
    %11680 = vset.pattern.permute.xlu0 0
    %11681 = vperm.xlu0 %11680, %v10112
    %v11682 = vpop.permute.xlu0 %11681
    %11683 = vset.pattern.permute.xlu0 0
    %11684 = vperm.xlu0 %11683, %v10161
    %v11685 = vpop.permute.xlu0 %11684
    %11686 = vset.pattern.permute.xlu0 0
    %11687 = vperm.xlu0 %11686, %v10210
    %v11688 = vpop.permute.xlu0 %11687
    %11689 = vset.pattern.permute.xlu0 0
    %11690 = vperm.xlu0 %11689, %v10259
    %v11691 = vpop.permute.xlu0 %11690
    %11692 = vset.pattern.permute.xlu0 0
    %11693 = vperm.xlu0 %11692, %v10308
    %v11694 = vpop.permute.xlu0 %11693
    %11695 = vset.pattern.permute.xlu0 0
    %11696 = vperm.xlu0 %11695, %v10357
    %v11697 = vpop.permute.xlu0 %11696
    %11698 = vset.pattern.permute.xlu0 0
    %11699 = vperm.xlu0 %11698, %v10406
    %v11700 = vpop.permute.xlu0 %11699
    %11701 = vset.pattern.permute.xlu0 0
    %11702 = vperm.xlu0 %11701, %v10455
    %v11703 = vpop.permute.xlu0 %11702
    %11704 = vset.pattern.permute.xlu0 0
    %11705 = vperm.xlu0 %11704, %v10504
    %v11706 = vpop.permute.xlu0 %11705
    %11707 = vset.pattern.permute.xlu0 0
    %11708 = vperm.xlu0 %11707, %v10553
    %v11709 = vpop.permute.xlu0 %11708
    %11710 = vset.pattern.permute.xlu0 0
    %11711 = vperm.xlu0 %11710, %v10602
    %v11712 = vpop.permute.xlu0 %11711
    %11713 = vset.pattern.permute.xlu0 0
    %11714 = vperm.xlu0 %11713, %v10651
    %v11715 = vpop.permute.xlu0 %11714
    %11716 = vset.pattern.permute.xlu0 0
    %11717 = vperm.xlu0 %11716, %v10700
    %v11718 = vpop.permute.xlu0 %11717
    %11719 = vset.pattern.permute.xlu0 0
    %11720 = vperm.xlu0 %11719, %v10749
    %v11721 = vpop.permute.xlu0 %11720
    %11722 = vset.pattern.permute.xlu0 0
    %11723 = vperm.xlu0 %11722, %v10798
    %v11724 = vpop.permute.xlu0 %11723
    %11725 = vset.pattern.permute.xlu0 0
    %11726 = vperm.xlu0 %11725, %v10847
    %v11727 = vpop.permute.xlu0 %11726
    %11728 = vset.pattern.permute.xlu0 0
    %11729 = vperm.xlu0 %11728, %v10896
    %v11730 = vpop.permute.xlu0 %11729
    %11731 = vset.pattern.permute.xlu0 0
    %11732 = vperm.xlu0 %11731, %v10945
    %v11733 = vpop.permute.xlu0 %11732
    %11734 = vset.pattern.permute.xlu0 0
    %11735 = vperm.xlu0 %11734, %v10994
    %v11736 = vpop.permute.xlu0 %11735
    %11737 = vset.pattern.permute.xlu0 0
    %11738 = vperm.xlu0 %11737, %v11043
    %v11739 = vpop.permute.xlu0 %11738
    %11740 = vset.pattern.permute.xlu0 0
    %11741 = vperm.xlu0 %11740, %v11092
    %v11742 = vpop.permute.xlu0 %11741
    %11743 = vset.pattern.permute.xlu0 0
    %11744 = vperm.xlu0 %11743, %v11141
    %v11745 = vpop.permute.xlu0 %11744
    %11746 = vset.pattern.permute.xlu0 0
    %11747 = vperm.xlu0 %11746, %v11190
    %v11748 = vpop.permute.xlu0 %11747
    %11749 = vset.pattern.permute.xlu0 0
    %11750 = vperm.xlu0 %11749, %v11239
    %v11751 = vpop.permute.xlu0 %11750
    %11752 = vset.pattern.permute.xlu0 0
    %11753 = vperm.xlu0 %11752, %v11288
    %v11754 = vpop.permute.xlu0 %11753
    %11755 = vset.pattern.permute.xlu0 0
    %11756 = vperm.xlu0 %11755, %v11337
    %v11757 = vpop.permute.xlu0 %11756
    %11758 = vset.pattern.permute.xlu0 0
    %11759 = vperm.xlu0 %11758, %v11386
    %v11760 = vpop.permute.xlu0 %11759
    %11761 = vset.pattern.permute.xlu0 0
    %11762 = vperm.xlu0 %11761, %v11435
    %v11763 = vpop.permute.xlu0 %11762
    %11764 = vset.pattern.permute.xlu0 0
    %11765 = vperm.xlu0 %11764, %v11484
    %v11766 = vpop.permute.xlu0 %11765
    %11767 = vset.pattern.permute.xlu0 0
    %11768 = vperm.xlu0 %11767, %v11533
    %v11769 = vpop.permute.xlu0 %11768
    %11770 = vset.pattern.permute.xlu0 0
    %11771 = vperm.xlu0 %11770, %v11582
    %v11772 = vpop.permute.xlu0 %11771
    %11773 = vset.pattern.permute.xlu0 0
    %11774 = vperm.xlu0 %11773, %v11631
    %v11775 = vpop.permute.xlu0 %11774
    %v11776 = vlaneseq
    %v11777 = vand.u32 %v11776, 127
    %v11778 = vlaneseq
    %v11779 = vshrl.u32 %v11778, 7
    %v11780 = vsub.s32 %v11777, %v11779
    %v11781 = vrot.slane %v11634, %v11780
    %v11782 = vadd.s32 %v11777, 4294967288
    %v11783 = vlaneseq
    %v11784 = vshrl.u32 %v11783, 7
    %v11785 = vsub.s32 %v11782, %v11784
    %v11786 = vrot.slane %v11637, %v11785
    %vm11787 = vcmask 130112
    %v11788 = vsel %vm11787, %v11786, %v11781
    %v11789 = vadd.s32 %v11777, 4294967280
    %v11790 = vlaneseq
    %v11791 = vshrl.u32 %v11790, 7
    %v11792 = vsub.s32 %v11789, %v11791
    %v11793 = vrot.slane %v11640, %v11792
    %vm11794 = vcmask 195712
    %v11795 = vsel %vm11794, %v11793, %v11788
    %v11796 = vadd.s32 %v11777, 4294967272
    %v11797 = vlaneseq
    %v11798 = vshrl.u32 %v11797, 7
    %v11799 = vsub.s32 %v11796, %v11798
    %v11800 = vrot.slane %v11643, %v11799
    %vm11801 = vcmask 261312
    %v11802 = vsel %vm11801, %v11800, %v11795
    %v11803 = vadd.s32 %v11777, 4294967264
    %v11804 = vlaneseq
    %v11805 = vshrl.u32 %v11804, 7
    %v11806 = vsub.s32 %v11803, %v11805
    %v11807 = vrot.slane %v11646, %v11806
    %vm11808 = vcmask 326912
    %v11809 = vsel %vm11808, %v11807, %v11802
    %v11810 = vadd.s32 %v11777, 4294967256
    %v11811 = vlaneseq
    %v11812 = vshrl.u32 %v11811, 7
    %v11813 = vsub.s32 %v11810, %v11812
    %v11814 = vrot.slane %v11649, %v11813
    %vm11815 = vcmask 392512
    %v11816 = vsel %vm11815, %v11814, %v11809
    %v11817 = vadd.s32 %v11777, 4294967248
    %v11818 = vlaneseq
    %v11819 = vshrl.u32 %v11818, 7
    %v11820 = vsub.s32 %v11817, %v11819
    %v11821 = vrot.slane %v11652, %v11820
    %vm11822 = vcmask 458112
    %v11823 = vsel %vm11822, %v11821, %v11816
    %v11824 = vadd.s32 %v11777, 4294967240
    %v11825 = vlaneseq
    %v11826 = vshrl.u32 %v11825, 7
    %v11827 = vsub.s32 %v11824, %v11826
    %v11828 = vrot.slane %v11655, %v11827
    %vm11829 = vcmask 523712
    %v11830 = vsel %vm11829, %v11828, %v11823
    %v11831 = vadd.s32 %v11777, 4294967232
    %v11832 = vlaneseq
    %v11833 = vshrl.u32 %v11832, 7
    %v11834 = vsub.s32 %v11831, %v11833
    %v11835 = vrot.slane %v11658, %v11834
    %vm11836 = vcmask 589312
    %v11837 = vsel %vm11836, %v11835, %v11830
    %v11838 = vadd.s32 %v11777, 4294967224
    %v11839 = vlaneseq
    %v11840 = vshrl.u32 %v11839, 7
    %v11841 = vsub.s32 %v11838, %v11840
    %v11842 = vrot.slane %v11661, %v11841
    %vm11843 = vcmask 654912
    %v11844 = vsel %vm11843, %v11842, %v11837
    %v11845 = vadd.s32 %v11777, 4294967216
    %v11846 = vlaneseq
    %v11847 = vshrl.u32 %v11846, 7
    %v11848 = vsub.s32 %v11845, %v11847
    %v11849 = vrot.slane %v11664, %v11848
    %vm11850 = vcmask 720512
    %v11851 = vsel %vm11850, %v11849, %v11844
    %v11852 = vadd.s32 %v11777, 4294967208
    %v11853 = vlaneseq
    %v11854 = vshrl.u32 %v11853, 7
    %v11855 = vsub.s32 %v11852, %v11854
    %v11856 = vrot.slane %v11667, %v11855
    %vm11857 = vcmask 786112
    %v11858 = vsel %vm11857, %v11856, %v11851
    %v11859 = vadd.s32 %v11777, 4294967200
    %v11860 = vlaneseq
    %v11861 = vshrl.u32 %v11860, 7
    %v11862 = vsub.s32 %v11859, %v11861
    %v11863 = vrot.slane %v11670, %v11862
    %vm11864 = vcmask 851712
    %v11865 = vsel %vm11864, %v11863, %v11858
    %v11866 = vadd.s32 %v11777, 4294967192
    %v11867 = vlaneseq
    %v11868 = vshrl.u32 %v11867, 7
    %v11869 = vsub.s32 %v11866, %v11868
    %v11870 = vrot.slane %v11673, %v11869
    %vm11871 = vcmask 917312
    %v11872 = vsel %vm11871, %v11870, %v11865
    %v11873 = vadd.s32 %v11777, 4294967184
    %v11874 = vlaneseq
    %v11875 = vshrl.u32 %v11874, 7
    %v11876 = vsub.s32 %v11873, %v11875
    %v11877 = vrot.slane %v11676, %v11876
    %vm11878 = vcmask 982912
    %v11879 = vsel %vm11878, %v11877, %v11872
    %v11880 = vadd.s32 %v11777, 4294967176
    %v11881 = vlaneseq
    %v11882 = vshrl.u32 %v11881, 7
    %v11883 = vsub.s32 %v11880, %v11882
    %v11884 = vrot.slane %v11679, %v11883
    %vm11885 = vcmask 1048512
    %v11886 = vsel %vm11885, %v11884, %v11879
    %v11887 = vlaneseq
    %v11888 = vshrl.u32 %v11887, 7
    %v11889 = vsub.s32 %v11777, %v11888
    %v11890 = vrot.slane %v11682, %v11889
    %v11891 = vlaneseq
    %v11892 = vshrl.u32 %v11891, 7
    %v11893 = vsub.s32 %v11782, %v11892
    %v11894 = vrot.slane %v11685, %v11893
    %v11895 = vsel %vm11787, %v11894, %v11890
    %v11896 = vlaneseq
    %v11897 = vshrl.u32 %v11896, 7
    %v11898 = vsub.s32 %v11789, %v11897
    %v11899 = vrot.slane %v11688, %v11898
    %v11900 = vsel %vm11794, %v11899, %v11895
    %v11901 = vlaneseq
    %v11902 = vshrl.u32 %v11901, 7
    %v11903 = vsub.s32 %v11796, %v11902
    %v11904 = vrot.slane %v11691, %v11903
    %v11905 = vsel %vm11801, %v11904, %v11900
    %v11906 = vlaneseq
    %v11907 = vshrl.u32 %v11906, 7
    %v11908 = vsub.s32 %v11803, %v11907
    %v11909 = vrot.slane %v11694, %v11908
    %v11910 = vsel %vm11808, %v11909, %v11905
    %v11911 = vlaneseq
    %v11912 = vshrl.u32 %v11911, 7
    %v11913 = vsub.s32 %v11810, %v11912
    %v11914 = vrot.slane %v11697, %v11913
    %v11915 = vsel %vm11815, %v11914, %v11910
    %v11916 = vlaneseq
    %v11917 = vshrl.u32 %v11916, 7
    %v11918 = vsub.s32 %v11817, %v11917
    %v11919 = vrot.slane %v11700, %v11918
    %v11920 = vsel %vm11822, %v11919, %v11915
    %v11921 = vlaneseq
    %v11922 = vshrl.u32 %v11921, 7
    %v11923 = vsub.s32 %v11824, %v11922
    %v11924 = vrot.slane %v11703, %v11923
    %v11925 = vsel %vm11829, %v11924, %v11920
    %v11926 = vlaneseq
    %v11927 = vshrl.u32 %v11926, 7
    %v11928 = vsub.s32 %v11831, %v11927
    %v11929 = vrot.slane %v11706, %v11928
    %v11930 = vsel %vm11836, %v11929, %v11925
    %v11931 = vlaneseq
    %v11932 = vshrl.u32 %v11931, 7
    %v11933 = vsub.s32 %v11838, %v11932
    %v11934 = vrot.slane %v11709, %v11933
    %v11935 = vsel %vm11843, %v11934, %v11930
    %v11936 = vlaneseq
    %v11937 = vshrl.u32 %v11936, 7
    %v11938 = vsub.s32 %v11845, %v11937
    %v11939 = vrot.slane %v11712, %v11938
    %v11940 = vsel %vm11850, %v11939, %v11935
    %v11941 = vlaneseq
    %v11942 = vshrl.u32 %v11941, 7
    %v11943 = vsub.s32 %v11852, %v11942
    %v11944 = vrot.slane %v11715, %v11943
    %v11945 = vsel %vm11857, %v11944, %v11940
    %v11946 = vlaneseq
    %v11947 = vshrl.u32 %v11946, 7
    %v11948 = vsub.s32 %v11859, %v11947
    %v11949 = vrot.slane %v11718, %v11948
    %v11950 = vsel %vm11864, %v11949, %v11945
    %v11951 = vlaneseq
    %v11952 = vshrl.u32 %v11951, 7
    %v11953 = vsub.s32 %v11866, %v11952
    %v11954 = vrot.slane %v11721, %v11953
    %v11955 = vsel %vm11871, %v11954, %v11950
    %v11956 = vlaneseq
    %v11957 = vshrl.u32 %v11956, 7
    %v11958 = vsub.s32 %v11873, %v11957
    %v11959 = vrot.slane %v11724, %v11958
    %v11960 = vsel %vm11878, %v11959, %v11955
    %v11961 = vlaneseq
    %v11962 = vshrl.u32 %v11961, 7
    %v11963 = vsub.s32 %v11880, %v11962
    %v11964 = vrot.slane %v11727, %v11963
    %v11965 = vsel %vm11885, %v11964, %v11960
    %v11966 = vlaneseq
    %v11967 = vshrl.u32 %v11966, 7
    %v11968 = vsub.s32 %v11777, %v11967
    %v11969 = vrot.slane %v11730, %v11968
    %v11970 = vlaneseq
    %v11971 = vshrl.u32 %v11970, 7
    %v11972 = vsub.s32 %v11782, %v11971
    %v11973 = vrot.slane %v11733, %v11972
    %v11974 = vsel %vm11787, %v11973, %v11969
    %v11975 = vlaneseq
    %v11976 = vshrl.u32 %v11975, 7
    %v11977 = vsub.s32 %v11789, %v11976
    %v11978 = vrot.slane %v11736, %v11977
    %v11979 = vsel %vm11794, %v11978, %v11974
    %v11980 = vlaneseq
    %v11981 = vshrl.u32 %v11980, 7
    %v11982 = vsub.s32 %v11796, %v11981
    %v11983 = vrot.slane %v11739, %v11982
    %v11984 = vsel %vm11801, %v11983, %v11979
    %v11985 = vlaneseq
    %v11986 = vshrl.u32 %v11985, 7
    %v11987 = vsub.s32 %v11803, %v11986
    %v11988 = vrot.slane %v11742, %v11987
    %v11989 = vsel %vm11808, %v11988, %v11984
    %v11990 = vlaneseq
    %v11991 = vshrl.u32 %v11990, 7
    %v11992 = vsub.s32 %v11810, %v11991
    %v11993 = vrot.slane %v11745, %v11992
    %v11994 = vsel %vm11815, %v11993, %v11989
    %v11995 = vlaneseq
    %v11996 = vshrl.u32 %v11995, 7
    %v11997 = vsub.s32 %v11817, %v11996
    %v11998 = vrot.slane %v11748, %v11997
    %v11999 = vsel %vm11822, %v11998, %v11994
    %v12000 = vlaneseq
    %v12001 = vshrl.u32 %v12000, 7
    %v12002 = vsub.s32 %v11824, %v12001
    %v12003 = vrot.slane %v11751, %v12002
    %v12004 = vsel %vm11829, %v12003, %v11999
    %v12005 = vlaneseq
    %v12006 = vshrl.u32 %v12005, 7
    %v12007 = vsub.s32 %v11831, %v12006
    %v12008 = vrot.slane %v11754, %v12007
    %v12009 = vsel %vm11836, %v12008, %v12004
    %v12010 = vlaneseq
    %v12011 = vshrl.u32 %v12010, 7
    %v12012 = vsub.s32 %v11838, %v12011
    %v12013 = vrot.slane %v11757, %v12012
    %v12014 = vsel %vm11843, %v12013, %v12009
    %v12015 = vlaneseq
    %v12016 = vshrl.u32 %v12015, 7
    %v12017 = vsub.s32 %v11845, %v12016
    %v12018 = vrot.slane %v11760, %v12017
    %v12019 = vsel %vm11850, %v12018, %v12014
    %v12020 = vlaneseq
    %v12021 = vshrl.u32 %v12020, 7
    %v12022 = vsub.s32 %v11852, %v12021
    %v12023 = vrot.slane %v11763, %v12022
    %v12024 = vsel %vm11857, %v12023, %v12019
    %v12025 = vlaneseq
    %v12026 = vshrl.u32 %v12025, 7
    %v12027 = vsub.s32 %v11859, %v12026
    %v12028 = vrot.slane %v11766, %v12027
    %v12029 = vsel %vm11864, %v12028, %v12024
    %v12030 = vlaneseq
    %v12031 = vshrl.u32 %v12030, 7
    %v12032 = vsub.s32 %v11866, %v12031
    %v12033 = vrot.slane %v11769, %v12032
    %v12034 = vsel %vm11871, %v12033, %v12029
    %v12035 = vlaneseq
    %v12036 = vshrl.u32 %v12035, 7
    %v12037 = vsub.s32 %v11873, %v12036
    %v12038 = vrot.slane %v11772, %v12037
    %v12039 = vsel %vm11878, %v12038, %v12034
    %v12040 = vlaneseq
    %v12041 = vshrl.u32 %v12040, 7
    %v12042 = vsub.s32 %v11880, %v12041
    %v12043 = vrot.slane %v11775, %v12042
    %v12044 = vsel %vm11885, %v12043, %v12039
    %v12045 = vcombine.low %v11886, %v11965
    %v12047 = vunpack.c.l.s4 1966171168
    %v12048 = vunpack.c.0.s8 %v12047
    %v12049 = vlaneseq
    %v12050 = vshrl.u32 %v12049, 7
    %v12051 = vsub.s32 %v12048, %v12050
    %v12052 = vrot.slane %v12045, %v12051
    %v12054 = vunpack.c.l.s4 1966171168
    %v12055 = vunpack.c.0.s8 %v12054
    %v12056 = vlaneseq
    %v12057 = vshrl.u32 %v12056, 7
    %v12058 = vsub.s32 %v12055, %v12057
    %v12059 = vrot.slane %v12044, %v12058
    %v12060 = vcombine.low %v12052, %v12059
    %v12062 = vunpack.c.l.s4 1966171168
    %v12063 = vunpack.c.0.s8 %v12062
    %v12064 = vlaneseq
    %v12065 = vshrl.u32 %v12064, 7
    %v12066 = vsub.s32 %v12063, %v12065
    %v12067 = vrot.slane %v12060, %v12066
    %v12069 = vlaneseq
    %vm12070 = vcmp.ge.s32.totalorder %v12069, 0
    %vm12071 = vcmp.lt.s32.totalorder %v12069, 384
    %vm12072 = vmand %vm12070, %vm12071
    %12073 = vst.msk [vmem:[%s10] sm:$0x7] %vm12072, %v12067
    // Predicated region
    $region50: #{kge_forward_pallas.2} parent=1 // pred_check
      _
    $region51: #{kge_forward_pallas.2} parent=1 // pred_check_branch
      %12075 = sbr.rel (0) target = $region53
    $region52: #{kge_forward_pallas.2} parent=1 // pred_region
      _
    $region53: #{kge_forward_pallas.2} parent=1 // pred_fallthru
      _
    // Predicated region
    $region54: #{kge_forward_pallas.2} parent=1 // pred_check
      _
    $region55: #{kge_forward_pallas.2} parent=1 // pred_check_branch
      %12077 = sbr.rel (0) target = $region57
    $region56: #{kge_forward_pallas.2} parent=1 // pred_region
      _
    $region57: #{kge_forward_pallas.2} parent=1 // pred_fallthru
      _

</llo_original>
